<compile_context>
chip_gen: v5e
topology: v5e:2x2
jax: 0.10.0
libtpu: 0.0.40
codegen_flags: <defaults>
</compile_context>

<pallas_src>
import numpy as np
import jax
import jax.numpy as jnp
from jax import lax
from jax.experimental import pallas as pl
from jax.experimental.pallas import tpu as pltpu

_S_MAX = 256          # keeps 2x(in+out+C0) blocks ~23 MiB < 32 MiB scoped VMEM
_MIN_GRID_STEPS = 4   # keep enough "parallel" grid steps for v7x megacore


def _c4_kernel(c0_ref, alpha_ref, out_ref):
    # c0_ref   : VMEM (81, 8, 128) f32, row = m*27+n*9+o*3+p, value broadcast
    #            across the full vreg (uses cost a vld, never a VALU splat).
    # alpha_ref: VMEM (9, S, 128)  f32, row = m*3 + i
    # out_ref  : VMEM (81, S, 128) f32, row = i*27 + j*9 + k*3 + l
    S = alpha_ref.shape[1]
    num_chunks = S // 8

    def c0v(m, n, o, p):
        return c0_ref[m * 27 + n * 9 + o * 3 + p]     # one (8,128) vreg

    def compute_chunk(s0):
        # A[m][i] is a full (8,128) vreg -> unmasked VALU ops and stores.
        A = [[alpha_ref[m * 3 + i, pl.ds(s0, 8), :] for i in range(3)]
             for m in range(3)]
        for i in range(3):
            # T1[n][o][p] = sum_m C0[m,n,o,p] * A[m][i]
            T1 = [[[c0v(0, n, o, p) * A[0][i]
                    + c0v(1, n, o, p) * A[1][i]
                    + c0v(2, n, o, p) * A[2][i]
                    for p in range(3)] for o in range(3)] for n in range(3)]
            for j in range(3):
                # T2[o][p] = sum_n A[n][j] * T1[n][o][p]
                T2 = [[A[0][j] * T1[0][o][p]
                       + A[1][j] * T1[1][o][p]
                       + A[2][j] * T1[2][o][p]
                       for p in range(3)] for o in range(3)]
                for k in range(3):
                    # T3[p] = sum_o A[o][k] * T2[o][p]
                    T3 = [A[0][k] * T2[0][p]
                          + A[1][k] * T2[1][p]
                          + A[2][k] * T2[2][p]
                          for p in range(3)]
                    for l in range(3):
                        # Full-vreg, unmasked, lane-dense store.
                        out_ref[i * 27 + j * 9 + k * 3 + l,
                                pl.ds(s0, 8), :] = (
                            A[0][l] * T3[0]
                            + A[1][l] * T3[1]
                            + A[2][l] * T3[2])

    # Keep the 8-sublane chunk (live set ~50 vregs).  Unroll the chunk loop
    # so next-chunk loads overlap current-chunk tail stores.
    if num_chunks <= 4:
        for c in range(num_chunks):
            compute_chunk(c * 8)
    else:
        def body(c, carry):
            compute_chunk(pl.multiple_of(c * 8, 8))
            return carry
        unroll = 2 if num_chunks % 2 == 0 else 1
        lax.fori_loop(0, num_chunks, body, 0, unroll=unroll)


def _pick_block_sublanes(batch, n_sub, max_block_sublanes):
    """Pick the block sublane count S (multiple of 8, <= 256).

    Preference order: (1) keep >= _MIN_GRID_STEPS parallel grid steps when
    achievable (v7x has 2 TensorCores), (2) minimize wasted compute in the
    final partial block, (3) largest tile (amortize per-step overhead)."""
    s_max = max(8, (min(int(max_block_sublanes), _S_MAX) // 8) * 8)
    s_cap = max(8, (n_sub // 8) * 8)      # never let a block exceed the array
    cands = range(8, min(s_max, s_cap) + 1, 8)

    def steps(s):
        return batch * (-(-n_sub // s))

    def waste(s):
        return (-(-n_sub // s)) * s - n_sub

    achievable = any(steps(s) >= _MIN_GRID_STEPS for s in cands)
    return max(cands,
               key=lambda s: ((steps(s) >= _MIN_GRID_STEPS) or not achievable,
                              -waste(s), s))


def alpha_c0_42c_4(alphatensor, C0_4, max_block_sublanes=_S_MAX):
    """Pallas implementation of alphaC0_42C_4.forward.

    alphatensor: (B, 3, 3, X, Y, Z) float32
    C0_4       : (3, 3, 3, 3)       float32
    returns    : (B, 3, 3, 3, 3, X, Y, Z) float32
    """
    B, M, I, X, Y, Z = alphatensor.shape
    assert M == 3 and I == 3, "alphaC0_42C_4 assumes 3x3 alpha matrices"
    N = X * Y * Z

    # Pure reshape of the PyTorch layout (no transpose): rows = (m, i).
    a = alphatensor.astype(jnp.float32).reshape(B, 9, N)

    n_sub = -(-N // 128)                  # lane tiles actually needed
    n_out = max(n_sub, 8)                 # output sublane extent (>= min tile)
    S = _pick_block_sublanes(B, n_sub, max_block_sublanes)
    grid_t = -(-n_sub // S)

    # Pad only the cheap 9-channel *input* so every input block is full.  The
    # 81-channel output keeps n_out lane-tiles; Pallas masks the write-back of
    # a partial final block, so no host-side de-pad copy of the output is
    # needed when X*Y*Z is a multiple of 128.
    Nin = grid_t * S * 128
    if Nin != N:
        a = jnp.pad(a, ((0, 0), (0, 0), (0, Nin - N)))   # zero pad is benign
    a = a.reshape(B, 9, grid_t * S, 128)

    # C0_4 broadcast to one full (8,128) vreg per (m,n,o,p) entry (~324 KiB):
    # in-kernel uses are plain vreg*vreg multiplies fed from the vld slot.
    c0v = jnp.broadcast_to(C0_4.astype(jnp.float32).reshape(81, 1, 1),
                           (81, 8, 128))

    flops = 2 * 972 * B * grid_t * S * 128                      # 972 FMA/point
    bytes_accessed = 4 * (B * 9 * grid_t * S * 128
                          + B * 81 * n_out * 128
                          + 81 * 8 * 128)

    out = pl.pallas_call(
        _c4_kernel,
        out_shape=jax.ShapeDtypeStruct((B, 81, n_out, 128), jnp.float32),
        grid=(B, grid_t),
        in_specs=[
            # Constant block index -> DMA'd once, stays VMEM-resident.
            pl.BlockSpec((81, 8, 128), lambda b, t: (0, 0, 0)),
            pl.BlockSpec((None, 9, S, 128), lambda b, t: (b, 0, t, 0)),
        ],
        out_specs=pl.BlockSpec((None, 81, S, 128), lambda b, t: (b, 0, t, 0)),
        compiler_params=pltpu.CompilerParams(
            dimension_semantics=("parallel", "parallel")),
        cost_estimate=pl.CostEstimate(flops=flops, transcendentals=0,
                                      bytes_accessed=bytes_accessed),
    )(c0v, a)

    out = out.reshape(B, 81, n_out * 128)
    if n_out * 128 != N:      # only when X*Y*Z is not a multiple of 128
        out = out[:, :, :N]
    # Free reshape to the PyTorch output layout (B, i, j, k, l, X, Y, Z).
    return out.reshape(B, 3, 3, 3, 3, X, Y, Z)


if __name__ == "__main__":
    key = jax.random.PRNGKey(0)
    k_c0, k1, k2, k3, k4 = jax.random.split(key, 5)

    C0_4 = jax.random.normal(k_c0, (3, 3, 3, 3), dtype=jnp.float32)

    def reference(alpha, c0):
        return jnp.einsum('bmixyz,bnjxyz,bokxyz,bplxyz,mnop->bijklxyz',
                          alpha, alpha, alpha, alpha, c0,
                          precision=jax.lax.Precision.HIGHEST)

    def check(alpha, **kw):
        out = jax.block_until_ready(alpha_c0_42c_4(alpha, C0_4, **kw))
        ref = np.asarray(reference(alpha, C0_4))
        np.testing.assert_allclose(np.asarray(out), ref, rtol=1e-4, atol=1e-4)
        assert out.shape == alpha.shape[:1] + (3, 3, 3, 3) + alpha.shape[3:]

    # 1) Module-sized small input (N=64): lane padding + de-pad slice path.
    check(jax.random.normal(k1, (2, 3, 3, 4, 4, 4), dtype=jnp.float32))

    # 2) N=2048 (multiple of 128): no pad, no de-pad copy, single S=16 tile
    #    (two 8-sublane chunks); with max_block_sublanes=8 -> multi-step grid.
    a2 = jax.random.normal(k2, (1, 3, 3, 8, 8, 32), dtype=jnp.float32)
    check(a2)
    check(a2, max_block_sublanes=8)

    # 3) N=1152=9*128: exercises the masked write-back of a partial output
    #    block (n_sub=9, S=8) with no host-side de-pad copy.
    check(jax.random.normal(k3, (2, 3, 3, 8, 8, 18), dtype=jnp.float32))

    # 4) Larger batch/volume: S=64 tile, fori_loop chunk loop (unroll=2),
    #    8 parallel grid steps for v7x megacore.
    check(jax.random.normal(k4, (8, 3, 3, 16, 16, 32), dtype=jnp.float32))

    print("KERNEL_OK")
</pallas_src>

<mosaic_0001>
module attributes {stable_mosaic.version = 11 : i64} {
  func.func @_c4_kernel(%arg0: i32, %arg1: i32, %arg2: memref<81x8x128xf32, #tpu.memory_space<vmem>>, %arg3: memref<1x9x8x128xf32, #tpu.memory_space<vmem>>, %arg4: memref<1x81x8x128xf32, #tpu.memory_space<vmem>>) attributes {dimension_semantics = [#tpu.dimension_semantics<parallel>, #tpu.dimension_semantics<parallel>], iteration_bounds = array<i64: 2, 1>, scalar_prefetch = 0 : i64, scratch_operands = 0 : i64, tpu.core_type = #tpu.core_type<tc>, window_params = [{pipeline_mode = #tpu.pipeline_mode<synchronous>, transform_indices = @transform_0, window_bounds = array<i64: 81, 8, 128>}, {transform_indices = @transform_1, window_bounds = array<i64: 1, 9, 8, 128>}, {transform_indices = @transform_2, window_bounds = array<i64: 1, 81, 8, 128>}]} {
    %c0 = arith.constant 0 : index
    %c0_0 = arith.constant 0 : index
    %c0_1 = arith.constant 0 : index
    %c0_2 = arith.constant 0 : index
    %0 = vector.load %arg3[%c0, %c0_0, %c0_1, %c0_2] : memref<1x9x8x128xf32, #tpu.memory_space<vmem>>, vector<1x1x8x128xf32>
    %1 = vector.shape_cast %0 : vector<1x1x8x128xf32> to vector<8x128xf32>
    %c0_3 = arith.constant 0 : index
    %c1 = arith.constant 1 : index
    %c0_4 = arith.constant 0 : index
    %c0_5 = arith.constant 0 : index
    %2 = vector.load %arg3[%c0_3, %c1, %c0_4, %c0_5] : memref<1x9x8x128xf32, #tpu.memory_space<vmem>>, vector<1x1x8x128xf32>
    %3 = vector.shape_cast %2 : vector<1x1x8x128xf32> to vector<8x128xf32>
    %c0_6 = arith.constant 0 : index
    %c2 = arith.constant 2 : index
    %c0_7 = arith.constant 0 : index
    %c0_8 = arith.constant 0 : index
    %4 = vector.load %arg3[%c0_6, %c2, %c0_7, %c0_8] : memref<1x9x8x128xf32, #tpu.memory_space<vmem>>, vector<1x1x8x128xf32>
    %5 = vector.shape_cast %4 : vector<1x1x8x128xf32> to vector<8x128xf32>
    %c0_9 = arith.constant 0 : index
    %c3 = arith.constant 3 : index
    %c0_10 = arith.constant 0 : index
    %c0_11 = arith.constant 0 : index
    %6 = vector.load %arg3[%c0_9, %c3, %c0_10, %c0_11] : memref<1x9x8x128xf32, #tpu.memory_space<vmem>>, vector<1x1x8x128xf32>
    %7 = vector.shape_cast %6 : vector<1x1x8x128xf32> to vector<8x128xf32>
    %c0_12 = arith.constant 0 : index
    %c4 = arith.constant 4 : index
    %c0_13 = arith.constant 0 : index
    %c0_14 = arith.constant 0 : index
    %8 = vector.load %arg3[%c0_12, %c4, %c0_13, %c0_14] : memref<1x9x8x128xf32, #tpu.memory_space<vmem>>, vector<1x1x8x128xf32>
    %9 = vector.shape_cast %8 : vector<1x1x8x128xf32> to vector<8x128xf32>
    %c0_15 = arith.constant 0 : index
    %c5 = arith.constant 5 : index
    %c0_16 = arith.constant 0 : index
    %c0_17 = arith.constant 0 : index
    %10 = vector.load %arg3[%c0_15, %c5, %c0_16, %c0_17] : memref<1x9x8x128xf32, #tpu.memory_space<vmem>>, vector<1x1x8x128xf32>
    %11 = vector.shape_cast %10 : vector<1x1x8x128xf32> to vector<8x128xf32>
    %c0_18 = arith.constant 0 : index
    %c6 = arith.constant 6 : index
    %c0_19 = arith.constant 0 : index
    %c0_20 = arith.constant 0 : index
    %12 = vector.load %arg3[%c0_18, %c6, %c0_19, %c0_20] : memref<1x9x8x128xf32, #tpu.memory_space<vmem>>, vector<1x1x8x128xf32>
    %13 = vector.shape_cast %12 : vector<1x1x8x128xf32> to vector<8x128xf32>
    %c0_21 = arith.constant 0 : index
    %c7 = arith.constant 7 : index
    %c0_22 = arith.constant 0 : index
    %c0_23 = arith.constant 0 : index
    %14 = vector.load %arg3[%c0_21, %c7, %c0_22, %c0_23] : memref<1x9x8x128xf32, #tpu.memory_space<vmem>>, vector<1x1x8x128xf32>
    %15 = vector.shape_cast %14 : vector<1x1x8x128xf32> to vector<8x128xf32>
    %c0_24 = arith.constant 0 : index
    %c8 = arith.constant 8 : index
    %c0_25 = arith.constant 0 : index
    %c0_26 = arith.constant 0 : index
    %16 = vector.load %arg3[%c0_24, %c8, %c0_25, %c0_26] : memref<1x9x8x128xf32, #tpu.memory_space<vmem>>, vector<1x1x8x128xf32>
    %17 = vector.shape_cast %16 : vector<1x1x8x128xf32> to vector<8x128xf32>
    %c0_27 = arith.constant 0 : index
    %c0_28 = arith.constant 0 : index
    %c0_29 = arith.constant 0 : index
    %18 = vector.load %arg2[%c0_27, %c0_28, %c0_29] : memref<81x8x128xf32, #tpu.memory_space<vmem>>, vector<1x8x128xf32>
    %19 = vector.shape_cast %18 : vector<1x8x128xf32> to vector<8x128xf32>
    %20 = arith.mulf %19, %1 : vector<8x128xf32>
    %c27 = arith.constant 27 : index
    %c0_30 = arith.constant 0 : index
    %c0_31 = arith.constant 0 : index
    %21 = vector.load %arg2[%c27, %c0_30, %c0_31] : memref<81x8x128xf32, #tpu.memory_space<vmem>>, vector<1x8x128xf32>
    %22 = vector.shape_cast %21 : vector<1x8x128xf32> to vector<8x128xf32>
    %23 = arith.mulf %22, %7 : vector<8x128xf32>
    %24 = arith.addf %20, %23 : vector<8x128xf32>
    %c54 = arith.constant 54 : index
    %c0_32 = arith.constant 0 : index
    %c0_33 = arith.constant 0 : index
    %25 = vector.load %arg2[%c54, %c0_32, %c0_33] : memref<81x8x128xf32, #tpu.memory_space<vmem>>, vector<1x8x128xf32>
    %26 = vector.shape_cast %25 : vector<1x8x128xf32> to vector<8x128xf32>
    %27 = arith.mulf %26, %13 : vector<8x128xf32>
    %28 = arith.addf %24, %27 : vector<8x128xf32>
    %c1_34 = arith.constant 1 : index
    %c0_35 = arith.constant 0 : index
    %c0_36 = arith.constant 0 : index
    %29 = vector.load %arg2[%c1_34, %c0_35, %c0_36] : memref<81x8x128xf32, #tpu.memory_space<vmem>>, vector<1x8x128xf32>
    %30 = vector.shape_cast %29 : vector<1x8x128xf32> to vector<8x128xf32>
    %31 = arith.mulf %30, %1 : vector<8x128xf32>
    %c28 = arith.constant 28 : index
    %c0_37 = arith.constant 0 : index
    %c0_38 = arith.constant 0 : index
    %32 = vector.load %arg2[%c28, %c0_37, %c0_38] : memref<81x8x128xf32, #tpu.memory_space<vmem>>, vector<1x8x128xf32>
    %33 = vector.shape_cast %32 : vector<1x8x128xf32> to vector<8x128xf32>
    %34 = arith.mulf %33, %7 : vector<8x128xf32>
    %35 = arith.addf %31, %34 : vector<8x128xf32>
    %c55 = arith.constant 55 : index
    %c0_39 = arith.constant 0 : index
    %c0_40 = arith.constant 0 : index
    %36 = vector.load %arg2[%c55, %c0_39, %c0_40] : memref<81x8x128xf32, #tpu.memory_space<vmem>>, vector<1x8x128xf32>
    %37 = vector.shape_cast %36 : vector<1x8x128xf32> to vector<8x128xf32>
    %38 = arith.mulf %37, %13 : vector<8x128xf32>
    %39 = arith.addf %35, %38 : vector<8x128xf32>
    %c2_41 = arith.constant 2 : index
    %c0_42 = arith.constant 0 : index
    %c0_43 = arith.constant 0 : index
    %40 = vector.load %arg2[%c2_41, %c0_42, %c0_43] : memref<81x8x128xf32, #tpu.memory_space<vmem>>, vector<1x8x128xf32>
    %41 = vector.shape_cast %40 : vector<1x8x128xf32> to vector<8x128xf32>
    %42 = arith.mulf %41, %1 : vector<8x128xf32>
    %c29 = arith.constant 29 : index
    %c0_44 = arith.constant 0 : index
    %c0_45 = arith.constant 0 : index
    %43 = vector.load %arg2[%c29, %c0_44, %c0_45] : memref<81x8x128xf32, #tpu.memory_space<vmem>>, vector<1x8x128xf32>
    %44 = vector.shape_cast %43 : vector<1x8x128xf32> to vector<8x128xf32>
    %45 = arith.mulf %44, %7 : vector<8x128xf32>
    %46 = arith.addf %42, %45 : vector<8x128xf32>
    %c56 = arith.constant 56 : index
    %c0_46 = arith.constant 0 : index
    %c0_47 = arith.constant 0 : index
    %47 = vector.load %arg2[%c56, %c0_46, %c0_47] : memref<81x8x128xf32, #tpu.memory_space<vmem>>, vector<1x8x128xf32>
    %48 = vector.shape_cast %47 : vector<1x8x128xf32> to vector<8x128xf32>
    %49 = arith.mulf %48, %13 : vector<8x128xf32>
    %50 = arith.addf %46, %49 : vector<8x128xf32>
    %c3_48 = arith.constant 3 : index
    %c0_49 = arith.constant 0 : index
    %c0_50 = arith.constant 0 : index
    %51 = vector.load %arg2[%c3_48, %c0_49, %c0_50] : memref<81x8x128xf32, #tpu.memory_space<vmem>>, vector<1x8x128xf32>
    %52 = vector.shape_cast %51 : vector<1x8x128xf32> to vector<8x128xf32>
    %53 = arith.mulf %52, %1 : vector<8x128xf32>
    %c30 = arith.constant 30 : index
    %c0_51 = arith.constant 0 : index
    %c0_52 = arith.constant 0 : index
    %54 = vector.load %arg2[%c30, %c0_51, %c0_52] : memref<81x8x128xf32, #tpu.memory_space<vmem>>, vector<1x8x128xf32>
    %55 = vector.shape_cast %54 : vector<1x8x128xf32> to vector<8x128xf32>
    %56 = arith.mulf %55, %7 : vector<8x128xf32>
    %57 = arith.addf %53, %56 : vector<8x128xf32>
    %c57 = arith.constant 57 : index
    %c0_53 = arith.constant 0 : index
    %c0_54 = arith.constant 0 : index
    %58 = vector.load %arg2[%c57, %c0_53, %c0_54] : memref<81x8x128xf32, #tpu.memory_space<vmem>>, vector<1x8x128xf32>
    %59 = vector.shape_cast %58 : vector<1x8x128xf32> to vector<8x128xf32>
    %60 = arith.mulf %59, %13 : vector<8x128xf32>
    %61 = arith.addf %57, %60 : vector<8x128xf32>
    %c4_55 = arith.constant 4 : index
    %c0_56 = arith.constant 0 : index
    %c0_57 = arith.constant 0 : index
    %62 = vector.load %arg2[%c4_55, %c0_56, %c0_57] : memref<81x8x128xf32, #tpu.memory_space<vmem>>, vector<1x8x128xf32>
    %63 = vector.shape_cast %62 : vector<1x8x128xf32> to vector<8x128xf32>
    %64 = arith.mulf %63, %1 : vector<8x128xf32>
    %c31 = arith.constant 31 : index
    %c0_58 = arith.constant 0 : index
    %c0_59 = arith.constant 0 : index
    %65 = vector.load %arg2[%c31, %c0_58, %c0_59] : memref<81x8x128xf32, #tpu.memory_space<vmem>>, vector<1x8x128xf32>
    %66 = vector.shape_cast %65 : vector<1x8x128xf32> to vector<8x128xf32>
    %67 = arith.mulf %66, %7 : vector<8x128xf32>
    %68 = arith.addf %64, %67 : vector<8x128xf32>
    %c58 = arith.constant 58 : index
    %c0_60 = arith.constant 0 : index
    %c0_61 = arith.constant 0 : index
    %69 = vector.load %arg2[%c58, %c0_60, %c0_61] : memref<81x8x128xf32, #tpu.memory_space<vmem>>, vector<1x8x128xf32>
    %70 = vector.shape_cast %69 : vector<1x8x128xf32> to vector<8x128xf32>
    %71 = arith.mulf %70, %13 : vector<8x128xf32>
    %72 = arith.addf %68, %71 : vector<8x128xf32>
    %c5_62 = arith.constant 5 : index
    %c0_63 = arith.constant 0 : index
    %c0_64 = arith.constant 0 : index
    %73 = vector.load %arg2[%c5_62, %c0_63, %c0_64] : memref<81x8x128xf32, #tpu.memory_space<vmem>>, vector<1x8x128xf32>
    %74 = vector.shape_cast %73 : vector<1x8x128xf32> to vector<8x128xf32>
    %75 = arith.mulf %74, %1 : vector<8x128xf32>
    %c32 = arith.constant 32 : index
    %c0_65 = arith.constant 0 : index
    %c0_66 = arith.constant 0 : index
    %76 = vector.load %arg2[%c32, %c0_65, %c0_66] : memref<81x8x128xf32, #tpu.memory_space<vmem>>, vector<1x8x128xf32>
    %77 = vector.shape_cast %76 : vector<1x8x128xf32> to vector<8x128xf32>
    %78 = arith.mulf %77, %7 : vector<8x128xf32>
    %79 = arith.addf %75, %78 : vector<8x128xf32>
    %c59 = arith.constant 59 : index
    %c0_67 = arith.constant 0 : index
    %c0_68 = arith.constant 0 : index
    %80 = vector.load %arg2[%c59, %c0_67, %c0_68] : memref<81x8x128xf32, #tpu.memory_space<vmem>>, vector<1x8x128xf32>
    %81 = vector.shape_cast %80 : vector<1x8x128xf32> to vector<8x128xf32>
    %82 = arith.mulf %81, %13 : vector<8x128xf32>
    %83 = arith.addf %79, %82 : vector<8x128xf32>
    %c6_69 = arith.constant 6 : index
    %c0_70 = arith.constant 0 : index
    %c0_71 = arith.constant 0 : index
    %84 = vector.load %arg2[%c6_69, %c0_70, %c0_71] : memref<81x8x128xf32, #tpu.memory_space<vmem>>, vector<1x8x128xf32>
    %85 = vector.shape_cast %84 : vector<1x8x128xf32> to vector<8x128xf32>
    %86 = arith.mulf %85, %1 : vector<8x128xf32>
    %c33 = arith.constant 33 : index
    %c0_72 = arith.constant 0 : index
    %c0_73 = arith.constant 0 : index
    %87 = vector.load %arg2[%c33, %c0_72, %c0_73] : memref<81x8x128xf32, #tpu.memory_space<vmem>>, vector<1x8x128xf32>
    %88 = vector.shape_cast %87 : vector<1x8x128xf32> to vector<8x128xf32>
    %89 = arith.mulf %88, %7 : vector<8x128xf32>
    %90 = arith.addf %86, %89 : vector<8x128xf32>
    %c60 = arith.constant 60 : index
    %c0_74 = arith.constant 0 : index
    %c0_75 = arith.constant 0 : index
    %91 = vector.load %arg2[%c60, %c0_74, %c0_75] : memref<81x8x128xf32, #tpu.memory_space<vmem>>, vector<1x8x128xf32>
    %92 = vector.shape_cast %91 : vector<1x8x128xf32> to vector<8x128xf32>
    %93 = arith.mulf %92, %13 : vector<8x128xf32>
    %94 = arith.addf %90, %93 : vector<8x128xf32>
    %c7_76 = arith.constant 7 : index
    %c0_77 = arith.constant 0 : index
    %c0_78 = arith.constant 0 : index
    %95 = vector.load %arg2[%c7_76, %c0_77, %c0_78] : memref<81x8x128xf32, #tpu.memory_space<vmem>>, vector<1x8x128xf32>
    %96 = vector.shape_cast %95 : vector<1x8x128xf32> to vector<8x128xf32>
    %97 = arith.mulf %96, %1 : vector<8x128xf32>
    %c34 = arith.constant 34 : index
    %c0_79 = arith.constant 0 : index
    %c0_80 = arith.constant 0 : index
    %98 = vector.load %arg2[%c34, %c0_79, %c0_80] : memref<81x8x128xf32, #tpu.memory_space<vmem>>, vector<1x8x128xf32>
    %99 = vector.shape_cast %98 : vector<1x8x128xf32> to vector<8x128xf32>
    %100 = arith.mulf %99, %7 : vector<8x128xf32>
    %101 = arith.addf %97, %100 : vector<8x128xf32>
    %c61 = arith.constant 61 : index
    %c0_81 = arith.constant 0 : index
    %c0_82 = arith.constant 0 : index
    %102 = vector.load %arg2[%c61, %c0_81, %c0_82] : memref<81x8x128xf32, #tpu.memory_space<vmem>>, vector<1x8x128xf32>
    %103 = vector.shape_cast %102 : vector<1x8x128xf32> to vector<8x128xf32>
    %104 = arith.mulf %103, %13 : vector<8x128xf32>
    %105 = arith.addf %101, %104 : vector<8x128xf32>
    %c8_83 = arith.constant 8 : index
    %c0_84 = arith.constant 0 : index
    %c0_85 = arith.constant 0 : index
    %106 = vector.load %arg2[%c8_83, %c0_84, %c0_85] : memref<81x8x128xf32, #tpu.memory_space<vmem>>, vector<1x8x128xf32>
    %107 = vector.shape_cast %106 : vector<1x8x128xf32> to vector<8x128xf32>
    %108 = arith.mulf %107, %1 : vector<8x128xf32>
    %c35 = arith.constant 35 : index
    %c0_86 = arith.constant 0 : index
    %c0_87 = arith.constant 0 : index
    %109 = vector.load %arg2[%c35, %c0_86, %c0_87] : memref<81x8x128xf32, #tpu.memory_space<vmem>>, vector<1x8x128xf32>
    %110 = vector.shape_cast %109 : vector<1x8x128xf32> to vector<8x128xf32>
    %111 = arith.mulf %110, %7 : vector<8x128xf32>
    %112 = arith.addf %108, %111 : vector<8x128xf32>
    %c62 = arith.constant 62 : index
    %c0_88 = arith.constant 0 : index
    %c0_89 = arith.constant 0 : index
    %113 = vector.load %arg2[%c62, %c0_88, %c0_89] : memref<81x8x128xf32, #tpu.memory_space<vmem>>, vector<1x8x128xf32>
    %114 = vector.shape_cast %113 : vector<1x8x128xf32> to vector<8x128xf32>
    %115 = arith.mulf %114, %13 : vector<8x128xf32>
    %116 = arith.addf %112, %115 : vector<8x128xf32>
    %c9 = arith.constant 9 : index
    %c0_90 = arith.constant 0 : index
    %c0_91 = arith.constant 0 : index
    %117 = vector.load %arg2[%c9, %c0_90, %c0_91] : memref<81x8x128xf32, #tpu.memory_space<vmem>>, vector<1x8x128xf32>
    %118 = vector.shape_cast %117 : vector<1x8x128xf32> to vector<8x128xf32>
    %119 = arith.mulf %118, %1 : vector<8x128xf32>
    %c36 = arith.constant 36 : index
    %c0_92 = arith.constant 0 : index
    %c0_93 = arith.constant 0 : index
    %120 = vector.load %arg2[%c36, %c0_92, %c0_93] : memref<81x8x128xf32, #tpu.memory_space<vmem>>, vector<1x8x128xf32>
    %121 = vector.shape_cast %120 : vector<1x8x128xf32> to vector<8x128xf32>
    %122 = arith.mulf %121, %7 : vector<8x128xf32>
    %123 = arith.addf %119, %122 : vector<8x128xf32>
    %c63 = arith.constant 63 : index
    %c0_94 = arith.constant 0 : index
    %c0_95 = arith.constant 0 : index
    %124 = vector.load %arg2[%c63, %c0_94, %c0_95] : memref<81x8x128xf32, #tpu.memory_space<vmem>>, vector<1x8x128xf32>
    %125 = vector.shape_cast %124 : vector<1x8x128xf32> to vector<8x128xf32>
    %126 = arith.mulf %125, %13 : vector<8x128xf32>
    %127 = arith.addf %123, %126 : vector<8x128xf32>
    %c10 = arith.constant 10 : index
    %c0_96 = arith.constant 0 : index
    %c0_97 = arith.constant 0 : index
    %128 = vector.load %arg2[%c10, %c0_96, %c0_97] : memref<81x8x128xf32, #tpu.memory_space<vmem>>, vector<1x8x128xf32>
    %129 = vector.shape_cast %128 : vector<1x8x128xf32> to vector<8x128xf32>
    %130 = arith.mulf %129, %1 : vector<8x128xf32>
    %c37 = arith.constant 37 : index
    %c0_98 = arith.constant 0 : index
    %c0_99 = arith.constant 0 : index
    %131 = vector.load %arg2[%c37, %c0_98, %c0_99] : memref<81x8x128xf32, #tpu.memory_space<vmem>>, vector<1x8x128xf32>
    %132 = vector.shape_cast %131 : vector<1x8x128xf32> to vector<8x128xf32>
    %133 = arith.mulf %132, %7 : vector<8x128xf32>
    %134 = arith.addf %130, %133 : vector<8x128xf32>
    %c64 = arith.constant 64 : index
    %c0_100 = arith.constant 0 : index
    %c0_101 = arith.constant 0 : index
    %135 = vector.load %arg2[%c64, %c0_100, %c0_101] : memref<81x8x128xf32, #tpu.memory_space<vmem>>, vector<1x8x128xf32>
    %136 = vector.shape_cast %135 : vector<1x8x128xf32> to vector<8x128xf32>
    %137 = arith.mulf %136, %13 : vector<8x128xf32>
    %138 = arith.addf %134, %137 : vector<8x128xf32>
    %c11 = arith.constant 11 : index
    %c0_102 = arith.constant 0 : index
    %c0_103 = arith.constant 0 : index
    %139 = vector.load %arg2[%c11, %c0_102, %c0_103] : memref<81x8x128xf32, #tpu.memory_space<vmem>>, vector<1x8x128xf32>
    %140 = vector.shape_cast %139 : vector<1x8x128xf32> to vector<8x128xf32>
    %141 = arith.mulf %140, %1 : vector<8x128xf32>
    %c38 = arith.constant 38 : index
    %c0_104 = arith.constant 0 : index
    %c0_105 = arith.constant 0 : index
    %142 = vector.load %arg2[%c38, %c0_104, %c0_105] : memref<81x8x128xf32, #tpu.memory_space<vmem>>, vector<1x8x128xf32>
    %143 = vector.shape_cast %142 : vector<1x8x128xf32> to vector<8x128xf32>
    %144 = arith.mulf %143, %7 : vector<8x128xf32>
    %145 = arith.addf %141, %144 : vector<8x128xf32>
    %c65 = arith.constant 65 : index
    %c0_106 = arith.constant 0 : index
    %c0_107 = arith.constant 0 : index
    %146 = vector.load %arg2[%c65, %c0_106, %c0_107] : memref<81x8x128xf32, #tpu.memory_space<vmem>>, vector<1x8x128xf32>
    %147 = vector.shape_cast %146 : vector<1x8x128xf32> to vector<8x128xf32>
    %148 = arith.mulf %147, %13 : vector<8x128xf32>
    %149 = arith.addf %145, %148 : vector<8x128xf32>
    %c12 = arith.constant 12 : index
    %c0_108 = arith.constant 0 : index
    %c0_109 = arith.constant 0 : index
    %150 = vector.load %arg2[%c12, %c0_108, %c0_109] : memref<81x8x128xf32, #tpu.memory_space<vmem>>, vector<1x8x128xf32>
    %151 = vector.shape_cast %150 : vector<1x8x128xf32> to vector<8x128xf32>
    %152 = arith.mulf %151, %1 : vector<8x128xf32>
    %c39 = arith.constant 39 : index
    %c0_110 = arith.constant 0 : index
    %c0_111 = arith.constant 0 : index
    %153 = vector.load %arg2[%c39, %c0_110, %c0_111] : memref<81x8x128xf32, #tpu.memory_space<vmem>>, vector<1x8x128xf32>
    %154 = vector.shape_cast %153 : vector<1x8x128xf32> to vector<8x128xf32>
    %155 = arith.mulf %154, %7 : vector<8x128xf32>
    %156 = arith.addf %152, %155 : vector<8x128xf32>
    %c66 = arith.constant 66 : index
    %c0_112 = arith.constant 0 : index
    %c0_113 = arith.constant 0 : index
    %157 = vector.load %arg2[%c66, %c0_112, %c0_113] : memref<81x8x128xf32, #tpu.memory_space<vmem>>, vector<1x8x128xf32>
    %158 = vector.shape_cast %157 : vector<1x8x128xf32> to vector<8x128xf32>
    %159 = arith.mulf %158, %13 : vector<8x128xf32>
    %160 = arith.addf %156, %159 : vector<8x128xf32>
    %c13 = arith.constant 13 : index
    %c0_114 = arith.constant 0 : index
    %c0_115 = arith.constant 0 : index
    %161 = vector.load %arg2[%c13, %c0_114, %c0_115] : memref<81x8x128xf32, #tpu.memory_space<vmem>>, vector<1x8x128xf32>
    %162 = vector.shape_cast %161 : vector<1x8x128xf32> to vector<8x128xf32>
    %163 = arith.mulf %162, %1 : vector<8x128xf32>
    %c40 = arith.constant 40 : index
    %c0_116 = arith.constant 0 : index
    %c0_117 = arith.constant 0 : index
    %164 = vector.load %arg2[%c40, %c0_116, %c0_117] : memref<81x8x128xf32, #tpu.memory_space<vmem>>, vector<1x8x128xf32>
    %165 = vector.shape_cast %164 : vector<1x8x128xf32> to vector<8x128xf32>
    %166 = arith.mulf %165, %7 : vector<8x128xf32>
    %167 = arith.addf %163, %166 : vector<8x128xf32>
    %c67 = arith.constant 67 : index
    %c0_118 = arith.constant 0 : index
    %c0_119 = arith.constant 0 : index
    %168 = vector.load %arg2[%c67, %c0_118, %c0_119] : memref<81x8x128xf32, #tpu.memory_space<vmem>>, vector<1x8x128xf32>
    %169 = vector.shape_cast %168 : vector<1x8x128xf32> to vector<8x128xf32>
    %170 = arith.mulf %169, %13 : vector<8x128xf32>
    %171 = arith.addf %167, %170 : vector<8x128xf32>
    %c14 = arith.constant 14 : index
    %c0_120 = arith.constant 0 : index
    %c0_121 = arith.constant 0 : index
    %172 = vector.load %arg2[%c14, %c0_120, %c0_121] : memref<81x8x128xf32, #tpu.memory_space<vmem>>, vector<1x8x128xf32>
    %173 = vector.shape_cast %172 : vector<1x8x128xf32> to vector<8x128xf32>
    %174 = arith.mulf %173, %1 : vector<8x128xf32>
    %c41 = arith.constant 41 : index
    %c0_122 = arith.constant 0 : index
    %c0_123 = arith.constant 0 : index
    %175 = vector.load %arg2[%c41, %c0_122, %c0_123] : memref<81x8x128xf32, #tpu.memory_space<vmem>>, vector<1x8x128xf32>
    %176 = vector.shape_cast %175 : vector<1x8x128xf32> to vector<8x128xf32>
    %177 = arith.mulf %176, %7 : vector<8x128xf32>
    %178 = arith.addf %174, %177 : vector<8x128xf32>
    %c68 = arith.constant 68 : index
    %c0_124 = arith.constant 0 : index
    %c0_125 = arith.constant 0 : index
    %179 = vector.load %arg2[%c68, %c0_124, %c0_125] : memref<81x8x128xf32, #tpu.memory_space<vmem>>, vector<1x8x128xf32>
    %180 = vector.shape_cast %179 : vector<1x8x128xf32> to vector<8x128xf32>
    %181 = arith.mulf %180, %13 : vector<8x128xf32>
    %182 = arith.addf %178, %181 : vector<8x128xf32>
    %c15 = arith.constant 15 : index
    %c0_126 = arith.constant 0 : index
    %c0_127 = arith.constant 0 : index
    %183 = vector.load %arg2[%c15, %c0_126, %c0_127] : memref<81x8x128xf32, #tpu.memory_space<vmem>>, vector<1x8x128xf32>
    %184 = vector.shape_cast %183 : vector<1x8x128xf32> to vector<8x128xf32>
    %185 = arith.mulf %184, %1 : vector<8x128xf32>
    %c42 = arith.constant 42 : index
    %c0_128 = arith.constant 0 : index
    %c0_129 = arith.constant 0 : index
    %186 = vector.load %arg2[%c42, %c0_128, %c0_129] : memref<81x8x128xf32, #tpu.memory_space<vmem>>, vector<1x8x128xf32>
    %187 = vector.shape_cast %186 : vector<1x8x128xf32> to vector<8x128xf32>
    %188 = arith.mulf %187, %7 : vector<8x128xf32>
    %189 = arith.addf %185, %188 : vector<8x128xf32>
    %c69 = arith.constant 69 : index
    %c0_130 = arith.constant 0 : index
    %c0_131 = arith.constant 0 : index
    %190 = vector.load %arg2[%c69, %c0_130, %c0_131] : memref<81x8x128xf32, #tpu.memory_space<vmem>>, vector<1x8x128xf32>
    %191 = vector.shape_cast %190 : vector<1x8x128xf32> to vector<8x128xf32>
    %192 = arith.mulf %191, %13 : vector<8x128xf32>
    %193 = arith.addf %189, %192 : vector<8x128xf32>
    %c16 = arith.constant 16 : index
    %c0_132 = arith.constant 0 : index
    %c0_133 = arith.constant 0 : index
    %194 = vector.load %arg2[%c16, %c0_132, %c0_133] : memref<81x8x128xf32, #tpu.memory_space<vmem>>, vector<1x8x128xf32>
    %195 = vector.shape_cast %194 : vector<1x8x128xf32> to vector<8x128xf32>
    %196 = arith.mulf %195, %1 : vector<8x128xf32>
    %c43 = arith.constant 43 : index
    %c0_134 = arith.constant 0 : index
    %c0_135 = arith.constant 0 : index
    %197 = vector.load %arg2[%c43, %c0_134, %c0_135] : memref<81x8x128xf32, #tpu.memory_space<vmem>>, vector<1x8x128xf32>
    %198 = vector.shape_cast %197 : vector<1x8x128xf32> to vector<8x128xf32>
    %199 = arith.mulf %198, %7 : vector<8x128xf32>
    %200 = arith.addf %196, %199 : vector<8x128xf32>
    %c70 = arith.constant 70 : index
    %c0_136 = arith.constant 0 : index
    %c0_137 = arith.constant 0 : index
    %201 = vector.load %arg2[%c70, %c0_136, %c0_137] : memref<81x8x128xf32, #tpu.memory_space<vmem>>, vector<1x8x128xf32>
    %202 = vector.shape_cast %201 : vector<1x8x128xf32> to vector<8x128xf32>
    %203 = arith.mulf %202, %13 : vector<8x128xf32>
    %204 = arith.addf %200, %203 : vector<8x128xf32>
    %c17 = arith.constant 17 : index
    %c0_138 = arith.constant 0 : index
    %c0_139 = arith.constant 0 : index
    %205 = vector.load %arg2[%c17, %c0_138, %c0_139] : memref<81x8x128xf32, #tpu.memory_space<vmem>>, vector<1x8x128xf32>
    %206 = vector.shape_cast %205 : vector<1x8x128xf32> to vector<8x128xf32>
    %207 = arith.mulf %206, %1 : vector<8x128xf32>
    %c44 = arith.constant 44 : index
    %c0_140 = arith.constant 0 : index
    %c0_141 = arith.constant 0 : index
    %208 = vector.load %arg2[%c44, %c0_140, %c0_141] : memref<81x8x128xf32, #tpu.memory_space<vmem>>, vector<1x8x128xf32>
    %209 = vector.shape_cast %208 : vector<1x8x128xf32> to vector<8x128xf32>
    %210 = arith.mulf %209, %7 : vector<8x128xf32>
    %211 = arith.addf %207, %210 : vector<8x128xf32>
    %c71 = arith.constant 71 : index
    %c0_142 = arith.constant 0 : index
    %c0_143 = arith.constant 0 : index
    %212 = vector.load %arg2[%c71, %c0_142, %c0_143] : memref<81x8x128xf32, #tpu.memory_space<vmem>>, vector<1x8x128xf32>
    %213 = vector.shape_cast %212 : vector<1x8x128xf32> to vector<8x128xf32>
    %214 = arith.mulf %213, %13 : vector<8x128xf32>
    %215 = arith.addf %211, %214 : vector<8x128xf32>
    %c18 = arith.constant 18 : index
    %c0_144 = arith.constant 0 : index
    %c0_145 = arith.constant 0 : index
    %216 = vector.load %arg2[%c18, %c0_144, %c0_145] : memref<81x8x128xf32, #tpu.memory_space<vmem>>, vector<1x8x128xf32>
    %217 = vector.shape_cast %216 : vector<1x8x128xf32> to vector<8x128xf32>
    %218 = arith.mulf %217, %1 : vector<8x128xf32>
    %c45 = arith.constant 45 : index
    %c0_146 = arith.constant 0 : index
    %c0_147 = arith.constant 0 : index
    %219 = vector.load %arg2[%c45, %c0_146, %c0_147] : memref<81x8x128xf32, #tpu.memory_space<vmem>>, vector<1x8x128xf32>
    %220 = vector.shape_cast %219 : vector<1x8x128xf32> to vector<8x128xf32>
    %221 = arith.mulf %220, %7 : vector<8x128xf32>
    %222 = arith.addf %218, %221 : vector<8x128xf32>
    %c72 = arith.constant 72 : index
    %c0_148 = arith.constant 0 : index
    %c0_149 = arith.constant 0 : index
    %223 = vector.load %arg2[%c72, %c0_148, %c0_149] : memref<81x8x128xf32, #tpu.memory_space<vmem>>, vector<1x8x128xf32>
    %224 = vector.shape_cast %223 : vector<1x8x128xf32> to vector<8x128xf32>
    %225 = arith.mulf %224, %13 : vector<8x128xf32>
    %226 = arith.addf %222, %225 : vector<8x128xf32>
    %c19 = arith.constant 19 : index
    %c0_150 = arith.constant 0 : index
    %c0_151 = arith.constant 0 : index
    %227 = vector.load %arg2[%c19, %c0_150, %c0_151] : memref<81x8x128xf32, #tpu.memory_space<vmem>>, vector<1x8x128xf32>
    %228 = vector.shape_cast %227 : vector<1x8x128xf32> to vector<8x128xf32>
    %229 = arith.mulf %228, %1 : vector<8x128xf32>
    %c46 = arith.constant 46 : index
    %c0_152 = arith.constant 0 : index
    %c0_153 = arith.constant 0 : index
    %230 = vector.load %arg2[%c46, %c0_152, %c0_153] : memref<81x8x128xf32, #tpu.memory_space<vmem>>, vector<1x8x128xf32>
    %231 = vector.shape_cast %230 : vector<1x8x128xf32> to vector<8x128xf32>
    %232 = arith.mulf %231, %7 : vector<8x128xf32>
    %233 = arith.addf %229, %232 : vector<8x128xf32>
    %c73 = arith.constant 73 : index
    %c0_154 = arith.constant 0 : index
    %c0_155 = arith.constant 0 : index
    %234 = vector.load %arg2[%c73, %c0_154, %c0_155] : memref<81x8x128xf32, #tpu.memory_space<vmem>>, vector<1x8x128xf32>
    %235 = vector.shape_cast %234 : vector<1x8x128xf32> to vector<8x128xf32>
    %236 = arith.mulf %235, %13 : vector<8x128xf32>
    %237 = arith.addf %233, %236 : vector<8x128xf32>
    %c20 = arith.constant 20 : index
    %c0_156 = arith.constant 0 : index
    %c0_157 = arith.constant 0 : index
    %238 = vector.load %arg2[%c20, %c0_156, %c0_157] : memref<81x8x128xf32, #tpu.memory_space<vmem>>, vector<1x8x128xf32>
    %239 = vector.shape_cast %238 : vector<1x8x128xf32> to vector<8x128xf32>
    %240 = arith.mulf %239, %1 : vector<8x128xf32>
    %c47 = arith.constant 47 : index
    %c0_158 = arith.constant 0 : index
    %c0_159 = arith.constant 0 : index
    %241 = vector.load %arg2[%c47, %c0_158, %c0_159] : memref<81x8x128xf32, #tpu.memory_space<vmem>>, vector<1x8x128xf32>
    %242 = vector.shape_cast %241 : vector<1x8x128xf32> to vector<8x128xf32>
    %243 = arith.mulf %242, %7 : vector<8x128xf32>
    %244 = arith.addf %240, %243 : vector<8x128xf32>
    %c74 = arith.constant 74 : index
    %c0_160 = arith.constant 0 : index
    %c0_161 = arith.constant 0 : index
    %245 = vector.load %arg2[%c74, %c0_160, %c0_161] : memref<81x8x128xf32, #tpu.memory_space<vmem>>, vector<1x8x128xf32>
    %246 = vector.shape_cast %245 : vector<1x8x128xf32> to vector<8x128xf32>
    %247 = arith.mulf %246, %13 : vector<8x128xf32>
    %248 = arith.addf %244, %247 : vector<8x128xf32>
    %c21 = arith.constant 21 : index
    %c0_162 = arith.constant 0 : index
    %c0_163 = arith.constant 0 : index
    %249 = vector.load %arg2[%c21, %c0_162, %c0_163] : memref<81x8x128xf32, #tpu.memory_space<vmem>>, vector<1x8x128xf32>
    %250 = vector.shape_cast %249 : vector<1x8x128xf32> to vector<8x128xf32>
    %251 = arith.mulf %250, %1 : vector<8x128xf32>
    %c48 = arith.constant 48 : index
    %c0_164 = arith.constant 0 : index
    %c0_165 = arith.constant 0 : index
    %252 = vector.load %arg2[%c48, %c0_164, %c0_165] : memref<81x8x128xf32, #tpu.memory_space<vmem>>, vector<1x8x128xf32>
    %253 = vector.shape_cast %252 : vector<1x8x128xf32> to vector<8x128xf32>
    %254 = arith.mulf %253, %7 : vector<8x128xf32>
    %255 = arith.addf %251, %254 : vector<8x128xf32>
    %c75 = arith.constant 75 : index
    %c0_166 = arith.constant 0 : index
    %c0_167 = arith.constant 0 : index
    %256 = vector.load %arg2[%c75, %c0_166, %c0_167] : memref<81x8x128xf32, #tpu.memory_space<vmem>>, vector<1x8x128xf32>
    %257 = vector.shape_cast %256 : vector<1x8x128xf32> to vector<8x128xf32>
    %258 = arith.mulf %257, %13 : vector<8x128xf32>
    %259 = arith.addf %255, %258 : vector<8x128xf32>
    %c22 = arith.constant 22 : index
    %c0_168 = arith.constant 0 : index
    %c0_169 = arith.constant 0 : index
    %260 = vector.load %arg2[%c22, %c0_168, %c0_169] : memref<81x8x128xf32, #tpu.memory_space<vmem>>, vector<1x8x128xf32>
    %261 = vector.shape_cast %260 : vector<1x8x128xf32> to vector<8x128xf32>
    %262 = arith.mulf %261, %1 : vector<8x128xf32>
    %c49 = arith.constant 49 : index
    %c0_170 = arith.constant 0 : index
    %c0_171 = arith.constant 0 : index
    %263 = vector.load %arg2[%c49, %c0_170, %c0_171] : memref<81x8x128xf32, #tpu.memory_space<vmem>>, vector<1x8x128xf32>
    %264 = vector.shape_cast %263 : vector<1x8x128xf32> to vector<8x128xf32>
    %265 = arith.mulf %264, %7 : vector<8x128xf32>
    %266 = arith.addf %262, %265 : vector<8x128xf32>
    %c76 = arith.constant 76 : index
    %c0_172 = arith.constant 0 : index
    %c0_173 = arith.constant 0 : index
    %267 = vector.load %arg2[%c76, %c0_172, %c0_173] : memref<81x8x128xf32, #tpu.memory_space<vmem>>, vector<1x8x128xf32>
    %268 = vector.shape_cast %267 : vector<1x8x128xf32> to vector<8x128xf32>
    %269 = arith.mulf %268, %13 : vector<8x128xf32>
    %270 = arith.addf %266, %269 : vector<8x128xf32>
    %c23 = arith.constant 23 : index
    %c0_174 = arith.constant 0 : index
    %c0_175 = arith.constant 0 : index
    %271 = vector.load %arg2[%c23, %c0_174, %c0_175] : memref<81x8x128xf32, #tpu.memory_space<vmem>>, vector<1x8x128xf32>
    %272 = vector.shape_cast %271 : vector<1x8x128xf32> to vector<8x128xf32>
    %273 = arith.mulf %272, %1 : vector<8x128xf32>
    %c50 = arith.constant 50 : index
    %c0_176 = arith.constant 0 : index
    %c0_177 = arith.constant 0 : index
    %274 = vector.load %arg2[%c50, %c0_176, %c0_177] : memref<81x8x128xf32, #tpu.memory_space<vmem>>, vector<1x8x128xf32>
    %275 = vector.shape_cast %274 : vector<1x8x128xf32> to vector<8x128xf32>
    %276 = arith.mulf %275, %7 : vector<8x128xf32>
    %277 = arith.addf %273, %276 : vector<8x128xf32>
    %c77 = arith.constant 77 : index
    %c0_178 = arith.constant 0 : index
    %c0_179 = arith.constant 0 : index
    %278 = vector.load %arg2[%c77, %c0_178, %c0_179] : memref<81x8x128xf32, #tpu.memory_space<vmem>>, vector<1x8x128xf32>
    %279 = vector.shape_cast %278 : vector<1x8x128xf32> to vector<8x128xf32>
    %280 = arith.mulf %279, %13 : vector<8x128xf32>
    %281 = arith.addf %277, %280 : vector<8x128xf32>
    %c24 = arith.constant 24 : index
    %c0_180 = arith.constant 0 : index
    %c0_181 = arith.constant 0 : index
    %282 = vector.load %arg2[%c24, %c0_180, %c0_181] : memref<81x8x128xf32, #tpu.memory_space<vmem>>, vector<1x8x128xf32>
    %283 = vector.shape_cast %282 : vector<1x8x128xf32> to vector<8x128xf32>
    %284 = arith.mulf %283, %1 : vector<8x128xf32>
    %c51 = arith.constant 51 : index
    %c0_182 = arith.constant 0 : index
    %c0_183 = arith.constant 0 : index
    %285 = vector.load %arg2[%c51, %c0_182, %c0_183] : memref<81x8x128xf32, #tpu.memory_space<vmem>>, vector<1x8x128xf32>
    %286 = vector.shape_cast %285 : vector<1x8x128xf32> to vector<8x128xf32>
    %287 = arith.mulf %286, %7 : vector<8x128xf32>
    %288 = arith.addf %284, %287 : vector<8x128xf32>
    %c78 = arith.constant 78 : index
    %c0_184 = arith.constant 0 : index
    %c0_185 = arith.constant 0 : index
    %289 = vector.load %arg2[%c78, %c0_184, %c0_185] : memref<81x8x128xf32, #tpu.memory_space<vmem>>, vector<1x8x128xf32>
    %290 = vector.shape_cast %289 : vector<1x8x128xf32> to vector<8x128xf32>
    %291 = arith.mulf %290, %13 : vector<8x128xf32>
    %292 = arith.addf %288, %291 : vector<8x128xf32>
    %c25 = arith.constant 25 : index
    %c0_186 = arith.constant 0 : index
    %c0_187 = arith.constant 0 : index
    %293 = vector.load %arg2[%c25, %c0_186, %c0_187] : memref<81x8x128xf32, #tpu.memory_space<vmem>>, vector<1x8x128xf32>
    %294 = vector.shape_cast %293 : vector<1x8x128xf32> to vector<8x128xf32>
    %295 = arith.mulf %294, %1 : vector<8x128xf32>
    %c52 = arith.constant 52 : index
    %c0_188 = arith.constant 0 : index
    %c0_189 = arith.constant 0 : index
    %296 = vector.load %arg2[%c52, %c0_188, %c0_189] : memref<81x8x128xf32, #tpu.memory_space<vmem>>, vector<1x8x128xf32>
    %297 = vector.shape_cast %296 : vector<1x8x128xf32> to vector<8x128xf32>
    %298 = arith.mulf %297, %7 : vector<8x128xf32>
    %299 = arith.addf %295, %298 : vector<8x128xf32>
    %c79 = arith.constant 79 : index
    %c0_190 = arith.constant 0 : index
    %c0_191 = arith.constant 0 : index
    %300 = vector.load %arg2[%c79, %c0_190, %c0_191] : memref<81x8x128xf32, #tpu.memory_space<vmem>>, vector<1x8x128xf32>
    %301 = vector.shape_cast %300 : vector<1x8x128xf32> to vector<8x128xf32>
    %302 = arith.mulf %301, %13 : vector<8x128xf32>
    %303 = arith.addf %299, %302 : vector<8x128xf32>
    %c26 = arith.constant 26 : index
    %c0_192 = arith.constant 0 : index
    %c0_193 = arith.constant 0 : index
    %304 = vector.load %arg2[%c26, %c0_192, %c0_193] : memref<81x8x128xf32, #tpu.memory_space<vmem>>, vector<1x8x128xf32>
    %305 = vector.shape_cast %304 : vector<1x8x128xf32> to vector<8x128xf32>
    %306 = arith.mulf %305, %1 : vector<8x128xf32>
    %c53 = arith.constant 53 : index
    %c0_194 = arith.constant 0 : index
    %c0_195 = arith.constant 0 : index
    %307 = vector.load %arg2[%c53, %c0_194, %c0_195] : memref<81x8x128xf32, #tpu.memory_space<vmem>>, vector<1x8x128xf32>
    %308 = vector.shape_cast %307 : vector<1x8x128xf32> to vector<8x128xf32>
    %309 = arith.mulf %308, %7 : vector<8x128xf32>
    %310 = arith.addf %306, %309 : vector<8x128xf32>
    %c80 = arith.constant 80 : index
    %c0_196 = arith.constant 0 : index
    %c0_197 = arith.constant 0 : index
    %311 = vector.load %arg2[%c80, %c0_196, %c0_197] : memref<81x8x128xf32, #tpu.memory_space<vmem>>, vector<1x8x128xf32>
    %312 = vector.shape_cast %311 : vector<1x8x128xf32> to vector<8x128xf32>
    %313 = arith.mulf %312, %13 : vector<8x128xf32>
    %314 = arith.addf %310, %313 : vector<8x128xf32>
    %315 = arith.mulf %1, %28 : vector<8x128xf32>
    %316 = arith.mulf %7, %127 : vector<8x128xf32>
    %317 = arith.addf %315, %316 : vector<8x128xf32>
    %318 = arith.mulf %13, %226 : vector<8x128xf32>
    %319 = arith.addf %317, %318 : vector<8x128xf32>
    %320 = arith.mulf %1, %39 : vector<8x128xf32>
    %321 = arith.mulf %7, %138 : vector<8x128xf32>
    %322 = arith.addf %320, %321 : vector<8x128xf32>
    %323 = arith.mulf %13, %237 : vector<8x128xf32>
    %324 = arith.addf %322, %323 : vector<8x128xf32>
    %325 = arith.mulf %1, %50 : vector<8x128xf32>
    %326 = arith.mulf %7, %149 : vector<8x128xf32>
    %327 = arith.addf %325, %326 : vector<8x128xf32>
    %328 = arith.mulf %13, %248 : vector<8x128xf32>
    %329 = arith.addf %327, %328 : vector<8x128xf32>
    %330 = arith.mulf %1, %61 : vector<8x128xf32>
    %331 = arith.mulf %7, %160 : vector<8x128xf32>
    %332 = arith.addf %330, %331 : vector<8x128xf32>
    %333 = arith.mulf %13, %259 : vector<8x128xf32>
    %334 = arith.addf %332, %333 : vector<8x128xf32>
    %335 = arith.mulf %1, %72 : vector<8x128xf32>
    %336 = arith.mulf %7, %171 : vector<8x128xf32>
    %337 = arith.addf %335, %336 : vector<8x128xf32>
    %338 = arith.mulf %13, %270 : vector<8x128xf32>
    %339 = arith.addf %337, %338 : vector<8x128xf32>
    %340 = arith.mulf %1, %83 : vector<8x128xf32>
    %341 = arith.mulf %7, %182 : vector<8x128xf32>
    %342 = arith.addf %340, %341 : vector<8x128xf32>
    %343 = arith.mulf %13, %281 : vector<8x128xf32>
    %344 = arith.addf %342, %343 : vector<8x128xf32>
    %345 = arith.mulf %1, %94 : vector<8x128xf32>
    %346 = arith.mulf %7, %193 : vector<8x128xf32>
    %347 = arith.addf %345, %346 : vector<8x128xf32>
    %348 = arith.mulf %13, %292 : vector<8x128xf32>
    %349 = arith.addf %347, %348 : vector<8x128xf32>
    %350 = arith.mulf %1, %105 : vector<8x128xf32>
    %351 = arith.mulf %7, %204 : vector<8x128xf32>
    %352 = arith.addf %350, %351 : vector<8x128xf32>
    %353 = arith.mulf %13, %303 : vector<8x128xf32>
    %354 = arith.addf %352, %353 : vector<8x128xf32>
    %355 = arith.mulf %1, %116 : vector<8x128xf32>
    %356 = arith.mulf %7, %215 : vector<8x128xf32>
    %357 = arith.addf %355, %356 : vector<8x128xf32>
    %358 = arith.mulf %13, %314 : vector<8x128xf32>
    %359 = arith.addf %357, %358 : vector<8x128xf32>
    %360 = arith.mulf %1, %319 : vector<8x128xf32>
    %361 = arith.mulf %7, %334 : vector<8x128xf32>
    %362 = arith.addf %360, %361 : vector<8x128xf32>
    %363 = arith.mulf %13, %349 : vector<8x128xf32>
    %364 = arith.addf %362, %363 : vector<8x128xf32>
    %365 = arith.mulf %1, %324 : vector<8x128xf32>
    %366 = arith.mulf %7, %339 : vector<8x128xf32>
    %367 = arith.addf %365, %366 : vector<8x128xf32>
    %368 = arith.mulf %13, %354 : vector<8x128xf32>
    %369 = arith.addf %367, %368 : vector<8x128xf32>
    %370 = arith.mulf %1, %329 : vector<8x128xf32>
    %371 = arith.mulf %7, %344 : vector<8x128xf32>
    %372 = arith.addf %370, %371 : vector<8x128xf32>
    %373 = arith.mulf %13, %359 : vector<8x128xf32>
    %374 = arith.addf %372, %373 : vector<8x128xf32>
    %375 = arith.mulf %1, %364 : vector<8x128xf32>
    %376 = arith.mulf %7, %369 : vector<8x128xf32>
    %377 = arith.addf %375, %376 : vector<8x128xf32>
    %378 = arith.mulf %13, %374 : vector<8x128xf32>
    %379 = arith.addf %377, %378 : vector<8x128xf32>
    %c0_198 = arith.constant 0 : index
    %c0_199 = arith.constant 0 : index
    %c0_200 = arith.constant 0 : index
    %c0_201 = arith.constant 0 : index
    %380 = vector.load %arg4[%c0_198, %c0_199, %c0_200, %c0_201] : memref<1x81x8x128xf32, #tpu.memory_space<vmem>>, vector<1x1x8x128xf32>
    %381 = vector.shape_cast %380 : vector<1x1x8x128xf32> to vector<8x128xf32>
    %382 = vector.shape_cast %379 : vector<8x128xf32> to vector<1x1x8x128xf32>
    tpu.vector_store %arg4[%c0_198, %c0_199, %c0_200, %c0_201], %382 {strides = array<i32>} : memref<1x81x8x128xf32, #tpu.memory_space<vmem>>, vector<1x1x8x128xf32>,
    %383 = arith.mulf %3, %364 : vector<8x128xf32>
    %384 = arith.mulf %9, %369 : vector<8x128xf32>
    %385 = arith.addf %383, %384 : vector<8x128xf32>
    %386 = arith.mulf %15, %374 : vector<8x128xf32>
    %387 = arith.addf %385, %386 : vector<8x128xf32>
    %c0_202 = arith.constant 0 : index
    %c1_203 = arith.constant 1 : index
    %c0_204 = arith.constant 0 : index
    %c0_205 = arith.constant 0 : index
    %388 = vector.load %arg4[%c0_202, %c1_203, %c0_204, %c0_205] : memref<1x81x8x128xf32, #tpu.memory_space<vmem>>, vector<1x1x8x128xf32>
    %389 = vector.shape_cast %388 : vector<1x1x8x128xf32> to vector<8x128xf32>
    %390 = vector.shape_cast %387 : vector<8x128xf32> to vector<1x1x8x128xf32>
    tpu.vector_store %arg4[%c0_202, %c1_203, %c0_204, %c0_205], %390 {strides = array<i32>} : memref<1x81x8x128xf32, #tpu.memory_space<vmem>>, vector<1x1x8x128xf32>,
    %391 = arith.mulf %5, %364 : vector<8x128xf32>
    %392 = arith.mulf %11, %369 : vector<8x128xf32>
    %393 = arith.addf %391, %392 : vector<8x128xf32>
    %394 = arith.mulf %17, %374 : vector<8x128xf32>
    %395 = arith.addf %393, %394 : vector<8x128xf32>
    %c0_206 = arith.constant 0 : index
    %c2_207 = arith.constant 2 : index
    %c0_208 = arith.constant 0 : index
    %c0_209 = arith.constant 0 : index
    %396 = vector.load %arg4[%c0_206, %c2_207, %c0_208, %c0_209] : memref<1x81x8x128xf32, #tpu.memory_space<vmem>>, vector<1x1x8x128xf32>
    %397 = vector.shape_cast %396 : vector<1x1x8x128xf32> to vector<8x128xf32>
    %398 = vector.shape_cast %395 : vector<8x128xf32> to vector<1x1x8x128xf32>
    tpu.vector_store %arg4[%c0_206, %c2_207, %c0_208, %c0_209], %398 {strides = array<i32>} : memref<1x81x8x128xf32, #tpu.memory_space<vmem>>, vector<1x1x8x128xf32>,
    %399 = arith.mulf %3, %319 : vector<8x128xf32>
    %400 = arith.mulf %9, %334 : vector<8x128xf32>
    %401 = arith.addf %399, %400 : vector<8x128xf32>
    %402 = arith.mulf %15, %349 : vector<8x128xf32>
    %403 = arith.addf %401, %402 : vector<8x128xf32>
    %404 = arith.mulf %3, %324 : vector<8x128xf32>
    %405 = arith.mulf %9, %339 : vector<8x128xf32>
    %406 = arith.addf %404, %405 : vector<8x128xf32>
    %407 = arith.mulf %15, %354 : vector<8x128xf32>
    %408 = arith.addf %406, %407 : vector<8x128xf32>
    %409 = arith.mulf %3, %329 : vector<8x128xf32>
    %410 = arith.mulf %9, %344 : vector<8x128xf32>
    %411 = arith.addf %409, %410 : vector<8x128xf32>
    %412 = arith.mulf %15, %359 : vector<8x128xf32>
    %413 = arith.addf %411, %412 : vector<8x128xf32>
    %414 = arith.mulf %1, %403 : vector<8x128xf32>
    %415 = arith.mulf %7, %408 : vector<8x128xf32>
    %416 = arith.addf %414, %415 : vector<8x128xf32>
    %417 = arith.mulf %13, %413 : vector<8x128xf32>
    %418 = arith.addf %416, %417 : vector<8x128xf32>
    %c0_210 = arith.constant 0 : index
    %c3_211 = arith.constant 3 : index
    %c0_212 = arith.constant 0 : index
    %c0_213 = arith.constant 0 : index
    %419 = vector.load %arg4[%c0_210, %c3_211, %c0_212, %c0_213] : memref<1x81x8x128xf32, #tpu.memory_space<vmem>>, vector<1x1x8x128xf32>
    %420 = vector.shape_cast %419 : vector<1x1x8x128xf32> to vector<8x128xf32>
    %421 = vector.shape_cast %418 : vector<8x128xf32> to vector<1x1x8x128xf32>
    tpu.vector_store %arg4[%c0_210, %c3_211, %c0_212, %c0_213], %421 {strides = array<i32>} : memref<1x81x8x128xf32, #tpu.memory_space<vmem>>, vector<1x1x8x128xf32>,
    %422 = arith.mulf %3, %403 : vector<8x128xf32>
    %423 = arith.mulf %9, %408 : vector<8x128xf32>
    %424 = arith.addf %422, %423 : vector<8x128xf32>
    %425 = arith.mulf %15, %413 : vector<8x128xf32>
    %426 = arith.addf %424, %425 : vector<8x128xf32>
    %c0_214 = arith.constant 0 : index
    %c4_215 = arith.constant 4 : index
    %c0_216 = arith.constant 0 : index
    %c0_217 = arith.constant 0 : index
    %427 = vector.load %arg4[%c0_214, %c4_215, %c0_216, %c0_217] : memref<1x81x8x128xf32, #tpu.memory_space<vmem>>, vector<1x1x8x128xf32>
    %428 = vector.shape_cast %427 : vector<1x1x8x128xf32> to vector<8x128xf32>
    %429 = vector.shape_cast %426 : vector<8x128xf32> to vector<1x1x8x128xf32>
    tpu.vector_store %arg4[%c0_214, %c4_215, %c0_216, %c0_217], %429 {strides = array<i32>} : memref<1x81x8x128xf32, #tpu.memory_space<vmem>>, vector<1x1x8x128xf32>,
    %430 = arith.mulf %5, %403 : vector<8x128xf32>
    %431 = arith.mulf %11, %408 : vector<8x128xf32>
    %432 = arith.addf %430, %431 : vector<8x128xf32>
    %433 = arith.mulf %17, %413 : vector<8x128xf32>
    %434 = arith.addf %432, %433 : vector<8x128xf32>
    %c0_218 = arith.constant 0 : index
    %c5_219 = arith.constant 5 : index
    %c0_220 = arith.constant 0 : index
    %c0_221 = arith.constant 0 : index
    %435 = vector.load %arg4[%c0_218, %c5_219, %c0_220, %c0_221] : memref<1x81x8x128xf32, #tpu.memory_space<vmem>>, vector<1x1x8x128xf32>
    %436 = vector.shape_cast %435 : vector<1x1x8x128xf32> to vector<8x128xf32>
    %437 = vector.shape_cast %434 : vector<8x128xf32> to vector<1x1x8x128xf32>
    tpu.vector_store %arg4[%c0_218, %c5_219, %c0_220, %c0_221], %437 {strides = array<i32>} : memref<1x81x8x128xf32, #tpu.memory_space<vmem>>, vector<1x1x8x128xf32>,
    %438 = arith.mulf %5, %319 : vector<8x128xf32>
    %439 = arith.mulf %11, %334 : vector<8x128xf32>
    %440 = arith.addf %438, %439 : vector<8x128xf32>
    %441 = arith.mulf %17, %349 : vector<8x128xf32>
    %442 = arith.addf %440, %441 : vector<8x128xf32>
    %443 = arith.mulf %5, %324 : vector<8x128xf32>
    %444 = arith.mulf %11, %339 : vector<8x128xf32>
    %445 = arith.addf %443, %444 : vector<8x128xf32>
    %446 = arith.mulf %17, %354 : vector<8x128xf32>
    %447 = arith.addf %445, %446 : vector<8x128xf32>
    %448 = arith.mulf %5, %329 : vector<8x128xf32>
    %449 = arith.mulf %11, %344 : vector<8x128xf32>
    %450 = arith.addf %448, %449 : vector<8x128xf32>
    %451 = arith.mulf %17, %359 : vector<8x128xf32>
    %452 = arith.addf %450, %451 : vector<8x128xf32>
    %453 = arith.mulf %1, %442 : vector<8x128xf32>
    %454 = arith.mulf %7, %447 : vector<8x128xf32>
    %455 = arith.addf %453, %454 : vector<8x128xf32>
    %456 = arith.mulf %13, %452 : vector<8x128xf32>
    %457 = arith.addf %455, %456 : vector<8x128xf32>
    %c0_222 = arith.constant 0 : index
    %c6_223 = arith.constant 6 : index
    %c0_224 = arith.constant 0 : index
    %c0_225 = arith.constant 0 : index
    %458 = vector.load %arg4[%c0_222, %c6_223, %c0_224, %c0_225] : memref<1x81x8x128xf32, #tpu.memory_space<vmem>>, vector<1x1x8x128xf32>
    %459 = vector.shape_cast %458 : vector<1x1x8x128xf32> to vector<8x128xf32>
    %460 = vector.shape_cast %457 : vector<8x128xf32> to vector<1x1x8x128xf32>
    tpu.vector_store %arg4[%c0_222, %c6_223, %c0_224, %c0_225], %460 {strides = array<i32>} : memref<1x81x8x128xf32, #tpu.memory_space<vmem>>, vector<1x1x8x128xf32>,
    %461 = arith.mulf %3, %442 : vector<8x128xf32>
    %462 = arith.mulf %9, %447 : vector<8x128xf32>
    %463 = arith.addf %461, %462 : vector<8x128xf32>
    %464 = arith.mulf %15, %452 : vector<8x128xf32>
    %465 = arith.addf %463, %464 : vector<8x128xf32>
    %c0_226 = arith.constant 0 : index
    %c7_227 = arith.constant 7 : index
    %c0_228 = arith.constant 0 : index
    %c0_229 = arith.constant 0 : index
    %466 = vector.load %arg4[%c0_226, %c7_227, %c0_228, %c0_229] : memref<1x81x8x128xf32, #tpu.memory_space<vmem>>, vector<1x1x8x128xf32>
    %467 = vector.shape_cast %466 : vector<1x1x8x128xf32> to vector<8x128xf32>
    %468 = vector.shape_cast %465 : vector<8x128xf32> to vector<1x1x8x128xf32>
    tpu.vector_store %arg4[%c0_226, %c7_227, %c0_228, %c0_229], %468 {strides = array<i32>} : memref<1x81x8x128xf32, #tpu.memory_space<vmem>>, vector<1x1x8x128xf32>,
    %469 = arith.mulf %5, %442 : vector<8x128xf32>
    %470 = arith.mulf %11, %447 : vector<8x128xf32>
    %471 = arith.addf %469, %470 : vector<8x128xf32>
    %472 = arith.mulf %17, %452 : vector<8x128xf32>
    %473 = arith.addf %471, %472 : vector<8x128xf32>
    %c0_230 = arith.constant 0 : index
    %c8_231 = arith.constant 8 : index
    %c0_232 = arith.constant 0 : index
    %c0_233 = arith.constant 0 : index
    %474 = vector.load %arg4[%c0_230, %c8_231, %c0_232, %c0_233] : memref<1x81x8x128xf32, #tpu.memory_space<vmem>>, vector<1x1x8x128xf32>
    %475 = vector.shape_cast %474 : vector<1x1x8x128xf32> to vector<8x128xf32>
    %476 = vector.shape_cast %473 : vector<8x128xf32> to vector<1x1x8x128xf32>
    tpu.vector_store %arg4[%c0_230, %c8_231, %c0_232, %c0_233], %476 {strides = array<i32>} : memref<1x81x8x128xf32, #tpu.memory_space<vmem>>, vector<1x1x8x128xf32>,
    %477 = arith.mulf %3, %28 : vector<8x128xf32>
    %478 = arith.mulf %9, %127 : vector<8x128xf32>
    %479 = arith.addf %477, %478 : vector<8x128xf32>
    %480 = arith.mulf %15, %226 : vector<8x128xf32>
    %481 = arith.addf %479, %480 : vector<8x128xf32>
    %482 = arith.mulf %3, %39 : vector<8x128xf32>
    %483 = arith.mulf %9, %138 : vector<8x128xf32>
    %484 = arith.addf %482, %483 : vector<8x128xf32>
    %485 = arith.mulf %15, %237 : vector<8x128xf32>
    %486 = arith.addf %484, %485 : vector<8x128xf32>
    %487 = arith.mulf %3, %50 : vector<8x128xf32>
    %488 = arith.mulf %9, %149 : vector<8x128xf32>
    %489 = arith.addf %487, %488 : vector<8x128xf32>
    %490 = arith.mulf %15, %248 : vector<8x128xf32>
    %491 = arith.addf %489, %490 : vector<8x128xf32>
    %492 = arith.mulf %3, %61 : vector<8x128xf32>
    %493 = arith.mulf %9, %160 : vector<8x128xf32>
    %494 = arith.addf %492, %493 : vector<8x128xf32>
    %495 = arith.mulf %15, %259 : vector<8x128xf32>
    %496 = arith.addf %494, %495 : vector<8x128xf32>
    %497 = arith.mulf %3, %72 : vector<8x128xf32>
    %498 = arith.mulf %9, %171 : vector<8x128xf32>
    %499 = arith.addf %497, %498 : vector<8x128xf32>
    %500 = arith.mulf %15, %270 : vector<8x128xf32>
    %501 = arith.addf %499, %500 : vector<8x128xf32>
    %502 = arith.mulf %3, %83 : vector<8x128xf32>
    %503 = arith.mulf %9, %182 : vector<8x128xf32>
    %504 = arith.addf %502, %503 : vector<8x128xf32>
    %505 = arith.mulf %15, %281 : vector<8x128xf32>
    %506 = arith.addf %504, %505 : vector<8x128xf32>
    %507 = arith.mulf %3, %94 : vector<8x128xf32>
    %508 = arith.mulf %9, %193 : vector<8x128xf32>
    %509 = arith.addf %507, %508 : vector<8x128xf32>
    %510 = arith.mulf %15, %292 : vector<8x128xf32>
    %511 = arith.addf %509, %510 : vector<8x128xf32>
    %512 = arith.mulf %3, %105 : vector<8x128xf32>
    %513 = arith.mulf %9, %204 : vector<8x128xf32>
    %514 = arith.addf %512, %513 : vector<8x128xf32>
    %515 = arith.mulf %15, %303 : vector<8x128xf32>
    %516 = arith.addf %514, %515 : vector<8x128xf32>
    %517 = arith.mulf %3, %116 : vector<8x128xf32>
    %518 = arith.mulf %9, %215 : vector<8x128xf32>
    %519 = arith.addf %517, %518 : vector<8x128xf32>
    %520 = arith.mulf %15, %314 : vector<8x128xf32>
    %521 = arith.addf %519, %520 : vector<8x128xf32>
    %522 = arith.mulf %1, %481 : vector<8x128xf32>
    %523 = arith.mulf %7, %496 : vector<8x128xf32>
    %524 = arith.addf %522, %523 : vector<8x128xf32>
    %525 = arith.mulf %13, %511 : vector<8x128xf32>
    %526 = arith.addf %524, %525 : vector<8x128xf32>
    %527 = arith.mulf %1, %486 : vector<8x128xf32>
    %528 = arith.mulf %7, %501 : vector<8x128xf32>
    %529 = arith.addf %527, %528 : vector<8x128xf32>
    %530 = arith.mulf %13, %516 : vector<8x128xf32>
    %531 = arith.addf %529, %530 : vector<8x128xf32>
    %532 = arith.mulf %1, %491 : vector<8x128xf32>
    %533 = arith.mulf %7, %506 : vector<8x128xf32>
    %534 = arith.addf %532, %533 : vector<8x128xf32>
    %535 = arith.mulf %13, %521 : vector<8x128xf32>
    %536 = arith.addf %534, %535 : vector<8x128xf32>
    %537 = arith.mulf %1, %526 : vector<8x128xf32>
    %538 = arith.mulf %7, %531 : vector<8x128xf32>
    %539 = arith.addf %537, %538 : vector<8x128xf32>
    %540 = arith.mulf %13, %536 : vector<8x128xf32>
    %541 = arith.addf %539, %540 : vector<8x128xf32>
    %c0_234 = arith.constant 0 : index
    %c9_235 = arith.constant 9 : index
    %c0_236 = arith.constant 0 : index
    %c0_237 = arith.constant 0 : index
    %542 = vector.load %arg4[%c0_234, %c9_235, %c0_236, %c0_237] : memref<1x81x8x128xf32, #tpu.memory_space<vmem>>, vector<1x1x8x128xf32>
    %543 = vector.shape_cast %542 : vector<1x1x8x128xf32> to vector<8x128xf32>
    %544 = vector.shape_cast %541 : vector<8x128xf32> to vector<1x1x8x128xf32>
    tpu.vector_store %arg4[%c0_234, %c9_235, %c0_236, %c0_237], %544 {strides = array<i32>} : memref<1x81x8x128xf32, #tpu.memory_space<vmem>>, vector<1x1x8x128xf32>,
    %545 = arith.mulf %3, %526 : vector<8x128xf32>
    %546 = arith.mulf %9, %531 : vector<8x128xf32>
    %547 = arith.addf %545, %546 : vector<8x128xf32>
    %548 = arith.mulf %15, %536 : vector<8x128xf32>
    %549 = arith.addf %547, %548 : vector<8x128xf32>
    %c0_238 = arith.constant 0 : index
    %c10_239 = arith.constant 10 : index
    %c0_240 = arith.constant 0 : index
    %c0_241 = arith.constant 0 : index
    %550 = vector.load %arg4[%c0_238, %c10_239, %c0_240, %c0_241] : memref<1x81x8x128xf32, #tpu.memory_space<vmem>>, vector<1x1x8x128xf32>
    %551 = vector.shape_cast %550 : vector<1x1x8x128xf32> to vector<8x128xf32>
    %552 = vector.shape_cast %549 : vector<8x128xf32> to vector<1x1x8x128xf32>
    tpu.vector_store %arg4[%c0_238, %c10_239, %c0_240, %c0_241], %552 {strides = array<i32>} : memref<1x81x8x128xf32, #tpu.memory_space<vmem>>, vector<1x1x8x128xf32>,
    %553 = arith.mulf %5, %526 : vector<8x128xf32>
    %554 = arith.mulf %11, %531 : vector<8x128xf32>
    %555 = arith.addf %553, %554 : vector<8x128xf32>
    %556 = arith.mulf %17, %536 : vector<8x128xf32>
    %557 = arith.addf %555, %556 : vector<8x128xf32>
    %c0_242 = arith.constant 0 : index
    %c11_243 = arith.constant 11 : index
    %c0_244 = arith.constant 0 : index
    %c0_245 = arith.constant 0 : index
    %558 = vector.load %arg4[%c0_242, %c11_243, %c0_244, %c0_245] : memref<1x81x8x128xf32, #tpu.memory_space<vmem>>, vector<1x1x8x128xf32>
    %559 = vector.shape_cast %558 : vector<1x1x8x128xf32> to vector<8x128xf32>
    %560 = vector.shape_cast %557 : vector<8x128xf32> to vector<1x1x8x128xf32>
    tpu.vector_store %arg4[%c0_242, %c11_243, %c0_244, %c0_245], %560 {strides = array<i32>} : memref<1x81x8x128xf32, #tpu.memory_space<vmem>>, vector<1x1x8x128xf32>,
    %561 = arith.mulf %3, %481 : vector<8x128xf32>
    %562 = arith.mulf %9, %496 : vector<8x128xf32>
    %563 = arith.addf %561, %562 : vector<8x128xf32>
    %564 = arith.mulf %15, %511 : vector<8x128xf32>
    %565 = arith.addf %563, %564 : vector<8x128xf32>
    %566 = arith.mulf %3, %486 : vector<8x128xf32>
    %567 = arith.mulf %9, %501 : vector<8x128xf32>
    %568 = arith.addf %566, %567 : vector<8x128xf32>
    %569 = arith.mulf %15, %516 : vector<8x128xf32>
    %570 = arith.addf %568, %569 : vector<8x128xf32>
    %571 = arith.mulf %3, %491 : vector<8x128xf32>
    %572 = arith.mulf %9, %506 : vector<8x128xf32>
    %573 = arith.addf %571, %572 : vector<8x128xf32>
    %574 = arith.mulf %15, %521 : vector<8x128xf32>
    %575 = arith.addf %573, %574 : vector<8x128xf32>
    %576 = arith.mulf %1, %565 : vector<8x128xf32>
    %577 = arith.mulf %7, %570 : vector<8x128xf32>
    %578 = arith.addf %576, %577 : vector<8x128xf32>
    %579 = arith.mulf %13, %575 : vector<8x128xf32>
    %580 = arith.addf %578, %579 : vector<8x128xf32>
    %c0_246 = arith.constant 0 : index
    %c12_247 = arith.constant 12 : index
    %c0_248 = arith.constant 0 : index
    %c0_249 = arith.constant 0 : index
    %581 = vector.load %arg4[%c0_246, %c12_247, %c0_248, %c0_249] : memref<1x81x8x128xf32, #tpu.memory_space<vmem>>, vector<1x1x8x128xf32>
    %582 = vector.shape_cast %581 : vector<1x1x8x128xf32> to vector<8x128xf32>
    %583 = vector.shape_cast %580 : vector<8x128xf32> to vector<1x1x8x128xf32>
    tpu.vector_store %arg4[%c0_246, %c12_247, %c0_248, %c0_249], %583 {strides = array<i32>} : memref<1x81x8x128xf32, #tpu.memory_space<vmem>>, vector<1x1x8x128xf32>,
    %584 = arith.mulf %3, %565 : vector<8x128xf32>
    %585 = arith.mulf %9, %570 : vector<8x128xf32>
    %586 = arith.addf %584, %585 : vector<8x128xf32>
    %587 = arith.mulf %15, %575 : vector<8x128xf32>
    %588 = arith.addf %586, %587 : vector<8x128xf32>
    %c0_250 = arith.constant 0 : index
    %c13_251 = arith.constant 13 : index
    %c0_252 = arith.constant 0 : index
    %c0_253 = arith.constant 0 : index
    %589 = vector.load %arg4[%c0_250, %c13_251, %c0_252, %c0_253] : memref<1x81x8x128xf32, #tpu.memory_space<vmem>>, vector<1x1x8x128xf32>
    %590 = vector.shape_cast %589 : vector<1x1x8x128xf32> to vector<8x128xf32>
    %591 = vector.shape_cast %588 : vector<8x128xf32> to vector<1x1x8x128xf32>
    tpu.vector_store %arg4[%c0_250, %c13_251, %c0_252, %c0_253], %591 {strides = array<i32>} : memref<1x81x8x128xf32, #tpu.memory_space<vmem>>, vector<1x1x8x128xf32>,
    %592 = arith.mulf %5, %565 : vector<8x128xf32>
    %593 = arith.mulf %11, %570 : vector<8x128xf32>
    %594 = arith.addf %592, %593 : vector<8x128xf32>
    %595 = arith.mulf %17, %575 : vector<8x128xf32>
    %596 = arith.addf %594, %595 : vector<8x128xf32>
    %c0_254 = arith.constant 0 : index
    %c14_255 = arith.constant 14 : index
    %c0_256 = arith.constant 0 : index
    %c0_257 = arith.constant 0 : index
    %597 = vector.load %arg4[%c0_254, %c14_255, %c0_256, %c0_257] : memref<1x81x8x128xf32, #tpu.memory_space<vmem>>, vector<1x1x8x128xf32>
    %598 = vector.shape_cast %597 : vector<1x1x8x128xf32> to vector<8x128xf32>
    %599 = vector.shape_cast %596 : vector<8x128xf32> to vector<1x1x8x128xf32>
    tpu.vector_store %arg4[%c0_254, %c14_255, %c0_256, %c0_257], %599 {strides = array<i32>} : memref<1x81x8x128xf32, #tpu.memory_space<vmem>>, vector<1x1x8x128xf32>,
    %600 = arith.mulf %5, %481 : vector<8x128xf32>
    %601 = arith.mulf %11, %496 : vector<8x128xf32>
    %602 = arith.addf %600, %601 : vector<8x128xf32>
    %603 = arith.mulf %17, %511 : vector<8x128xf32>
    %604 = arith.addf %602, %603 : vector<8x128xf32>
    %605 = arith.mulf %5, %486 : vector<8x128xf32>
    %606 = arith.mulf %11, %501 : vector<8x128xf32>
    %607 = arith.addf %605, %606 : vector<8x128xf32>
    %608 = arith.mulf %17, %516 : vector<8x128xf32>
    %609 = arith.addf %607, %608 : vector<8x128xf32>
    %610 = arith.mulf %5, %491 : vector<8x128xf32>
    %611 = arith.mulf %11, %506 : vector<8x128xf32>
    %612 = arith.addf %610, %611 : vector<8x128xf32>
    %613 = arith.mulf %17, %521 : vector<8x128xf32>
    %614 = arith.addf %612, %613 : vector<8x128xf32>
    %615 = arith.mulf %1, %604 : vector<8x128xf32>
    %616 = arith.mulf %7, %609 : vector<8x128xf32>
    %617 = arith.addf %615, %616 : vector<8x128xf32>
    %618 = arith.mulf %13, %614 : vector<8x128xf32>
    %619 = arith.addf %617, %618 : vector<8x128xf32>
    %c0_258 = arith.constant 0 : index
    %c15_259 = arith.constant 15 : index
    %c0_260 = arith.constant 0 : index
    %c0_261 = arith.constant 0 : index
    %620 = vector.load %arg4[%c0_258, %c15_259, %c0_260, %c0_261] : memref<1x81x8x128xf32, #tpu.memory_space<vmem>>, vector<1x1x8x128xf32>
    %621 = vector.shape_cast %620 : vector<1x1x8x128xf32> to vector<8x128xf32>
    %622 = vector.shape_cast %619 : vector<8x128xf32> to vector<1x1x8x128xf32>
    tpu.vector_store %arg4[%c0_258, %c15_259, %c0_260, %c0_261], %622 {strides = array<i32>} : memref<1x81x8x128xf32, #tpu.memory_space<vmem>>, vector<1x1x8x128xf32>,
    %623 = arith.mulf %3, %604 : vector<8x128xf32>
    %624 = arith.mulf %9, %609 : vector<8x128xf32>
    %625 = arith.addf %623, %624 : vector<8x128xf32>
    %626 = arith.mulf %15, %614 : vector<8x128xf32>
    %627 = arith.addf %625, %626 : vector<8x128xf32>
    %c0_262 = arith.constant 0 : index
    %c16_263 = arith.constant 16 : index
    %c0_264 = arith.constant 0 : index
    %c0_265 = arith.constant 0 : index
    %628 = vector.load %arg4[%c0_262, %c16_263, %c0_264, %c0_265] : memref<1x81x8x128xf32, #tpu.memory_space<vmem>>, vector<1x1x8x128xf32>
    %629 = vector.shape_cast %628 : vector<1x1x8x128xf32> to vector<8x128xf32>
    %630 = vector.shape_cast %627 : vector<8x128xf32> to vector<1x1x8x128xf32>
    tpu.vector_store %arg4[%c0_262, %c16_263, %c0_264, %c0_265], %630 {strides = array<i32>} : memref<1x81x8x128xf32, #tpu.memory_space<vmem>>, vector<1x1x8x128xf32>,
    %631 = arith.mulf %5, %604 : vector<8x128xf32>
    %632 = arith.mulf %11, %609 : vector<8x128xf32>
    %633 = arith.addf %631, %632 : vector<8x128xf32>
    %634 = arith.mulf %17, %614 : vector<8x128xf32>
    %635 = arith.addf %633, %634 : vector<8x128xf32>
    %c0_266 = arith.constant 0 : index
    %c17_267 = arith.constant 17 : index
    %c0_268 = arith.constant 0 : index
    %c0_269 = arith.constant 0 : index
    %636 = vector.load %arg4[%c0_266, %c17_267, %c0_268, %c0_269] : memref<1x81x8x128xf32, #tpu.memory_space<vmem>>, vector<1x1x8x128xf32>
    %637 = vector.shape_cast %636 : vector<1x1x8x128xf32> to vector<8x128xf32>
    %638 = vector.shape_cast %635 : vector<8x128xf32> to vector<1x1x8x128xf32>
    tpu.vector_store %arg4[%c0_266, %c17_267, %c0_268, %c0_269], %638 {strides = array<i32>} : memref<1x81x8x128xf32, #tpu.memory_space<vmem>>, vector<1x1x8x128xf32>,
    %639 = arith.mulf %5, %28 : vector<8x128xf32>
    %640 = arith.mulf %11, %127 : vector<8x128xf32>
    %641 = arith.addf %639, %640 : vector<8x128xf32>
    %642 = arith.mulf %17, %226 : vector<8x128xf32>
    %643 = arith.addf %641, %642 : vector<8x128xf32>
    %644 = arith.mulf %5, %39 : vector<8x128xf32>
    %645 = arith.mulf %11, %138 : vector<8x128xf32>
    %646 = arith.addf %644, %645 : vector<8x128xf32>
    %647 = arith.mulf %17, %237 : vector<8x128xf32>
    %648 = arith.addf %646, %647 : vector<8x128xf32>
    %649 = arith.mulf %5, %50 : vector<8x128xf32>
    %650 = arith.mulf %11, %149 : vector<8x128xf32>
    %651 = arith.addf %649, %650 : vector<8x128xf32>
    %652 = arith.mulf %17, %248 : vector<8x128xf32>
    %653 = arith.addf %651, %652 : vector<8x128xf32>
    %654 = arith.mulf %5, %61 : vector<8x128xf32>
    %655 = arith.mulf %11, %160 : vector<8x128xf32>
    %656 = arith.addf %654, %655 : vector<8x128xf32>
    %657 = arith.mulf %17, %259 : vector<8x128xf32>
    %658 = arith.addf %656, %657 : vector<8x128xf32>
    %659 = arith.mulf %5, %72 : vector<8x128xf32>
    %660 = arith.mulf %11, %171 : vector<8x128xf32>
    %661 = arith.addf %659, %660 : vector<8x128xf32>
    %662 = arith.mulf %17, %270 : vector<8x128xf32>
    %663 = arith.addf %661, %662 : vector<8x128xf32>
    %664 = arith.mulf %5, %83 : vector<8x128xf32>
    %665 = arith.mulf %11, %182 : vector<8x128xf32>
    %666 = arith.addf %664, %665 : vector<8x128xf32>
    %667 = arith.mulf %17, %281 : vector<8x128xf32>
    %668 = arith.addf %666, %667 : vector<8x128xf32>
    %669 = arith.mulf %5, %94 : vector<8x128xf32>
    %670 = arith.mulf %11, %193 : vector<8x128xf32>
    %671 = arith.addf %669, %670 : vector<8x128xf32>
    %672 = arith.mulf %17, %292 : vector<8x128xf32>
    %673 = arith.addf %671, %672 : vector<8x128xf32>
    %674 = arith.mulf %5, %105 : vector<8x128xf32>
    %675 = arith.mulf %11, %204 : vector<8x128xf32>
    %676 = arith.addf %674, %675 : vector<8x128xf32>
    %677 = arith.mulf %17, %303 : vector<8x128xf32>
    %678 = arith.addf %676, %677 : vector<8x128xf32>
    %679 = arith.mulf %5, %116 : vector<8x128xf32>
    %680 = arith.mulf %11, %215 : vector<8x128xf32>
    %681 = arith.addf %679, %680 : vector<8x128xf32>
    %682 = arith.mulf %17, %314 : vector<8x128xf32>
    %683 = arith.addf %681, %682 : vector<8x128xf32>
    %684 = arith.mulf %1, %643 : vector<8x128xf32>
    %685 = arith.mulf %7, %658 : vector<8x128xf32>
    %686 = arith.addf %684, %685 : vector<8x128xf32>
    %687 = arith.mulf %13, %673 : vector<8x128xf32>
    %688 = arith.addf %686, %687 : vector<8x128xf32>
    %689 = arith.mulf %1, %648 : vector<8x128xf32>
    %690 = arith.mulf %7, %663 : vector<8x128xf32>
    %691 = arith.addf %689, %690 : vector<8x128xf32>
    %692 = arith.mulf %13, %678 : vector<8x128xf32>
    %693 = arith.addf %691, %692 : vector<8x128xf32>
    %694 = arith.mulf %1, %653 : vector<8x128xf32>
    %695 = arith.mulf %7, %668 : vector<8x128xf32>
    %696 = arith.addf %694, %695 : vector<8x128xf32>
    %697 = arith.mulf %13, %683 : vector<8x128xf32>
    %698 = arith.addf %696, %697 : vector<8x128xf32>
    %699 = arith.mulf %1, %688 : vector<8x128xf32>
    %700 = arith.mulf %7, %693 : vector<8x128xf32>
    %701 = arith.addf %699, %700 : vector<8x128xf32>
    %702 = arith.mulf %13, %698 : vector<8x128xf32>
    %703 = arith.addf %701, %702 : vector<8x128xf32>
    %c0_270 = arith.constant 0 : index
    %c18_271 = arith.constant 18 : index
    %c0_272 = arith.constant 0 : index
    %c0_273 = arith.constant 0 : index
    %704 = vector.load %arg4[%c0_270, %c18_271, %c0_272, %c0_273] : memref<1x81x8x128xf32, #tpu.memory_space<vmem>>, vector<1x1x8x128xf32>
    %705 = vector.shape_cast %704 : vector<1x1x8x128xf32> to vector<8x128xf32>
    %706 = vector.shape_cast %703 : vector<8x128xf32> to vector<1x1x8x128xf32>
    tpu.vector_store %arg4[%c0_270, %c18_271, %c0_272, %c0_273], %706 {strides = array<i32>} : memref<1x81x8x128xf32, #tpu.memory_space<vmem>>, vector<1x1x8x128xf32>,
    %707 = arith.mulf %3, %688 : vector<8x128xf32>
    %708 = arith.mulf %9, %693 : vector<8x128xf32>
    %709 = arith.addf %707, %708 : vector<8x128xf32>
    %710 = arith.mulf %15, %698 : vector<8x128xf32>
    %711 = arith.addf %709, %710 : vector<8x128xf32>
    %c0_274 = arith.constant 0 : index
    %c19_275 = arith.constant 19 : index
    %c0_276 = arith.constant 0 : index
    %c0_277 = arith.constant 0 : index
    %712 = vector.load %arg4[%c0_274, %c19_275, %c0_276, %c0_277] : memref<1x81x8x128xf32, #tpu.memory_space<vmem>>, vector<1x1x8x128xf32>
    %713 = vector.shape_cast %712 : vector<1x1x8x128xf32> to vector<8x128xf32>
    %714 = vector.shape_cast %711 : vector<8x128xf32> to vector<1x1x8x128xf32>
    tpu.vector_store %arg4[%c0_274, %c19_275, %c0_276, %c0_277], %714 {strides = array<i32>} : memref<1x81x8x128xf32, #tpu.memory_space<vmem>>, vector<1x1x8x128xf32>,
    %715 = arith.mulf %5, %688 : vector<8x128xf32>
    %716 = arith.mulf %11, %693 : vector<8x128xf32>
    %717 = arith.addf %715, %716 : vector<8x128xf32>
    %718 = arith.mulf %17, %698 : vector<8x128xf32>
    %719 = arith.addf %717, %718 : vector<8x128xf32>
    %c0_278 = arith.constant 0 : index
    %c20_279 = arith.constant 20 : index
    %c0_280 = arith.constant 0 : index
    %c0_281 = arith.constant 0 : index
    %720 = vector.load %arg4[%c0_278, %c20_279, %c0_280, %c0_281] : memref<1x81x8x128xf32, #tpu.memory_space<vmem>>, vector<1x1x8x128xf32>
    %721 = vector.shape_cast %720 : vector<1x1x8x128xf32> to vector<8x128xf32>
    %722 = vector.shape_cast %719 : vector<8x128xf32> to vector<1x1x8x128xf32>
    tpu.vector_store %arg4[%c0_278, %c20_279, %c0_280, %c0_281], %722 {strides = array<i32>} : memref<1x81x8x128xf32, #tpu.memory_space<vmem>>, vector<1x1x8x128xf32>,
    %723 = arith.mulf %3, %643 : vector<8x128xf32>
    %724 = arith.mulf %9, %658 : vector<8x128xf32>
    %725 = arith.addf %723, %724 : vector<8x128xf32>
    %726 = arith.mulf %15, %673 : vector<8x128xf32>
    %727 = arith.addf %725, %726 : vector<8x128xf32>
    %728 = arith.mulf %3, %648 : vector<8x128xf32>
    %729 = arith.mulf %9, %663 : vector<8x128xf32>
    %730 = arith.addf %728, %729 : vector<8x128xf32>
    %731 = arith.mulf %15, %678 : vector<8x128xf32>
    %732 = arith.addf %730, %731 : vector<8x128xf32>
    %733 = arith.mulf %3, %653 : vector<8x128xf32>
    %734 = arith.mulf %9, %668 : vector<8x128xf32>
    %735 = arith.addf %733, %734 : vector<8x128xf32>
    %736 = arith.mulf %15, %683 : vector<8x128xf32>
    %737 = arith.addf %735, %736 : vector<8x128xf32>
    %738 = arith.mulf %1, %727 : vector<8x128xf32>
    %739 = arith.mulf %7, %732 : vector<8x128xf32>
    %740 = arith.addf %738, %739 : vector<8x128xf32>
    %741 = arith.mulf %13, %737 : vector<8x128xf32>
    %742 = arith.addf %740, %741 : vector<8x128xf32>
    %c0_282 = arith.constant 0 : index
    %c21_283 = arith.constant 21 : index
    %c0_284 = arith.constant 0 : index
    %c0_285 = arith.constant 0 : index
    %743 = vector.load %arg4[%c0_282, %c21_283, %c0_284, %c0_285] : memref<1x81x8x128xf32, #tpu.memory_space<vmem>>, vector<1x1x8x128xf32>
    %744 = vector.shape_cast %743 : vector<1x1x8x128xf32> to vector<8x128xf32>
    %745 = vector.shape_cast %742 : vector<8x128xf32> to vector<1x1x8x128xf32>
    tpu.vector_store %arg4[%c0_282, %c21_283, %c0_284, %c0_285], %745 {strides = array<i32>} : memref<1x81x8x128xf32, #tpu.memory_space<vmem>>, vector<1x1x8x128xf32>,
    %746 = arith.mulf %3, %727 : vector<8x128xf32>
    %747 = arith.mulf %9, %732 : vector<8x128xf32>
    %748 = arith.addf %746, %747 : vector<8x128xf32>
    %749 = arith.mulf %15, %737 : vector<8x128xf32>
    %750 = arith.addf %748, %749 : vector<8x128xf32>
    %c0_286 = arith.constant 0 : index
    %c22_287 = arith.constant 22 : index
    %c0_288 = arith.constant 0 : index
    %c0_289 = arith.constant 0 : index
    %751 = vector.load %arg4[%c0_286, %c22_287, %c0_288, %c0_289] : memref<1x81x8x128xf32, #tpu.memory_space<vmem>>, vector<1x1x8x128xf32>
    %752 = vector.shape_cast %751 : vector<1x1x8x128xf32> to vector<8x128xf32>
    %753 = vector.shape_cast %750 : vector<8x128xf32> to vector<1x1x8x128xf32>
    tpu.vector_store %arg4[%c0_286, %c22_287, %c0_288, %c0_289], %753 {strides = array<i32>} : memref<1x81x8x128xf32, #tpu.memory_space<vmem>>, vector<1x1x8x128xf32>,
    %754 = arith.mulf %5, %727 : vector<8x128xf32>
    %755 = arith.mulf %11, %732 : vector<8x128xf32>
    %756 = arith.addf %754, %755 : vector<8x128xf32>
    %757 = arith.mulf %17, %737 : vector<8x128xf32>
    %758 = arith.addf %756, %757 : vector<8x128xf32>
    %c0_290 = arith.constant 0 : index
    %c23_291 = arith.constant 23 : index
    %c0_292 = arith.constant 0 : index
    %c0_293 = arith.constant 0 : index
    %759 = vector.load %arg4[%c0_290, %c23_291, %c0_292, %c0_293] : memref<1x81x8x128xf32, #tpu.memory_space<vmem>>, vector<1x1x8x128xf32>
    %760 = vector.shape_cast %759 : vector<1x1x8x128xf32> to vector<8x128xf32>
    %761 = vector.shape_cast %758 : vector<8x128xf32> to vector<1x1x8x128xf32>
    tpu.vector_store %arg4[%c0_290, %c23_291, %c0_292, %c0_293], %761 {strides = array<i32>} : memref<1x81x8x128xf32, #tpu.memory_space<vmem>>, vector<1x1x8x128xf32>,
    %762 = arith.mulf %5, %643 : vector<8x128xf32>
    %763 = arith.mulf %11, %658 : vector<8x128xf32>
    %764 = arith.addf %762, %763 : vector<8x128xf32>
    %765 = arith.mulf %17, %673 : vector<8x128xf32>
    %766 = arith.addf %764, %765 : vector<8x128xf32>
    %767 = arith.mulf %5, %648 : vector<8x128xf32>
    %768 = arith.mulf %11, %663 : vector<8x128xf32>
    %769 = arith.addf %767, %768 : vector<8x128xf32>
    %770 = arith.mulf %17, %678 : vector<8x128xf32>
    %771 = arith.addf %769, %770 : vector<8x128xf32>
    %772 = arith.mulf %5, %653 : vector<8x128xf32>
    %773 = arith.mulf %11, %668 : vector<8x128xf32>
    %774 = arith.addf %772, %773 : vector<8x128xf32>
    %775 = arith.mulf %17, %683 : vector<8x128xf32>
    %776 = arith.addf %774, %775 : vector<8x128xf32>
    %777 = arith.mulf %1, %766 : vector<8x128xf32>
    %778 = arith.mulf %7, %771 : vector<8x128xf32>
    %779 = arith.addf %777, %778 : vector<8x128xf32>
    %780 = arith.mulf %13, %776 : vector<8x128xf32>
    %781 = arith.addf %779, %780 : vector<8x128xf32>
    %c0_294 = arith.constant 0 : index
    %c24_295 = arith.constant 24 : index
    %c0_296 = arith.constant 0 : index
    %c0_297 = arith.constant 0 : index
    %782 = vector.load %arg4[%c0_294, %c24_295, %c0_296, %c0_297] : memref<1x81x8x128xf32, #tpu.memory_space<vmem>>, vector<1x1x8x128xf32>
    %783 = vector.shape_cast %782 : vector<1x1x8x128xf32> to vector<8x128xf32>
    %784 = vector.shape_cast %781 : vector<8x128xf32> to vector<1x1x8x128xf32>
    tpu.vector_store %arg4[%c0_294, %c24_295, %c0_296, %c0_297], %784 {strides = array<i32>} : memref<1x81x8x128xf32, #tpu.memory_space<vmem>>, vector<1x1x8x128xf32>,
    %785 = arith.mulf %3, %766 : vector<8x128xf32>
    %786 = arith.mulf %9, %771 : vector<8x128xf32>
    %787 = arith.addf %785, %786 : vector<8x128xf32>
    %788 = arith.mulf %15, %776 : vector<8x128xf32>
    %789 = arith.addf %787, %788 : vector<8x128xf32>
    %c0_298 = arith.constant 0 : index
    %c25_299 = arith.constant 25 : index
    %c0_300 = arith.constant 0 : index
    %c0_301 = arith.constant 0 : index
    %790 = vector.load %arg4[%c0_298, %c25_299, %c0_300, %c0_301] : memref<1x81x8x128xf32, #tpu.memory_space<vmem>>, vector<1x1x8x128xf32>
    %791 = vector.shape_cast %790 : vector<1x1x8x128xf32> to vector<8x128xf32>
    %792 = vector.shape_cast %789 : vector<8x128xf32> to vector<1x1x8x128xf32>
    tpu.vector_store %arg4[%c0_298, %c25_299, %c0_300, %c0_301], %792 {strides = array<i32>} : memref<1x81x8x128xf32, #tpu.memory_space<vmem>>, vector<1x1x8x128xf32>,
    %793 = arith.mulf %5, %766 : vector<8x128xf32>
    %794 = arith.mulf %11, %771 : vector<8x128xf32>
    %795 = arith.addf %793, %794 : vector<8x128xf32>
    %796 = arith.mulf %17, %776 : vector<8x128xf32>
    %797 = arith.addf %795, %796 : vector<8x128xf32>
    %c0_302 = arith.constant 0 : index
    %c26_303 = arith.constant 26 : index
    %c0_304 = arith.constant 0 : index
    %c0_305 = arith.constant 0 : index
    %798 = vector.load %arg4[%c0_302, %c26_303, %c0_304, %c0_305] : memref<1x81x8x128xf32, #tpu.memory_space<vmem>>, vector<1x1x8x128xf32>
    %799 = vector.shape_cast %798 : vector<1x1x8x128xf32> to vector<8x128xf32>
    %800 = vector.shape_cast %797 : vector<8x128xf32> to vector<1x1x8x128xf32>
    tpu.vector_store %arg4[%c0_302, %c26_303, %c0_304, %c0_305], %800 {strides = array<i32>} : memref<1x81x8x128xf32, #tpu.memory_space<vmem>>, vector<1x1x8x128xf32>,
    %c0_306 = arith.constant 0 : index
    %c0_307 = arith.constant 0 : index
    %c0_308 = arith.constant 0 : index
    %801 = vector.load %arg2[%c0_306, %c0_307, %c0_308] : memref<81x8x128xf32, #tpu.memory_space<vmem>>, vector<1x8x128xf32>
    %802 = vector.shape_cast %801 : vector<1x8x128xf32> to vector<8x128xf32>
    %803 = arith.mulf %802, %3 : vector<8x128xf32>
    %c27_309 = arith.constant 27 : index
    %c0_310 = arith.constant 0 : index
    %c0_311 = arith.constant 0 : index
    %804 = vector.load %arg2[%c27_309, %c0_310, %c0_311] : memref<81x8x128xf32, #tpu.memory_space<vmem>>, vector<1x8x128xf32>
    %805 = vector.shape_cast %804 : vector<1x8x128xf32> to vector<8x128xf32>
    %806 = arith.mulf %805, %9 : vector<8x128xf32>
    %807 = arith.addf %803, %806 : vector<8x128xf32>
    %c54_312 = arith.constant 54 : index
    %c0_313 = arith.constant 0 : index
    %c0_314 = arith.constant 0 : index
    %808 = vector.load %arg2[%c54_312, %c0_313, %c0_314] : memref<81x8x128xf32, #tpu.memory_space<vmem>>, vector<1x8x128xf32>
    %809 = vector.shape_cast %808 : vector<1x8x128xf32> to vector<8x128xf32>
    %810 = arith.mulf %809, %15 : vector<8x128xf32>
    %811 = arith.addf %807, %810 : vector<8x128xf32>
    %c1_315 = arith.constant 1 : index
    %c0_316 = arith.constant 0 : index
    %c0_317 = arith.constant 0 : index
    %812 = vector.load %arg2[%c1_315, %c0_316, %c0_317] : memref<81x8x128xf32, #tpu.memory_space<vmem>>, vector<1x8x128xf32>
    %813 = vector.shape_cast %812 : vector<1x8x128xf32> to vector<8x128xf32>
    %814 = arith.mulf %813, %3 : vector<8x128xf32>
    %c28_318 = arith.constant 28 : index
    %c0_319 = arith.constant 0 : index
    %c0_320 = arith.constant 0 : index
    %815 = vector.load %arg2[%c28_318, %c0_319, %c0_320] : memref<81x8x128xf32, #tpu.memory_space<vmem>>, vector<1x8x128xf32>
    %816 = vector.shape_cast %815 : vector<1x8x128xf32> to vector<8x128xf32>
    %817 = arith.mulf %816, %9 : vector<8x128xf32>
    %818 = arith.addf %814, %817 : vector<8x128xf32>
    %c55_321 = arith.constant 55 : index
    %c0_322 = arith.constant 0 : index
    %c0_323 = arith.constant 0 : index
    %819 = vector.load %arg2[%c55_321, %c0_322, %c0_323] : memref<81x8x128xf32, #tpu.memory_space<vmem>>, vector<1x8x128xf32>
    %820 = vector.shape_cast %819 : vector<1x8x128xf32> to vector<8x128xf32>
    %821 = arith.mulf %820, %15 : vector<8x128xf32>
    %822 = arith.addf %818, %821 : vector<8x128xf32>
    %c2_324 = arith.constant 2 : index
    %c0_325 = arith.constant 0 : index
    %c0_326 = arith.constant 0 : index
    %823 = vector.load %arg2[%c2_324, %c0_325, %c0_326] : memref<81x8x128xf32, #tpu.memory_space<vmem>>, vector<1x8x128xf32>
    %824 = vector.shape_cast %823 : vector<1x8x128xf32> to vector<8x128xf32>
    %825 = arith.mulf %824, %3 : vector<8x128xf32>
    %c29_327 = arith.constant 29 : index
    %c0_328 = arith.constant 0 : index
    %c0_329 = arith.constant 0 : index
    %826 = vector.load %arg2[%c29_327, %c0_328, %c0_329] : memref<81x8x128xf32, #tpu.memory_space<vmem>>, vector<1x8x128xf32>
    %827 = vector.shape_cast %826 : vector<1x8x128xf32> to vector<8x128xf32>
    %828 = arith.mulf %827, %9 : vector<8x128xf32>
    %829 = arith.addf %825, %828 : vector<8x128xf32>
    %c56_330 = arith.constant 56 : index
    %c0_331 = arith.constant 0 : index
    %c0_332 = arith.constant 0 : index
    %830 = vector.load %arg2[%c56_330, %c0_331, %c0_332] : memref<81x8x128xf32, #tpu.memory_space<vmem>>, vector<1x8x128xf32>
    %831 = vector.shape_cast %830 : vector<1x8x128xf32> to vector<8x128xf32>
    %832 = arith.mulf %831, %15 : vector<8x128xf32>
    %833 = arith.addf %829, %832 : vector<8x128xf32>
    %c3_333 = arith.constant 3 : index
    %c0_334 = arith.constant 0 : index
    %c0_335 = arith.constant 0 : index
    %834 = vector.load %arg2[%c3_333, %c0_334, %c0_335] : memref<81x8x128xf32, #tpu.memory_space<vmem>>, vector<1x8x128xf32>
    %835 = vector.shape_cast %834 : vector<1x8x128xf32> to vector<8x128xf32>
    %836 = arith.mulf %835, %3 : vector<8x128xf32>
    %c30_336 = arith.constant 30 : index
    %c0_337 = arith.constant 0 : index
    %c0_338 = arith.constant 0 : index
    %837 = vector.load %arg2[%c30_336, %c0_337, %c0_338] : memref<81x8x128xf32, #tpu.memory_space<vmem>>, vector<1x8x128xf32>
    %838 = vector.shape_cast %837 : vector<1x8x128xf32> to vector<8x128xf32>
    %839 = arith.mulf %838, %9 : vector<8x128xf32>
    %840 = arith.addf %836, %839 : vector<8x128xf32>
    %c57_339 = arith.constant 57 : index
    %c0_340 = arith.constant 0 : index
    %c0_341 = arith.constant 0 : index
    %841 = vector.load %arg2[%c57_339, %c0_340, %c0_341] : memref<81x8x128xf32, #tpu.memory_space<vmem>>, vector<1x8x128xf32>
    %842 = vector.shape_cast %841 : vector<1x8x128xf32> to vector<8x128xf32>
    %843 = arith.mulf %842, %15 : vector<8x128xf32>
    %844 = arith.addf %840, %843 : vector<8x128xf32>
    %c4_342 = arith.constant 4 : index
    %c0_343 = arith.constant 0 : index
    %c0_344 = arith.constant 0 : index
    %845 = vector.load %arg2[%c4_342, %c0_343, %c0_344] : memref<81x8x128xf32, #tpu.memory_space<vmem>>, vector<1x8x128xf32>
    %846 = vector.shape_cast %845 : vector<1x8x128xf32> to vector<8x128xf32>
    %847 = arith.mulf %846, %3 : vector<8x128xf32>
    %c31_345 = arith.constant 31 : index
    %c0_346 = arith.constant 0 : index
    %c0_347 = arith.constant 0 : index
    %848 = vector.load %arg2[%c31_345, %c0_346, %c0_347] : memref<81x8x128xf32, #tpu.memory_space<vmem>>, vector<1x8x128xf32>
    %849 = vector.shape_cast %848 : vector<1x8x128xf32> to vector<8x128xf32>
    %850 = arith.mulf %849, %9 : vector<8x128xf32>
    %851 = arith.addf %847, %850 : vector<8x128xf32>
    %c58_348 = arith.constant 58 : index
    %c0_349 = arith.constant 0 : index
    %c0_350 = arith.constant 0 : index
    %852 = vector.load %arg2[%c58_348, %c0_349, %c0_350] : memref<81x8x128xf32, #tpu.memory_space<vmem>>, vector<1x8x128xf32>
    %853 = vector.shape_cast %852 : vector<1x8x128xf32> to vector<8x128xf32>
    %854 = arith.mulf %853, %15 : vector<8x128xf32>
    %855 = arith.addf %851, %854 : vector<8x128xf32>
    %c5_351 = arith.constant 5 : index
    %c0_352 = arith.constant 0 : index
    %c0_353 = arith.constant 0 : index
    %856 = vector.load %arg2[%c5_351, %c0_352, %c0_353] : memref<81x8x128xf32, #tpu.memory_space<vmem>>, vector<1x8x128xf32>
    %857 = vector.shape_cast %856 : vector<1x8x128xf32> to vector<8x128xf32>
    %858 = arith.mulf %857, %3 : vector<8x128xf32>
    %c32_354 = arith.constant 32 : index
    %c0_355 = arith.constant 0 : index
    %c0_356 = arith.constant 0 : index
    %859 = vector.load %arg2[%c32_354, %c0_355, %c0_356] : memref<81x8x128xf32, #tpu.memory_space<vmem>>, vector<1x8x128xf32>
    %860 = vector.shape_cast %859 : vector<1x8x128xf32> to vector<8x128xf32>
    %861 = arith.mulf %860, %9 : vector<8x128xf32>
    %862 = arith.addf %858, %861 : vector<8x128xf32>
    %c59_357 = arith.constant 59 : index
    %c0_358 = arith.constant 0 : index
    %c0_359 = arith.constant 0 : index
    %863 = vector.load %arg2[%c59_357, %c0_358, %c0_359] : memref<81x8x128xf32, #tpu.memory_space<vmem>>, vector<1x8x128xf32>
    %864 = vector.shape_cast %863 : vector<1x8x128xf32> to vector<8x128xf32>
    %865 = arith.mulf %864, %15 : vector<8x128xf32>
    %866 = arith.addf %862, %865 : vector<8x128xf32>
    %c6_360 = arith.constant 6 : index
    %c0_361 = arith.constant 0 : index
    %c0_362 = arith.constant 0 : index
    %867 = vector.load %arg2[%c6_360, %c0_361, %c0_362] : memref<81x8x128xf32, #tpu.memory_space<vmem>>, vector<1x8x128xf32>
    %868 = vector.shape_cast %867 : vector<1x8x128xf32> to vector<8x128xf32>
    %869 = arith.mulf %868, %3 : vector<8x128xf32>
    %c33_363 = arith.constant 33 : index
    %c0_364 = arith.constant 0 : index
    %c0_365 = arith.constant 0 : index
    %870 = vector.load %arg2[%c33_363, %c0_364, %c0_365] : memref<81x8x128xf32, #tpu.memory_space<vmem>>, vector<1x8x128xf32>
    %871 = vector.shape_cast %870 : vector<1x8x128xf32> to vector<8x128xf32>
    %872 = arith.mulf %871, %9 : vector<8x128xf32>
    %873 = arith.addf %869, %872 : vector<8x128xf32>
    %c60_366 = arith.constant 60 : index
    %c0_367 = arith.constant 0 : index
    %c0_368 = arith.constant 0 : index
    %874 = vector.load %arg2[%c60_366, %c0_367, %c0_368] : memref<81x8x128xf32, #tpu.memory_space<vmem>>, vector<1x8x128xf32>
    %875 = vector.shape_cast %874 : vector<1x8x128xf32> to vector<8x128xf32>
    %876 = arith.mulf %875, %15 : vector<8x128xf32>
    %877 = arith.addf %873, %876 : vector<8x128xf32>
    %c7_369 = arith.constant 7 : index
    %c0_370 = arith.constant 0 : index
    %c0_371 = arith.constant 0 : index
    %878 = vector.load %arg2[%c7_369, %c0_370, %c0_371] : memref<81x8x128xf32, #tpu.memory_space<vmem>>, vector<1x8x128xf32>
    %879 = vector.shape_cast %878 : vector<1x8x128xf32> to vector<8x128xf32>
    %880 = arith.mulf %879, %3 : vector<8x128xf32>
    %c34_372 = arith.constant 34 : index
    %c0_373 = arith.constant 0 : index
    %c0_374 = arith.constant 0 : index
    %881 = vector.load %arg2[%c34_372, %c0_373, %c0_374] : memref<81x8x128xf32, #tpu.memory_space<vmem>>, vector<1x8x128xf32>
    %882 = vector.shape_cast %881 : vector<1x8x128xf32> to vector<8x128xf32>
    %883 = arith.mulf %882, %9 : vector<8x128xf32>
    %884 = arith.addf %880, %883 : vector<8x128xf32>
    %c61_375 = arith.constant 61 : index
    %c0_376 = arith.constant 0 : index
    %c0_377 = arith.constant 0 : index
    %885 = vector.load %arg2[%c61_375, %c0_376, %c0_377] : memref<81x8x128xf32, #tpu.memory_space<vmem>>, vector<1x8x128xf32>
    %886 = vector.shape_cast %885 : vector<1x8x128xf32> to vector<8x128xf32>
    %887 = arith.mulf %886, %15 : vector<8x128xf32>
    %888 = arith.addf %884, %887 : vector<8x128xf32>
    %c8_378 = arith.constant 8 : index
    %c0_379 = arith.constant 0 : index
    %c0_380 = arith.constant 0 : index
    %889 = vector.load %arg2[%c8_378, %c0_379, %c0_380] : memref<81x8x128xf32, #tpu.memory_space<vmem>>, vector<1x8x128xf32>
    %890 = vector.shape_cast %889 : vector<1x8x128xf32> to vector<8x128xf32>
    %891 = arith.mulf %890, %3 : vector<8x128xf32>
    %c35_381 = arith.constant 35 : index
    %c0_382 = arith.constant 0 : index
    %c0_383 = arith.constant 0 : index
    %892 = vector.load %arg2[%c35_381, %c0_382, %c0_383] : memref<81x8x128xf32, #tpu.memory_space<vmem>>, vector<1x8x128xf32>
    %893 = vector.shape_cast %892 : vector<1x8x128xf32> to vector<8x128xf32>
    %894 = arith.mulf %893, %9 : vector<8x128xf32>
    %895 = arith.addf %891, %894 : vector<8x128xf32>
    %c62_384 = arith.constant 62 : index
    %c0_385 = arith.constant 0 : index
    %c0_386 = arith.constant 0 : index
    %896 = vector.load %arg2[%c62_384, %c0_385, %c0_386] : memref<81x8x128xf32, #tpu.memory_space<vmem>>, vector<1x8x128xf32>
    %897 = vector.shape_cast %896 : vector<1x8x128xf32> to vector<8x128xf32>
    %898 = arith.mulf %897, %15 : vector<8x128xf32>
    %899 = arith.addf %895, %898 : vector<8x128xf32>
    %c9_387 = arith.constant 9 : index
    %c0_388 = arith.constant 0 : index
    %c0_389 = arith.constant 0 : index
    %900 = vector.load %arg2[%c9_387, %c0_388, %c0_389] : memref<81x8x128xf32, #tpu.memory_space<vmem>>, vector<1x8x128xf32>
    %901 = vector.shape_cast %900 : vector<1x8x128xf32> to vector<8x128xf32>
    %902 = arith.mulf %901, %3 : vector<8x128xf32>
    %c36_390 = arith.constant 36 : index
    %c0_391 = arith.constant 0 : index
    %c0_392 = arith.constant 0 : index
    %903 = vector.load %arg2[%c36_390, %c0_391, %c0_392] : memref<81x8x128xf32, #tpu.memory_space<vmem>>, vector<1x8x128xf32>
    %904 = vector.shape_cast %903 : vector<1x8x128xf32> to vector<8x128xf32>
    %905 = arith.mulf %904, %9 : vector<8x128xf32>
    %906 = arith.addf %902, %905 : vector<8x128xf32>
    %c63_393 = arith.constant 63 : index
    %c0_394 = arith.constant 0 : index
    %c0_395 = arith.constant 0 : index
    %907 = vector.load %arg2[%c63_393, %c0_394, %c0_395] : memref<81x8x128xf32, #tpu.memory_space<vmem>>, vector<1x8x128xf32>
    %908 = vector.shape_cast %907 : vector<1x8x128xf32> to vector<8x128xf32>
    %909 = arith.mulf %908, %15 : vector<8x128xf32>
    %910 = arith.addf %906, %909 : vector<8x128xf32>
    %c10_396 = arith.constant 10 : index
    %c0_397 = arith.constant 0 : index
    %c0_398 = arith.constant 0 : index
    %911 = vector.load %arg2[%c10_396, %c0_397, %c0_398] : memref<81x8x128xf32, #tpu.memory_space<vmem>>, vector<1x8x128xf32>
    %912 = vector.shape_cast %911 : vector<1x8x128xf32> to vector<8x128xf32>
    %913 = arith.mulf %912, %3 : vector<8x128xf32>
    %c37_399 = arith.constant 37 : index
    %c0_400 = arith.constant 0 : index
    %c0_401 = arith.constant 0 : index
    %914 = vector.load %arg2[%c37_399, %c0_400, %c0_401] : memref<81x8x128xf32, #tpu.memory_space<vmem>>, vector<1x8x128xf32>
    %915 = vector.shape_cast %914 : vector<1x8x128xf32> to vector<8x128xf32>
    %916 = arith.mulf %915, %9 : vector<8x128xf32>
    %917 = arith.addf %913, %916 : vector<8x128xf32>
    %c64_402 = arith.constant 64 : index
    %c0_403 = arith.constant 0 : index
    %c0_404 = arith.constant 0 : index
    %918 = vector.load %arg2[%c64_402, %c0_403, %c0_404] : memref<81x8x128xf32, #tpu.memory_space<vmem>>, vector<1x8x128xf32>
    %919 = vector.shape_cast %918 : vector<1x8x128xf32> to vector<8x128xf32>
    %920 = arith.mulf %919, %15 : vector<8x128xf32>
    %921 = arith.addf %917, %920 : vector<8x128xf32>
    %c11_405 = arith.constant 11 : index
    %c0_406 = arith.constant 0 : index
    %c0_407 = arith.constant 0 : index
    %922 = vector.load %arg2[%c11_405, %c0_406, %c0_407] : memref<81x8x128xf32, #tpu.memory_space<vmem>>, vector<1x8x128xf32>
    %923 = vector.shape_cast %922 : vector<1x8x128xf32> to vector<8x128xf32>
    %924 = arith.mulf %923, %3 : vector<8x128xf32>
    %c38_408 = arith.constant 38 : index
    %c0_409 = arith.constant 0 : index
    %c0_410 = arith.constant 0 : index
    %925 = vector.load %arg2[%c38_408, %c0_409, %c0_410] : memref<81x8x128xf32, #tpu.memory_space<vmem>>, vector<1x8x128xf32>
    %926 = vector.shape_cast %925 : vector<1x8x128xf32> to vector<8x128xf32>
    %927 = arith.mulf %926, %9 : vector<8x128xf32>
    %928 = arith.addf %924, %927 : vector<8x128xf32>
    %c65_411 = arith.constant 65 : index
    %c0_412 = arith.constant 0 : index
    %c0_413 = arith.constant 0 : index
    %929 = vector.load %arg2[%c65_411, %c0_412, %c0_413] : memref<81x8x128xf32, #tpu.memory_space<vmem>>, vector<1x8x128xf32>
    %930 = vector.shape_cast %929 : vector<1x8x128xf32> to vector<8x128xf32>
    %931 = arith.mulf %930, %15 : vector<8x128xf32>
    %932 = arith.addf %928, %931 : vector<8x128xf32>
    %c12_414 = arith.constant 12 : index
    %c0_415 = arith.constant 0 : index
    %c0_416 = arith.constant 0 : index
    %933 = vector.load %arg2[%c12_414, %c0_415, %c0_416] : memref<81x8x128xf32, #tpu.memory_space<vmem>>, vector<1x8x128xf32>
    %934 = vector.shape_cast %933 : vector<1x8x128xf32> to vector<8x128xf32>
    %935 = arith.mulf %934, %3 : vector<8x128xf32>
    %c39_417 = arith.constant 39 : index
    %c0_418 = arith.constant 0 : index
    %c0_419 = arith.constant 0 : index
    %936 = vector.load %arg2[%c39_417, %c0_418, %c0_419] : memref<81x8x128xf32, #tpu.memory_space<vmem>>, vector<1x8x128xf32>
    %937 = vector.shape_cast %936 : vector<1x8x128xf32> to vector<8x128xf32>
    %938 = arith.mulf %937, %9 : vector<8x128xf32>
    %939 = arith.addf %935, %938 : vector<8x128xf32>
    %c66_420 = arith.constant 66 : index
    %c0_421 = arith.constant 0 : index
    %c0_422 = arith.constant 0 : index
    %940 = vector.load %arg2[%c66_420, %c0_421, %c0_422] : memref<81x8x128xf32, #tpu.memory_space<vmem>>, vector<1x8x128xf32>
    %941 = vector.shape_cast %940 : vector<1x8x128xf32> to vector<8x128xf32>
    %942 = arith.mulf %941, %15 : vector<8x128xf32>
    %943 = arith.addf %939, %942 : vector<8x128xf32>
    %c13_423 = arith.constant 13 : index
    %c0_424 = arith.constant 0 : index
    %c0_425 = arith.constant 0 : index
    %944 = vector.load %arg2[%c13_423, %c0_424, %c0_425] : memref<81x8x128xf32, #tpu.memory_space<vmem>>, vector<1x8x128xf32>
    %945 = vector.shape_cast %944 : vector<1x8x128xf32> to vector<8x128xf32>
    %946 = arith.mulf %945, %3 : vector<8x128xf32>
    %c40_426 = arith.constant 40 : index
    %c0_427 = arith.constant 0 : index
    %c0_428 = arith.constant 0 : index
    %947 = vector.load %arg2[%c40_426, %c0_427, %c0_428] : memref<81x8x128xf32, #tpu.memory_space<vmem>>, vector<1x8x128xf32>
    %948 = vector.shape_cast %947 : vector<1x8x128xf32> to vector<8x128xf32>
    %949 = arith.mulf %948, %9 : vector<8x128xf32>
    %950 = arith.addf %946, %949 : vector<8x128xf32>
    %c67_429 = arith.constant 67 : index
    %c0_430 = arith.constant 0 : index
    %c0_431 = arith.constant 0 : index
    %951 = vector.load %arg2[%c67_429, %c0_430, %c0_431] : memref<81x8x128xf32, #tpu.memory_space<vmem>>, vector<1x8x128xf32>
    %952 = vector.shape_cast %951 : vector<1x8x128xf32> to vector<8x128xf32>
    %953 = arith.mulf %952, %15 : vector<8x128xf32>
    %954 = arith.addf %950, %953 : vector<8x128xf32>
    %c14_432 = arith.constant 14 : index
    %c0_433 = arith.constant 0 : index
    %c0_434 = arith.constant 0 : index
    %955 = vector.load %arg2[%c14_432, %c0_433, %c0_434] : memref<81x8x128xf32, #tpu.memory_space<vmem>>, vector<1x8x128xf32>
    %956 = vector.shape_cast %955 : vector<1x8x128xf32> to vector<8x128xf32>
    %957 = arith.mulf %956, %3 : vector<8x128xf32>
    %c41_435 = arith.constant 41 : index
    %c0_436 = arith.constant 0 : index
    %c0_437 = arith.constant 0 : index
    %958 = vector.load %arg2[%c41_435, %c0_436, %c0_437] : memref<81x8x128xf32, #tpu.memory_space<vmem>>, vector<1x8x128xf32>
    %959 = vector.shape_cast %958 : vector<1x8x128xf32> to vector<8x128xf32>
    %960 = arith.mulf %959, %9 : vector<8x128xf32>
    %961 = arith.addf %957, %960 : vector<8x128xf32>
    %c68_438 = arith.constant 68 : index
    %c0_439 = arith.constant 0 : index
    %c0_440 = arith.constant 0 : index
    %962 = vector.load %arg2[%c68_438, %c0_439, %c0_440] : memref<81x8x128xf32, #tpu.memory_space<vmem>>, vector<1x8x128xf32>
    %963 = vector.shape_cast %962 : vector<1x8x128xf32> to vector<8x128xf32>
    %964 = arith.mulf %963, %15 : vector<8x128xf32>
    %965 = arith.addf %961, %964 : vector<8x128xf32>
    %c15_441 = arith.constant 15 : index
    %c0_442 = arith.constant 0 : index
    %c0_443 = arith.constant 0 : index
    %966 = vector.load %arg2[%c15_441, %c0_442, %c0_443] : memref<81x8x128xf32, #tpu.memory_space<vmem>>, vector<1x8x128xf32>
    %967 = vector.shape_cast %966 : vector<1x8x128xf32> to vector<8x128xf32>
    %968 = arith.mulf %967, %3 : vector<8x128xf32>
    %c42_444 = arith.constant 42 : index
    %c0_445 = arith.constant 0 : index
    %c0_446 = arith.constant 0 : index
    %969 = vector.load %arg2[%c42_444, %c0_445, %c0_446] : memref<81x8x128xf32, #tpu.memory_space<vmem>>, vector<1x8x128xf32>
    %970 = vector.shape_cast %969 : vector<1x8x128xf32> to vector<8x128xf32>
    %971 = arith.mulf %970, %9 : vector<8x128xf32>
    %972 = arith.addf %968, %971 : vector<8x128xf32>
    %c69_447 = arith.constant 69 : index
    %c0_448 = arith.constant 0 : index
    %c0_449 = arith.constant 0 : index
    %973 = vector.load %arg2[%c69_447, %c0_448, %c0_449] : memref<81x8x128xf32, #tpu.memory_space<vmem>>, vector<1x8x128xf32>
    %974 = vector.shape_cast %973 : vector<1x8x128xf32> to vector<8x128xf32>
    %975 = arith.mulf %974, %15 : vector<8x128xf32>
    %976 = arith.addf %972, %975 : vector<8x128xf32>
    %c16_450 = arith.constant 16 : index
    %c0_451 = arith.constant 0 : index
    %c0_452 = arith.constant 0 : index
    %977 = vector.load %arg2[%c16_450, %c0_451, %c0_452] : memref<81x8x128xf32, #tpu.memory_space<vmem>>, vector<1x8x128xf32>
    %978 = vector.shape_cast %977 : vector<1x8x128xf32> to vector<8x128xf32>
    %979 = arith.mulf %978, %3 : vector<8x128xf32>
    %c43_453 = arith.constant 43 : index
    %c0_454 = arith.constant 0 : index
    %c0_455 = arith.constant 0 : index
    %980 = vector.load %arg2[%c43_453, %c0_454, %c0_455] : memref<81x8x128xf32, #tpu.memory_space<vmem>>, vector<1x8x128xf32>
    %981 = vector.shape_cast %980 : vector<1x8x128xf32> to vector<8x128xf32>
    %982 = arith.mulf %981, %9 : vector<8x128xf32>
    %983 = arith.addf %979, %982 : vector<8x128xf32>
    %c70_456 = arith.constant 70 : index
    %c0_457 = arith.constant 0 : index
    %c0_458 = arith.constant 0 : index
    %984 = vector.load %arg2[%c70_456, %c0_457, %c0_458] : memref<81x8x128xf32, #tpu.memory_space<vmem>>, vector<1x8x128xf32>
    %985 = vector.shape_cast %984 : vector<1x8x128xf32> to vector<8x128xf32>
    %986 = arith.mulf %985, %15 : vector<8x128xf32>
    %987 = arith.addf %983, %986 : vector<8x128xf32>
    %c17_459 = arith.constant 17 : index
    %c0_460 = arith.constant 0 : index
    %c0_461 = arith.constant 0 : index
    %988 = vector.load %arg2[%c17_459, %c0_460, %c0_461] : memref<81x8x128xf32, #tpu.memory_space<vmem>>, vector<1x8x128xf32>
    %989 = vector.shape_cast %988 : vector<1x8x128xf32> to vector<8x128xf32>
    %990 = arith.mulf %989, %3 : vector<8x128xf32>
    %c44_462 = arith.constant 44 : index
    %c0_463 = arith.constant 0 : index
    %c0_464 = arith.constant 0 : index
    %991 = vector.load %arg2[%c44_462, %c0_463, %c0_464] : memref<81x8x128xf32, #tpu.memory_space<vmem>>, vector<1x8x128xf32>
    %992 = vector.shape_cast %991 : vector<1x8x128xf32> to vector<8x128xf32>
    %993 = arith.mulf %992, %9 : vector<8x128xf32>
    %994 = arith.addf %990, %993 : vector<8x128xf32>
    %c71_465 = arith.constant 71 : index
    %c0_466 = arith.constant 0 : index
    %c0_467 = arith.constant 0 : index
    %995 = vector.load %arg2[%c71_465, %c0_466, %c0_467] : memref<81x8x128xf32, #tpu.memory_space<vmem>>, vector<1x8x128xf32>
    %996 = vector.shape_cast %995 : vector<1x8x128xf32> to vector<8x128xf32>
    %997 = arith.mulf %996, %15 : vector<8x128xf32>
    %998 = arith.addf %994, %997 : vector<8x128xf32>
    %c18_468 = arith.constant 18 : index
    %c0_469 = arith.constant 0 : index
    %c0_470 = arith.constant 0 : index
    %999 = vector.load %arg2[%c18_468, %c0_469, %c0_470] : memref<81x8x128xf32, #tpu.memory_space<vmem>>, vector<1x8x128xf32>
    %1000 = vector.shape_cast %999 : vector<1x8x128xf32> to vector<8x128xf32>
    %1001 = arith.mulf %1000, %3 : vector<8x128xf32>
    %c45_471 = arith.constant 45 : index
    %c0_472 = arith.constant 0 : index
    %c0_473 = arith.constant 0 : index
    %1002 = vector.load %arg2[%c45_471, %c0_472, %c0_473] : memref<81x8x128xf32, #tpu.memory_space<vmem>>, vector<1x8x128xf32>
    %1003 = vector.shape_cast %1002 : vector<1x8x128xf32> to vector<8x128xf32>
    %1004 = arith.mulf %1003, %9 : vector<8x128xf32>
    %1005 = arith.addf %1001, %1004 : vector<8x128xf32>
    %c72_474 = arith.constant 72 : index
    %c0_475 = arith.constant 0 : index
    %c0_476 = arith.constant 0 : index
    %1006 = vector.load %arg2[%c72_474, %c0_475, %c0_476] : memref<81x8x128xf32, #tpu.memory_space<vmem>>, vector<1x8x128xf32>
    %1007 = vector.shape_cast %1006 : vector<1x8x128xf32> to vector<8x128xf32>
    %1008 = arith.mulf %1007, %15 : vector<8x128xf32>
    %1009 = arith.addf %1005, %1008 : vector<8x128xf32>
    %c19_477 = arith.constant 19 : index
    %c0_478 = arith.constant 0 : index
    %c0_479 = arith.constant 0 : index
    %1010 = vector.load %arg2[%c19_477, %c0_478, %c0_479] : memref<81x8x128xf32, #tpu.memory_space<vmem>>, vector<1x8x128xf32>
    %1011 = vector.shape_cast %1010 : vector<1x8x128xf32> to vector<8x128xf32>
    %1012 = arith.mulf %1011, %3 : vector<8x128xf32>
    %c46_480 = arith.constant 46 : index
    %c0_481 = arith.constant 0 : index
    %c0_482 = arith.constant 0 : index
    %1013 = vector.load %arg2[%c46_480, %c0_481, %c0_482] : memref<81x8x128xf32, #tpu.memory_space<vmem>>, vector<1x8x128xf32>
    %1014 = vector.shape_cast %1013 : vector<1x8x128xf32> to vector<8x128xf32>
    %1015 = arith.mulf %1014, %9 : vector<8x128xf32>
    %1016 = arith.addf %1012, %1015 : vector<8x128xf32>
    %c73_483 = arith.constant 73 : index
    %c0_484 = arith.constant 0 : index
    %c0_485 = arith.constant 0 : index
    %1017 = vector.load %arg2[%c73_483, %c0_484, %c0_485] : memref<81x8x128xf32, #tpu.memory_space<vmem>>, vector<1x8x128xf32>
    %1018 = vector.shape_cast %1017 : vector<1x8x128xf32> to vector<8x128xf32>
    %1019 = arith.mulf %1018, %15 : vector<8x128xf32>
    %1020 = arith.addf %1016, %1019 : vector<8x128xf32>
    %c20_486 = arith.constant 20 : index
    %c0_487 = arith.constant 0 : index
    %c0_488 = arith.constant 0 : index
    %1021 = vector.load %arg2[%c20_486, %c0_487, %c0_488] : memref<81x8x128xf32, #tpu.memory_space<vmem>>, vector<1x8x128xf32>
    %1022 = vector.shape_cast %1021 : vector<1x8x128xf32> to vector<8x128xf32>
    %1023 = arith.mulf %1022, %3 : vector<8x128xf32>
    %c47_489 = arith.constant 47 : index
    %c0_490 = arith.constant 0 : index
    %c0_491 = arith.constant 0 : index
    %1024 = vector.load %arg2[%c47_489, %c0_490, %c0_491] : memref<81x8x128xf32, #tpu.memory_space<vmem>>, vector<1x8x128xf32>
    %1025 = vector.shape_cast %1024 : vector<1x8x128xf32> to vector<8x128xf32>
    %1026 = arith.mulf %1025, %9 : vector<8x128xf32>
    %1027 = arith.addf %1023, %1026 : vector<8x128xf32>
    %c74_492 = arith.constant 74 : index
    %c0_493 = arith.constant 0 : index
    %c0_494 = arith.constant 0 : index
    %1028 = vector.load %arg2[%c74_492, %c0_493, %c0_494] : memref<81x8x128xf32, #tpu.memory_space<vmem>>, vector<1x8x128xf32>
    %1029 = vector.shape_cast %1028 : vector<1x8x128xf32> to vector<8x128xf32>
    %1030 = arith.mulf %1029, %15 : vector<8x128xf32>
    %1031 = arith.addf %1027, %1030 : vector<8x128xf32>
    %c21_495 = arith.constant 21 : index
    %c0_496 = arith.constant 0 : index
    %c0_497 = arith.constant 0 : index
    %1032 = vector.load %arg2[%c21_495, %c0_496, %c0_497] : memref<81x8x128xf32, #tpu.memory_space<vmem>>, vector<1x8x128xf32>
    %1033 = vector.shape_cast %1032 : vector<1x8x128xf32> to vector<8x128xf32>
    %1034 = arith.mulf %1033, %3 : vector<8x128xf32>
    %c48_498 = arith.constant 48 : index
    %c0_499 = arith.constant 0 : index
    %c0_500 = arith.constant 0 : index
    %1035 = vector.load %arg2[%c48_498, %c0_499, %c0_500] : memref<81x8x128xf32, #tpu.memory_space<vmem>>, vector<1x8x128xf32>
    %1036 = vector.shape_cast %1035 : vector<1x8x128xf32> to vector<8x128xf32>
    %1037 = arith.mulf %1036, %9 : vector<8x128xf32>
    %1038 = arith.addf %1034, %1037 : vector<8x128xf32>
    %c75_501 = arith.constant 75 : index
    %c0_502 = arith.constant 0 : index
    %c0_503 = arith.constant 0 : index
    %1039 = vector.load %arg2[%c75_501, %c0_502, %c0_503] : memref<81x8x128xf32, #tpu.memory_space<vmem>>, vector<1x8x128xf32>
    %1040 = vector.shape_cast %1039 : vector<1x8x128xf32> to vector<8x128xf32>
    %1041 = arith.mulf %1040, %15 : vector<8x128xf32>
    %1042 = arith.addf %1038, %1041 : vector<8x128xf32>
    %c22_504 = arith.constant 22 : index
    %c0_505 = arith.constant 0 : index
    %c0_506 = arith.constant 0 : index
    %1043 = vector.load %arg2[%c22_504, %c0_505, %c0_506] : memref<81x8x128xf32, #tpu.memory_space<vmem>>, vector<1x8x128xf32>
    %1044 = vector.shape_cast %1043 : vector<1x8x128xf32> to vector<8x128xf32>
    %1045 = arith.mulf %1044, %3 : vector<8x128xf32>
    %c49_507 = arith.constant 49 : index
    %c0_508 = arith.constant 0 : index
    %c0_509 = arith.constant 0 : index
    %1046 = vector.load %arg2[%c49_507, %c0_508, %c0_509] : memref<81x8x128xf32, #tpu.memory_space<vmem>>, vector<1x8x128xf32>
    %1047 = vector.shape_cast %1046 : vector<1x8x128xf32> to vector<8x128xf32>
    %1048 = arith.mulf %1047, %9 : vector<8x128xf32>
    %1049 = arith.addf %1045, %1048 : vector<8x128xf32>
    %c76_510 = arith.constant 76 : index
    %c0_511 = arith.constant 0 : index
    %c0_512 = arith.constant 0 : index
    %1050 = vector.load %arg2[%c76_510, %c0_511, %c0_512] : memref<81x8x128xf32, #tpu.memory_space<vmem>>, vector<1x8x128xf32>
    %1051 = vector.shape_cast %1050 : vector<1x8x128xf32> to vector<8x128xf32>
    %1052 = arith.mulf %1051, %15 : vector<8x128xf32>
    %1053 = arith.addf %1049, %1052 : vector<8x128xf32>
    %c23_513 = arith.constant 23 : index
    %c0_514 = arith.constant 0 : index
    %c0_515 = arith.constant 0 : index
    %1054 = vector.load %arg2[%c23_513, %c0_514, %c0_515] : memref<81x8x128xf32, #tpu.memory_space<vmem>>, vector<1x8x128xf32>
    %1055 = vector.shape_cast %1054 : vector<1x8x128xf32> to vector<8x128xf32>
    %1056 = arith.mulf %1055, %3 : vector<8x128xf32>
    %c50_516 = arith.constant 50 : index
    %c0_517 = arith.constant 0 : index
    %c0_518 = arith.constant 0 : index
    %1057 = vector.load %arg2[%c50_516, %c0_517, %c0_518] : memref<81x8x128xf32, #tpu.memory_space<vmem>>, vector<1x8x128xf32>
    %1058 = vector.shape_cast %1057 : vector<1x8x128xf32> to vector<8x128xf32>
    %1059 = arith.mulf %1058, %9 : vector<8x128xf32>
    %1060 = arith.addf %1056, %1059 : vector<8x128xf32>
    %c77_519 = arith.constant 77 : index
    %c0_520 = arith.constant 0 : index
    %c0_521 = arith.constant 0 : index
    %1061 = vector.load %arg2[%c77_519, %c0_520, %c0_521] : memref<81x8x128xf32, #tpu.memory_space<vmem>>, vector<1x8x128xf32>
    %1062 = vector.shape_cast %1061 : vector<1x8x128xf32> to vector<8x128xf32>
    %1063 = arith.mulf %1062, %15 : vector<8x128xf32>
    %1064 = arith.addf %1060, %1063 : vector<8x128xf32>
    %c24_522 = arith.constant 24 : index
    %c0_523 = arith.constant 0 : index
    %c0_524 = arith.constant 0 : index
    %1065 = vector.load %arg2[%c24_522, %c0_523, %c0_524] : memref<81x8x128xf32, #tpu.memory_space<vmem>>, vector<1x8x128xf32>
    %1066 = vector.shape_cast %1065 : vector<1x8x128xf32> to vector<8x128xf32>
    %1067 = arith.mulf %1066, %3 : vector<8x128xf32>
    %c51_525 = arith.constant 51 : index
    %c0_526 = arith.constant 0 : index
    %c0_527 = arith.constant 0 : index
    %1068 = vector.load %arg2[%c51_525, %c0_526, %c0_527] : memref<81x8x128xf32, #tpu.memory_space<vmem>>, vector<1x8x128xf32>
    %1069 = vector.shape_cast %1068 : vector<1x8x128xf32> to vector<8x128xf32>
    %1070 = arith.mulf %1069, %9 : vector<8x128xf32>
    %1071 = arith.addf %1067, %1070 : vector<8x128xf32>
    %c78_528 = arith.constant 78 : index
    %c0_529 = arith.constant 0 : index
    %c0_530 = arith.constant 0 : index
    %1072 = vector.load %arg2[%c78_528, %c0_529, %c0_530] : memref<81x8x128xf32, #tpu.memory_space<vmem>>, vector<1x8x128xf32>
    %1073 = vector.shape_cast %1072 : vector<1x8x128xf32> to vector<8x128xf32>
    %1074 = arith.mulf %1073, %15 : vector<8x128xf32>
    %1075 = arith.addf %1071, %1074 : vector<8x128xf32>
    %c25_531 = arith.constant 25 : index
    %c0_532 = arith.constant 0 : index
    %c0_533 = arith.constant 0 : index
    %1076 = vector.load %arg2[%c25_531, %c0_532, %c0_533] : memref<81x8x128xf32, #tpu.memory_space<vmem>>, vector<1x8x128xf32>
    %1077 = vector.shape_cast %1076 : vector<1x8x128xf32> to vector<8x128xf32>
    %1078 = arith.mulf %1077, %3 : vector<8x128xf32>
    %c52_534 = arith.constant 52 : index
    %c0_535 = arith.constant 0 : index
    %c0_536 = arith.constant 0 : index
    %1079 = vector.load %arg2[%c52_534, %c0_535, %c0_536] : memref<81x8x128xf32, #tpu.memory_space<vmem>>, vector<1x8x128xf32>
    %1080 = vector.shape_cast %1079 : vector<1x8x128xf32> to vector<8x128xf32>
    %1081 = arith.mulf %1080, %9 : vector<8x128xf32>
    %1082 = arith.addf %1078, %1081 : vector<8x128xf32>
    %c79_537 = arith.constant 79 : index
    %c0_538 = arith.constant 0 : index
    %c0_539 = arith.constant 0 : index
    %1083 = vector.load %arg2[%c79_537, %c0_538, %c0_539] : memref<81x8x128xf32, #tpu.memory_space<vmem>>, vector<1x8x128xf32>
    %1084 = vector.shape_cast %1083 : vector<1x8x128xf32> to vector<8x128xf32>
    %1085 = arith.mulf %1084, %15 : vector<8x128xf32>
    %1086 = arith.addf %1082, %1085 : vector<8x128xf32>
    %c26_540 = arith.constant 26 : index
    %c0_541 = arith.constant 0 : index
    %c0_542 = arith.constant 0 : index
    %1087 = vector.load %arg2[%c26_540, %c0_541, %c0_542] : memref<81x8x128xf32, #tpu.memory_space<vmem>>, vector<1x8x128xf32>
    %1088 = vector.shape_cast %1087 : vector<1x8x128xf32> to vector<8x128xf32>
    %1089 = arith.mulf %1088, %3 : vector<8x128xf32>
    %c53_543 = arith.constant 53 : index
    %c0_544 = arith.constant 0 : index
    %c0_545 = arith.constant 0 : index
    %1090 = vector.load %arg2[%c53_543, %c0_544, %c0_545] : memref<81x8x128xf32, #tpu.memory_space<vmem>>, vector<1x8x128xf32>
    %1091 = vector.shape_cast %1090 : vector<1x8x128xf32> to vector<8x128xf32>
    %1092 = arith.mulf %1091, %9 : vector<8x128xf32>
    %1093 = arith.addf %1089, %1092 : vector<8x128xf32>
    %c80_546 = arith.constant 80 : index
    %c0_547 = arith.constant 0 : index
    %c0_548 = arith.constant 0 : index
    %1094 = vector.load %arg2[%c80_546, %c0_547, %c0_548] : memref<81x8x128xf32, #tpu.memory_space<vmem>>, vector<1x8x128xf32>
    %1095 = vector.shape_cast %1094 : vector<1x8x128xf32> to vector<8x128xf32>
    %1096 = arith.mulf %1095, %15 : vector<8x128xf32>
    %1097 = arith.addf %1093, %1096 : vector<8x128xf32>
    %1098 = arith.mulf %1, %811 : vector<8x128xf32>
    %1099 = arith.mulf %7, %910 : vector<8x128xf32>
    %1100 = arith.addf %1098, %1099 : vector<8x128xf32>
    %1101 = arith.mulf %13, %1009 : vector<8x128xf32>
    %1102 = arith.addf %1100, %1101 : vector<8x128xf32>
    %1103 = arith.mulf %1, %822 : vector<8x128xf32>
    %1104 = arith.mulf %7, %921 : vector<8x128xf32>
    %1105 = arith.addf %1103, %1104 : vector<8x128xf32>
    %1106 = arith.mulf %13, %1020 : vector<8x128xf32>
    %1107 = arith.addf %1105, %1106 : vector<8x128xf32>
    %1108 = arith.mulf %1, %833 : vector<8x128xf32>
    %1109 = arith.mulf %7, %932 : vector<8x128xf32>
    %1110 = arith.addf %1108, %1109 : vector<8x128xf32>
    %1111 = arith.mulf %13, %1031 : vector<8x128xf32>
    %1112 = arith.addf %1110, %1111 : vector<8x128xf32>
    %1113 = arith.mulf %1, %844 : vector<8x128xf32>
    %1114 = arith.mulf %7, %943 : vector<8x128xf32>
    %1115 = arith.addf %1113, %1114 : vector<8x128xf32>
    %1116 = arith.mulf %13, %1042 : vector<8x128xf32>
    %1117 = arith.addf %1115, %1116 : vector<8x128xf32>
    %1118 = arith.mulf %1, %855 : vector<8x128xf32>
    %1119 = arith.mulf %7, %954 : vector<8x128xf32>
    %1120 = arith.addf %1118, %1119 : vector<8x128xf32>
    %1121 = arith.mulf %13, %1053 : vector<8x128xf32>
    %1122 = arith.addf %1120, %1121 : vector<8x128xf32>
    %1123 = arith.mulf %1, %866 : vector<8x128xf32>
    %1124 = arith.mulf %7, %965 : vector<8x128xf32>
    %1125 = arith.addf %1123, %1124 : vector<8x128xf32>
    %1126 = arith.mulf %13, %1064 : vector<8x128xf32>
    %1127 = arith.addf %1125, %1126 : vector<8x128xf32>
    %1128 = arith.mulf %1, %877 : vector<8x128xf32>
    %1129 = arith.mulf %7, %976 : vector<8x128xf32>
    %1130 = arith.addf %1128, %1129 : vector<8x128xf32>
    %1131 = arith.mulf %13, %1075 : vector<8x128xf32>
    %1132 = arith.addf %1130, %1131 : vector<8x128xf32>
    %1133 = arith.mulf %1, %888 : vector<8x128xf32>
    %1134 = arith.mulf %7, %987 : vector<8x128xf32>
    %1135 = arith.addf %1133, %1134 : vector<8x128xf32>
    %1136 = arith.mulf %13, %1086 : vector<8x128xf32>
    %1137 = arith.addf %1135, %1136 : vector<8x128xf32>
    %1138 = arith.mulf %1, %899 : vector<8x128xf32>
    %1139 = arith.mulf %7, %998 : vector<8x128xf32>
    %1140 = arith.addf %1138, %1139 : vector<8x128xf32>
    %1141 = arith.mulf %13, %1097 : vector<8x128xf32>
    %1142 = arith.addf %1140, %1141 : vector<8x128xf32>
    %1143 = arith.mulf %1, %1102 : vector<8x128xf32>
    %1144 = arith.mulf %7, %1117 : vector<8x128xf32>
    %1145 = arith.addf %1143, %1144 : vector<8x128xf32>
    %1146 = arith.mulf %13, %1132 : vector<8x128xf32>
    %1147 = arith.addf %1145, %1146 : vector<8x128xf32>
    %1148 = arith.mulf %1, %1107 : vector<8x128xf32>
    %1149 = arith.mulf %7, %1122 : vector<8x128xf32>
    %1150 = arith.addf %1148, %1149 : vector<8x128xf32>
    %1151 = arith.mulf %13, %1137 : vector<8x128xf32>
    %1152 = arith.addf %1150, %1151 : vector<8x128xf32>
    %1153 = arith.mulf %1, %1112 : vector<8x128xf32>
    %1154 = arith.mulf %7, %1127 : vector<8x128xf32>
    %1155 = arith.addf %1153, %1154 : vector<8x128xf32>
    %1156 = arith.mulf %13, %1142 : vector<8x128xf32>
    %1157 = arith.addf %1155, %1156 : vector<8x128xf32>
    %1158 = arith.mulf %1, %1147 : vector<8x128xf32>
    %1159 = arith.mulf %7, %1152 : vector<8x128xf32>
    %1160 = arith.addf %1158, %1159 : vector<8x128xf32>
    %1161 = arith.mulf %13, %1157 : vector<8x128xf32>
    %1162 = arith.addf %1160, %1161 : vector<8x128xf32>
    %c0_549 = arith.constant 0 : index
    %c27_550 = arith.constant 27 : index
    %c0_551 = arith.constant 0 : index
    %c0_552 = arith.constant 0 : index
    %1163 = vector.load %arg4[%c0_549, %c27_550, %c0_551, %c0_552] : memref<1x81x8x128xf32, #tpu.memory_space<vmem>>, vector<1x1x8x128xf32>
    %1164 = vector.shape_cast %1163 : vector<1x1x8x128xf32> to vector<8x128xf32>
    %1165 = vector.shape_cast %1162 : vector<8x128xf32> to vector<1x1x8x128xf32>
    tpu.vector_store %arg4[%c0_549, %c27_550, %c0_551, %c0_552], %1165 {strides = array<i32>} : memref<1x81x8x128xf32, #tpu.memory_space<vmem>>, vector<1x1x8x128xf32>,
    %1166 = arith.mulf %3, %1147 : vector<8x128xf32>
    %1167 = arith.mulf %9, %1152 : vector<8x128xf32>
    %1168 = arith.addf %1166, %1167 : vector<8x128xf32>
    %1169 = arith.mulf %15, %1157 : vector<8x128xf32>
    %1170 = arith.addf %1168, %1169 : vector<8x128xf32>
    %c0_553 = arith.constant 0 : index
    %c28_554 = arith.constant 28 : index
    %c0_555 = arith.constant 0 : index
    %c0_556 = arith.constant 0 : index
    %1171 = vector.load %arg4[%c0_553, %c28_554, %c0_555, %c0_556] : memref<1x81x8x128xf32, #tpu.memory_space<vmem>>, vector<1x1x8x128xf32>
    %1172 = vector.shape_cast %1171 : vector<1x1x8x128xf32> to vector<8x128xf32>
    %1173 = vector.shape_cast %1170 : vector<8x128xf32> to vector<1x1x8x128xf32>
    tpu.vector_store %arg4[%c0_553, %c28_554, %c0_555, %c0_556], %1173 {strides = array<i32>} : memref<1x81x8x128xf32, #tpu.memory_space<vmem>>, vector<1x1x8x128xf32>,
    %1174 = arith.mulf %5, %1147 : vector<8x128xf32>
    %1175 = arith.mulf %11, %1152 : vector<8x128xf32>
    %1176 = arith.addf %1174, %1175 : vector<8x128xf32>
    %1177 = arith.mulf %17, %1157 : vector<8x128xf32>
    %1178 = arith.addf %1176, %1177 : vector<8x128xf32>
    %c0_557 = arith.constant 0 : index
    %c29_558 = arith.constant 29 : index
    %c0_559 = arith.constant 0 : index
    %c0_560 = arith.constant 0 : index
    %1179 = vector.load %arg4[%c0_557, %c29_558, %c0_559, %c0_560] : memref<1x81x8x128xf32, #tpu.memory_space<vmem>>, vector<1x1x8x128xf32>
    %1180 = vector.shape_cast %1179 : vector<1x1x8x128xf32> to vector<8x128xf32>
    %1181 = vector.shape_cast %1178 : vector<8x128xf32> to vector<1x1x8x128xf32>
    tpu.vector_store %arg4[%c0_557, %c29_558, %c0_559, %c0_560], %1181 {strides = array<i32>} : memref<1x81x8x128xf32, #tpu.memory_space<vmem>>, vector<1x1x8x128xf32>,
    %1182 = arith.mulf %3, %1102 : vector<8x128xf32>
    %1183 = arith.mulf %9, %1117 : vector<8x128xf32>
    %1184 = arith.addf %1182, %1183 : vector<8x128xf32>
    %1185 = arith.mulf %15, %1132 : vector<8x128xf32>
    %1186 = arith.addf %1184, %1185 : vector<8x128xf32>
    %1187 = arith.mulf %3, %1107 : vector<8x128xf32>
    %1188 = arith.mulf %9, %1122 : vector<8x128xf32>
    %1189 = arith.addf %1187, %1188 : vector<8x128xf32>
    %1190 = arith.mulf %15, %1137 : vector<8x128xf32>
    %1191 = arith.addf %1189, %1190 : vector<8x128xf32>
    %1192 = arith.mulf %3, %1112 : vector<8x128xf32>
    %1193 = arith.mulf %9, %1127 : vector<8x128xf32>
    %1194 = arith.addf %1192, %1193 : vector<8x128xf32>
    %1195 = arith.mulf %15, %1142 : vector<8x128xf32>
    %1196 = arith.addf %1194, %1195 : vector<8x128xf32>
    %1197 = arith.mulf %1, %1186 : vector<8x128xf32>
    %1198 = arith.mulf %7, %1191 : vector<8x128xf32>
    %1199 = arith.addf %1197, %1198 : vector<8x128xf32>
    %1200 = arith.mulf %13, %1196 : vector<8x128xf32>
    %1201 = arith.addf %1199, %1200 : vector<8x128xf32>
    %c0_561 = arith.constant 0 : index
    %c30_562 = arith.constant 30 : index
    %c0_563 = arith.constant 0 : index
    %c0_564 = arith.constant 0 : index
    %1202 = vector.load %arg4[%c0_561, %c30_562, %c0_563, %c0_564] : memref<1x81x8x128xf32, #tpu.memory_space<vmem>>, vector<1x1x8x128xf32>
    %1203 = vector.shape_cast %1202 : vector<1x1x8x128xf32> to vector<8x128xf32>
    %1204 = vector.shape_cast %1201 : vector<8x128xf32> to vector<1x1x8x128xf32>
    tpu.vector_store %arg4[%c0_561, %c30_562, %c0_563, %c0_564], %1204 {strides = array<i32>} : memref<1x81x8x128xf32, #tpu.memory_space<vmem>>, vector<1x1x8x128xf32>,
    %1205 = arith.mulf %3, %1186 : vector<8x128xf32>
    %1206 = arith.mulf %9, %1191 : vector<8x128xf32>
    %1207 = arith.addf %1205, %1206 : vector<8x128xf32>
    %1208 = arith.mulf %15, %1196 : vector<8x128xf32>
    %1209 = arith.addf %1207, %1208 : vector<8x128xf32>
    %c0_565 = arith.constant 0 : index
    %c31_566 = arith.constant 31 : index
    %c0_567 = arith.constant 0 : index
    %c0_568 = arith.constant 0 : index
    %1210 = vector.load %arg4[%c0_565, %c31_566, %c0_567, %c0_568] : memref<1x81x8x128xf32, #tpu.memory_space<vmem>>, vector<1x1x8x128xf32>
    %1211 = vector.shape_cast %1210 : vector<1x1x8x128xf32> to vector<8x128xf32>
    %1212 = vector.shape_cast %1209 : vector<8x128xf32> to vector<1x1x8x128xf32>
    tpu.vector_store %arg4[%c0_565, %c31_566, %c0_567, %c0_568], %1212 {strides = array<i32>} : memref<1x81x8x128xf32, #tpu.memory_space<vmem>>, vector<1x1x8x128xf32>,
    %1213 = arith.mulf %5, %1186 : vector<8x128xf32>
    %1214 = arith.mulf %11, %1191 : vector<8x128xf32>
    %1215 = arith.addf %1213, %1214 : vector<8x128xf32>
    %1216 = arith.mulf %17, %1196 : vector<8x128xf32>
    %1217 = arith.addf %1215, %1216 : vector<8x128xf32>
    %c0_569 = arith.constant 0 : index
    %c32_570 = arith.constant 32 : index
    %c0_571 = arith.constant 0 : index
    %c0_572 = arith.constant 0 : index
    %1218 = vector.load %arg4[%c0_569, %c32_570, %c0_571, %c0_572] : memref<1x81x8x128xf32, #tpu.memory_space<vmem>>, vector<1x1x8x128xf32>
    %1219 = vector.shape_cast %1218 : vector<1x1x8x128xf32> to vector<8x128xf32>
    %1220 = vector.shape_cast %1217 : vector<8x128xf32> to vector<1x1x8x128xf32>
    tpu.vector_store %arg4[%c0_569, %c32_570, %c0_571, %c0_572], %1220 {strides = array<i32>} : memref<1x81x8x128xf32, #tpu.memory_space<vmem>>, vector<1x1x8x128xf32>,
    %1221 = arith.mulf %5, %1102 : vector<8x128xf32>
    %1222 = arith.mulf %11, %1117 : vector<8x128xf32>
    %1223 = arith.addf %1221, %1222 : vector<8x128xf32>
    %1224 = arith.mulf %17, %1132 : vector<8x128xf32>
    %1225 = arith.addf %1223, %1224 : vector<8x128xf32>
    %1226 = arith.mulf %5, %1107 : vector<8x128xf32>
    %1227 = arith.mulf %11, %1122 : vector<8x128xf32>
    %1228 = arith.addf %1226, %1227 : vector<8x128xf32>
    %1229 = arith.mulf %17, %1137 : vector<8x128xf32>
    %1230 = arith.addf %1228, %1229 : vector<8x128xf32>
    %1231 = arith.mulf %5, %1112 : vector<8x128xf32>
    %1232 = arith.mulf %11, %1127 : vector<8x128xf32>
    %1233 = arith.addf %1231, %1232 : vector<8x128xf32>
    %1234 = arith.mulf %17, %1142 : vector<8x128xf32>
    %1235 = arith.addf %1233, %1234 : vector<8x128xf32>
    %1236 = arith.mulf %1, %1225 : vector<8x128xf32>
    %1237 = arith.mulf %7, %1230 : vector<8x128xf32>
    %1238 = arith.addf %1236, %1237 : vector<8x128xf32>
    %1239 = arith.mulf %13, %1235 : vector<8x128xf32>
    %1240 = arith.addf %1238, %1239 : vector<8x128xf32>
    %c0_573 = arith.constant 0 : index
    %c33_574 = arith.constant 33 : index
    %c0_575 = arith.constant 0 : index
    %c0_576 = arith.constant 0 : index
    %1241 = vector.load %arg4[%c0_573, %c33_574, %c0_575, %c0_576] : memref<1x81x8x128xf32, #tpu.memory_space<vmem>>, vector<1x1x8x128xf32>
    %1242 = vector.shape_cast %1241 : vector<1x1x8x128xf32> to vector<8x128xf32>
    %1243 = vector.shape_cast %1240 : vector<8x128xf32> to vector<1x1x8x128xf32>
    tpu.vector_store %arg4[%c0_573, %c33_574, %c0_575, %c0_576], %1243 {strides = array<i32>} : memref<1x81x8x128xf32, #tpu.memory_space<vmem>>, vector<1x1x8x128xf32>,
    %1244 = arith.mulf %3, %1225 : vector<8x128xf32>
    %1245 = arith.mulf %9, %1230 : vector<8x128xf32>
    %1246 = arith.addf %1244, %1245 : vector<8x128xf32>
    %1247 = arith.mulf %15, %1235 : vector<8x128xf32>
    %1248 = arith.addf %1246, %1247 : vector<8x128xf32>
    %c0_577 = arith.constant 0 : index
    %c34_578 = arith.constant 34 : index
    %c0_579 = arith.constant 0 : index
    %c0_580 = arith.constant 0 : index
    %1249 = vector.load %arg4[%c0_577, %c34_578, %c0_579, %c0_580] : memref<1x81x8x128xf32, #tpu.memory_space<vmem>>, vector<1x1x8x128xf32>
    %1250 = vector.shape_cast %1249 : vector<1x1x8x128xf32> to vector<8x128xf32>
    %1251 = vector.shape_cast %1248 : vector<8x128xf32> to vector<1x1x8x128xf32>
    tpu.vector_store %arg4[%c0_577, %c34_578, %c0_579, %c0_580], %1251 {strides = array<i32>} : memref<1x81x8x128xf32, #tpu.memory_space<vmem>>, vector<1x1x8x128xf32>,
    %1252 = arith.mulf %5, %1225 : vector<8x128xf32>
    %1253 = arith.mulf %11, %1230 : vector<8x128xf32>
    %1254 = arith.addf %1252, %1253 : vector<8x128xf32>
    %1255 = arith.mulf %17, %1235 : vector<8x128xf32>
    %1256 = arith.addf %1254, %1255 : vector<8x128xf32>
    %c0_581 = arith.constant 0 : index
    %c35_582 = arith.constant 35 : index
    %c0_583 = arith.constant 0 : index
    %c0_584 = arith.constant 0 : index
    %1257 = vector.load %arg4[%c0_581, %c35_582, %c0_583, %c0_584] : memref<1x81x8x128xf32, #tpu.memory_space<vmem>>, vector<1x1x8x128xf32>
    %1258 = vector.shape_cast %1257 : vector<1x1x8x128xf32> to vector<8x128xf32>
    %1259 = vector.shape_cast %1256 : vector<8x128xf32> to vector<1x1x8x128xf32>
    tpu.vector_store %arg4[%c0_581, %c35_582, %c0_583, %c0_584], %1259 {strides = array<i32>} : memref<1x81x8x128xf32, #tpu.memory_space<vmem>>, vector<1x1x8x128xf32>,
    %1260 = arith.mulf %3, %811 : vector<8x128xf32>
    %1261 = arith.mulf %9, %910 : vector<8x128xf32>
    %1262 = arith.addf %1260, %1261 : vector<8x128xf32>
    %1263 = arith.mulf %15, %1009 : vector<8x128xf32>
    %1264 = arith.addf %1262, %1263 : vector<8x128xf32>
    %1265 = arith.mulf %3, %822 : vector<8x128xf32>
    %1266 = arith.mulf %9, %921 : vector<8x128xf32>
    %1267 = arith.addf %1265, %1266 : vector<8x128xf32>
    %1268 = arith.mulf %15, %1020 : vector<8x128xf32>
    %1269 = arith.addf %1267, %1268 : vector<8x128xf32>
    %1270 = arith.mulf %3, %833 : vector<8x128xf32>
    %1271 = arith.mulf %9, %932 : vector<8x128xf32>
    %1272 = arith.addf %1270, %1271 : vector<8x128xf32>
    %1273 = arith.mulf %15, %1031 : vector<8x128xf32>
    %1274 = arith.addf %1272, %1273 : vector<8x128xf32>
    %1275 = arith.mulf %3, %844 : vector<8x128xf32>
    %1276 = arith.mulf %9, %943 : vector<8x128xf32>
    %1277 = arith.addf %1275, %1276 : vector<8x128xf32>
    %1278 = arith.mulf %15, %1042 : vector<8x128xf32>
    %1279 = arith.addf %1277, %1278 : vector<8x128xf32>
    %1280 = arith.mulf %3, %855 : vector<8x128xf32>
    %1281 = arith.mulf %9, %954 : vector<8x128xf32>
    %1282 = arith.addf %1280, %1281 : vector<8x128xf32>
    %1283 = arith.mulf %15, %1053 : vector<8x128xf32>
    %1284 = arith.addf %1282, %1283 : vector<8x128xf32>
    %1285 = arith.mulf %3, %866 : vector<8x128xf32>
    %1286 = arith.mulf %9, %965 : vector<8x128xf32>
    %1287 = arith.addf %1285, %1286 : vector<8x128xf32>
    %1288 = arith.mulf %15, %1064 : vector<8x128xf32>
    %1289 = arith.addf %1287, %1288 : vector<8x128xf32>
    %1290 = arith.mulf %3, %877 : vector<8x128xf32>
    %1291 = arith.mulf %9, %976 : vector<8x128xf32>
    %1292 = arith.addf %1290, %1291 : vector<8x128xf32>
    %1293 = arith.mulf %15, %1075 : vector<8x128xf32>
    %1294 = arith.addf %1292, %1293 : vector<8x128xf32>
    %1295 = arith.mulf %3, %888 : vector<8x128xf32>
    %1296 = arith.mulf %9, %987 : vector<8x128xf32>
    %1297 = arith.addf %1295, %1296 : vector<8x128xf32>
    %1298 = arith.mulf %15, %1086 : vector<8x128xf32>
    %1299 = arith.addf %1297, %1298 : vector<8x128xf32>
    %1300 = arith.mulf %3, %899 : vector<8x128xf32>
    %1301 = arith.mulf %9, %998 : vector<8x128xf32>
    %1302 = arith.addf %1300, %1301 : vector<8x128xf32>
    %1303 = arith.mulf %15, %1097 : vector<8x128xf32>
    %1304 = arith.addf %1302, %1303 : vector<8x128xf32>
    %1305 = arith.mulf %1, %1264 : vector<8x128xf32>
    %1306 = arith.mulf %7, %1279 : vector<8x128xf32>
    %1307 = arith.addf %1305, %1306 : vector<8x128xf32>
    %1308 = arith.mulf %13, %1294 : vector<8x128xf32>
    %1309 = arith.addf %1307, %1308 : vector<8x128xf32>
    %1310 = arith.mulf %1, %1269 : vector<8x128xf32>
    %1311 = arith.mulf %7, %1284 : vector<8x128xf32>
    %1312 = arith.addf %1310, %1311 : vector<8x128xf32>
    %1313 = arith.mulf %13, %1299 : vector<8x128xf32>
    %1314 = arith.addf %1312, %1313 : vector<8x128xf32>
    %1315 = arith.mulf %1, %1274 : vector<8x128xf32>
    %1316 = arith.mulf %7, %1289 : vector<8x128xf32>
    %1317 = arith.addf %1315, %1316 : vector<8x128xf32>
    %1318 = arith.mulf %13, %1304 : vector<8x128xf32>
    %1319 = arith.addf %1317, %1318 : vector<8x128xf32>
    %1320 = arith.mulf %1, %1309 : vector<8x128xf32>
    %1321 = arith.mulf %7, %1314 : vector<8x128xf32>
    %1322 = arith.addf %1320, %1321 : vector<8x128xf32>
    %1323 = arith.mulf %13, %1319 : vector<8x128xf32>
    %1324 = arith.addf %1322, %1323 : vector<8x128xf32>
    %c0_585 = arith.constant 0 : index
    %c36_586 = arith.constant 36 : index
    %c0_587 = arith.constant 0 : index
    %c0_588 = arith.constant 0 : index
    %1325 = vector.load %arg4[%c0_585, %c36_586, %c0_587, %c0_588] : memref<1x81x8x128xf32, #tpu.memory_space<vmem>>, vector<1x1x8x128xf32>
    %1326 = vector.shape_cast %1325 : vector<1x1x8x128xf32> to vector<8x128xf32>
    %1327 = vector.shape_cast %1324 : vector<8x128xf32> to vector<1x1x8x128xf32>
    tpu.vector_store %arg4[%c0_585, %c36_586, %c0_587, %c0_588], %1327 {strides = array<i32>} : memref<1x81x8x128xf32, #tpu.memory_space<vmem>>, vector<1x1x8x128xf32>,
    %1328 = arith.mulf %3, %1309 : vector<8x128xf32>
    %1329 = arith.mulf %9, %1314 : vector<8x128xf32>
    %1330 = arith.addf %1328, %1329 : vector<8x128xf32>
    %1331 = arith.mulf %15, %1319 : vector<8x128xf32>
    %1332 = arith.addf %1330, %1331 : vector<8x128xf32>
    %c0_589 = arith.constant 0 : index
    %c37_590 = arith.constant 37 : index
    %c0_591 = arith.constant 0 : index
    %c0_592 = arith.constant 0 : index
    %1333 = vector.load %arg4[%c0_589, %c37_590, %c0_591, %c0_592] : memref<1x81x8x128xf32, #tpu.memory_space<vmem>>, vector<1x1x8x128xf32>
    %1334 = vector.shape_cast %1333 : vector<1x1x8x128xf32> to vector<8x128xf32>
    %1335 = vector.shape_cast %1332 : vector<8x128xf32> to vector<1x1x8x128xf32>
    tpu.vector_store %arg4[%c0_589, %c37_590, %c0_591, %c0_592], %1335 {strides = array<i32>} : memref<1x81x8x128xf32, #tpu.memory_space<vmem>>, vector<1x1x8x128xf32>,
    %1336 = arith.mulf %5, %1309 : vector<8x128xf32>
    %1337 = arith.mulf %11, %1314 : vector<8x128xf32>
    %1338 = arith.addf %1336, %1337 : vector<8x128xf32>
    %1339 = arith.mulf %17, %1319 : vector<8x128xf32>
    %1340 = arith.addf %1338, %1339 : vector<8x128xf32>
    %c0_593 = arith.constant 0 : index
    %c38_594 = arith.constant 38 : index
    %c0_595 = arith.constant 0 : index
    %c0_596 = arith.constant 0 : index
    %1341 = vector.load %arg4[%c0_593, %c38_594, %c0_595, %c0_596] : memref<1x81x8x128xf32, #tpu.memory_space<vmem>>, vector<1x1x8x128xf32>
    %1342 = vector.shape_cast %1341 : vector<1x1x8x128xf32> to vector<8x128xf32>
    %1343 = vector.shape_cast %1340 : vector<8x128xf32> to vector<1x1x8x128xf32>
    tpu.vector_store %arg4[%c0_593, %c38_594, %c0_595, %c0_596], %1343 {strides = array<i32>} : memref<1x81x8x128xf32, #tpu.memory_space<vmem>>, vector<1x1x8x128xf32>,
    %1344 = arith.mulf %3, %1264 : vector<8x128xf32>
    %1345 = arith.mulf %9, %1279 : vector<8x128xf32>
    %1346 = arith.addf %1344, %1345 : vector<8x128xf32>
    %1347 = arith.mulf %15, %1294 : vector<8x128xf32>
    %1348 = arith.addf %1346, %1347 : vector<8x128xf32>
    %1349 = arith.mulf %3, %1269 : vector<8x128xf32>
    %1350 = arith.mulf %9, %1284 : vector<8x128xf32>
    %1351 = arith.addf %1349, %1350 : vector<8x128xf32>
    %1352 = arith.mulf %15, %1299 : vector<8x128xf32>
    %1353 = arith.addf %1351, %1352 : vector<8x128xf32>
    %1354 = arith.mulf %3, %1274 : vector<8x128xf32>
    %1355 = arith.mulf %9, %1289 : vector<8x128xf32>
    %1356 = arith.addf %1354, %1355 : vector<8x128xf32>
    %1357 = arith.mulf %15, %1304 : vector<8x128xf32>
    %1358 = arith.addf %1356, %1357 : vector<8x128xf32>
    %1359 = arith.mulf %1, %1348 : vector<8x128xf32>
    %1360 = arith.mulf %7, %1353 : vector<8x128xf32>
    %1361 = arith.addf %1359, %1360 : vector<8x128xf32>
    %1362 = arith.mulf %13, %1358 : vector<8x128xf32>
    %1363 = arith.addf %1361, %1362 : vector<8x128xf32>
    %c0_597 = arith.constant 0 : index
    %c39_598 = arith.constant 39 : index
    %c0_599 = arith.constant 0 : index
    %c0_600 = arith.constant 0 : index
    %1364 = vector.load %arg4[%c0_597, %c39_598, %c0_599, %c0_600] : memref<1x81x8x128xf32, #tpu.memory_space<vmem>>, vector<1x1x8x128xf32>
    %1365 = vector.shape_cast %1364 : vector<1x1x8x128xf32> to vector<8x128xf32>
    %1366 = vector.shape_cast %1363 : vector<8x128xf32> to vector<1x1x8x128xf32>
    tpu.vector_store %arg4[%c0_597, %c39_598, %c0_599, %c0_600], %1366 {strides = array<i32>} : memref<1x81x8x128xf32, #tpu.memory_space<vmem>>, vector<1x1x8x128xf32>,
    %1367 = arith.mulf %3, %1348 : vector<8x128xf32>
    %1368 = arith.mulf %9, %1353 : vector<8x128xf32>
    %1369 = arith.addf %1367, %1368 : vector<8x128xf32>
    %1370 = arith.mulf %15, %1358 : vector<8x128xf32>
    %1371 = arith.addf %1369, %1370 : vector<8x128xf32>
    %c0_601 = arith.constant 0 : index
    %c40_602 = arith.constant 40 : index
    %c0_603 = arith.constant 0 : index
    %c0_604 = arith.constant 0 : index
    %1372 = vector.load %arg4[%c0_601, %c40_602, %c0_603, %c0_604] : memref<1x81x8x128xf32, #tpu.memory_space<vmem>>, vector<1x1x8x128xf32>
    %1373 = vector.shape_cast %1372 : vector<1x1x8x128xf32> to vector<8x128xf32>
    %1374 = vector.shape_cast %1371 : vector<8x128xf32> to vector<1x1x8x128xf32>
    tpu.vector_store %arg4[%c0_601, %c40_602, %c0_603, %c0_604], %1374 {strides = array<i32>} : memref<1x81x8x128xf32, #tpu.memory_space<vmem>>, vector<1x1x8x128xf32>,
    %1375 = arith.mulf %5, %1348 : vector<8x128xf32>
    %1376 = arith.mulf %11, %1353 : vector<8x128xf32>
    %1377 = arith.addf %1375, %1376 : vector<8x128xf32>
    %1378 = arith.mulf %17, %1358 : vector<8x128xf32>
    %1379 = arith.addf %1377, %1378 : vector<8x128xf32>
    %c0_605 = arith.constant 0 : index
    %c41_606 = arith.constant 41 : index
    %c0_607 = arith.constant 0 : index
    %c0_608 = arith.constant 0 : index
    %1380 = vector.load %arg4[%c0_605, %c41_606, %c0_607, %c0_608] : memref<1x81x8x128xf32, #tpu.memory_space<vmem>>, vector<1x1x8x128xf32>
    %1381 = vector.shape_cast %1380 : vector<1x1x8x128xf32> to vector<8x128xf32>
    %1382 = vector.shape_cast %1379 : vector<8x128xf32> to vector<1x1x8x128xf32>
    tpu.vector_store %arg4[%c0_605, %c41_606, %c0_607, %c0_608], %1382 {strides = array<i32>} : memref<1x81x8x128xf32, #tpu.memory_space<vmem>>, vector<1x1x8x128xf32>,
    %1383 = arith.mulf %5, %1264 : vector<8x128xf32>
    %1384 = arith.mulf %11, %1279 : vector<8x128xf32>
    %1385 = arith.addf %1383, %1384 : vector<8x128xf32>
    %1386 = arith.mulf %17, %1294 : vector<8x128xf32>
    %1387 = arith.addf %1385, %1386 : vector<8x128xf32>
    %1388 = arith.mulf %5, %1269 : vector<8x128xf32>
    %1389 = arith.mulf %11, %1284 : vector<8x128xf32>
    %1390 = arith.addf %1388, %1389 : vector<8x128xf32>
    %1391 = arith.mulf %17, %1299 : vector<8x128xf32>
    %1392 = arith.addf %1390, %1391 : vector<8x128xf32>
    %1393 = arith.mulf %5, %1274 : vector<8x128xf32>
    %1394 = arith.mulf %11, %1289 : vector<8x128xf32>
    %1395 = arith.addf %1393, %1394 : vector<8x128xf32>
    %1396 = arith.mulf %17, %1304 : vector<8x128xf32>
    %1397 = arith.addf %1395, %1396 : vector<8x128xf32>
    %1398 = arith.mulf %1, %1387 : vector<8x128xf32>
    %1399 = arith.mulf %7, %1392 : vector<8x128xf32>
    %1400 = arith.addf %1398, %1399 : vector<8x128xf32>
    %1401 = arith.mulf %13, %1397 : vector<8x128xf32>
    %1402 = arith.addf %1400, %1401 : vector<8x128xf32>
    %c0_609 = arith.constant 0 : index
    %c42_610 = arith.constant 42 : index
    %c0_611 = arith.constant 0 : index
    %c0_612 = arith.constant 0 : index
    %1403 = vector.load %arg4[%c0_609, %c42_610, %c0_611, %c0_612] : memref<1x81x8x128xf32, #tpu.memory_space<vmem>>, vector<1x1x8x128xf32>
    %1404 = vector.shape_cast %1403 : vector<1x1x8x128xf32> to vector<8x128xf32>
    %1405 = vector.shape_cast %1402 : vector<8x128xf32> to vector<1x1x8x128xf32>
    tpu.vector_store %arg4[%c0_609, %c42_610, %c0_611, %c0_612], %1405 {strides = array<i32>} : memref<1x81x8x128xf32, #tpu.memory_space<vmem>>, vector<1x1x8x128xf32>,
    %1406 = arith.mulf %3, %1387 : vector<8x128xf32>
    %1407 = arith.mulf %9, %1392 : vector<8x128xf32>
    %1408 = arith.addf %1406, %1407 : vector<8x128xf32>
    %1409 = arith.mulf %15, %1397 : vector<8x128xf32>
    %1410 = arith.addf %1408, %1409 : vector<8x128xf32>
    %c0_613 = arith.constant 0 : index
    %c43_614 = arith.constant 43 : index
    %c0_615 = arith.constant 0 : index
    %c0_616 = arith.constant 0 : index
    %1411 = vector.load %arg4[%c0_613, %c43_614, %c0_615, %c0_616] : memref<1x81x8x128xf32, #tpu.memory_space<vmem>>, vector<1x1x8x128xf32>
    %1412 = vector.shape_cast %1411 : vector<1x1x8x128xf32> to vector<8x128xf32>
    %1413 = vector.shape_cast %1410 : vector<8x128xf32> to vector<1x1x8x128xf32>
    tpu.vector_store %arg4[%c0_613, %c43_614, %c0_615, %c0_616], %1413 {strides = array<i32>} : memref<1x81x8x128xf32, #tpu.memory_space<vmem>>, vector<1x1x8x128xf32>,
    %1414 = arith.mulf %5, %1387 : vector<8x128xf32>
    %1415 = arith.mulf %11, %1392 : vector<8x128xf32>
    %1416 = arith.addf %1414, %1415 : vector<8x128xf32>
    %1417 = arith.mulf %17, %1397 : vector<8x128xf32>
    %1418 = arith.addf %1416, %1417 : vector<8x128xf32>
    %c0_617 = arith.constant 0 : index
    %c44_618 = arith.constant 44 : index
    %c0_619 = arith.constant 0 : index
    %c0_620 = arith.constant 0 : index
    %1419 = vector.load %arg4[%c0_617, %c44_618, %c0_619, %c0_620] : memref<1x81x8x128xf32, #tpu.memory_space<vmem>>, vector<1x1x8x128xf32>
    %1420 = vector.shape_cast %1419 : vector<1x1x8x128xf32> to vector<8x128xf32>
    %1421 = vector.shape_cast %1418 : vector<8x128xf32> to vector<1x1x8x128xf32>
    tpu.vector_store %arg4[%c0_617, %c44_618, %c0_619, %c0_620], %1421 {strides = array<i32>} : memref<1x81x8x128xf32, #tpu.memory_space<vmem>>, vector<1x1x8x128xf32>,
    %1422 = arith.mulf %5, %811 : vector<8x128xf32>
    %1423 = arith.mulf %11, %910 : vector<8x128xf32>
    %1424 = arith.addf %1422, %1423 : vector<8x128xf32>
    %1425 = arith.mulf %17, %1009 : vector<8x128xf32>
    %1426 = arith.addf %1424, %1425 : vector<8x128xf32>
    %1427 = arith.mulf %5, %822 : vector<8x128xf32>
    %1428 = arith.mulf %11, %921 : vector<8x128xf32>
    %1429 = arith.addf %1427, %1428 : vector<8x128xf32>
    %1430 = arith.mulf %17, %1020 : vector<8x128xf32>
    %1431 = arith.addf %1429, %1430 : vector<8x128xf32>
    %1432 = arith.mulf %5, %833 : vector<8x128xf32>
    %1433 = arith.mulf %11, %932 : vector<8x128xf32>
    %1434 = arith.addf %1432, %1433 : vector<8x128xf32>
    %1435 = arith.mulf %17, %1031 : vector<8x128xf32>
    %1436 = arith.addf %1434, %1435 : vector<8x128xf32>
    %1437 = arith.mulf %5, %844 : vector<8x128xf32>
    %1438 = arith.mulf %11, %943 : vector<8x128xf32>
    %1439 = arith.addf %1437, %1438 : vector<8x128xf32>
    %1440 = arith.mulf %17, %1042 : vector<8x128xf32>
    %1441 = arith.addf %1439, %1440 : vector<8x128xf32>
    %1442 = arith.mulf %5, %855 : vector<8x128xf32>
    %1443 = arith.mulf %11, %954 : vector<8x128xf32>
    %1444 = arith.addf %1442, %1443 : vector<8x128xf32>
    %1445 = arith.mulf %17, %1053 : vector<8x128xf32>
    %1446 = arith.addf %1444, %1445 : vector<8x128xf32>
    %1447 = arith.mulf %5, %866 : vector<8x128xf32>
    %1448 = arith.mulf %11, %965 : vector<8x128xf32>
    %1449 = arith.addf %1447, %1448 : vector<8x128xf32>
    %1450 = arith.mulf %17, %1064 : vector<8x128xf32>
    %1451 = arith.addf %1449, %1450 : vector<8x128xf32>
    %1452 = arith.mulf %5, %877 : vector<8x128xf32>
    %1453 = arith.mulf %11, %976 : vector<8x128xf32>
    %1454 = arith.addf %1452, %1453 : vector<8x128xf32>
    %1455 = arith.mulf %17, %1075 : vector<8x128xf32>
    %1456 = arith.addf %1454, %1455 : vector<8x128xf32>
    %1457 = arith.mulf %5, %888 : vector<8x128xf32>
    %1458 = arith.mulf %11, %987 : vector<8x128xf32>
    %1459 = arith.addf %1457, %1458 : vector<8x128xf32>
    %1460 = arith.mulf %17, %1086 : vector<8x128xf32>
    %1461 = arith.addf %1459, %1460 : vector<8x128xf32>
    %1462 = arith.mulf %5, %899 : vector<8x128xf32>
    %1463 = arith.mulf %11, %998 : vector<8x128xf32>
    %1464 = arith.addf %1462, %1463 : vector<8x128xf32>
    %1465 = arith.mulf %17, %1097 : vector<8x128xf32>
    %1466 = arith.addf %1464, %1465 : vector<8x128xf32>
    %1467 = arith.mulf %1, %1426 : vector<8x128xf32>
    %1468 = arith.mulf %7, %1441 : vector<8x128xf32>
    %1469 = arith.addf %1467, %1468 : vector<8x128xf32>
    %1470 = arith.mulf %13, %1456 : vector<8x128xf32>
    %1471 = arith.addf %1469, %1470 : vector<8x128xf32>
    %1472 = arith.mulf %1, %1431 : vector<8x128xf32>
    %1473 = arith.mulf %7, %1446 : vector<8x128xf32>
    %1474 = arith.addf %1472, %1473 : vector<8x128xf32>
    %1475 = arith.mulf %13, %1461 : vector<8x128xf32>
    %1476 = arith.addf %1474, %1475 : vector<8x128xf32>
    %1477 = arith.mulf %1, %1436 : vector<8x128xf32>
    %1478 = arith.mulf %7, %1451 : vector<8x128xf32>
    %1479 = arith.addf %1477, %1478 : vector<8x128xf32>
    %1480 = arith.mulf %13, %1466 : vector<8x128xf32>
    %1481 = arith.addf %1479, %1480 : vector<8x128xf32>
    %1482 = arith.mulf %1, %1471 : vector<8x128xf32>
    %1483 = arith.mulf %7, %1476 : vector<8x128xf32>
    %1484 = arith.addf %1482, %1483 : vector<8x128xf32>
    %1485 = arith.mulf %13, %1481 : vector<8x128xf32>
    %1486 = arith.addf %1484, %1485 : vector<8x128xf32>
    %c0_621 = arith.constant 0 : index
    %c45_622 = arith.constant 45 : index
    %c0_623 = arith.constant 0 : index
    %c0_624 = arith.constant 0 : index
    %1487 = vector.load %arg4[%c0_621, %c45_622, %c0_623, %c0_624] : memref<1x81x8x128xf32, #tpu.memory_space<vmem>>, vector<1x1x8x128xf32>
    %1488 = vector.shape_cast %1487 : vector<1x1x8x128xf32> to vector<8x128xf32>
    %1489 = vector.shape_cast %1486 : vector<8x128xf32> to vector<1x1x8x128xf32>
    tpu.vector_store %arg4[%c0_621, %c45_622, %c0_623, %c0_624], %1489 {strides = array<i32>} : memref<1x81x8x128xf32, #tpu.memory_space<vmem>>, vector<1x1x8x128xf32>,
    %1490 = arith.mulf %3, %1471 : vector<8x128xf32>
    %1491 = arith.mulf %9, %1476 : vector<8x128xf32>
    %1492 = arith.addf %1490, %1491 : vector<8x128xf32>
    %1493 = arith.mulf %15, %1481 : vector<8x128xf32>
    %1494 = arith.addf %1492, %1493 : vector<8x128xf32>
    %c0_625 = arith.constant 0 : index
    %c46_626 = arith.constant 46 : index
    %c0_627 = arith.constant 0 : index
    %c0_628 = arith.constant 0 : index
    %1495 = vector.load %arg4[%c0_625, %c46_626, %c0_627, %c0_628] : memref<1x81x8x128xf32, #tpu.memory_space<vmem>>, vector<1x1x8x128xf32>
    %1496 = vector.shape_cast %1495 : vector<1x1x8x128xf32> to vector<8x128xf32>
    %1497 = vector.shape_cast %1494 : vector<8x128xf32> to vector<1x1x8x128xf32>
    tpu.vector_store %arg4[%c0_625, %c46_626, %c0_627, %c0_628], %1497 {strides = array<i32>} : memref<1x81x8x128xf32, #tpu.memory_space<vmem>>, vector<1x1x8x128xf32>,
    %1498 = arith.mulf %5, %1471 : vector<8x128xf32>
    %1499 = arith.mulf %11, %1476 : vector<8x128xf32>
    %1500 = arith.addf %1498, %1499 : vector<8x128xf32>
    %1501 = arith.mulf %17, %1481 : vector<8x128xf32>
    %1502 = arith.addf %1500, %1501 : vector<8x128xf32>
    %c0_629 = arith.constant 0 : index
    %c47_630 = arith.constant 47 : index
    %c0_631 = arith.constant 0 : index
    %c0_632 = arith.constant 0 : index
    %1503 = vector.load %arg4[%c0_629, %c47_630, %c0_631, %c0_632] : memref<1x81x8x128xf32, #tpu.memory_space<vmem>>, vector<1x1x8x128xf32>
    %1504 = vector.shape_cast %1503 : vector<1x1x8x128xf32> to vector<8x128xf32>
    %1505 = vector.shape_cast %1502 : vector<8x128xf32> to vector<1x1x8x128xf32>
    tpu.vector_store %arg4[%c0_629, %c47_630, %c0_631, %c0_632], %1505 {strides = array<i32>} : memref<1x81x8x128xf32, #tpu.memory_space<vmem>>, vector<1x1x8x128xf32>,
    %1506 = arith.mulf %3, %1426 : vector<8x128xf32>
    %1507 = arith.mulf %9, %1441 : vector<8x128xf32>
    %1508 = arith.addf %1506, %1507 : vector<8x128xf32>
    %1509 = arith.mulf %15, %1456 : vector<8x128xf32>
    %1510 = arith.addf %1508, %1509 : vector<8x128xf32>
    %1511 = arith.mulf %3, %1431 : vector<8x128xf32>
    %1512 = arith.mulf %9, %1446 : vector<8x128xf32>
    %1513 = arith.addf %1511, %1512 : vector<8x128xf32>
    %1514 = arith.mulf %15, %1461 : vector<8x128xf32>
    %1515 = arith.addf %1513, %1514 : vector<8x128xf32>
    %1516 = arith.mulf %3, %1436 : vector<8x128xf32>
    %1517 = arith.mulf %9, %1451 : vector<8x128xf32>
    %1518 = arith.addf %1516, %1517 : vector<8x128xf32>
    %1519 = arith.mulf %15, %1466 : vector<8x128xf32>
    %1520 = arith.addf %1518, %1519 : vector<8x128xf32>
    %1521 = arith.mulf %1, %1510 : vector<8x128xf32>
    %1522 = arith.mulf %7, %1515 : vector<8x128xf32>
    %1523 = arith.addf %1521, %1522 : vector<8x128xf32>
    %1524 = arith.mulf %13, %1520 : vector<8x128xf32>
    %1525 = arith.addf %1523, %1524 : vector<8x128xf32>
    %c0_633 = arith.constant 0 : index
    %c48_634 = arith.constant 48 : index
    %c0_635 = arith.constant 0 : index
    %c0_636 = arith.constant 0 : index
    %1526 = vector.load %arg4[%c0_633, %c48_634, %c0_635, %c0_636] : memref<1x81x8x128xf32, #tpu.memory_space<vmem>>, vector<1x1x8x128xf32>
    %1527 = vector.shape_cast %1526 : vector<1x1x8x128xf32> to vector<8x128xf32>
    %1528 = vector.shape_cast %1525 : vector<8x128xf32> to vector<1x1x8x128xf32>
    tpu.vector_store %arg4[%c0_633, %c48_634, %c0_635, %c0_636], %1528 {strides = array<i32>} : memref<1x81x8x128xf32, #tpu.memory_space<vmem>>, vector<1x1x8x128xf32>,
    %1529 = arith.mulf %3, %1510 : vector<8x128xf32>
    %1530 = arith.mulf %9, %1515 : vector<8x128xf32>
    %1531 = arith.addf %1529, %1530 : vector<8x128xf32>
    %1532 = arith.mulf %15, %1520 : vector<8x128xf32>
    %1533 = arith.addf %1531, %1532 : vector<8x128xf32>
    %c0_637 = arith.constant 0 : index
    %c49_638 = arith.constant 49 : index
    %c0_639 = arith.constant 0 : index
    %c0_640 = arith.constant 0 : index
    %1534 = vector.load %arg4[%c0_637, %c49_638, %c0_639, %c0_640] : memref<1x81x8x128xf32, #tpu.memory_space<vmem>>, vector<1x1x8x128xf32>
    %1535 = vector.shape_cast %1534 : vector<1x1x8x128xf32> to vector<8x128xf32>
    %1536 = vector.shape_cast %1533 : vector<8x128xf32> to vector<1x1x8x128xf32>
    tpu.vector_store %arg4[%c0_637, %c49_638, %c0_639, %c0_640], %1536 {strides = array<i32>} : memref<1x81x8x128xf32, #tpu.memory_space<vmem>>, vector<1x1x8x128xf32>,
    %1537 = arith.mulf %5, %1510 : vector<8x128xf32>
    %1538 = arith.mulf %11, %1515 : vector<8x128xf32>
    %1539 = arith.addf %1537, %1538 : vector<8x128xf32>
    %1540 = arith.mulf %17, %1520 : vector<8x128xf32>
    %1541 = arith.addf %1539, %1540 : vector<8x128xf32>
    %c0_641 = arith.constant 0 : index
    %c50_642 = arith.constant 50 : index
    %c0_643 = arith.constant 0 : index
    %c0_644 = arith.constant 0 : index
    %1542 = vector.load %arg4[%c0_641, %c50_642, %c0_643, %c0_644] : memref<1x81x8x128xf32, #tpu.memory_space<vmem>>, vector<1x1x8x128xf32>
    %1543 = vector.shape_cast %1542 : vector<1x1x8x128xf32> to vector<8x128xf32>
    %1544 = vector.shape_cast %1541 : vector<8x128xf32> to vector<1x1x8x128xf32>
    tpu.vector_store %arg4[%c0_641, %c50_642, %c0_643, %c0_644], %1544 {strides = array<i32>} : memref<1x81x8x128xf32, #tpu.memory_space<vmem>>, vector<1x1x8x128xf32>,
    %1545 = arith.mulf %5, %1426 : vector<8x128xf32>
    %1546 = arith.mulf %11, %1441 : vector<8x128xf32>
    %1547 = arith.addf %1545, %1546 : vector<8x128xf32>
    %1548 = arith.mulf %17, %1456 : vector<8x128xf32>
    %1549 = arith.addf %1547, %1548 : vector<8x128xf32>
    %1550 = arith.mulf %5, %1431 : vector<8x128xf32>
    %1551 = arith.mulf %11, %1446 : vector<8x128xf32>
    %1552 = arith.addf %1550, %1551 : vector<8x128xf32>
    %1553 = arith.mulf %17, %1461 : vector<8x128xf32>
    %1554 = arith.addf %1552, %1553 : vector<8x128xf32>
    %1555 = arith.mulf %5, %1436 : vector<8x128xf32>
    %1556 = arith.mulf %11, %1451 : vector<8x128xf32>
    %1557 = arith.addf %1555, %1556 : vector<8x128xf32>
    %1558 = arith.mulf %17, %1466 : vector<8x128xf32>
    %1559 = arith.addf %1557, %1558 : vector<8x128xf32>
    %1560 = arith.mulf %1, %1549 : vector<8x128xf32>
    %1561 = arith.mulf %7, %1554 : vector<8x128xf32>
    %1562 = arith.addf %1560, %1561 : vector<8x128xf32>
    %1563 = arith.mulf %13, %1559 : vector<8x128xf32>
    %1564 = arith.addf %1562, %1563 : vector<8x128xf32>
    %c0_645 = arith.constant 0 : index
    %c51_646 = arith.constant 51 : index
    %c0_647 = arith.constant 0 : index
    %c0_648 = arith.constant 0 : index
    %1565 = vector.load %arg4[%c0_645, %c51_646, %c0_647, %c0_648] : memref<1x81x8x128xf32, #tpu.memory_space<vmem>>, vector<1x1x8x128xf32>
    %1566 = vector.shape_cast %1565 : vector<1x1x8x128xf32> to vector<8x128xf32>
    %1567 = vector.shape_cast %1564 : vector<8x128xf32> to vector<1x1x8x128xf32>
    tpu.vector_store %arg4[%c0_645, %c51_646, %c0_647, %c0_648], %1567 {strides = array<i32>} : memref<1x81x8x128xf32, #tpu.memory_space<vmem>>, vector<1x1x8x128xf32>,
    %1568 = arith.mulf %3, %1549 : vector<8x128xf32>
    %1569 = arith.mulf %9, %1554 : vector<8x128xf32>
    %1570 = arith.addf %1568, %1569 : vector<8x128xf32>
    %1571 = arith.mulf %15, %1559 : vector<8x128xf32>
    %1572 = arith.addf %1570, %1571 : vector<8x128xf32>
    %c0_649 = arith.constant 0 : index
    %c52_650 = arith.constant 52 : index
    %c0_651 = arith.constant 0 : index
    %c0_652 = arith.constant 0 : index
    %1573 = vector.load %arg4[%c0_649, %c52_650, %c0_651, %c0_652] : memref<1x81x8x128xf32, #tpu.memory_space<vmem>>, vector<1x1x8x128xf32>
    %1574 = vector.shape_cast %1573 : vector<1x1x8x128xf32> to vector<8x128xf32>
    %1575 = vector.shape_cast %1572 : vector<8x128xf32> to vector<1x1x8x128xf32>
    tpu.vector_store %arg4[%c0_649, %c52_650, %c0_651, %c0_652], %1575 {strides = array<i32>} : memref<1x81x8x128xf32, #tpu.memory_space<vmem>>, vector<1x1x8x128xf32>,
    %1576 = arith.mulf %5, %1549 : vector<8x128xf32>
    %1577 = arith.mulf %11, %1554 : vector<8x128xf32>
    %1578 = arith.addf %1576, %1577 : vector<8x128xf32>
    %1579 = arith.mulf %17, %1559 : vector<8x128xf32>
    %1580 = arith.addf %1578, %1579 : vector<8x128xf32>
    %c0_653 = arith.constant 0 : index
    %c53_654 = arith.constant 53 : index
    %c0_655 = arith.constant 0 : index
    %c0_656 = arith.constant 0 : index
    %1581 = vector.load %arg4[%c0_653, %c53_654, %c0_655, %c0_656] : memref<1x81x8x128xf32, #tpu.memory_space<vmem>>, vector<1x1x8x128xf32>
    %1582 = vector.shape_cast %1581 : vector<1x1x8x128xf32> to vector<8x128xf32>
    %1583 = vector.shape_cast %1580 : vector<8x128xf32> to vector<1x1x8x128xf32>
    tpu.vector_store %arg4[%c0_653, %c53_654, %c0_655, %c0_656], %1583 {strides = array<i32>} : memref<1x81x8x128xf32, #tpu.memory_space<vmem>>, vector<1x1x8x128xf32>,
    %c0_657 = arith.constant 0 : index
    %c0_658 = arith.constant 0 : index
    %c0_659 = arith.constant 0 : index
    %1584 = vector.load %arg2[%c0_657, %c0_658, %c0_659] : memref<81x8x128xf32, #tpu.memory_space<vmem>>, vector<1x8x128xf32>
    %1585 = vector.shape_cast %1584 : vector<1x8x128xf32> to vector<8x128xf32>
    %1586 = arith.mulf %1585, %5 : vector<8x128xf32>
    %c27_660 = arith.constant 27 : index
    %c0_661 = arith.constant 0 : index
    %c0_662 = arith.constant 0 : index
    %1587 = vector.load %arg2[%c27_660, %c0_661, %c0_662] : memref<81x8x128xf32, #tpu.memory_space<vmem>>, vector<1x8x128xf32>
    %1588 = vector.shape_cast %1587 : vector<1x8x128xf32> to vector<8x128xf32>
    %1589 = arith.mulf %1588, %11 : vector<8x128xf32>
    %1590 = arith.addf %1586, %1589 : vector<8x128xf32>
    %c54_663 = arith.constant 54 : index
    %c0_664 = arith.constant 0 : index
    %c0_665 = arith.constant 0 : index
    %1591 = vector.load %arg2[%c54_663, %c0_664, %c0_665] : memref<81x8x128xf32, #tpu.memory_space<vmem>>, vector<1x8x128xf32>
    %1592 = vector.shape_cast %1591 : vector<1x8x128xf32> to vector<8x128xf32>
    %1593 = arith.mulf %1592, %17 : vector<8x128xf32>
    %1594 = arith.addf %1590, %1593 : vector<8x128xf32>
    %c1_666 = arith.constant 1 : index
    %c0_667 = arith.constant 0 : index
    %c0_668 = arith.constant 0 : index
    %1595 = vector.load %arg2[%c1_666, %c0_667, %c0_668] : memref<81x8x128xf32, #tpu.memory_space<vmem>>, vector<1x8x128xf32>
    %1596 = vector.shape_cast %1595 : vector<1x8x128xf32> to vector<8x128xf32>
    %1597 = arith.mulf %1596, %5 : vector<8x128xf32>
    %c28_669 = arith.constant 28 : index
    %c0_670 = arith.constant 0 : index
    %c0_671 = arith.constant 0 : index
    %1598 = vector.load %arg2[%c28_669, %c0_670, %c0_671] : memref<81x8x128xf32, #tpu.memory_space<vmem>>, vector<1x8x128xf32>
    %1599 = vector.shape_cast %1598 : vector<1x8x128xf32> to vector<8x128xf32>
    %1600 = arith.mulf %1599, %11 : vector<8x128xf32>
    %1601 = arith.addf %1597, %1600 : vector<8x128xf32>
    %c55_672 = arith.constant 55 : index
    %c0_673 = arith.constant 0 : index
    %c0_674 = arith.constant 0 : index
    %1602 = vector.load %arg2[%c55_672, %c0_673, %c0_674] : memref<81x8x128xf32, #tpu.memory_space<vmem>>, vector<1x8x128xf32>
    %1603 = vector.shape_cast %1602 : vector<1x8x128xf32> to vector<8x128xf32>
    %1604 = arith.mulf %1603, %17 : vector<8x128xf32>
    %1605 = arith.addf %1601, %1604 : vector<8x128xf32>
    %c2_675 = arith.constant 2 : index
    %c0_676 = arith.constant 0 : index
    %c0_677 = arith.constant 0 : index
    %1606 = vector.load %arg2[%c2_675, %c0_676, %c0_677] : memref<81x8x128xf32, #tpu.memory_space<vmem>>, vector<1x8x128xf32>
    %1607 = vector.shape_cast %1606 : vector<1x8x128xf32> to vector<8x128xf32>
    %1608 = arith.mulf %1607, %5 : vector<8x128xf32>
    %c29_678 = arith.constant 29 : index
    %c0_679 = arith.constant 0 : index
    %c0_680 = arith.constant 0 : index
    %1609 = vector.load %arg2[%c29_678, %c0_679, %c0_680] : memref<81x8x128xf32, #tpu.memory_space<vmem>>, vector<1x8x128xf32>
    %1610 = vector.shape_cast %1609 : vector<1x8x128xf32> to vector<8x128xf32>
    %1611 = arith.mulf %1610, %11 : vector<8x128xf32>
    %1612 = arith.addf %1608, %1611 : vector<8x128xf32>
    %c56_681 = arith.constant 56 : index
    %c0_682 = arith.constant 0 : index
    %c0_683 = arith.constant 0 : index
    %1613 = vector.load %arg2[%c56_681, %c0_682, %c0_683] : memref<81x8x128xf32, #tpu.memory_space<vmem>>, vector<1x8x128xf32>
    %1614 = vector.shape_cast %1613 : vector<1x8x128xf32> to vector<8x128xf32>
    %1615 = arith.mulf %1614, %17 : vector<8x128xf32>
    %1616 = arith.addf %1612, %1615 : vector<8x128xf32>
    %c3_684 = arith.constant 3 : index
    %c0_685 = arith.constant 0 : index
    %c0_686 = arith.constant 0 : index
    %1617 = vector.load %arg2[%c3_684, %c0_685, %c0_686] : memref<81x8x128xf32, #tpu.memory_space<vmem>>, vector<1x8x128xf32>
    %1618 = vector.shape_cast %1617 : vector<1x8x128xf32> to vector<8x128xf32>
    %1619 = arith.mulf %1618, %5 : vector<8x128xf32>
    %c30_687 = arith.constant 30 : index
    %c0_688 = arith.constant 0 : index
    %c0_689 = arith.constant 0 : index
    %1620 = vector.load %arg2[%c30_687, %c0_688, %c0_689] : memref<81x8x128xf32, #tpu.memory_space<vmem>>, vector<1x8x128xf32>
    %1621 = vector.shape_cast %1620 : vector<1x8x128xf32> to vector<8x128xf32>
    %1622 = arith.mulf %1621, %11 : vector<8x128xf32>
    %1623 = arith.addf %1619, %1622 : vector<8x128xf32>
    %c57_690 = arith.constant 57 : index
    %c0_691 = arith.constant 0 : index
    %c0_692 = arith.constant 0 : index
    %1624 = vector.load %arg2[%c57_690, %c0_691, %c0_692] : memref<81x8x128xf32, #tpu.memory_space<vmem>>, vector<1x8x128xf32>
    %1625 = vector.shape_cast %1624 : vector<1x8x128xf32> to vector<8x128xf32>
    %1626 = arith.mulf %1625, %17 : vector<8x128xf32>
    %1627 = arith.addf %1623, %1626 : vector<8x128xf32>
    %c4_693 = arith.constant 4 : index
    %c0_694 = arith.constant 0 : index
    %c0_695 = arith.constant 0 : index
    %1628 = vector.load %arg2[%c4_693, %c0_694, %c0_695] : memref<81x8x128xf32, #tpu.memory_space<vmem>>, vector<1x8x128xf32>
    %1629 = vector.shape_cast %1628 : vector<1x8x128xf32> to vector<8x128xf32>
    %1630 = arith.mulf %1629, %5 : vector<8x128xf32>
    %c31_696 = arith.constant 31 : index
    %c0_697 = arith.constant 0 : index
    %c0_698 = arith.constant 0 : index
    %1631 = vector.load %arg2[%c31_696, %c0_697, %c0_698] : memref<81x8x128xf32, #tpu.memory_space<vmem>>, vector<1x8x128xf32>
    %1632 = vector.shape_cast %1631 : vector<1x8x128xf32> to vector<8x128xf32>
    %1633 = arith.mulf %1632, %11 : vector<8x128xf32>
    %1634 = arith.addf %1630, %1633 : vector<8x128xf32>
    %c58_699 = arith.constant 58 : index
    %c0_700 = arith.constant 0 : index
    %c0_701 = arith.constant 0 : index
    %1635 = vector.load %arg2[%c58_699, %c0_700, %c0_701] : memref<81x8x128xf32, #tpu.memory_space<vmem>>, vector<1x8x128xf32>
    %1636 = vector.shape_cast %1635 : vector<1x8x128xf32> to vector<8x128xf32>
    %1637 = arith.mulf %1636, %17 : vector<8x128xf32>
    %1638 = arith.addf %1634, %1637 : vector<8x128xf32>
    %c5_702 = arith.constant 5 : index
    %c0_703 = arith.constant 0 : index
    %c0_704 = arith.constant 0 : index
    %1639 = vector.load %arg2[%c5_702, %c0_703, %c0_704] : memref<81x8x128xf32, #tpu.memory_space<vmem>>, vector<1x8x128xf32>
    %1640 = vector.shape_cast %1639 : vector<1x8x128xf32> to vector<8x128xf32>
    %1641 = arith.mulf %1640, %5 : vector<8x128xf32>
    %c32_705 = arith.constant 32 : index
    %c0_706 = arith.constant 0 : index
    %c0_707 = arith.constant 0 : index
    %1642 = vector.load %arg2[%c32_705, %c0_706, %c0_707] : memref<81x8x128xf32, #tpu.memory_space<vmem>>, vector<1x8x128xf32>
    %1643 = vector.shape_cast %1642 : vector<1x8x128xf32> to vector<8x128xf32>
    %1644 = arith.mulf %1643, %11 : vector<8x128xf32>
    %1645 = arith.addf %1641, %1644 : vector<8x128xf32>
    %c59_708 = arith.constant 59 : index
    %c0_709 = arith.constant 0 : index
    %c0_710 = arith.constant 0 : index
    %1646 = vector.load %arg2[%c59_708, %c0_709, %c0_710] : memref<81x8x128xf32, #tpu.memory_space<vmem>>, vector<1x8x128xf32>
    %1647 = vector.shape_cast %1646 : vector<1x8x128xf32> to vector<8x128xf32>
    %1648 = arith.mulf %1647, %17 : vector<8x128xf32>
    %1649 = arith.addf %1645, %1648 : vector<8x128xf32>
    %c6_711 = arith.constant 6 : index
    %c0_712 = arith.constant 0 : index
    %c0_713 = arith.constant 0 : index
    %1650 = vector.load %arg2[%c6_711, %c0_712, %c0_713] : memref<81x8x128xf32, #tpu.memory_space<vmem>>, vector<1x8x128xf32>
    %1651 = vector.shape_cast %1650 : vector<1x8x128xf32> to vector<8x128xf32>
    %1652 = arith.mulf %1651, %5 : vector<8x128xf32>
    %c33_714 = arith.constant 33 : index
    %c0_715 = arith.constant 0 : index
    %c0_716 = arith.constant 0 : index
    %1653 = vector.load %arg2[%c33_714, %c0_715, %c0_716] : memref<81x8x128xf32, #tpu.memory_space<vmem>>, vector<1x8x128xf32>
    %1654 = vector.shape_cast %1653 : vector<1x8x128xf32> to vector<8x128xf32>
    %1655 = arith.mulf %1654, %11 : vector<8x128xf32>
    %1656 = arith.addf %1652, %1655 : vector<8x128xf32>
    %c60_717 = arith.constant 60 : index
    %c0_718 = arith.constant 0 : index
    %c0_719 = arith.constant 0 : index
    %1657 = vector.load %arg2[%c60_717, %c0_718, %c0_719] : memref<81x8x128xf32, #tpu.memory_space<vmem>>, vector<1x8x128xf32>
    %1658 = vector.shape_cast %1657 : vector<1x8x128xf32> to vector<8x128xf32>
    %1659 = arith.mulf %1658, %17 : vector<8x128xf32>
    %1660 = arith.addf %1656, %1659 : vector<8x128xf32>
    %c7_720 = arith.constant 7 : index
    %c0_721 = arith.constant 0 : index
    %c0_722 = arith.constant 0 : index
    %1661 = vector.load %arg2[%c7_720, %c0_721, %c0_722] : memref<81x8x128xf32, #tpu.memory_space<vmem>>, vector<1x8x128xf32>
    %1662 = vector.shape_cast %1661 : vector<1x8x128xf32> to vector<8x128xf32>
    %1663 = arith.mulf %1662, %5 : vector<8x128xf32>
    %c34_723 = arith.constant 34 : index
    %c0_724 = arith.constant 0 : index
    %c0_725 = arith.constant 0 : index
    %1664 = vector.load %arg2[%c34_723, %c0_724, %c0_725] : memref<81x8x128xf32, #tpu.memory_space<vmem>>, vector<1x8x128xf32>
    %1665 = vector.shape_cast %1664 : vector<1x8x128xf32> to vector<8x128xf32>
    %1666 = arith.mulf %1665, %11 : vector<8x128xf32>
    %1667 = arith.addf %1663, %1666 : vector<8x128xf32>
    %c61_726 = arith.constant 61 : index
    %c0_727 = arith.constant 0 : index
    %c0_728 = arith.constant 0 : index
    %1668 = vector.load %arg2[%c61_726, %c0_727, %c0_728] : memref<81x8x128xf32, #tpu.memory_space<vmem>>, vector<1x8x128xf32>
    %1669 = vector.shape_cast %1668 : vector<1x8x128xf32> to vector<8x128xf32>
    %1670 = arith.mulf %1669, %17 : vector<8x128xf32>
    %1671 = arith.addf %1667, %1670 : vector<8x128xf32>
    %c8_729 = arith.constant 8 : index
    %c0_730 = arith.constant 0 : index
    %c0_731 = arith.constant 0 : index
    %1672 = vector.load %arg2[%c8_729, %c0_730, %c0_731] : memref<81x8x128xf32, #tpu.memory_space<vmem>>, vector<1x8x128xf32>
    %1673 = vector.shape_cast %1672 : vector<1x8x128xf32> to vector<8x128xf32>
    %1674 = arith.mulf %1673, %5 : vector<8x128xf32>
    %c35_732 = arith.constant 35 : index
    %c0_733 = arith.constant 0 : index
    %c0_734 = arith.constant 0 : index
    %1675 = vector.load %arg2[%c35_732, %c0_733, %c0_734] : memref<81x8x128xf32, #tpu.memory_space<vmem>>, vector<1x8x128xf32>
    %1676 = vector.shape_cast %1675 : vector<1x8x128xf32> to vector<8x128xf32>
    %1677 = arith.mulf %1676, %11 : vector<8x128xf32>
    %1678 = arith.addf %1674, %1677 : vector<8x128xf32>
    %c62_735 = arith.constant 62 : index
    %c0_736 = arith.constant 0 : index
    %c0_737 = arith.constant 0 : index
    %1679 = vector.load %arg2[%c62_735, %c0_736, %c0_737] : memref<81x8x128xf32, #tpu.memory_space<vmem>>, vector<1x8x128xf32>
    %1680 = vector.shape_cast %1679 : vector<1x8x128xf32> to vector<8x128xf32>
    %1681 = arith.mulf %1680, %17 : vector<8x128xf32>
    %1682 = arith.addf %1678, %1681 : vector<8x128xf32>
    %c9_738 = arith.constant 9 : index
    %c0_739 = arith.constant 0 : index
    %c0_740 = arith.constant 0 : index
    %1683 = vector.load %arg2[%c9_738, %c0_739, %c0_740] : memref<81x8x128xf32, #tpu.memory_space<vmem>>, vector<1x8x128xf32>
    %1684 = vector.shape_cast %1683 : vector<1x8x128xf32> to vector<8x128xf32>
    %1685 = arith.mulf %1684, %5 : vector<8x128xf32>
    %c36_741 = arith.constant 36 : index
    %c0_742 = arith.constant 0 : index
    %c0_743 = arith.constant 0 : index
    %1686 = vector.load %arg2[%c36_741, %c0_742, %c0_743] : memref<81x8x128xf32, #tpu.memory_space<vmem>>, vector<1x8x128xf32>
    %1687 = vector.shape_cast %1686 : vector<1x8x128xf32> to vector<8x128xf32>
    %1688 = arith.mulf %1687, %11 : vector<8x128xf32>
    %1689 = arith.addf %1685, %1688 : vector<8x128xf32>
    %c63_744 = arith.constant 63 : index
    %c0_745 = arith.constant 0 : index
    %c0_746 = arith.constant 0 : index
    %1690 = vector.load %arg2[%c63_744, %c0_745, %c0_746] : memref<81x8x128xf32, #tpu.memory_space<vmem>>, vector<1x8x128xf32>
    %1691 = vector.shape_cast %1690 : vector<1x8x128xf32> to vector<8x128xf32>
    %1692 = arith.mulf %1691, %17 : vector<8x128xf32>
    %1693 = arith.addf %1689, %1692 : vector<8x128xf32>
    %c10_747 = arith.constant 10 : index
    %c0_748 = arith.constant 0 : index
    %c0_749 = arith.constant 0 : index
    %1694 = vector.load %arg2[%c10_747, %c0_748, %c0_749] : memref<81x8x128xf32, #tpu.memory_space<vmem>>, vector<1x8x128xf32>
    %1695 = vector.shape_cast %1694 : vector<1x8x128xf32> to vector<8x128xf32>
    %1696 = arith.mulf %1695, %5 : vector<8x128xf32>
    %c37_750 = arith.constant 37 : index
    %c0_751 = arith.constant 0 : index
    %c0_752 = arith.constant 0 : index
    %1697 = vector.load %arg2[%c37_750, %c0_751, %c0_752] : memref<81x8x128xf32, #tpu.memory_space<vmem>>, vector<1x8x128xf32>
    %1698 = vector.shape_cast %1697 : vector<1x8x128xf32> to vector<8x128xf32>
    %1699 = arith.mulf %1698, %11 : vector<8x128xf32>
    %1700 = arith.addf %1696, %1699 : vector<8x128xf32>
    %c64_753 = arith.constant 64 : index
    %c0_754 = arith.constant 0 : index
    %c0_755 = arith.constant 0 : index
    %1701 = vector.load %arg2[%c64_753, %c0_754, %c0_755] : memref<81x8x128xf32, #tpu.memory_space<vmem>>, vector<1x8x128xf32>
    %1702 = vector.shape_cast %1701 : vector<1x8x128xf32> to vector<8x128xf32>
    %1703 = arith.mulf %1702, %17 : vector<8x128xf32>
    %1704 = arith.addf %1700, %1703 : vector<8x128xf32>
    %c11_756 = arith.constant 11 : index
    %c0_757 = arith.constant 0 : index
    %c0_758 = arith.constant 0 : index
    %1705 = vector.load %arg2[%c11_756, %c0_757, %c0_758] : memref<81x8x128xf32, #tpu.memory_space<vmem>>, vector<1x8x128xf32>
    %1706 = vector.shape_cast %1705 : vector<1x8x128xf32> to vector<8x128xf32>
    %1707 = arith.mulf %1706, %5 : vector<8x128xf32>
    %c38_759 = arith.constant 38 : index
    %c0_760 = arith.constant 0 : index
    %c0_761 = arith.constant 0 : index
    %1708 = vector.load %arg2[%c38_759, %c0_760, %c0_761] : memref<81x8x128xf32, #tpu.memory_space<vmem>>, vector<1x8x128xf32>
    %1709 = vector.shape_cast %1708 : vector<1x8x128xf32> to vector<8x128xf32>
    %1710 = arith.mulf %1709, %11 : vector<8x128xf32>
    %1711 = arith.addf %1707, %1710 : vector<8x128xf32>
    %c65_762 = arith.constant 65 : index
    %c0_763 = arith.constant 0 : index
    %c0_764 = arith.constant 0 : index
    %1712 = vector.load %arg2[%c65_762, %c0_763, %c0_764] : memref<81x8x128xf32, #tpu.memory_space<vmem>>, vector<1x8x128xf32>
    %1713 = vector.shape_cast %1712 : vector<1x8x128xf32> to vector<8x128xf32>
    %1714 = arith.mulf %1713, %17 : vector<8x128xf32>
    %1715 = arith.addf %1711, %1714 : vector<8x128xf32>
    %c12_765 = arith.constant 12 : index
    %c0_766 = arith.constant 0 : index
    %c0_767 = arith.constant 0 : index
    %1716 = vector.load %arg2[%c12_765, %c0_766, %c0_767] : memref<81x8x128xf32, #tpu.memory_space<vmem>>, vector<1x8x128xf32>
    %1717 = vector.shape_cast %1716 : vector<1x8x128xf32> to vector<8x128xf32>
    %1718 = arith.mulf %1717, %5 : vector<8x128xf32>
    %c39_768 = arith.constant 39 : index
    %c0_769 = arith.constant 0 : index
    %c0_770 = arith.constant 0 : index
    %1719 = vector.load %arg2[%c39_768, %c0_769, %c0_770] : memref<81x8x128xf32, #tpu.memory_space<vmem>>, vector<1x8x128xf32>
    %1720 = vector.shape_cast %1719 : vector<1x8x128xf32> to vector<8x128xf32>
    %1721 = arith.mulf %1720, %11 : vector<8x128xf32>
    %1722 = arith.addf %1718, %1721 : vector<8x128xf32>
    %c66_771 = arith.constant 66 : index
    %c0_772 = arith.constant 0 : index
    %c0_773 = arith.constant 0 : index
    %1723 = vector.load %arg2[%c66_771, %c0_772, %c0_773] : memref<81x8x128xf32, #tpu.memory_space<vmem>>, vector<1x8x128xf32>
    %1724 = vector.shape_cast %1723 : vector<1x8x128xf32> to vector<8x128xf32>
    %1725 = arith.mulf %1724, %17 : vector<8x128xf32>
    %1726 = arith.addf %1722, %1725 : vector<8x128xf32>
    %c13_774 = arith.constant 13 : index
    %c0_775 = arith.constant 0 : index
    %c0_776 = arith.constant 0 : index
    %1727 = vector.load %arg2[%c13_774, %c0_775, %c0_776] : memref<81x8x128xf32, #tpu.memory_space<vmem>>, vector<1x8x128xf32>
    %1728 = vector.shape_cast %1727 : vector<1x8x128xf32> to vector<8x128xf32>
    %1729 = arith.mulf %1728, %5 : vector<8x128xf32>
    %c40_777 = arith.constant 40 : index
    %c0_778 = arith.constant 0 : index
    %c0_779 = arith.constant 0 : index
    %1730 = vector.load %arg2[%c40_777, %c0_778, %c0_779] : memref<81x8x128xf32, #tpu.memory_space<vmem>>, vector<1x8x128xf32>
    %1731 = vector.shape_cast %1730 : vector<1x8x128xf32> to vector<8x128xf32>
    %1732 = arith.mulf %1731, %11 : vector<8x128xf32>
    %1733 = arith.addf %1729, %1732 : vector<8x128xf32>
    %c67_780 = arith.constant 67 : index
    %c0_781 = arith.constant 0 : index
    %c0_782 = arith.constant 0 : index
    %1734 = vector.load %arg2[%c67_780, %c0_781, %c0_782] : memref<81x8x128xf32, #tpu.memory_space<vmem>>, vector<1x8x128xf32>
    %1735 = vector.shape_cast %1734 : vector<1x8x128xf32> to vector<8x128xf32>
    %1736 = arith.mulf %1735, %17 : vector<8x128xf32>
    %1737 = arith.addf %1733, %1736 : vector<8x128xf32>
    %c14_783 = arith.constant 14 : index
    %c0_784 = arith.constant 0 : index
    %c0_785 = arith.constant 0 : index
    %1738 = vector.load %arg2[%c14_783, %c0_784, %c0_785] : memref<81x8x128xf32, #tpu.memory_space<vmem>>, vector<1x8x128xf32>
    %1739 = vector.shape_cast %1738 : vector<1x8x128xf32> to vector<8x128xf32>
    %1740 = arith.mulf %1739, %5 : vector<8x128xf32>
    %c41_786 = arith.constant 41 : index
    %c0_787 = arith.constant 0 : index
    %c0_788 = arith.constant 0 : index
    %1741 = vector.load %arg2[%c41_786, %c0_787, %c0_788] : memref<81x8x128xf32, #tpu.memory_space<vmem>>, vector<1x8x128xf32>
    %1742 = vector.shape_cast %1741 : vector<1x8x128xf32> to vector<8x128xf32>
    %1743 = arith.mulf %1742, %11 : vector<8x128xf32>
    %1744 = arith.addf %1740, %1743 : vector<8x128xf32>
    %c68_789 = arith.constant 68 : index
    %c0_790 = arith.constant 0 : index
    %c0_791 = arith.constant 0 : index
    %1745 = vector.load %arg2[%c68_789, %c0_790, %c0_791] : memref<81x8x128xf32, #tpu.memory_space<vmem>>, vector<1x8x128xf32>
    %1746 = vector.shape_cast %1745 : vector<1x8x128xf32> to vector<8x128xf32>
    %1747 = arith.mulf %1746, %17 : vector<8x128xf32>
    %1748 = arith.addf %1744, %1747 : vector<8x128xf32>
    %c15_792 = arith.constant 15 : index
    %c0_793 = arith.constant 0 : index
    %c0_794 = arith.constant 0 : index
    %1749 = vector.load %arg2[%c15_792, %c0_793, %c0_794] : memref<81x8x128xf32, #tpu.memory_space<vmem>>, vector<1x8x128xf32>
    %1750 = vector.shape_cast %1749 : vector<1x8x128xf32> to vector<8x128xf32>
    %1751 = arith.mulf %1750, %5 : vector<8x128xf32>
    %c42_795 = arith.constant 42 : index
    %c0_796 = arith.constant 0 : index
    %c0_797 = arith.constant 0 : index
    %1752 = vector.load %arg2[%c42_795, %c0_796, %c0_797] : memref<81x8x128xf32, #tpu.memory_space<vmem>>, vector<1x8x128xf32>
    %1753 = vector.shape_cast %1752 : vector<1x8x128xf32> to vector<8x128xf32>
    %1754 = arith.mulf %1753, %11 : vector<8x128xf32>
    %1755 = arith.addf %1751, %1754 : vector<8x128xf32>
    %c69_798 = arith.constant 69 : index
    %c0_799 = arith.constant 0 : index
    %c0_800 = arith.constant 0 : index
    %1756 = vector.load %arg2[%c69_798, %c0_799, %c0_800] : memref<81x8x128xf32, #tpu.memory_space<vmem>>, vector<1x8x128xf32>
    %1757 = vector.shape_cast %1756 : vector<1x8x128xf32> to vector<8x128xf32>
    %1758 = arith.mulf %1757, %17 : vector<8x128xf32>
    %1759 = arith.addf %1755, %1758 : vector<8x128xf32>
    %c16_801 = arith.constant 16 : index
    %c0_802 = arith.constant 0 : index
    %c0_803 = arith.constant 0 : index
    %1760 = vector.load %arg2[%c16_801, %c0_802, %c0_803] : memref<81x8x128xf32, #tpu.memory_space<vmem>>, vector<1x8x128xf32>
    %1761 = vector.shape_cast %1760 : vector<1x8x128xf32> to vector<8x128xf32>
    %1762 = arith.mulf %1761, %5 : vector<8x128xf32>
    %c43_804 = arith.constant 43 : index
    %c0_805 = arith.constant 0 : index
    %c0_806 = arith.constant 0 : index
    %1763 = vector.load %arg2[%c43_804, %c0_805, %c0_806] : memref<81x8x128xf32, #tpu.memory_space<vmem>>, vector<1x8x128xf32>
    %1764 = vector.shape_cast %1763 : vector<1x8x128xf32> to vector<8x128xf32>
    %1765 = arith.mulf %1764, %11 : vector<8x128xf32>
    %1766 = arith.addf %1762, %1765 : vector<8x128xf32>
    %c70_807 = arith.constant 70 : index
    %c0_808 = arith.constant 0 : index
    %c0_809 = arith.constant 0 : index
    %1767 = vector.load %arg2[%c70_807, %c0_808, %c0_809] : memref<81x8x128xf32, #tpu.memory_space<vmem>>, vector<1x8x128xf32>
    %1768 = vector.shape_cast %1767 : vector<1x8x128xf32> to vector<8x128xf32>
    %1769 = arith.mulf %1768, %17 : vector<8x128xf32>
    %1770 = arith.addf %1766, %1769 : vector<8x128xf32>
    %c17_810 = arith.constant 17 : index
    %c0_811 = arith.constant 0 : index
    %c0_812 = arith.constant 0 : index
    %1771 = vector.load %arg2[%c17_810, %c0_811, %c0_812] : memref<81x8x128xf32, #tpu.memory_space<vmem>>, vector<1x8x128xf32>
    %1772 = vector.shape_cast %1771 : vector<1x8x128xf32> to vector<8x128xf32>
    %1773 = arith.mulf %1772, %5 : vector<8x128xf32>
    %c44_813 = arith.constant 44 : index
    %c0_814 = arith.constant 0 : index
    %c0_815 = arith.constant 0 : index
    %1774 = vector.load %arg2[%c44_813, %c0_814, %c0_815] : memref<81x8x128xf32, #tpu.memory_space<vmem>>, vector<1x8x128xf32>
    %1775 = vector.shape_cast %1774 : vector<1x8x128xf32> to vector<8x128xf32>
    %1776 = arith.mulf %1775, %11 : vector<8x128xf32>
    %1777 = arith.addf %1773, %1776 : vector<8x128xf32>
    %c71_816 = arith.constant 71 : index
    %c0_817 = arith.constant 0 : index
    %c0_818 = arith.constant 0 : index
    %1778 = vector.load %arg2[%c71_816, %c0_817, %c0_818] : memref<81x8x128xf32, #tpu.memory_space<vmem>>, vector<1x8x128xf32>
    %1779 = vector.shape_cast %1778 : vector<1x8x128xf32> to vector<8x128xf32>
    %1780 = arith.mulf %1779, %17 : vector<8x128xf32>
    %1781 = arith.addf %1777, %1780 : vector<8x128xf32>
    %c18_819 = arith.constant 18 : index
    %c0_820 = arith.constant 0 : index
    %c0_821 = arith.constant 0 : index
    %1782 = vector.load %arg2[%c18_819, %c0_820, %c0_821] : memref<81x8x128xf32, #tpu.memory_space<vmem>>, vector<1x8x128xf32>
    %1783 = vector.shape_cast %1782 : vector<1x8x128xf32> to vector<8x128xf32>
    %1784 = arith.mulf %1783, %5 : vector<8x128xf32>
    %c45_822 = arith.constant 45 : index
    %c0_823 = arith.constant 0 : index
    %c0_824 = arith.constant 0 : index
    %1785 = vector.load %arg2[%c45_822, %c0_823, %c0_824] : memref<81x8x128xf32, #tpu.memory_space<vmem>>, vector<1x8x128xf32>
    %1786 = vector.shape_cast %1785 : vector<1x8x128xf32> to vector<8x128xf32>
    %1787 = arith.mulf %1786, %11 : vector<8x128xf32>
    %1788 = arith.addf %1784, %1787 : vector<8x128xf32>
    %c72_825 = arith.constant 72 : index
    %c0_826 = arith.constant 0 : index
    %c0_827 = arith.constant 0 : index
    %1789 = vector.load %arg2[%c72_825, %c0_826, %c0_827] : memref<81x8x128xf32, #tpu.memory_space<vmem>>, vector<1x8x128xf32>
    %1790 = vector.shape_cast %1789 : vector<1x8x128xf32> to vector<8x128xf32>
    %1791 = arith.mulf %1790, %17 : vector<8x128xf32>
    %1792 = arith.addf %1788, %1791 : vector<8x128xf32>
    %c19_828 = arith.constant 19 : index
    %c0_829 = arith.constant 0 : index
    %c0_830 = arith.constant 0 : index
    %1793 = vector.load %arg2[%c19_828, %c0_829, %c0_830] : memref<81x8x128xf32, #tpu.memory_space<vmem>>, vector<1x8x128xf32>
    %1794 = vector.shape_cast %1793 : vector<1x8x128xf32> to vector<8x128xf32>
    %1795 = arith.mulf %1794, %5 : vector<8x128xf32>
    %c46_831 = arith.constant 46 : index
    %c0_832 = arith.constant 0 : index
    %c0_833 = arith.constant 0 : index
    %1796 = vector.load %arg2[%c46_831, %c0_832, %c0_833] : memref<81x8x128xf32, #tpu.memory_space<vmem>>, vector<1x8x128xf32>
    %1797 = vector.shape_cast %1796 : vector<1x8x128xf32> to vector<8x128xf32>
    %1798 = arith.mulf %1797, %11 : vector<8x128xf32>
    %1799 = arith.addf %1795, %1798 : vector<8x128xf32>
    %c73_834 = arith.constant 73 : index
    %c0_835 = arith.constant 0 : index
    %c0_836 = arith.constant 0 : index
    %1800 = vector.load %arg2[%c73_834, %c0_835, %c0_836] : memref<81x8x128xf32, #tpu.memory_space<vmem>>, vector<1x8x128xf32>
    %1801 = vector.shape_cast %1800 : vector<1x8x128xf32> to vector<8x128xf32>
    %1802 = arith.mulf %1801, %17 : vector<8x128xf32>
    %1803 = arith.addf %1799, %1802 : vector<8x128xf32>
    %c20_837 = arith.constant 20 : index
    %c0_838 = arith.constant 0 : index
    %c0_839 = arith.constant 0 : index
    %1804 = vector.load %arg2[%c20_837, %c0_838, %c0_839] : memref<81x8x128xf32, #tpu.memory_space<vmem>>, vector<1x8x128xf32>
    %1805 = vector.shape_cast %1804 : vector<1x8x128xf32> to vector<8x128xf32>
    %1806 = arith.mulf %1805, %5 : vector<8x128xf32>
    %c47_840 = arith.constant 47 : index
    %c0_841 = arith.constant 0 : index
    %c0_842 = arith.constant 0 : index
    %1807 = vector.load %arg2[%c47_840, %c0_841, %c0_842] : memref<81x8x128xf32, #tpu.memory_space<vmem>>, vector<1x8x128xf32>
    %1808 = vector.shape_cast %1807 : vector<1x8x128xf32> to vector<8x128xf32>
    %1809 = arith.mulf %1808, %11 : vector<8x128xf32>
    %1810 = arith.addf %1806, %1809 : vector<8x128xf32>
    %c74_843 = arith.constant 74 : index
    %c0_844 = arith.constant 0 : index
    %c0_845 = arith.constant 0 : index
    %1811 = vector.load %arg2[%c74_843, %c0_844, %c0_845] : memref<81x8x128xf32, #tpu.memory_space<vmem>>, vector<1x8x128xf32>
    %1812 = vector.shape_cast %1811 : vector<1x8x128xf32> to vector<8x128xf32>
    %1813 = arith.mulf %1812, %17 : vector<8x128xf32>
    %1814 = arith.addf %1810, %1813 : vector<8x128xf32>
    %c21_846 = arith.constant 21 : index
    %c0_847 = arith.constant 0 : index
    %c0_848 = arith.constant 0 : index
    %1815 = vector.load %arg2[%c21_846, %c0_847, %c0_848] : memref<81x8x128xf32, #tpu.memory_space<vmem>>, vector<1x8x128xf32>
    %1816 = vector.shape_cast %1815 : vector<1x8x128xf32> to vector<8x128xf32>
    %1817 = arith.mulf %1816, %5 : vector<8x128xf32>
    %c48_849 = arith.constant 48 : index
    %c0_850 = arith.constant 0 : index
    %c0_851 = arith.constant 0 : index
    %1818 = vector.load %arg2[%c48_849, %c0_850, %c0_851] : memref<81x8x128xf32, #tpu.memory_space<vmem>>, vector<1x8x128xf32>
    %1819 = vector.shape_cast %1818 : vector<1x8x128xf32> to vector<8x128xf32>
    %1820 = arith.mulf %1819, %11 : vector<8x128xf32>
    %1821 = arith.addf %1817, %1820 : vector<8x128xf32>
    %c75_852 = arith.constant 75 : index
    %c0_853 = arith.constant 0 : index
    %c0_854 = arith.constant 0 : index
    %1822 = vector.load %arg2[%c75_852, %c0_853, %c0_854] : memref<81x8x128xf32, #tpu.memory_space<vmem>>, vector<1x8x128xf32>
    %1823 = vector.shape_cast %1822 : vector<1x8x128xf32> to vector<8x128xf32>
    %1824 = arith.mulf %1823, %17 : vector<8x128xf32>
    %1825 = arith.addf %1821, %1824 : vector<8x128xf32>
    %c22_855 = arith.constant 22 : index
    %c0_856 = arith.constant 0 : index
    %c0_857 = arith.constant 0 : index
    %1826 = vector.load %arg2[%c22_855, %c0_856, %c0_857] : memref<81x8x128xf32, #tpu.memory_space<vmem>>, vector<1x8x128xf32>
    %1827 = vector.shape_cast %1826 : vector<1x8x128xf32> to vector<8x128xf32>
    %1828 = arith.mulf %1827, %5 : vector<8x128xf32>
    %c49_858 = arith.constant 49 : index
    %c0_859 = arith.constant 0 : index
    %c0_860 = arith.constant 0 : index
    %1829 = vector.load %arg2[%c49_858, %c0_859, %c0_860] : memref<81x8x128xf32, #tpu.memory_space<vmem>>, vector<1x8x128xf32>
    %1830 = vector.shape_cast %1829 : vector<1x8x128xf32> to vector<8x128xf32>
    %1831 = arith.mulf %1830, %11 : vector<8x128xf32>
    %1832 = arith.addf %1828, %1831 : vector<8x128xf32>
    %c76_861 = arith.constant 76 : index
    %c0_862 = arith.constant 0 : index
    %c0_863 = arith.constant 0 : index
    %1833 = vector.load %arg2[%c76_861, %c0_862, %c0_863] : memref<81x8x128xf32, #tpu.memory_space<vmem>>, vector<1x8x128xf32>
    %1834 = vector.shape_cast %1833 : vector<1x8x128xf32> to vector<8x128xf32>
    %1835 = arith.mulf %1834, %17 : vector<8x128xf32>
    %1836 = arith.addf %1832, %1835 : vector<8x128xf32>
    %c23_864 = arith.constant 23 : index
    %c0_865 = arith.constant 0 : index
    %c0_866 = arith.constant 0 : index
    %1837 = vector.load %arg2[%c23_864, %c0_865, %c0_866] : memref<81x8x128xf32, #tpu.memory_space<vmem>>, vector<1x8x128xf32>
    %1838 = vector.shape_cast %1837 : vector<1x8x128xf32> to vector<8x128xf32>
    %1839 = arith.mulf %1838, %5 : vector<8x128xf32>
    %c50_867 = arith.constant 50 : index
    %c0_868 = arith.constant 0 : index
    %c0_869 = arith.constant 0 : index
    %1840 = vector.load %arg2[%c50_867, %c0_868, %c0_869] : memref<81x8x128xf32, #tpu.memory_space<vmem>>, vector<1x8x128xf32>
    %1841 = vector.shape_cast %1840 : vector<1x8x128xf32> to vector<8x128xf32>
    %1842 = arith.mulf %1841, %11 : vector<8x128xf32>
    %1843 = arith.addf %1839, %1842 : vector<8x128xf32>
    %c77_870 = arith.constant 77 : index
    %c0_871 = arith.constant 0 : index
    %c0_872 = arith.constant 0 : index
    %1844 = vector.load %arg2[%c77_870, %c0_871, %c0_872] : memref<81x8x128xf32, #tpu.memory_space<vmem>>, vector<1x8x128xf32>
    %1845 = vector.shape_cast %1844 : vector<1x8x128xf32> to vector<8x128xf32>
    %1846 = arith.mulf %1845, %17 : vector<8x128xf32>
    %1847 = arith.addf %1843, %1846 : vector<8x128xf32>
    %c24_873 = arith.constant 24 : index
    %c0_874 = arith.constant 0 : index
    %c0_875 = arith.constant 0 : index
    %1848 = vector.load %arg2[%c24_873, %c0_874, %c0_875] : memref<81x8x128xf32, #tpu.memory_space<vmem>>, vector<1x8x128xf32>
    %1849 = vector.shape_cast %1848 : vector<1x8x128xf32> to vector<8x128xf32>
    %1850 = arith.mulf %1849, %5 : vector<8x128xf32>
    %c51_876 = arith.constant 51 : index
    %c0_877 = arith.constant 0 : index
    %c0_878 = arith.constant 0 : index
    %1851 = vector.load %arg2[%c51_876, %c0_877, %c0_878] : memref<81x8x128xf32, #tpu.memory_space<vmem>>, vector<1x8x128xf32>
    %1852 = vector.shape_cast %1851 : vector<1x8x128xf32> to vector<8x128xf32>
    %1853 = arith.mulf %1852, %11 : vector<8x128xf32>
    %1854 = arith.addf %1850, %1853 : vector<8x128xf32>
    %c78_879 = arith.constant 78 : index
    %c0_880 = arith.constant 0 : index
    %c0_881 = arith.constant 0 : index
    %1855 = vector.load %arg2[%c78_879, %c0_880, %c0_881] : memref<81x8x128xf32, #tpu.memory_space<vmem>>, vector<1x8x128xf32>
    %1856 = vector.shape_cast %1855 : vector<1x8x128xf32> to vector<8x128xf32>
    %1857 = arith.mulf %1856, %17 : vector<8x128xf32>
    %1858 = arith.addf %1854, %1857 : vector<8x128xf32>
    %c25_882 = arith.constant 25 : index
    %c0_883 = arith.constant 0 : index
    %c0_884 = arith.constant 0 : index
    %1859 = vector.load %arg2[%c25_882, %c0_883, %c0_884] : memref<81x8x128xf32, #tpu.memory_space<vmem>>, vector<1x8x128xf32>
    %1860 = vector.shape_cast %1859 : vector<1x8x128xf32> to vector<8x128xf32>
    %1861 = arith.mulf %1860, %5 : vector<8x128xf32>
    %c52_885 = arith.constant 52 : index
    %c0_886 = arith.constant 0 : index
    %c0_887 = arith.constant 0 : index
    %1862 = vector.load %arg2[%c52_885, %c0_886, %c0_887] : memref<81x8x128xf32, #tpu.memory_space<vmem>>, vector<1x8x128xf32>
    %1863 = vector.shape_cast %1862 : vector<1x8x128xf32> to vector<8x128xf32>
    %1864 = arith.mulf %1863, %11 : vector<8x128xf32>
    %1865 = arith.addf %1861, %1864 : vector<8x128xf32>
    %c79_888 = arith.constant 79 : index
    %c0_889 = arith.constant 0 : index
    %c0_890 = arith.constant 0 : index
    %1866 = vector.load %arg2[%c79_888, %c0_889, %c0_890] : memref<81x8x128xf32, #tpu.memory_space<vmem>>, vector<1x8x128xf32>
    %1867 = vector.shape_cast %1866 : vector<1x8x128xf32> to vector<8x128xf32>
    %1868 = arith.mulf %1867, %17 : vector<8x128xf32>
    %1869 = arith.addf %1865, %1868 : vector<8x128xf32>
    %c26_891 = arith.constant 26 : index
    %c0_892 = arith.constant 0 : index
    %c0_893 = arith.constant 0 : index
    %1870 = vector.load %arg2[%c26_891, %c0_892, %c0_893] : memref<81x8x128xf32, #tpu.memory_space<vmem>>, vector<1x8x128xf32>
    %1871 = vector.shape_cast %1870 : vector<1x8x128xf32> to vector<8x128xf32>
    %1872 = arith.mulf %1871, %5 : vector<8x128xf32>
    %c53_894 = arith.constant 53 : index
    %c0_895 = arith.constant 0 : index
    %c0_896 = arith.constant 0 : index
    %1873 = vector.load %arg2[%c53_894, %c0_895, %c0_896] : memref<81x8x128xf32, #tpu.memory_space<vmem>>, vector<1x8x128xf32>
    %1874 = vector.shape_cast %1873 : vector<1x8x128xf32> to vector<8x128xf32>
    %1875 = arith.mulf %1874, %11 : vector<8x128xf32>
    %1876 = arith.addf %1872, %1875 : vector<8x128xf32>
    %c80_897 = arith.constant 80 : index
    %c0_898 = arith.constant 0 : index
    %c0_899 = arith.constant 0 : index
    %1877 = vector.load %arg2[%c80_897, %c0_898, %c0_899] : memref<81x8x128xf32, #tpu.memory_space<vmem>>, vector<1x8x128xf32>
    %1878 = vector.shape_cast %1877 : vector<1x8x128xf32> to vector<8x128xf32>
    %1879 = arith.mulf %1878, %17 : vector<8x128xf32>
    %1880 = arith.addf %1876, %1879 : vector<8x128xf32>
    %1881 = arith.mulf %1, %1594 : vector<8x128xf32>
    %1882 = arith.mulf %7, %1693 : vector<8x128xf32>
    %1883 = arith.addf %1881, %1882 : vector<8x128xf32>
    %1884 = arith.mulf %13, %1792 : vector<8x128xf32>
    %1885 = arith.addf %1883, %1884 : vector<8x128xf32>
    %1886 = arith.mulf %1, %1605 : vector<8x128xf32>
    %1887 = arith.mulf %7, %1704 : vector<8x128xf32>
    %1888 = arith.addf %1886, %1887 : vector<8x128xf32>
    %1889 = arith.mulf %13, %1803 : vector<8x128xf32>
    %1890 = arith.addf %1888, %1889 : vector<8x128xf32>
    %1891 = arith.mulf %1, %1616 : vector<8x128xf32>
    %1892 = arith.mulf %7, %1715 : vector<8x128xf32>
    %1893 = arith.addf %1891, %1892 : vector<8x128xf32>
    %1894 = arith.mulf %13, %1814 : vector<8x128xf32>
    %1895 = arith.addf %1893, %1894 : vector<8x128xf32>
    %1896 = arith.mulf %1, %1627 : vector<8x128xf32>
    %1897 = arith.mulf %7, %1726 : vector<8x128xf32>
    %1898 = arith.addf %1896, %1897 : vector<8x128xf32>
    %1899 = arith.mulf %13, %1825 : vector<8x128xf32>
    %1900 = arith.addf %1898, %1899 : vector<8x128xf32>
    %1901 = arith.mulf %1, %1638 : vector<8x128xf32>
    %1902 = arith.mulf %7, %1737 : vector<8x128xf32>
    %1903 = arith.addf %1901, %1902 : vector<8x128xf32>
    %1904 = arith.mulf %13, %1836 : vector<8x128xf32>
    %1905 = arith.addf %1903, %1904 : vector<8x128xf32>
    %1906 = arith.mulf %1, %1649 : vector<8x128xf32>
    %1907 = arith.mulf %7, %1748 : vector<8x128xf32>
    %1908 = arith.addf %1906, %1907 : vector<8x128xf32>
    %1909 = arith.mulf %13, %1847 : vector<8x128xf32>
    %1910 = arith.addf %1908, %1909 : vector<8x128xf32>
    %1911 = arith.mulf %1, %1660 : vector<8x128xf32>
    %1912 = arith.mulf %7, %1759 : vector<8x128xf32>
    %1913 = arith.addf %1911, %1912 : vector<8x128xf32>
    %1914 = arith.mulf %13, %1858 : vector<8x128xf32>
    %1915 = arith.addf %1913, %1914 : vector<8x128xf32>
    %1916 = arith.mulf %1, %1671 : vector<8x128xf32>
    %1917 = arith.mulf %7, %1770 : vector<8x128xf32>
    %1918 = arith.addf %1916, %1917 : vector<8x128xf32>
    %1919 = arith.mulf %13, %1869 : vector<8x128xf32>
    %1920 = arith.addf %1918, %1919 : vector<8x128xf32>
    %1921 = arith.mulf %1, %1682 : vector<8x128xf32>
    %1922 = arith.mulf %7, %1781 : vector<8x128xf32>
    %1923 = arith.addf %1921, %1922 : vector<8x128xf32>
    %1924 = arith.mulf %13, %1880 : vector<8x128xf32>
    %1925 = arith.addf %1923, %1924 : vector<8x128xf32>
    %1926 = arith.mulf %1, %1885 : vector<8x128xf32>
    %1927 = arith.mulf %7, %1900 : vector<8x128xf32>
    %1928 = arith.addf %1926, %1927 : vector<8x128xf32>
    %1929 = arith.mulf %13, %1915 : vector<8x128xf32>
    %1930 = arith.addf %1928, %1929 : vector<8x128xf32>
    %1931 = arith.mulf %1, %1890 : vector<8x128xf32>
    %1932 = arith.mulf %7, %1905 : vector<8x128xf32>
    %1933 = arith.addf %1931, %1932 : vector<8x128xf32>
    %1934 = arith.mulf %13, %1920 : vector<8x128xf32>
    %1935 = arith.addf %1933, %1934 : vector<8x128xf32>
    %1936 = arith.mulf %1, %1895 : vector<8x128xf32>
    %1937 = arith.mulf %7, %1910 : vector<8x128xf32>
    %1938 = arith.addf %1936, %1937 : vector<8x128xf32>
    %1939 = arith.mulf %13, %1925 : vector<8x128xf32>
    %1940 = arith.addf %1938, %1939 : vector<8x128xf32>
    %1941 = arith.mulf %1, %1930 : vector<8x128xf32>
    %1942 = arith.mulf %7, %1935 : vector<8x128xf32>
    %1943 = arith.addf %1941, %1942 : vector<8x128xf32>
    %1944 = arith.mulf %13, %1940 : vector<8x128xf32>
    %1945 = arith.addf %1943, %1944 : vector<8x128xf32>
    %c0_900 = arith.constant 0 : index
    %c54_901 = arith.constant 54 : index
    %c0_902 = arith.constant 0 : index
    %c0_903 = arith.constant 0 : index
    %1946 = vector.load %arg4[%c0_900, %c54_901, %c0_902, %c0_903] : memref<1x81x8x128xf32, #tpu.memory_space<vmem>>, vector<1x1x8x128xf32>
    %1947 = vector.shape_cast %1946 : vector<1x1x8x128xf32> to vector<8x128xf32>
    %1948 = vector.shape_cast %1945 : vector<8x128xf32> to vector<1x1x8x128xf32>
    tpu.vector_store %arg4[%c0_900, %c54_901, %c0_902, %c0_903], %1948 {strides = array<i32>} : memref<1x81x8x128xf32, #tpu.memory_space<vmem>>, vector<1x1x8x128xf32>,
    %1949 = arith.mulf %3, %1930 : vector<8x128xf32>
    %1950 = arith.mulf %9, %1935 : vector<8x128xf32>
    %1951 = arith.addf %1949, %1950 : vector<8x128xf32>
    %1952 = arith.mulf %15, %1940 : vector<8x128xf32>
    %1953 = arith.addf %1951, %1952 : vector<8x128xf32>
    %c0_904 = arith.constant 0 : index
    %c55_905 = arith.constant 55 : index
    %c0_906 = arith.constant 0 : index
    %c0_907 = arith.constant 0 : index
    %1954 = vector.load %arg4[%c0_904, %c55_905, %c0_906, %c0_907] : memref<1x81x8x128xf32, #tpu.memory_space<vmem>>, vector<1x1x8x128xf32>
    %1955 = vector.shape_cast %1954 : vector<1x1x8x128xf32> to vector<8x128xf32>
    %1956 = vector.shape_cast %1953 : vector<8x128xf32> to vector<1x1x8x128xf32>
    tpu.vector_store %arg4[%c0_904, %c55_905, %c0_906, %c0_907], %1956 {strides = array<i32>} : memref<1x81x8x128xf32, #tpu.memory_space<vmem>>, vector<1x1x8x128xf32>,
    %1957 = arith.mulf %5, %1930 : vector<8x128xf32>
    %1958 = arith.mulf %11, %1935 : vector<8x128xf32>
    %1959 = arith.addf %1957, %1958 : vector<8x128xf32>
    %1960 = arith.mulf %17, %1940 : vector<8x128xf32>
    %1961 = arith.addf %1959, %1960 : vector<8x128xf32>
    %c0_908 = arith.constant 0 : index
    %c56_909 = arith.constant 56 : index
    %c0_910 = arith.constant 0 : index
    %c0_911 = arith.constant 0 : index
    %1962 = vector.load %arg4[%c0_908, %c56_909, %c0_910, %c0_911] : memref<1x81x8x128xf32, #tpu.memory_space<vmem>>, vector<1x1x8x128xf32>
    %1963 = vector.shape_cast %1962 : vector<1x1x8x128xf32> to vector<8x128xf32>
    %1964 = vector.shape_cast %1961 : vector<8x128xf32> to vector<1x1x8x128xf32>
    tpu.vector_store %arg4[%c0_908, %c56_909, %c0_910, %c0_911], %1964 {strides = array<i32>} : memref<1x81x8x128xf32, #tpu.memory_space<vmem>>, vector<1x1x8x128xf32>,
    %1965 = arith.mulf %3, %1885 : vector<8x128xf32>
    %1966 = arith.mulf %9, %1900 : vector<8x128xf32>
    %1967 = arith.addf %1965, %1966 : vector<8x128xf32>
    %1968 = arith.mulf %15, %1915 : vector<8x128xf32>
    %1969 = arith.addf %1967, %1968 : vector<8x128xf32>
    %1970 = arith.mulf %3, %1890 : vector<8x128xf32>
    %1971 = arith.mulf %9, %1905 : vector<8x128xf32>
    %1972 = arith.addf %1970, %1971 : vector<8x128xf32>
    %1973 = arith.mulf %15, %1920 : vector<8x128xf32>
    %1974 = arith.addf %1972, %1973 : vector<8x128xf32>
    %1975 = arith.mulf %3, %1895 : vector<8x128xf32>
    %1976 = arith.mulf %9, %1910 : vector<8x128xf32>
    %1977 = arith.addf %1975, %1976 : vector<8x128xf32>
    %1978 = arith.mulf %15, %1925 : vector<8x128xf32>
    %1979 = arith.addf %1977, %1978 : vector<8x128xf32>
    %1980 = arith.mulf %1, %1969 : vector<8x128xf32>
    %1981 = arith.mulf %7, %1974 : vector<8x128xf32>
    %1982 = arith.addf %1980, %1981 : vector<8x128xf32>
    %1983 = arith.mulf %13, %1979 : vector<8x128xf32>
    %1984 = arith.addf %1982, %1983 : vector<8x128xf32>
    %c0_912 = arith.constant 0 : index
    %c57_913 = arith.constant 57 : index
    %c0_914 = arith.constant 0 : index
    %c0_915 = arith.constant 0 : index
    %1985 = vector.load %arg4[%c0_912, %c57_913, %c0_914, %c0_915] : memref<1x81x8x128xf32, #tpu.memory_space<vmem>>, vector<1x1x8x128xf32>
    %1986 = vector.shape_cast %1985 : vector<1x1x8x128xf32> to vector<8x128xf32>
    %1987 = vector.shape_cast %1984 : vector<8x128xf32> to vector<1x1x8x128xf32>
    tpu.vector_store %arg4[%c0_912, %c57_913, %c0_914, %c0_915], %1987 {strides = array<i32>} : memref<1x81x8x128xf32, #tpu.memory_space<vmem>>, vector<1x1x8x128xf32>,
    %1988 = arith.mulf %3, %1969 : vector<8x128xf32>
    %1989 = arith.mulf %9, %1974 : vector<8x128xf32>
    %1990 = arith.addf %1988, %1989 : vector<8x128xf32>
    %1991 = arith.mulf %15, %1979 : vector<8x128xf32>
    %1992 = arith.addf %1990, %1991 : vector<8x128xf32>
    %c0_916 = arith.constant 0 : index
    %c58_917 = arith.constant 58 : index
    %c0_918 = arith.constant 0 : index
    %c0_919 = arith.constant 0 : index
    %1993 = vector.load %arg4[%c0_916, %c58_917, %c0_918, %c0_919] : memref<1x81x8x128xf32, #tpu.memory_space<vmem>>, vector<1x1x8x128xf32>
    %1994 = vector.shape_cast %1993 : vector<1x1x8x128xf32> to vector<8x128xf32>
    %1995 = vector.shape_cast %1992 : vector<8x128xf32> to vector<1x1x8x128xf32>
    tpu.vector_store %arg4[%c0_916, %c58_917, %c0_918, %c0_919], %1995 {strides = array<i32>} : memref<1x81x8x128xf32, #tpu.memory_space<vmem>>, vector<1x1x8x128xf32>,
    %1996 = arith.mulf %5, %1969 : vector<8x128xf32>
    %1997 = arith.mulf %11, %1974 : vector<8x128xf32>
    %1998 = arith.addf %1996, %1997 : vector<8x128xf32>
    %1999 = arith.mulf %17, %1979 : vector<8x128xf32>
    %2000 = arith.addf %1998, %1999 : vector<8x128xf32>
    %c0_920 = arith.constant 0 : index
    %c59_921 = arith.constant 59 : index
    %c0_922 = arith.constant 0 : index
    %c0_923 = arith.constant 0 : index
    %2001 = vector.load %arg4[%c0_920, %c59_921, %c0_922, %c0_923] : memref<1x81x8x128xf32, #tpu.memory_space<vmem>>, vector<1x1x8x128xf32>
    %2002 = vector.shape_cast %2001 : vector<1x1x8x128xf32> to vector<8x128xf32>
    %2003 = vector.shape_cast %2000 : vector<8x128xf32> to vector<1x1x8x128xf32>
    tpu.vector_store %arg4[%c0_920, %c59_921, %c0_922, %c0_923], %2003 {strides = array<i32>} : memref<1x81x8x128xf32, #tpu.memory_space<vmem>>, vector<1x1x8x128xf32>,
    %2004 = arith.mulf %5, %1885 : vector<8x128xf32>
    %2005 = arith.mulf %11, %1900 : vector<8x128xf32>
    %2006 = arith.addf %2004, %2005 : vector<8x128xf32>
    %2007 = arith.mulf %17, %1915 : vector<8x128xf32>
    %2008 = arith.addf %2006, %2007 : vector<8x128xf32>
    %2009 = arith.mulf %5, %1890 : vector<8x128xf32>
    %2010 = arith.mulf %11, %1905 : vector<8x128xf32>
    %2011 = arith.addf %2009, %2010 : vector<8x128xf32>
    %2012 = arith.mulf %17, %1920 : vector<8x128xf32>
    %2013 = arith.addf %2011, %2012 : vector<8x128xf32>
    %2014 = arith.mulf %5, %1895 : vector<8x128xf32>
    %2015 = arith.mulf %11, %1910 : vector<8x128xf32>
    %2016 = arith.addf %2014, %2015 : vector<8x128xf32>
    %2017 = arith.mulf %17, %1925 : vector<8x128xf32>
    %2018 = arith.addf %2016, %2017 : vector<8x128xf32>
    %2019 = arith.mulf %1, %2008 : vector<8x128xf32>
    %2020 = arith.mulf %7, %2013 : vector<8x128xf32>
    %2021 = arith.addf %2019, %2020 : vector<8x128xf32>
    %2022 = arith.mulf %13, %2018 : vector<8x128xf32>
    %2023 = arith.addf %2021, %2022 : vector<8x128xf32>
    %c0_924 = arith.constant 0 : index
    %c60_925 = arith.constant 60 : index
    %c0_926 = arith.constant 0 : index
    %c0_927 = arith.constant 0 : index
    %2024 = vector.load %arg4[%c0_924, %c60_925, %c0_926, %c0_927] : memref<1x81x8x128xf32, #tpu.memory_space<vmem>>, vector<1x1x8x128xf32>
    %2025 = vector.shape_cast %2024 : vector<1x1x8x128xf32> to vector<8x128xf32>
    %2026 = vector.shape_cast %2023 : vector<8x128xf32> to vector<1x1x8x128xf32>
    tpu.vector_store %arg4[%c0_924, %c60_925, %c0_926, %c0_927], %2026 {strides = array<i32>} : memref<1x81x8x128xf32, #tpu.memory_space<vmem>>, vector<1x1x8x128xf32>,
    %2027 = arith.mulf %3, %2008 : vector<8x128xf32>
    %2028 = arith.mulf %9, %2013 : vector<8x128xf32>
    %2029 = arith.addf %2027, %2028 : vector<8x128xf32>
    %2030 = arith.mulf %15, %2018 : vector<8x128xf32>
    %2031 = arith.addf %2029, %2030 : vector<8x128xf32>
    %c0_928 = arith.constant 0 : index
    %c61_929 = arith.constant 61 : index
    %c0_930 = arith.constant 0 : index
    %c0_931 = arith.constant 0 : index
    %2032 = vector.load %arg4[%c0_928, %c61_929, %c0_930, %c0_931] : memref<1x81x8x128xf32, #tpu.memory_space<vmem>>, vector<1x1x8x128xf32>
    %2033 = vector.shape_cast %2032 : vector<1x1x8x128xf32> to vector<8x128xf32>
    %2034 = vector.shape_cast %2031 : vector<8x128xf32> to vector<1x1x8x128xf32>
    tpu.vector_store %arg4[%c0_928, %c61_929, %c0_930, %c0_931], %2034 {strides = array<i32>} : memref<1x81x8x128xf32, #tpu.memory_space<vmem>>, vector<1x1x8x128xf32>,
    %2035 = arith.mulf %5, %2008 : vector<8x128xf32>
    %2036 = arith.mulf %11, %2013 : vector<8x128xf32>
    %2037 = arith.addf %2035, %2036 : vector<8x128xf32>
    %2038 = arith.mulf %17, %2018 : vector<8x128xf32>
    %2039 = arith.addf %2037, %2038 : vector<8x128xf32>
    %c0_932 = arith.constant 0 : index
    %c62_933 = arith.constant 62 : index
    %c0_934 = arith.constant 0 : index
    %c0_935 = arith.constant 0 : index
    %2040 = vector.load %arg4[%c0_932, %c62_933, %c0_934, %c0_935] : memref<1x81x8x128xf32, #tpu.memory_space<vmem>>, vector<1x1x8x128xf32>
    %2041 = vector.shape_cast %2040 : vector<1x1x8x128xf32> to vector<8x128xf32>
    %2042 = vector.shape_cast %2039 : vector<8x128xf32> to vector<1x1x8x128xf32>
    tpu.vector_store %arg4[%c0_932, %c62_933, %c0_934, %c0_935], %2042 {strides = array<i32>} : memref<1x81x8x128xf32, #tpu.memory_space<vmem>>, vector<1x1x8x128xf32>,
    %2043 = arith.mulf %3, %1594 : vector<8x128xf32>
    %2044 = arith.mulf %9, %1693 : vector<8x128xf32>
    %2045 = arith.addf %2043, %2044 : vector<8x128xf32>
    %2046 = arith.mulf %15, %1792 : vector<8x128xf32>
    %2047 = arith.addf %2045, %2046 : vector<8x128xf32>
    %2048 = arith.mulf %3, %1605 : vector<8x128xf32>
    %2049 = arith.mulf %9, %1704 : vector<8x128xf32>
    %2050 = arith.addf %2048, %2049 : vector<8x128xf32>
    %2051 = arith.mulf %15, %1803 : vector<8x128xf32>
    %2052 = arith.addf %2050, %2051 : vector<8x128xf32>
    %2053 = arith.mulf %3, %1616 : vector<8x128xf32>
    %2054 = arith.mulf %9, %1715 : vector<8x128xf32>
    %2055 = arith.addf %2053, %2054 : vector<8x128xf32>
    %2056 = arith.mulf %15, %1814 : vector<8x128xf32>
    %2057 = arith.addf %2055, %2056 : vector<8x128xf32>
    %2058 = arith.mulf %3, %1627 : vector<8x128xf32>
    %2059 = arith.mulf %9, %1726 : vector<8x128xf32>
    %2060 = arith.addf %2058, %2059 : vector<8x128xf32>
    %2061 = arith.mulf %15, %1825 : vector<8x128xf32>
    %2062 = arith.addf %2060, %2061 : vector<8x128xf32>
    %2063 = arith.mulf %3, %1638 : vector<8x128xf32>
    %2064 = arith.mulf %9, %1737 : vector<8x128xf32>
    %2065 = arith.addf %2063, %2064 : vector<8x128xf32>
    %2066 = arith.mulf %15, %1836 : vector<8x128xf32>
    %2067 = arith.addf %2065, %2066 : vector<8x128xf32>
    %2068 = arith.mulf %3, %1649 : vector<8x128xf32>
    %2069 = arith.mulf %9, %1748 : vector<8x128xf32>
    %2070 = arith.addf %2068, %2069 : vector<8x128xf32>
    %2071 = arith.mulf %15, %1847 : vector<8x128xf32>
    %2072 = arith.addf %2070, %2071 : vector<8x128xf32>
    %2073 = arith.mulf %3, %1660 : vector<8x128xf32>
    %2074 = arith.mulf %9, %1759 : vector<8x128xf32>
    %2075 = arith.addf %2073, %2074 : vector<8x128xf32>
    %2076 = arith.mulf %15, %1858 : vector<8x128xf32>
    %2077 = arith.addf %2075, %2076 : vector<8x128xf32>
    %2078 = arith.mulf %3, %1671 : vector<8x128xf32>
    %2079 = arith.mulf %9, %1770 : vector<8x128xf32>
    %2080 = arith.addf %2078, %2079 : vector<8x128xf32>
    %2081 = arith.mulf %15, %1869 : vector<8x128xf32>
    %2082 = arith.addf %2080, %2081 : vector<8x128xf32>
    %2083 = arith.mulf %3, %1682 : vector<8x128xf32>
    %2084 = arith.mulf %9, %1781 : vector<8x128xf32>
    %2085 = arith.addf %2083, %2084 : vector<8x128xf32>
    %2086 = arith.mulf %15, %1880 : vector<8x128xf32>
    %2087 = arith.addf %2085, %2086 : vector<8x128xf32>
    %2088 = arith.mulf %1, %2047 : vector<8x128xf32>
    %2089 = arith.mulf %7, %2062 : vector<8x128xf32>
    %2090 = arith.addf %2088, %2089 : vector<8x128xf32>
    %2091 = arith.mulf %13, %2077 : vector<8x128xf32>
    %2092 = arith.addf %2090, %2091 : vector<8x128xf32>
    %2093 = arith.mulf %1, %2052 : vector<8x128xf32>
    %2094 = arith.mulf %7, %2067 : vector<8x128xf32>
    %2095 = arith.addf %2093, %2094 : vector<8x128xf32>
    %2096 = arith.mulf %13, %2082 : vector<8x128xf32>
    %2097 = arith.addf %2095, %2096 : vector<8x128xf32>
    %2098 = arith.mulf %1, %2057 : vector<8x128xf32>
    %2099 = arith.mulf %7, %2072 : vector<8x128xf32>
    %2100 = arith.addf %2098, %2099 : vector<8x128xf32>
    %2101 = arith.mulf %13, %2087 : vector<8x128xf32>
    %2102 = arith.addf %2100, %2101 : vector<8x128xf32>
    %2103 = arith.mulf %1, %2092 : vector<8x128xf32>
    %2104 = arith.mulf %7, %2097 : vector<8x128xf32>
    %2105 = arith.addf %2103, %2104 : vector<8x128xf32>
    %2106 = arith.mulf %13, %2102 : vector<8x128xf32>
    %2107 = arith.addf %2105, %2106 : vector<8x128xf32>
    %c0_936 = arith.constant 0 : index
    %c63_937 = arith.constant 63 : index
    %c0_938 = arith.constant 0 : index
    %c0_939 = arith.constant 0 : index
    %2108 = vector.load %arg4[%c0_936, %c63_937, %c0_938, %c0_939] : memref<1x81x8x128xf32, #tpu.memory_space<vmem>>, vector<1x1x8x128xf32>
    %2109 = vector.shape_cast %2108 : vector<1x1x8x128xf32> to vector<8x128xf32>
    %2110 = vector.shape_cast %2107 : vector<8x128xf32> to vector<1x1x8x128xf32>
    tpu.vector_store %arg4[%c0_936, %c63_937, %c0_938, %c0_939], %2110 {strides = array<i32>} : memref<1x81x8x128xf32, #tpu.memory_space<vmem>>, vector<1x1x8x128xf32>,
    %2111 = arith.mulf %3, %2092 : vector<8x128xf32>
    %2112 = arith.mulf %9, %2097 : vector<8x128xf32>
    %2113 = arith.addf %2111, %2112 : vector<8x128xf32>
    %2114 = arith.mulf %15, %2102 : vector<8x128xf32>
    %2115 = arith.addf %2113, %2114 : vector<8x128xf32>
    %c0_940 = arith.constant 0 : index
    %c64_941 = arith.constant 64 : index
    %c0_942 = arith.constant 0 : index
    %c0_943 = arith.constant 0 : index
    %2116 = vector.load %arg4[%c0_940, %c64_941, %c0_942, %c0_943] : memref<1x81x8x128xf32, #tpu.memory_space<vmem>>, vector<1x1x8x128xf32>
    %2117 = vector.shape_cast %2116 : vector<1x1x8x128xf32> to vector<8x128xf32>
    %2118 = vector.shape_cast %2115 : vector<8x128xf32> to vector<1x1x8x128xf32>
    tpu.vector_store %arg4[%c0_940, %c64_941, %c0_942, %c0_943], %2118 {strides = array<i32>} : memref<1x81x8x128xf32, #tpu.memory_space<vmem>>, vector<1x1x8x128xf32>,
    %2119 = arith.mulf %5, %2092 : vector<8x128xf32>
    %2120 = arith.mulf %11, %2097 : vector<8x128xf32>
    %2121 = arith.addf %2119, %2120 : vector<8x128xf32>
    %2122 = arith.mulf %17, %2102 : vector<8x128xf32>
    %2123 = arith.addf %2121, %2122 : vector<8x128xf32>
    %c0_944 = arith.constant 0 : index
    %c65_945 = arith.constant 65 : index
    %c0_946 = arith.constant 0 : index
    %c0_947 = arith.constant 0 : index
    %2124 = vector.load %arg4[%c0_944, %c65_945, %c0_946, %c0_947] : memref<1x81x8x128xf32, #tpu.memory_space<vmem>>, vector<1x1x8x128xf32>
    %2125 = vector.shape_cast %2124 : vector<1x1x8x128xf32> to vector<8x128xf32>
    %2126 = vector.shape_cast %2123 : vector<8x128xf32> to vector<1x1x8x128xf32>
    tpu.vector_store %arg4[%c0_944, %c65_945, %c0_946, %c0_947], %2126 {strides = array<i32>} : memref<1x81x8x128xf32, #tpu.memory_space<vmem>>, vector<1x1x8x128xf32>,
    %2127 = arith.mulf %3, %2047 : vector<8x128xf32>
    %2128 = arith.mulf %9, %2062 : vector<8x128xf32>
    %2129 = arith.addf %2127, %2128 : vector<8x128xf32>
    %2130 = arith.mulf %15, %2077 : vector<8x128xf32>
    %2131 = arith.addf %2129, %2130 : vector<8x128xf32>
    %2132 = arith.mulf %3, %2052 : vector<8x128xf32>
    %2133 = arith.mulf %9, %2067 : vector<8x128xf32>
    %2134 = arith.addf %2132, %2133 : vector<8x128xf32>
    %2135 = arith.mulf %15, %2082 : vector<8x128xf32>
    %2136 = arith.addf %2134, %2135 : vector<8x128xf32>
    %2137 = arith.mulf %3, %2057 : vector<8x128xf32>
    %2138 = arith.mulf %9, %2072 : vector<8x128xf32>
    %2139 = arith.addf %2137, %2138 : vector<8x128xf32>
    %2140 = arith.mulf %15, %2087 : vector<8x128xf32>
    %2141 = arith.addf %2139, %2140 : vector<8x128xf32>
    %2142 = arith.mulf %1, %2131 : vector<8x128xf32>
    %2143 = arith.mulf %7, %2136 : vector<8x128xf32>
    %2144 = arith.addf %2142, %2143 : vector<8x128xf32>
    %2145 = arith.mulf %13, %2141 : vector<8x128xf32>
    %2146 = arith.addf %2144, %2145 : vector<8x128xf32>
    %c0_948 = arith.constant 0 : index
    %c66_949 = arith.constant 66 : index
    %c0_950 = arith.constant 0 : index
    %c0_951 = arith.constant 0 : index
    %2147 = vector.load %arg4[%c0_948, %c66_949, %c0_950, %c0_951] : memref<1x81x8x128xf32, #tpu.memory_space<vmem>>, vector<1x1x8x128xf32>
    %2148 = vector.shape_cast %2147 : vector<1x1x8x128xf32> to vector<8x128xf32>
    %2149 = vector.shape_cast %2146 : vector<8x128xf32> to vector<1x1x8x128xf32>
    tpu.vector_store %arg4[%c0_948, %c66_949, %c0_950, %c0_951], %2149 {strides = array<i32>} : memref<1x81x8x128xf32, #tpu.memory_space<vmem>>, vector<1x1x8x128xf32>,
    %2150 = arith.mulf %3, %2131 : vector<8x128xf32>
    %2151 = arith.mulf %9, %2136 : vector<8x128xf32>
    %2152 = arith.addf %2150, %2151 : vector<8x128xf32>
    %2153 = arith.mulf %15, %2141 : vector<8x128xf32>
    %2154 = arith.addf %2152, %2153 : vector<8x128xf32>
    %c0_952 = arith.constant 0 : index
    %c67_953 = arith.constant 67 : index
    %c0_954 = arith.constant 0 : index
    %c0_955 = arith.constant 0 : index
    %2155 = vector.load %arg4[%c0_952, %c67_953, %c0_954, %c0_955] : memref<1x81x8x128xf32, #tpu.memory_space<vmem>>, vector<1x1x8x128xf32>
    %2156 = vector.shape_cast %2155 : vector<1x1x8x128xf32> to vector<8x128xf32>
    %2157 = vector.shape_cast %2154 : vector<8x128xf32> to vector<1x1x8x128xf32>
    tpu.vector_store %arg4[%c0_952, %c67_953, %c0_954, %c0_955], %2157 {strides = array<i32>} : memref<1x81x8x128xf32, #tpu.memory_space<vmem>>, vector<1x1x8x128xf32>,
    %2158 = arith.mulf %5, %2131 : vector<8x128xf32>
    %2159 = arith.mulf %11, %2136 : vector<8x128xf32>
    %2160 = arith.addf %2158, %2159 : vector<8x128xf32>
    %2161 = arith.mulf %17, %2141 : vector<8x128xf32>
    %2162 = arith.addf %2160, %2161 : vector<8x128xf32>
    %c0_956 = arith.constant 0 : index
    %c68_957 = arith.constant 68 : index
    %c0_958 = arith.constant 0 : index
    %c0_959 = arith.constant 0 : index
    %2163 = vector.load %arg4[%c0_956, %c68_957, %c0_958, %c0_959] : memref<1x81x8x128xf32, #tpu.memory_space<vmem>>, vector<1x1x8x128xf32>
    %2164 = vector.shape_cast %2163 : vector<1x1x8x128xf32> to vector<8x128xf32>
    %2165 = vector.shape_cast %2162 : vector<8x128xf32> to vector<1x1x8x128xf32>
    tpu.vector_store %arg4[%c0_956, %c68_957, %c0_958, %c0_959], %2165 {strides = array<i32>} : memref<1x81x8x128xf32, #tpu.memory_space<vmem>>, vector<1x1x8x128xf32>,
    %2166 = arith.mulf %5, %2047 : vector<8x128xf32>
    %2167 = arith.mulf %11, %2062 : vector<8x128xf32>
    %2168 = arith.addf %2166, %2167 : vector<8x128xf32>
    %2169 = arith.mulf %17, %2077 : vector<8x128xf32>
    %2170 = arith.addf %2168, %2169 : vector<8x128xf32>
    %2171 = arith.mulf %5, %2052 : vector<8x128xf32>
    %2172 = arith.mulf %11, %2067 : vector<8x128xf32>
    %2173 = arith.addf %2171, %2172 : vector<8x128xf32>
    %2174 = arith.mulf %17, %2082 : vector<8x128xf32>
    %2175 = arith.addf %2173, %2174 : vector<8x128xf32>
    %2176 = arith.mulf %5, %2057 : vector<8x128xf32>
    %2177 = arith.mulf %11, %2072 : vector<8x128xf32>
    %2178 = arith.addf %2176, %2177 : vector<8x128xf32>
    %2179 = arith.mulf %17, %2087 : vector<8x128xf32>
    %2180 = arith.addf %2178, %2179 : vector<8x128xf32>
    %2181 = arith.mulf %1, %2170 : vector<8x128xf32>
    %2182 = arith.mulf %7, %2175 : vector<8x128xf32>
    %2183 = arith.addf %2181, %2182 : vector<8x128xf32>
    %2184 = arith.mulf %13, %2180 : vector<8x128xf32>
    %2185 = arith.addf %2183, %2184 : vector<8x128xf32>
    %c0_960 = arith.constant 0 : index
    %c69_961 = arith.constant 69 : index
    %c0_962 = arith.constant 0 : index
    %c0_963 = arith.constant 0 : index
    %2186 = vector.load %arg4[%c0_960, %c69_961, %c0_962, %c0_963] : memref<1x81x8x128xf32, #tpu.memory_space<vmem>>, vector<1x1x8x128xf32>
    %2187 = vector.shape_cast %2186 : vector<1x1x8x128xf32> to vector<8x128xf32>
    %2188 = vector.shape_cast %2185 : vector<8x128xf32> to vector<1x1x8x128xf32>
    tpu.vector_store %arg4[%c0_960, %c69_961, %c0_962, %c0_963], %2188 {strides = array<i32>} : memref<1x81x8x128xf32, #tpu.memory_space<vmem>>, vector<1x1x8x128xf32>,
    %2189 = arith.mulf %3, %2170 : vector<8x128xf32>
    %2190 = arith.mulf %9, %2175 : vector<8x128xf32>
    %2191 = arith.addf %2189, %2190 : vector<8x128xf32>
    %2192 = arith.mulf %15, %2180 : vector<8x128xf32>
    %2193 = arith.addf %2191, %2192 : vector<8x128xf32>
    %c0_964 = arith.constant 0 : index
    %c70_965 = arith.constant 70 : index
    %c0_966 = arith.constant 0 : index
    %c0_967 = arith.constant 0 : index
    %2194 = vector.load %arg4[%c0_964, %c70_965, %c0_966, %c0_967] : memref<1x81x8x128xf32, #tpu.memory_space<vmem>>, vector<1x1x8x128xf32>
    %2195 = vector.shape_cast %2194 : vector<1x1x8x128xf32> to vector<8x128xf32>
    %2196 = vector.shape_cast %2193 : vector<8x128xf32> to vector<1x1x8x128xf32>
    tpu.vector_store %arg4[%c0_964, %c70_965, %c0_966, %c0_967], %2196 {strides = array<i32>} : memref<1x81x8x128xf32, #tpu.memory_space<vmem>>, vector<1x1x8x128xf32>,
    %2197 = arith.mulf %5, %2170 : vector<8x128xf32>
    %2198 = arith.mulf %11, %2175 : vector<8x128xf32>
    %2199 = arith.addf %2197, %2198 : vector<8x128xf32>
    %2200 = arith.mulf %17, %2180 : vector<8x128xf32>
    %2201 = arith.addf %2199, %2200 : vector<8x128xf32>
    %c0_968 = arith.constant 0 : index
    %c71_969 = arith.constant 71 : index
    %c0_970 = arith.constant 0 : index
    %c0_971 = arith.constant 0 : index
    %2202 = vector.load %arg4[%c0_968, %c71_969, %c0_970, %c0_971] : memref<1x81x8x128xf32, #tpu.memory_space<vmem>>, vector<1x1x8x128xf32>
    %2203 = vector.shape_cast %2202 : vector<1x1x8x128xf32> to vector<8x128xf32>
    %2204 = vector.shape_cast %2201 : vector<8x128xf32> to vector<1x1x8x128xf32>
    tpu.vector_store %arg4[%c0_968, %c71_969, %c0_970, %c0_971], %2204 {strides = array<i32>} : memref<1x81x8x128xf32, #tpu.memory_space<vmem>>, vector<1x1x8x128xf32>,
    %2205 = arith.mulf %5, %1594 : vector<8x128xf32>
    %2206 = arith.mulf %11, %1693 : vector<8x128xf32>
    %2207 = arith.addf %2205, %2206 : vector<8x128xf32>
    %2208 = arith.mulf %17, %1792 : vector<8x128xf32>
    %2209 = arith.addf %2207, %2208 : vector<8x128xf32>
    %2210 = arith.mulf %5, %1605 : vector<8x128xf32>
    %2211 = arith.mulf %11, %1704 : vector<8x128xf32>
    %2212 = arith.addf %2210, %2211 : vector<8x128xf32>
    %2213 = arith.mulf %17, %1803 : vector<8x128xf32>
    %2214 = arith.addf %2212, %2213 : vector<8x128xf32>
    %2215 = arith.mulf %5, %1616 : vector<8x128xf32>
    %2216 = arith.mulf %11, %1715 : vector<8x128xf32>
    %2217 = arith.addf %2215, %2216 : vector<8x128xf32>
    %2218 = arith.mulf %17, %1814 : vector<8x128xf32>
    %2219 = arith.addf %2217, %2218 : vector<8x128xf32>
    %2220 = arith.mulf %5, %1627 : vector<8x128xf32>
    %2221 = arith.mulf %11, %1726 : vector<8x128xf32>
    %2222 = arith.addf %2220, %2221 : vector<8x128xf32>
    %2223 = arith.mulf %17, %1825 : vector<8x128xf32>
    %2224 = arith.addf %2222, %2223 : vector<8x128xf32>
    %2225 = arith.mulf %5, %1638 : vector<8x128xf32>
    %2226 = arith.mulf %11, %1737 : vector<8x128xf32>
    %2227 = arith.addf %2225, %2226 : vector<8x128xf32>
    %2228 = arith.mulf %17, %1836 : vector<8x128xf32>
    %2229 = arith.addf %2227, %2228 : vector<8x128xf32>
    %2230 = arith.mulf %5, %1649 : vector<8x128xf32>
    %2231 = arith.mulf %11, %1748 : vector<8x128xf32>
    %2232 = arith.addf %2230, %2231 : vector<8x128xf32>
    %2233 = arith.mulf %17, %1847 : vector<8x128xf32>
    %2234 = arith.addf %2232, %2233 : vector<8x128xf32>
    %2235 = arith.mulf %5, %1660 : vector<8x128xf32>
    %2236 = arith.mulf %11, %1759 : vector<8x128xf32>
    %2237 = arith.addf %2235, %2236 : vector<8x128xf32>
    %2238 = arith.mulf %17, %1858 : vector<8x128xf32>
    %2239 = arith.addf %2237, %2238 : vector<8x128xf32>
    %2240 = arith.mulf %5, %1671 : vector<8x128xf32>
    %2241 = arith.mulf %11, %1770 : vector<8x128xf32>
    %2242 = arith.addf %2240, %2241 : vector<8x128xf32>
    %2243 = arith.mulf %17, %1869 : vector<8x128xf32>
    %2244 = arith.addf %2242, %2243 : vector<8x128xf32>
    %2245 = arith.mulf %5, %1682 : vector<8x128xf32>
    %2246 = arith.mulf %11, %1781 : vector<8x128xf32>
    %2247 = arith.addf %2245, %2246 : vector<8x128xf32>
    %2248 = arith.mulf %17, %1880 : vector<8x128xf32>
    %2249 = arith.addf %2247, %2248 : vector<8x128xf32>
    %2250 = arith.mulf %1, %2209 : vector<8x128xf32>
    %2251 = arith.mulf %7, %2224 : vector<8x128xf32>
    %2252 = arith.addf %2250, %2251 : vector<8x128xf32>
    %2253 = arith.mulf %13, %2239 : vector<8x128xf32>
    %2254 = arith.addf %2252, %2253 : vector<8x128xf32>
    %2255 = arith.mulf %1, %2214 : vector<8x128xf32>
    %2256 = arith.mulf %7, %2229 : vector<8x128xf32>
    %2257 = arith.addf %2255, %2256 : vector<8x128xf32>
    %2258 = arith.mulf %13, %2244 : vector<8x128xf32>
    %2259 = arith.addf %2257, %2258 : vector<8x128xf32>
    %2260 = arith.mulf %1, %2219 : vector<8x128xf32>
    %2261 = arith.mulf %7, %2234 : vector<8x128xf32>
    %2262 = arith.addf %2260, %2261 : vector<8x128xf32>
    %2263 = arith.mulf %13, %2249 : vector<8x128xf32>
    %2264 = arith.addf %2262, %2263 : vector<8x128xf32>
    %2265 = arith.mulf %1, %2254 : vector<8x128xf32>
    %2266 = arith.mulf %7, %2259 : vector<8x128xf32>
    %2267 = arith.addf %2265, %2266 : vector<8x128xf32>
    %2268 = arith.mulf %13, %2264 : vector<8x128xf32>
    %2269 = arith.addf %2267, %2268 : vector<8x128xf32>
    %c0_972 = arith.constant 0 : index
    %c72_973 = arith.constant 72 : index
    %c0_974 = arith.constant 0 : index
    %c0_975 = arith.constant 0 : index
    %2270 = vector.load %arg4[%c0_972, %c72_973, %c0_974, %c0_975] : memref<1x81x8x128xf32, #tpu.memory_space<vmem>>, vector<1x1x8x128xf32>
    %2271 = vector.shape_cast %2270 : vector<1x1x8x128xf32> to vector<8x128xf32>
    %2272 = vector.shape_cast %2269 : vector<8x128xf32> to vector<1x1x8x128xf32>
    tpu.vector_store %arg4[%c0_972, %c72_973, %c0_974, %c0_975], %2272 {strides = array<i32>} : memref<1x81x8x128xf32, #tpu.memory_space<vmem>>, vector<1x1x8x128xf32>,
    %2273 = arith.mulf %3, %2254 : vector<8x128xf32>
    %2274 = arith.mulf %9, %2259 : vector<8x128xf32>
    %2275 = arith.addf %2273, %2274 : vector<8x128xf32>
    %2276 = arith.mulf %15, %2264 : vector<8x128xf32>
    %2277 = arith.addf %2275, %2276 : vector<8x128xf32>
    %c0_976 = arith.constant 0 : index
    %c73_977 = arith.constant 73 : index
    %c0_978 = arith.constant 0 : index
    %c0_979 = arith.constant 0 : index
    %2278 = vector.load %arg4[%c0_976, %c73_977, %c0_978, %c0_979] : memref<1x81x8x128xf32, #tpu.memory_space<vmem>>, vector<1x1x8x128xf32>
    %2279 = vector.shape_cast %2278 : vector<1x1x8x128xf32> to vector<8x128xf32>
    %2280 = vector.shape_cast %2277 : vector<8x128xf32> to vector<1x1x8x128xf32>
    tpu.vector_store %arg4[%c0_976, %c73_977, %c0_978, %c0_979], %2280 {strides = array<i32>} : memref<1x81x8x128xf32, #tpu.memory_space<vmem>>, vector<1x1x8x128xf32>,
    %2281 = arith.mulf %5, %2254 : vector<8x128xf32>
    %2282 = arith.mulf %11, %2259 : vector<8x128xf32>
    %2283 = arith.addf %2281, %2282 : vector<8x128xf32>
    %2284 = arith.mulf %17, %2264 : vector<8x128xf32>
    %2285 = arith.addf %2283, %2284 : vector<8x128xf32>
    %c0_980 = arith.constant 0 : index
    %c74_981 = arith.constant 74 : index
    %c0_982 = arith.constant 0 : index
    %c0_983 = arith.constant 0 : index
    %2286 = vector.load %arg4[%c0_980, %c74_981, %c0_982, %c0_983] : memref<1x81x8x128xf32, #tpu.memory_space<vmem>>, vector<1x1x8x128xf32>
    %2287 = vector.shape_cast %2286 : vector<1x1x8x128xf32> to vector<8x128xf32>
    %2288 = vector.shape_cast %2285 : vector<8x128xf32> to vector<1x1x8x128xf32>
    tpu.vector_store %arg4[%c0_980, %c74_981, %c0_982, %c0_983], %2288 {strides = array<i32>} : memref<1x81x8x128xf32, #tpu.memory_space<vmem>>, vector<1x1x8x128xf32>,
    %2289 = arith.mulf %3, %2209 : vector<8x128xf32>
    %2290 = arith.mulf %9, %2224 : vector<8x128xf32>
    %2291 = arith.addf %2289, %2290 : vector<8x128xf32>
    %2292 = arith.mulf %15, %2239 : vector<8x128xf32>
    %2293 = arith.addf %2291, %2292 : vector<8x128xf32>
    %2294 = arith.mulf %3, %2214 : vector<8x128xf32>
    %2295 = arith.mulf %9, %2229 : vector<8x128xf32>
    %2296 = arith.addf %2294, %2295 : vector<8x128xf32>
    %2297 = arith.mulf %15, %2244 : vector<8x128xf32>
    %2298 = arith.addf %2296, %2297 : vector<8x128xf32>
    %2299 = arith.mulf %3, %2219 : vector<8x128xf32>
    %2300 = arith.mulf %9, %2234 : vector<8x128xf32>
    %2301 = arith.addf %2299, %2300 : vector<8x128xf32>
    %2302 = arith.mulf %15, %2249 : vector<8x128xf32>
    %2303 = arith.addf %2301, %2302 : vector<8x128xf32>
    %2304 = arith.mulf %1, %2293 : vector<8x128xf32>
    %2305 = arith.mulf %7, %2298 : vector<8x128xf32>
    %2306 = arith.addf %2304, %2305 : vector<8x128xf32>
    %2307 = arith.mulf %13, %2303 : vector<8x128xf32>
    %2308 = arith.addf %2306, %2307 : vector<8x128xf32>
    %c0_984 = arith.constant 0 : index
    %c75_985 = arith.constant 75 : index
    %c0_986 = arith.constant 0 : index
    %c0_987 = arith.constant 0 : index
    %2309 = vector.load %arg4[%c0_984, %c75_985, %c0_986, %c0_987] : memref<1x81x8x128xf32, #tpu.memory_space<vmem>>, vector<1x1x8x128xf32>
    %2310 = vector.shape_cast %2309 : vector<1x1x8x128xf32> to vector<8x128xf32>
    %2311 = vector.shape_cast %2308 : vector<8x128xf32> to vector<1x1x8x128xf32>
    tpu.vector_store %arg4[%c0_984, %c75_985, %c0_986, %c0_987], %2311 {strides = array<i32>} : memref<1x81x8x128xf32, #tpu.memory_space<vmem>>, vector<1x1x8x128xf32>,
    %2312 = arith.mulf %3, %2293 : vector<8x128xf32>
    %2313 = arith.mulf %9, %2298 : vector<8x128xf32>
    %2314 = arith.addf %2312, %2313 : vector<8x128xf32>
    %2315 = arith.mulf %15, %2303 : vector<8x128xf32>
    %2316 = arith.addf %2314, %2315 : vector<8x128xf32>
    %c0_988 = arith.constant 0 : index
    %c76_989 = arith.constant 76 : index
    %c0_990 = arith.constant 0 : index
    %c0_991 = arith.constant 0 : index
    %2317 = vector.load %arg4[%c0_988, %c76_989, %c0_990, %c0_991] : memref<1x81x8x128xf32, #tpu.memory_space<vmem>>, vector<1x1x8x128xf32>
    %2318 = vector.shape_cast %2317 : vector<1x1x8x128xf32> to vector<8x128xf32>
    %2319 = vector.shape_cast %2316 : vector<8x128xf32> to vector<1x1x8x128xf32>
    tpu.vector_store %arg4[%c0_988, %c76_989, %c0_990, %c0_991], %2319 {strides = array<i32>} : memref<1x81x8x128xf32, #tpu.memory_space<vmem>>, vector<1x1x8x128xf32>,
    %2320 = arith.mulf %5, %2293 : vector<8x128xf32>
    %2321 = arith.mulf %11, %2298 : vector<8x128xf32>
    %2322 = arith.addf %2320, %2321 : vector<8x128xf32>
    %2323 = arith.mulf %17, %2303 : vector<8x128xf32>
    %2324 = arith.addf %2322, %2323 : vector<8x128xf32>
    %c0_992 = arith.constant 0 : index
    %c77_993 = arith.constant 77 : index
    %c0_994 = arith.constant 0 : index
    %c0_995 = arith.constant 0 : index
    %2325 = vector.load %arg4[%c0_992, %c77_993, %c0_994, %c0_995] : memref<1x81x8x128xf32, #tpu.memory_space<vmem>>, vector<1x1x8x128xf32>
    %2326 = vector.shape_cast %2325 : vector<1x1x8x128xf32> to vector<8x128xf32>
    %2327 = vector.shape_cast %2324 : vector<8x128xf32> to vector<1x1x8x128xf32>
    tpu.vector_store %arg4[%c0_992, %c77_993, %c0_994, %c0_995], %2327 {strides = array<i32>} : memref<1x81x8x128xf32, #tpu.memory_space<vmem>>, vector<1x1x8x128xf32>,
    %2328 = arith.mulf %5, %2209 : vector<8x128xf32>
    %2329 = arith.mulf %11, %2224 : vector<8x128xf32>
    %2330 = arith.addf %2328, %2329 : vector<8x128xf32>
    %2331 = arith.mulf %17, %2239 : vector<8x128xf32>
    %2332 = arith.addf %2330, %2331 : vector<8x128xf32>
    %2333 = arith.mulf %5, %2214 : vector<8x128xf32>
    %2334 = arith.mulf %11, %2229 : vector<8x128xf32>
    %2335 = arith.addf %2333, %2334 : vector<8x128xf32>
    %2336 = arith.mulf %17, %2244 : vector<8x128xf32>
    %2337 = arith.addf %2335, %2336 : vector<8x128xf32>
    %2338 = arith.mulf %5, %2219 : vector<8x128xf32>
    %2339 = arith.mulf %11, %2234 : vector<8x128xf32>
    %2340 = arith.addf %2338, %2339 : vector<8x128xf32>
    %2341 = arith.mulf %17, %2249 : vector<8x128xf32>
    %2342 = arith.addf %2340, %2341 : vector<8x128xf32>
    %2343 = arith.mulf %1, %2332 : vector<8x128xf32>
    %2344 = arith.mulf %7, %2337 : vector<8x128xf32>
    %2345 = arith.addf %2343, %2344 : vector<8x128xf32>
    %2346 = arith.mulf %13, %2342 : vector<8x128xf32>
    %2347 = arith.addf %2345, %2346 : vector<8x128xf32>
    %c0_996 = arith.constant 0 : index
    %c78_997 = arith.constant 78 : index
    %c0_998 = arith.constant 0 : index
    %c0_999 = arith.constant 0 : index
    %2348 = vector.load %arg4[%c0_996, %c78_997, %c0_998, %c0_999] : memref<1x81x8x128xf32, #tpu.memory_space<vmem>>, vector<1x1x8x128xf32>
    %2349 = vector.shape_cast %2348 : vector<1x1x8x128xf32> to vector<8x128xf32>
    %2350 = vector.shape_cast %2347 : vector<8x128xf32> to vector<1x1x8x128xf32>
    tpu.vector_store %arg4[%c0_996, %c78_997, %c0_998, %c0_999], %2350 {strides = array<i32>} : memref<1x81x8x128xf32, #tpu.memory_space<vmem>>, vector<1x1x8x128xf32>,
    %2351 = arith.mulf %3, %2332 : vector<8x128xf32>
    %2352 = arith.mulf %9, %2337 : vector<8x128xf32>
    %2353 = arith.addf %2351, %2352 : vector<8x128xf32>
    %2354 = arith.mulf %15, %2342 : vector<8x128xf32>
    %2355 = arith.addf %2353, %2354 : vector<8x128xf32>
    %c0_1000 = arith.constant 0 : index
    %c79_1001 = arith.constant 79 : index
    %c0_1002 = arith.constant 0 : index
    %c0_1003 = arith.constant 0 : index
    %2356 = vector.load %arg4[%c0_1000, %c79_1001, %c0_1002, %c0_1003] : memref<1x81x8x128xf32, #tpu.memory_space<vmem>>, vector<1x1x8x128xf32>
    %2357 = vector.shape_cast %2356 : vector<1x1x8x128xf32> to vector<8x128xf32>
    %2358 = vector.shape_cast %2355 : vector<8x128xf32> to vector<1x1x8x128xf32>
    tpu.vector_store %arg4[%c0_1000, %c79_1001, %c0_1002, %c0_1003], %2358 {strides = array<i32>} : memref<1x81x8x128xf32, #tpu.memory_space<vmem>>, vector<1x1x8x128xf32>,
    %2359 = arith.mulf %5, %2332 : vector<8x128xf32>
    %2360 = arith.mulf %11, %2337 : vector<8x128xf32>
    %2361 = arith.addf %2359, %2360 : vector<8x128xf32>
    %2362 = arith.mulf %17, %2342 : vector<8x128xf32>
    %2363 = arith.addf %2361, %2362 : vector<8x128xf32>
    %c0_1004 = arith.constant 0 : index
    %c80_1005 = arith.constant 80 : index
    %c0_1006 = arith.constant 0 : index
    %c0_1007 = arith.constant 0 : index
    %2364 = vector.load %arg4[%c0_1004, %c80_1005, %c0_1006, %c0_1007] : memref<1x81x8x128xf32, #tpu.memory_space<vmem>>, vector<1x1x8x128xf32>
    %2365 = vector.shape_cast %2364 : vector<1x1x8x128xf32> to vector<8x128xf32>
    %2366 = vector.shape_cast %2363 : vector<8x128xf32> to vector<1x1x8x128xf32>
    tpu.vector_store %arg4[%c0_1004, %c80_1005, %c0_1006, %c0_1007], %2366 {strides = array<i32>} : memref<1x81x8x128xf32, #tpu.memory_space<vmem>>, vector<1x1x8x128xf32>,
    return
  }
  func.func @transform_0(%arg0: i32, %arg1: i32) -> (i32, i32, i32) {
    %c0_i32 = arith.constant 0 : i32
    %c0_i32_0 = arith.constant 0 : i32
    %c0_i32_1 = arith.constant 0 : i32
    %c0_i32_2 = arith.constant 0 : i32
    return %c0_i32, %c0_i32_0, %c0_i32_1 : i32, i32, i32
  }
  func.func @transform_1(%arg0: i32, %arg1: i32) -> (i32, i32, i32, i32) {
    %c0_i32 = arith.constant 0 : i32
    %c0_i32_0 = arith.constant 0 : i32
    %c0_i32_1 = arith.constant 0 : i32
    return %arg0, %c0_i32, %arg1, %c0_i32_0 : i32, i32, i32, i32
  }
  func.func @transform_2(%arg0: i32, %arg1: i32) -> (i32, i32, i32, i32) {
    %c0_i32 = arith.constant 0 : i32
    %c0_i32_0 = arith.constant 0 : i32
    %c0_i32_1 = arith.constant 0 : i32
    return %arg0, %c0_i32, %arg1, %c0_i32_0 : i32, i32, i32, i32
  }
}

</mosaic_0001>

<llo_original>
// kernel: tpu_custom_call.1
$region0: #{tpu_custom_call.1}
  #allocation0 [shape = 'u32[]', space=smem, size = 0x4, offset = 0x4, fixed_abs, tag = 'smem constant byte address 0x4 - core index']
  #allocation1 [shape = 'u32[72,128]{1,0:T(1,128)}', space=vmem, size = 0x9000, scoped, tag = 'internal scratch']
  %s0 = inlined_call_operand.hbm [shape: f32[81,8,128], index: 0, kind: input, shape index: {}]
  %s1 = inlined_call_operand.hbm [shape: f32[2,9,8,128], index: 1, kind: input, shape index: {}]
  %s2 = inlined_call_operand.hbm [shape: f32[2,81,8,128], index: 2, kind: output, shape index: {}]
  %s3 = sld [smem:[#allocation0]]
  $region49: #{tpu_custom_call.1} parent=0
    _
  %s5 = ssub.s32 1, %s3
  %s6 = scalar_select 0, %s5, %s3
  $region1: #{tpu_custom_call.1} parent=0
    #allocation2 [shape = 'u8[331776]{0}', space=vmem, size = 0x51000, scoped, tag = 'input window, operand 0, single buffered']
    #allocation3 [shape = 's32[2]{0}', space=sflag, size = 0x8, scoped, tag = 'scoped memory for tpu_custom_call.1']
    #allocation4 [shape = 's32[2]{0}', space=sflag, size = 0x8, scoped, tag = 'scoped memory for tpu_custom_call.1']
    #allocation5 [shape = 'u8[73728]{0}', space=vmem, size = 0x12000, scoped, tag = 'input window, operand 1']
    #allocation6 [shape = 's32[2]{0}', space=sflag, size = 0x8, scoped, tag = 'scoped memory for tpu_custom_call.1']
    #allocation7 [shape = 'u8[663552]{0}', space=vmem, size = 0xa2000, scoped, tag = 'output window, operand 0']
    %7 = vsyncpa [#allocation3], 0
    %8 = vsyncpa [#allocation6], 0
    %s9 = scalar_lea.sflag [#allocation6], 1
    %10 = vsyncpa %s9, 0
    %11 = vsyncpa [#allocation4], 0
    %s12 = scalar_lea.sflag [#allocation4], 1
    %13 = vsyncpa %s12, 0
    loop: start=0, step=1, limit=4
    $region2: #{tpu_custom_call.1} parent=1 // loop_pre_header
      _
    $region3: #{tpu_custom_call.1} parent=1 // loop_header
      %s15 = sphi 0, %s19
      %p16 = scmp.ge.s32.totalorder %s15, 4
      %s22 = sphi 0, %s34
      %s23 = sphi 0, %s30
      %s24 = sphi 0, %s22
      %s25 = sphi 0, %s23
      %s26 = sphi 0, %s24
      %s27 = sphi 0, %s25
      %s35 = sphi 0, %s35
      %s37 = sphi 0, %s35
      %s38 = sphi 0, %s37
      %s52 = sphi 0, %s38
      %s60 = sphi 0, %s62
      %s63 = sphi 0, %s60
      %s64 = sphi 0, %s63
      %s80 = sphi 0, %s64
      %s88 = sphi 0, %s90
      %s91 = sphi 0, %s88
      %s92 = sphi 0, %s91
      %s108 = sphi 0, %s92
    $region4: #{tpu_custom_call.1} parent=1 // loop_header_branch
      %18 = sbr.rel (%p16) target = $region8
    $region5: #{tpu_custom_call.1} parent=1 // loop_body
      %s20 = ssub.s32 %s15, 1
      %s21 = ssub.s32 %s15, 2
      %s28 = sadd.s32 1, %s23
      %p29 = scmp.ge.s32.totalorder %s28, 1
      %s30 = scalar_select %p29, 0, %s28
      %s31 = sadd.s32 1, %s22
      %s32 = scalar_select %p29, %s31, %s22
      %p33 = scmp.ge.s32.totalorder %s32, 2
      %s34 = scalar_select %p33, 0, %s32
      %s36 = sadd.s32 %s35, 1
      %p39 = scmp.eq.s32.totalorder %s15, 1
      %p40 = scmp.ne.s32.totalorder %s35, %s37
      %p41 = scmp.eq.s32.totalorder %s15, 0
      %p42 = por %p40, %p41
      %p43 = scmp.ne.s32.totalorder %s35, %s37
      %p44 = scmp.eq.s32.totalorder %s20, 1
      %p45 = por %p43, %p44
      %p46 = scmp.ne.s32.totalorder %s37, %s38
      %p47 = scmp.eq.s32.totalorder %s20, 0
      %p48 = por %p46, %p47
      %p49 = scmp.ne.s32.totalorder %s37, %s38
      %p50 = scmp.eq.s32.totalorder %s21, 1
      %p51 = por %p49, %p50
      %p53 = scmp.ne.s32.totalorder %s38, %s52
      %p54 = scmp.eq.s32.totalorder %s21, 0
      %p55 = por %p53, %p54
      %s56 = ssub.s32 %s22, %s34
      %s57 = ssub.s32 %s23, %s30
      %s58 = sor.u32 %s56, %s57
      %p59 = scmp.eq.s32.totalorder %s58, 0
      %s61 = sadd.s32 %s60, 1
      %s62 = scalar_select %p59, %s60, %s61
      %p65 = pneg %p59
      %p66 = scmp.eq.s32.totalorder %s15, 1
      %p67 = por %p65, %p66
      %p68 = scmp.ne.s32.totalorder %s60, %s63
      %p69 = scmp.eq.s32.totalorder %s15, 0
      %p70 = por %p68, %p69
      %p71 = scmp.ne.s32.totalorder %s60, %s63
      %p72 = scmp.eq.s32.totalorder %s20, 1
      %p73 = por %p71, %p72
      %p74 = scmp.ne.s32.totalorder %s63, %s64
      %p75 = scmp.eq.s32.totalorder %s20, 0
      %p76 = por %p74, %p75
      %p77 = scmp.ne.s32.totalorder %s63, %s64
      %p78 = scmp.eq.s32.totalorder %s21, 1
      %p79 = por %p77, %p78
      %p81 = scmp.ne.s32.totalorder %s64, %s80
      %p82 = scmp.eq.s32.totalorder %s21, 0
      %p83 = por %p81, %p82
      %s84 = ssub.s32 %s22, %s34
      %s85 = ssub.s32 %s23, %s30
      %s86 = sor.u32 %s84, %s85
      %p87 = scmp.eq.s32.totalorder %s86, 0
      %s89 = sadd.s32 %s88, 1
      %s90 = scalar_select %p87, %s88, %s89
      %p93 = pneg %p87
      %p94 = scmp.eq.s32.totalorder %s15, 1
      %p95 = por %p93, %p94
      %p96 = scmp.ne.s32.totalorder %s88, %s91
      %p97 = scmp.eq.s32.totalorder %s15, 0
      %p98 = por %p96, %p97
      %p99 = scmp.ne.s32.totalorder %s88, %s91
      %p100 = scmp.eq.s32.totalorder %s20, 1
      %p101 = por %p99, %p100
      %p102 = scmp.ne.s32.totalorder %s91, %s92
      %p103 = scmp.eq.s32.totalorder %s20, 0
      %p104 = por %p102, %p103
      %p105 = scmp.ne.s32.totalorder %s91, %s92
      %p106 = scmp.eq.s32.totalorder %s21, 1
      %p107 = por %p105, %p106
      %p109 = scmp.ne.s32.totalorder %s92, %s108
      %p110 = scmp.eq.s32.totalorder %s21, 0
      %p111 = por %p109, %p110
      %p112 = scmp.le.s32.totalorder 1, %s15
      %p113 = scmp.lt.s32.totalorder %s15, 3
      %p114 = pnand %p112, %p113
      %p115 = pneg %p114
      // Predicated region
      $region9: #{tpu_custom_call.1} parent=5 // pred_check
        _
      $region10: #{tpu_custom_call.1} parent=5 // pred_check_branch
        %117 = sbr.rel (%p114) target = $region12
      $region11: #{tpu_custom_call.1} parent=5 // pred_region
        %s118 = ssub.s32 %s15, 1
        // Predicated region
        $region13: #{tpu_custom_call.1} parent=11 // pred_check
          %p119 = pneg %p48
        $region14: #{tpu_custom_call.1} parent=11 // pred_check_branch
          %121 = sbr.rel (%p119) target = $region16
        $region15: #{tpu_custom_call.1} parent=11 // pred_region
          %123 = vsyncadd [#allocation3], 0
          %s124 = sshll.u32 %s0, 4
          %s125 = int_to_ptr.hbm [resolvable:$true] %s124
          %s126 = sshll.u32 [#allocation2], 4
          %s127 = int_to_ptr.vmem [resolvable:$true] %s126
          %132 = dma.hbm_to_vmem [thread:$0]  %s125, 10368, %s127, [#allocation3], 128, 128, 8
        $region16: #{tpu_custom_call.1} parent=11 // pred_fallthru
          _
      $region12: #{tpu_custom_call.1} parent=5 // pred_fallthru
        _
      %p133 = scmp.lt.s32.totalorder %s15, 2
      // Predicated region
      $region17: #{tpu_custom_call.1} parent=5 // pred_check
        %p134 = pneg %p133
      $region18: #{tpu_custom_call.1} parent=5 // pred_check_branch
        %136 = sbr.rel (%p134) target = $region20
      $region19: #{tpu_custom_call.1} parent=5 // pred_region
        // Predicated region
        $region21: #{tpu_custom_call.1} parent=19 // pred_check
          %p137 = pneg %p70
        $region22: #{tpu_custom_call.1} parent=19 // pred_check_branch
          %139 = sbr.rel (%p137) target = $region24
        $region23: #{tpu_custom_call.1} parent=19 // pred_region
          %s140 = sand.u32 %s60, 1
          %s141 = scalar_lea.sflag [#allocation6], %s140
          %s142 = sand.u32 %s60, 1
          %s143 = smul.addr %s142, 72
          %s144 = scalar_lea.vmem [#allocation5], %s143
          %146 = vsyncadd %s141, 0
          %s147 = smul.addr %s22, 9
          %s148 = sadd.s32 %s23, %s147
          %s149 = smul.addr %s148, 8
          %s150 = scalar_lea.hbm %s1, %s149
          %s151 = sshll.u32 %s150, 4
          %s152 = int_to_ptr.hbm [resolvable:$true] %s151
          %s153 = sshll.u32 %s144, 4
          %s154 = int_to_ptr.vmem [resolvable:$true] %s153
          %159 = dma.hbm_to_vmem [thread:$0]  %s152, 1152, %s154, %s141, 128, 128, 8
        $region24: #{tpu_custom_call.1} parent=19 // pred_fallthru
          _
      $region20: #{tpu_custom_call.1} parent=5 // pred_fallthru
        _
      %p160 = scmp.le.s32.totalorder 1, %s15
      %p161 = scmp.lt.s32.totalorder %s15, 3
      %p162 = pnand %p160, %p161
      %p163 = pneg %p162
      // Predicated region
      $region25: #{tpu_custom_call.1} parent=5 // pred_check
        _
      $region26: #{tpu_custom_call.1} parent=5 // pred_check_branch
        %165 = sbr.rel (%p162) target = $region28
      $region27: #{tpu_custom_call.1} parent=5 // pred_region
        %s166 = ssub.s32 %s15, 1
        // Predicated region
        $region29: #{tpu_custom_call.1} parent=27 // pred_check
          %p167 = pneg %p48
        $region30: #{tpu_custom_call.1} parent=27 // pred_check_branch
          %169 = sbr.rel (%p167) target = $region32
        $region31: #{tpu_custom_call.1} parent=27 // pred_region
          %171 = dma.done [#allocation3], 10368
        $region32: #{tpu_custom_call.1} parent=27 // pred_fallthru
          _
        %s172 = sand.u32 %s63, 1
        %s173 = scalar_lea.sflag [#allocation6], %s172
        %s174 = sand.u32 %s63, 1
        %s175 = smul.addr %s174, 72
        %s176 = scalar_lea.vmem [#allocation5], %s175
        // Predicated region
        $region33: #{tpu_custom_call.1} parent=27 // pred_check
          %p177 = pneg %p76
        $region34: #{tpu_custom_call.1} parent=27 // pred_check_branch
          %179 = sbr.rel (%p177) target = $region36
        $region35: #{tpu_custom_call.1} parent=27 // pred_region
          %181 = dma.done %s173, 1152
        $region36: #{tpu_custom_call.1} parent=27 // pred_fallthru
          _
        %p182 = pneg %p48
        %p183 = pneg %p45
        %s184 = sand.u32 %s63, 1
        %s185 = scalar_lea.sflag [#allocation6], %s184
        %s186 = sand.u32 %s63, 1
        %s187 = smul.addr %s186, 72
        %s188 = scalar_lea.vmem [#allocation5], %s187
        %p189 = pneg %p76
        %p190 = pneg %p73
        %p191 = pneg %p104
        %p192 = pneg %p101
        %s193 = sand.u32 %s91, 1
        %s194 = scalar_lea.sflag [#allocation4], %s193
        %s195 = sand.u32 %s91, 1
        %s196 = smul.addr %s195, 648
        %s197 = scalar_lea.vmem [#allocation7], %s196
        %v198 = vld [vmem:[%s176] sm:$0xff]
        %s199 = scalar_lea.vmem %s176, 8 [#allocation5]
        %v200 = vld [vmem:[%s199] sm:$0xff]
        %s201 = scalar_lea.vmem %s176, 16 [#allocation5]
        %v202 = vld [vmem:[%s201] sm:$0xff]
        %s203 = scalar_lea.vmem %s176, 24 [#allocation5]
        %v204 = vld [vmem:[%s203] sm:$0xff]
        %s205 = scalar_lea.vmem %s176, 32 [#allocation5]
        %v206 = vld [vmem:[%s205] sm:$0xff]
        %s207 = scalar_lea.vmem %s176, 40 [#allocation5]
        %v208 = vld [vmem:[%s207] sm:$0xff]
        %s209 = scalar_lea.vmem %s176, 48 [#allocation5]
        %v210 = vld [vmem:[%s209] sm:$0xff]
        %s211 = scalar_lea.vmem %s176, 56 [#allocation5]
        %v212 = vld [vmem:[%s211] sm:$0xff]
        %s213 = scalar_lea.vmem %s176, 64 [#allocation5]
        %v214 = vld [vmem:[%s213] sm:$0xff]
        %v215 = vld [vmem:[#allocation2] sm:$0xff]
        %v216 = vmul.f32 %v215, %v198
        %s217 = scalar_lea.vmem [#allocation2], 216
        %v218 = vld [vmem:[%s217] sm:$0xff]
        %v219 = vmul.f32 %v218, %v204
        %v220 = vadd.f32 %v216, %v219
        %s221 = scalar_lea.vmem [#allocation2], 432
        %v222 = vld [vmem:[%s221] sm:$0xff]
        %v223 = vmul.f32 %v222, %v210
        %v224 = vadd.f32 %v220, %v223
        %s225 = scalar_lea.vmem [#allocation2], 8
        %v226 = vld [vmem:[%s225] sm:$0xff]
        %v227 = vmul.f32 %v226, %v198
        %s228 = scalar_lea.vmem [#allocation2], 224
        %v229 = vld [vmem:[%s228] sm:$0xff]
        %v230 = vmul.f32 %v229, %v204
        %v231 = vadd.f32 %v227, %v230
        %s232 = scalar_lea.vmem [#allocation2], 440
        %v233 = vld [vmem:[%s232] sm:$0xff]
        %v234 = vmul.f32 %v233, %v210
        %v235 = vadd.f32 %v231, %v234
        %s236 = scalar_lea.vmem [#allocation2], 16
        %v237 = vld [vmem:[%s236] sm:$0xff]
        %v238 = vmul.f32 %v237, %v198
        %s239 = scalar_lea.vmem [#allocation2], 232
        %v240 = vld [vmem:[%s239] sm:$0xff]
        %v241 = vmul.f32 %v240, %v204
        %v242 = vadd.f32 %v238, %v241
        %s243 = scalar_lea.vmem [#allocation2], 448
        %v244 = vld [vmem:[%s243] sm:$0xff]
        %v245 = vmul.f32 %v244, %v210
        %v246 = vadd.f32 %v242, %v245
        %s247 = scalar_lea.vmem [#allocation2], 24
        %v248 = vld [vmem:[%s247] sm:$0xff]
        %v249 = vmul.f32 %v248, %v198
        %s250 = scalar_lea.vmem [#allocation2], 240
        %v251 = vld [vmem:[%s250] sm:$0xff]
        %v252 = vmul.f32 %v251, %v204
        %v253 = vadd.f32 %v249, %v252
        %s254 = scalar_lea.vmem [#allocation2], 456
        %v255 = vld [vmem:[%s254] sm:$0xff]
        %v256 = vmul.f32 %v255, %v210
        %v257 = vadd.f32 %v253, %v256
        %s258 = scalar_lea.vmem [#allocation2], 32
        %v259 = vld [vmem:[%s258] sm:$0xff]
        %v260 = vmul.f32 %v259, %v198
        %s261 = scalar_lea.vmem [#allocation2], 248
        %v262 = vld [vmem:[%s261] sm:$0xff]
        %v263 = vmul.f32 %v262, %v204
        %v264 = vadd.f32 %v260, %v263
        %s265 = scalar_lea.vmem [#allocation2], 464
        %v266 = vld [vmem:[%s265] sm:$0xff]
        %v267 = vmul.f32 %v266, %v210
        %v268 = vadd.f32 %v264, %v267
        %s269 = scalar_lea.vmem [#allocation2], 40
        %v270 = vld [vmem:[%s269] sm:$0xff]
        %v271 = vmul.f32 %v270, %v198
        %s272 = scalar_lea.vmem [#allocation2], 256
        %v273 = vld [vmem:[%s272] sm:$0xff]
        %v274 = vmul.f32 %v273, %v204
        %v275 = vadd.f32 %v271, %v274
        %s276 = scalar_lea.vmem [#allocation2], 472
        %v277 = vld [vmem:[%s276] sm:$0xff]
        %v278 = vmul.f32 %v277, %v210
        %v279 = vadd.f32 %v275, %v278
        %s280 = scalar_lea.vmem [#allocation2], 48
        %v281 = vld [vmem:[%s280] sm:$0xff]
        %v282 = vmul.f32 %v281, %v198
        %s283 = scalar_lea.vmem [#allocation2], 264
        %v284 = vld [vmem:[%s283] sm:$0xff]
        %v285 = vmul.f32 %v284, %v204
        %v286 = vadd.f32 %v282, %v285
        %s287 = scalar_lea.vmem [#allocation2], 480
        %v288 = vld [vmem:[%s287] sm:$0xff]
        %v289 = vmul.f32 %v288, %v210
        %v290 = vadd.f32 %v286, %v289
        %s291 = scalar_lea.vmem [#allocation2], 56
        %v292 = vld [vmem:[%s291] sm:$0xff]
        %v293 = vmul.f32 %v292, %v198
        %s294 = scalar_lea.vmem [#allocation2], 272
        %v295 = vld [vmem:[%s294] sm:$0xff]
        %v296 = vmul.f32 %v295, %v204
        %v297 = vadd.f32 %v293, %v296
        %s298 = scalar_lea.vmem [#allocation2], 488
        %v299 = vld [vmem:[%s298] sm:$0xff]
        %v300 = vmul.f32 %v299, %v210
        %v301 = vadd.f32 %v297, %v300
        %s302 = scalar_lea.vmem [#allocation2], 64
        %v303 = vld [vmem:[%s302] sm:$0xff]
        %v304 = vmul.f32 %v303, %v198
        %s305 = scalar_lea.vmem [#allocation2], 280
        %v306 = vld [vmem:[%s305] sm:$0xff]
        %v307 = vmul.f32 %v306, %v204
        %v308 = vadd.f32 %v304, %v307
        %s309 = scalar_lea.vmem [#allocation2], 496
        %v310 = vld [vmem:[%s309] sm:$0xff]
        %v311 = vmul.f32 %v310, %v210
        %v312 = vadd.f32 %v308, %v311
        %s313 = scalar_lea.vmem [#allocation2], 72
        %v314 = vld [vmem:[%s313] sm:$0xff]
        %v315 = vmul.f32 %v314, %v198
        %s316 = scalar_lea.vmem [#allocation2], 288
        %v317 = vld [vmem:[%s316] sm:$0xff]
        %v318 = vmul.f32 %v317, %v204
        %v319 = vadd.f32 %v315, %v318
        %s320 = scalar_lea.vmem [#allocation2], 504
        %v321 = vld [vmem:[%s320] sm:$0xff]
        %v322 = vmul.f32 %v321, %v210
        %v323 = vadd.f32 %v319, %v322
        %s324 = scalar_lea.vmem [#allocation2], 80
        %v325 = vld [vmem:[%s324] sm:$0xff]
        %v326 = vmul.f32 %v325, %v198
        %s327 = scalar_lea.vmem [#allocation2], 296
        %v328 = vld [vmem:[%s327] sm:$0xff]
        %v329 = vmul.f32 %v328, %v204
        %v330 = vadd.f32 %v326, %v329
        %s331 = scalar_lea.vmem [#allocation2], 512
        %v332 = vld [vmem:[%s331] sm:$0xff]
        %v333 = vmul.f32 %v332, %v210
        %v334 = vadd.f32 %v330, %v333
        %s335 = scalar_lea.vmem [#allocation2], 88
        %v336 = vld [vmem:[%s335] sm:$0xff]
        %v337 = vmul.f32 %v336, %v198
        %s338 = scalar_lea.vmem [#allocation2], 304
        %v339 = vld [vmem:[%s338] sm:$0xff]
        %v340 = vmul.f32 %v339, %v204
        %v341 = vadd.f32 %v337, %v340
        %s342 = scalar_lea.vmem [#allocation2], 520
        %v343 = vld [vmem:[%s342] sm:$0xff]
        %v344 = vmul.f32 %v343, %v210
        %v345 = vadd.f32 %v341, %v344
        %s346 = scalar_lea.vmem [#allocation2], 96
        %v347 = vld [vmem:[%s346] sm:$0xff]
        %v348 = vmul.f32 %v347, %v198
        %s349 = scalar_lea.vmem [#allocation2], 312
        %v350 = vld [vmem:[%s349] sm:$0xff]
        %v351 = vmul.f32 %v350, %v204
        %v352 = vadd.f32 %v348, %v351
        %s353 = scalar_lea.vmem [#allocation2], 528
        %v354 = vld [vmem:[%s353] sm:$0xff]
        %v355 = vmul.f32 %v354, %v210
        %v356 = vadd.f32 %v352, %v355
        %s357 = scalar_lea.vmem [#allocation2], 104
        %v358 = vld [vmem:[%s357] sm:$0xff]
        %v359 = vmul.f32 %v358, %v198
        %s360 = scalar_lea.vmem [#allocation2], 320
        %v361 = vld [vmem:[%s360] sm:$0xff]
        %v362 = vmul.f32 %v361, %v204
        %v363 = vadd.f32 %v359, %v362
        %s364 = scalar_lea.vmem [#allocation2], 536
        %v365 = vld [vmem:[%s364] sm:$0xff]
        %v366 = vmul.f32 %v365, %v210
        %v367 = vadd.f32 %v363, %v366
        %s368 = scalar_lea.vmem [#allocation2], 112
        %v369 = vld [vmem:[%s368] sm:$0xff]
        %v370 = vmul.f32 %v369, %v198
        %s371 = scalar_lea.vmem [#allocation2], 328
        %v372 = vld [vmem:[%s371] sm:$0xff]
        %v373 = vmul.f32 %v372, %v204
        %v374 = vadd.f32 %v370, %v373
        %s375 = scalar_lea.vmem [#allocation2], 544
        %v376 = vld [vmem:[%s375] sm:$0xff]
        %v377 = vmul.f32 %v376, %v210
        %v378 = vadd.f32 %v374, %v377
        %s379 = scalar_lea.vmem [#allocation2], 120
        %v380 = vld [vmem:[%s379] sm:$0xff]
        %v381 = vmul.f32 %v380, %v198
        %s382 = scalar_lea.vmem [#allocation2], 336
        %v383 = vld [vmem:[%s382] sm:$0xff]
        %v384 = vmul.f32 %v383, %v204
        %v385 = vadd.f32 %v381, %v384
        %s386 = scalar_lea.vmem [#allocation2], 552
        %v387 = vld [vmem:[%s386] sm:$0xff]
        %v388 = vmul.f32 %v387, %v210
        %v389 = vadd.f32 %v385, %v388
        %s390 = scalar_lea.vmem [#allocation2], 128
        %v391 = vld [vmem:[%s390] sm:$0xff]
        %v392 = vmul.f32 %v391, %v198
        %s393 = scalar_lea.vmem [#allocation2], 344
        %v394 = vld [vmem:[%s393] sm:$0xff]
        %v395 = vmul.f32 %v394, %v204
        %v396 = vadd.f32 %v392, %v395
        %s397 = scalar_lea.vmem [#allocation2], 560
        %v398 = vld [vmem:[%s397] sm:$0xff]
        %v399 = vmul.f32 %v398, %v210
        %v400 = vadd.f32 %v396, %v399
        %s401 = scalar_lea.vmem [#allocation2], 136
        %v402 = vld [vmem:[%s401] sm:$0xff]
        %v403 = vmul.f32 %v402, %v198
        %s404 = scalar_lea.vmem [#allocation2], 352
        %v405 = vld [vmem:[%s404] sm:$0xff]
        %v406 = vmul.f32 %v405, %v204
        %v407 = vadd.f32 %v403, %v406
        %s408 = scalar_lea.vmem [#allocation2], 568
        %v409 = vld [vmem:[%s408] sm:$0xff]
        %v410 = vmul.f32 %v409, %v210
        %v411 = vadd.f32 %v407, %v410
        %s412 = scalar_lea.vmem [#allocation2], 144
        %v413 = vld [vmem:[%s412] sm:$0xff]
        %v414 = vmul.f32 %v413, %v198
        %s415 = scalar_lea.vmem [#allocation2], 360
        %v416 = vld [vmem:[%s415] sm:$0xff]
        %v417 = vmul.f32 %v416, %v204
        %v418 = vadd.f32 %v414, %v417
        %s419 = scalar_lea.vmem [#allocation2], 576
        %v420 = vld [vmem:[%s419] sm:$0xff]
        %v421 = vmul.f32 %v420, %v210
        %v422 = vadd.f32 %v418, %v421
        %s423 = scalar_lea.vmem [#allocation2], 152
        %v424 = vld [vmem:[%s423] sm:$0xff]
        %v425 = vmul.f32 %v424, %v198
        %s426 = scalar_lea.vmem [#allocation2], 368
        %v427 = vld [vmem:[%s426] sm:$0xff]
        %v428 = vmul.f32 %v427, %v204
        %v429 = vadd.f32 %v425, %v428
        %s430 = scalar_lea.vmem [#allocation2], 584
        %v431 = vld [vmem:[%s430] sm:$0xff]
        %v432 = vmul.f32 %v431, %v210
        %v433 = vadd.f32 %v429, %v432
        %s434 = scalar_lea.vmem [#allocation2], 160
        %v435 = vld [vmem:[%s434] sm:$0xff]
        %v436 = vmul.f32 %v435, %v198
        %s437 = scalar_lea.vmem [#allocation2], 376
        %v438 = vld [vmem:[%s437] sm:$0xff]
        %v439 = vmul.f32 %v438, %v204
        %v440 = vadd.f32 %v436, %v439
        %s441 = scalar_lea.vmem [#allocation2], 592
        %v442 = vld [vmem:[%s441] sm:$0xff]
        %v443 = vmul.f32 %v442, %v210
        %v444 = vadd.f32 %v440, %v443
        %s445 = scalar_lea.vmem [#allocation2], 168
        %v446 = vld [vmem:[%s445] sm:$0xff]
        %v447 = vmul.f32 %v446, %v198
        %s448 = scalar_lea.vmem [#allocation2], 384
        %v449 = vld [vmem:[%s448] sm:$0xff]
        %v450 = vmul.f32 %v449, %v204
        %v451 = vadd.f32 %v447, %v450
        %s452 = scalar_lea.vmem [#allocation2], 600
        %v453 = vld [vmem:[%s452] sm:$0xff]
        %v454 = vmul.f32 %v453, %v210
        %v455 = vadd.f32 %v451, %v454
        %s456 = scalar_lea.vmem [#allocation2], 176
        %v457 = vld [vmem:[%s456] sm:$0xff]
        %v458 = vmul.f32 %v457, %v198
        %s459 = scalar_lea.vmem [#allocation2], 392
        %v460 = vld [vmem:[%s459] sm:$0xff]
        %v461 = vmul.f32 %v460, %v204
        %v462 = vadd.f32 %v458, %v461
        %s463 = scalar_lea.vmem [#allocation2], 608
        %v464 = vld [vmem:[%s463] sm:$0xff]
        %v465 = vmul.f32 %v464, %v210
        %v466 = vadd.f32 %v462, %v465
        %s467 = scalar_lea.vmem [#allocation2], 184
        %v468 = vld [vmem:[%s467] sm:$0xff]
        %v469 = vmul.f32 %v468, %v198
        %s470 = scalar_lea.vmem [#allocation2], 400
        %v471 = vld [vmem:[%s470] sm:$0xff]
        %v472 = vmul.f32 %v471, %v204
        %v473 = vadd.f32 %v469, %v472
        %s474 = scalar_lea.vmem [#allocation2], 616
        %v475 = vld [vmem:[%s474] sm:$0xff]
        %v476 = vmul.f32 %v475, %v210
        %v477 = vadd.f32 %v473, %v476
        %s478 = scalar_lea.vmem [#allocation2], 192
        %v479 = vld [vmem:[%s478] sm:$0xff]
        %v480 = vmul.f32 %v479, %v198
        %s481 = scalar_lea.vmem [#allocation2], 408
        %v482 = vld [vmem:[%s481] sm:$0xff]
        %v483 = vmul.f32 %v482, %v204
        %v484 = vadd.f32 %v480, %v483
        %s485 = scalar_lea.vmem [#allocation2], 624
        %v486 = vld [vmem:[%s485] sm:$0xff]
        %v487 = vmul.f32 %v486, %v210
        %v488 = vadd.f32 %v484, %v487
        %s489 = scalar_lea.vmem [#allocation2], 200
        %v490 = vld [vmem:[%s489] sm:$0xff]
        %v491 = vmul.f32 %v490, %v198
        %s492 = scalar_lea.vmem [#allocation2], 416
        %v493 = vld [vmem:[%s492] sm:$0xff]
        %v494 = vmul.f32 %v493, %v204
        %v495 = vadd.f32 %v491, %v494
        %s496 = scalar_lea.vmem [#allocation2], 632
        %v497 = vld [vmem:[%s496] sm:$0xff]
        %v498 = vmul.f32 %v497, %v210
        %v499 = vadd.f32 %v495, %v498
        %s500 = scalar_lea.vmem [#allocation2], 208
        %v501 = vld [vmem:[%s500] sm:$0xff]
        %v502 = vmul.f32 %v501, %v198
        %s503 = scalar_lea.vmem [#allocation2], 424
        %v504 = vld [vmem:[%s503] sm:$0xff]
        %v505 = vmul.f32 %v504, %v204
        %v506 = vadd.f32 %v502, %v505
        %s507 = scalar_lea.vmem [#allocation2], 640
        %v508 = vld [vmem:[%s507] sm:$0xff]
        %v509 = vmul.f32 %v508, %v210
        %v510 = vadd.f32 %v506, %v509
        %v511 = vmul.f32 %v198, %v224
        %v512 = vmul.f32 %v204, %v323
        %v513 = vadd.f32 %v511, %v512
        %v514 = vmul.f32 %v210, %v422
        %v515 = vadd.f32 %v513, %v514
        %v516 = vmul.f32 %v198, %v235
        %v517 = vmul.f32 %v204, %v334
        %v518 = vadd.f32 %v516, %v517
        %v519 = vmul.f32 %v210, %v433
        %v520 = vadd.f32 %v518, %v519
        %v521 = vmul.f32 %v198, %v246
        %v522 = vmul.f32 %v204, %v345
        %v523 = vadd.f32 %v521, %v522
        %v524 = vmul.f32 %v210, %v444
        %v525 = vadd.f32 %v523, %v524
        %v526 = vmul.f32 %v198, %v257
        %v527 = vmul.f32 %v204, %v356
        %v528 = vadd.f32 %v526, %v527
        %v529 = vmul.f32 %v210, %v455
        %v530 = vadd.f32 %v528, %v529
        %v531 = vmul.f32 %v198, %v268
        %v532 = vmul.f32 %v204, %v367
        %v533 = vadd.f32 %v531, %v532
        %v534 = vmul.f32 %v210, %v466
        %v535 = vadd.f32 %v533, %v534
        %v536 = vmul.f32 %v198, %v279
        %v537 = vmul.f32 %v204, %v378
        %v538 = vadd.f32 %v536, %v537
        %v539 = vmul.f32 %v210, %v477
        %v540 = vadd.f32 %v538, %v539
        %v541 = vmul.f32 %v198, %v290
        %v542 = vmul.f32 %v204, %v389
        %v543 = vadd.f32 %v541, %v542
        %v544 = vmul.f32 %v210, %v488
        %v545 = vadd.f32 %v543, %v544
        %v546 = vmul.f32 %v198, %v301
        %v547 = vmul.f32 %v204, %v400
        %v548 = vadd.f32 %v546, %v547
        %v549 = vmul.f32 %v210, %v499
        %v550 = vadd.f32 %v548, %v549
        %v551 = vmul.f32 %v198, %v312
        %v552 = vmul.f32 %v204, %v411
        %v553 = vadd.f32 %v551, %v552
        %v554 = vmul.f32 %v210, %v510
        %v555 = vadd.f32 %v553, %v554
        %v556 = vmul.f32 %v198, %v515
        %v557 = vmul.f32 %v204, %v530
        %v558 = vadd.f32 %v556, %v557
        %v559 = vmul.f32 %v210, %v545
        %v560 = vadd.f32 %v558, %v559
        %v561 = vmul.f32 %v198, %v520
        %v562 = vmul.f32 %v204, %v535
        %v563 = vadd.f32 %v561, %v562
        %v564 = vmul.f32 %v210, %v550
        %v565 = vadd.f32 %v563, %v564
        %v566 = vmul.f32 %v198, %v525
        %v567 = vmul.f32 %v204, %v540
        %v568 = vadd.f32 %v566, %v567
        %v569 = vmul.f32 %v210, %v555
        %v570 = vadd.f32 %v568, %v569
        %v571 = vmul.f32 %v198, %v560
        %v572 = vmul.f32 %v204, %v565
        %v573 = vadd.f32 %v571, %v572
        %v574 = vmul.f32 %v210, %v570
        %v575 = vadd.f32 %v573, %v574
        %576 = vst [vmem:[%s197] sm:$0xff] %v575
        %v577 = vmul.f32 %v200, %v560
        %v578 = vmul.f32 %v206, %v565
        %v579 = vadd.f32 %v577, %v578
        %v580 = vmul.f32 %v212, %v570
        %v581 = vadd.f32 %v579, %v580
        %s582 = scalar_lea.vmem %s197, 8 [#allocation7]
        %583 = vst [vmem:[%s582] sm:$0xff] %v581
        %v584 = vmul.f32 %v202, %v560
        %v585 = vmul.f32 %v208, %v565
        %v586 = vadd.f32 %v584, %v585
        %v587 = vmul.f32 %v214, %v570
        %v588 = vadd.f32 %v586, %v587
        %s589 = scalar_lea.vmem %s197, 16 [#allocation7]
        %590 = vst [vmem:[%s589] sm:$0xff] %v588
        %v591 = vmul.f32 %v200, %v515
        %v592 = vmul.f32 %v206, %v530
        %v593 = vadd.f32 %v591, %v592
        %v594 = vmul.f32 %v212, %v545
        %v595 = vadd.f32 %v593, %v594
        %v596 = vmul.f32 %v200, %v520
        %v597 = vmul.f32 %v206, %v535
        %v598 = vadd.f32 %v596, %v597
        %v599 = vmul.f32 %v212, %v550
        %v600 = vadd.f32 %v598, %v599
        %v601 = vmul.f32 %v200, %v525
        %v602 = vmul.f32 %v206, %v540
        %v603 = vadd.f32 %v601, %v602
        %v604 = vmul.f32 %v212, %v555
        %v605 = vadd.f32 %v603, %v604
        %v606 = vmul.f32 %v198, %v595
        %v607 = vmul.f32 %v204, %v600
        %v608 = vadd.f32 %v606, %v607
        %v609 = vmul.f32 %v210, %v605
        %v610 = vadd.f32 %v608, %v609
        %s611 = scalar_lea.vmem %s197, 24 [#allocation7]
        %612 = vst [vmem:[%s611] sm:$0xff] %v610
        %v613 = vmul.f32 %v200, %v595
        %v614 = vmul.f32 %v206, %v600
        %v615 = vadd.f32 %v613, %v614
        %v616 = vmul.f32 %v212, %v605
        %v617 = vadd.f32 %v615, %v616
        %s618 = scalar_lea.vmem %s197, 32 [#allocation7]
        %619 = vst [vmem:[%s618] sm:$0xff] %v617
        %v620 = vmul.f32 %v202, %v595
        %v621 = vmul.f32 %v208, %v600
        %v622 = vadd.f32 %v620, %v621
        %v623 = vmul.f32 %v214, %v605
        %v624 = vadd.f32 %v622, %v623
        %s625 = scalar_lea.vmem %s197, 40 [#allocation7]
        %626 = vst [vmem:[%s625] sm:$0xff] %v624
        %v627 = vmul.f32 %v202, %v515
        %v628 = vmul.f32 %v208, %v530
        %v629 = vadd.f32 %v627, %v628
        %v630 = vmul.f32 %v214, %v545
        %v631 = vadd.f32 %v629, %v630
        %v632 = vmul.f32 %v202, %v520
        %v633 = vmul.f32 %v208, %v535
        %v634 = vadd.f32 %v632, %v633
        %v635 = vmul.f32 %v214, %v550
        %v636 = vadd.f32 %v634, %v635
        %v637 = vmul.f32 %v202, %v525
        %v638 = vmul.f32 %v208, %v540
        %v639 = vadd.f32 %v637, %v638
        %v640 = vmul.f32 %v214, %v555
        %v641 = vadd.f32 %v639, %v640
        %v642 = vmul.f32 %v198, %v631
        %v643 = vmul.f32 %v204, %v636
        %v644 = vadd.f32 %v642, %v643
        %v645 = vmul.f32 %v210, %v641
        %v646 = vadd.f32 %v644, %v645
        %s647 = scalar_lea.vmem %s197, 48 [#allocation7]
        %648 = vst [vmem:[%s647] sm:$0xff] %v646
        %v649 = vmul.f32 %v200, %v631
        %v650 = vmul.f32 %v206, %v636
        %v651 = vadd.f32 %v649, %v650
        %v652 = vmul.f32 %v212, %v641
        %v653 = vadd.f32 %v651, %v652
        %s654 = scalar_lea.vmem %s197, 56 [#allocation7]
        %655 = vst [vmem:[%s654] sm:$0xff] %v653
        %v656 = vmul.f32 %v202, %v631
        %v657 = vmul.f32 %v208, %v636
        %v658 = vadd.f32 %v656, %v657
        %v659 = vmul.f32 %v214, %v641
        %v660 = vadd.f32 %v658, %v659
        %s661 = scalar_lea.vmem %s197, 64 [#allocation7]
        %662 = vst [vmem:[%s661] sm:$0xff] %v660
        %v663 = vmul.f32 %v200, %v224
        %v664 = vmul.f32 %v206, %v323
        %v665 = vadd.f32 %v663, %v664
        %v666 = vmul.f32 %v212, %v422
        %v667 = vadd.f32 %v665, %v666
        %v668 = vmul.f32 %v200, %v235
        %v669 = vmul.f32 %v206, %v334
        %v670 = vadd.f32 %v668, %v669
        %v671 = vmul.f32 %v212, %v433
        %v672 = vadd.f32 %v670, %v671
        %v673 = vmul.f32 %v200, %v246
        %v674 = vmul.f32 %v206, %v345
        %v675 = vadd.f32 %v673, %v674
        %v676 = vmul.f32 %v212, %v444
        %v677 = vadd.f32 %v675, %v676
        %v678 = vmul.f32 %v200, %v257
        %v679 = vmul.f32 %v206, %v356
        %v680 = vadd.f32 %v678, %v679
        %v681 = vmul.f32 %v212, %v455
        %v682 = vadd.f32 %v680, %v681
        %v683 = vmul.f32 %v200, %v268
        %v684 = vmul.f32 %v206, %v367
        %v685 = vadd.f32 %v683, %v684
        %v686 = vmul.f32 %v212, %v466
        %v687 = vadd.f32 %v685, %v686
        %v688 = vmul.f32 %v200, %v279
        %v689 = vmul.f32 %v206, %v378
        %v690 = vadd.f32 %v688, %v689
        %v691 = vmul.f32 %v212, %v477
        %v692 = vadd.f32 %v690, %v691
        %v693 = vmul.f32 %v200, %v290
        %v694 = vmul.f32 %v206, %v389
        %v695 = vadd.f32 %v693, %v694
        %v696 = vmul.f32 %v212, %v488
        %v697 = vadd.f32 %v695, %v696
        %v698 = vmul.f32 %v200, %v301
        %v699 = vmul.f32 %v206, %v400
        %v700 = vadd.f32 %v698, %v699
        %v701 = vmul.f32 %v212, %v499
        %v702 = vadd.f32 %v700, %v701
        %v703 = vmul.f32 %v200, %v312
        %v704 = vmul.f32 %v206, %v411
        %v705 = vadd.f32 %v703, %v704
        %v706 = vmul.f32 %v212, %v510
        %v707 = vadd.f32 %v705, %v706
        %v708 = vmul.f32 %v198, %v667
        %v709 = vmul.f32 %v204, %v682
        %v710 = vadd.f32 %v708, %v709
        %v711 = vmul.f32 %v210, %v697
        %v712 = vadd.f32 %v710, %v711
        %v713 = vmul.f32 %v198, %v672
        %v714 = vmul.f32 %v204, %v687
        %v715 = vadd.f32 %v713, %v714
        %v716 = vmul.f32 %v210, %v702
        %v717 = vadd.f32 %v715, %v716
        %v718 = vmul.f32 %v198, %v677
        %v719 = vmul.f32 %v204, %v692
        %v720 = vadd.f32 %v718, %v719
        %v721 = vmul.f32 %v210, %v707
        %v722 = vadd.f32 %v720, %v721
        %v723 = vmul.f32 %v198, %v712
        %v724 = vmul.f32 %v204, %v717
        %v725 = vadd.f32 %v723, %v724
        %v726 = vmul.f32 %v210, %v722
        %v727 = vadd.f32 %v725, %v726
        %s728 = scalar_lea.vmem %s197, 72 [#allocation7]
        %729 = vst [vmem:[%s728] sm:$0xff] %v727
        %v730 = vmul.f32 %v200, %v712
        %v731 = vmul.f32 %v206, %v717
        %v732 = vadd.f32 %v730, %v731
        %v733 = vmul.f32 %v212, %v722
        %v734 = vadd.f32 %v732, %v733
        %s735 = scalar_lea.vmem %s197, 80 [#allocation7]
        %736 = vst [vmem:[%s735] sm:$0xff] %v734
        %v737 = vmul.f32 %v202, %v712
        %v738 = vmul.f32 %v208, %v717
        %v739 = vadd.f32 %v737, %v738
        %v740 = vmul.f32 %v214, %v722
        %v741 = vadd.f32 %v739, %v740
        %s742 = scalar_lea.vmem %s197, 88 [#allocation7]
        %743 = vst [vmem:[%s742] sm:$0xff] %v741
        %v744 = vmul.f32 %v200, %v667
        %v745 = vmul.f32 %v206, %v682
        %v746 = vadd.f32 %v744, %v745
        %v747 = vmul.f32 %v212, %v697
        %v748 = vadd.f32 %v746, %v747
        %v749 = vmul.f32 %v200, %v672
        %v750 = vmul.f32 %v206, %v687
        %v751 = vadd.f32 %v749, %v750
        %v752 = vmul.f32 %v212, %v702
        %v753 = vadd.f32 %v751, %v752
        %v754 = vmul.f32 %v200, %v677
        %v755 = vmul.f32 %v206, %v692
        %v756 = vadd.f32 %v754, %v755
        %v757 = vmul.f32 %v212, %v707
        %v758 = vadd.f32 %v756, %v757
        %v759 = vmul.f32 %v198, %v748
        %v760 = vmul.f32 %v204, %v753
        %v761 = vadd.f32 %v759, %v760
        %v762 = vmul.f32 %v210, %v758
        %v763 = vadd.f32 %v761, %v762
        %s764 = scalar_lea.vmem %s197, 96 [#allocation7]
        %765 = vst [vmem:[%s764] sm:$0xff] %v763
        %v766 = vmul.f32 %v200, %v748
        %v767 = vmul.f32 %v206, %v753
        %v768 = vadd.f32 %v766, %v767
        %v769 = vmul.f32 %v212, %v758
        %v770 = vadd.f32 %v768, %v769
        %s771 = scalar_lea.vmem %s197, 104 [#allocation7]
        %772 = vst [vmem:[%s771] sm:$0xff] %v770
        %v773 = vmul.f32 %v202, %v748
        %v774 = vmul.f32 %v208, %v753
        %v775 = vadd.f32 %v773, %v774
        %v776 = vmul.f32 %v214, %v758
        %v777 = vadd.f32 %v775, %v776
        %s778 = scalar_lea.vmem %s197, 112 [#allocation7]
        %779 = vst [vmem:[%s778] sm:$0xff] %v777
        %v780 = vmul.f32 %v202, %v667
        %v781 = vmul.f32 %v208, %v682
        %v782 = vadd.f32 %v780, %v781
        %v783 = vmul.f32 %v214, %v697
        %v784 = vadd.f32 %v782, %v783
        %v785 = vmul.f32 %v202, %v672
        %v786 = vmul.f32 %v208, %v687
        %v787 = vadd.f32 %v785, %v786
        %v788 = vmul.f32 %v214, %v702
        %v789 = vadd.f32 %v787, %v788
        %v790 = vmul.f32 %v202, %v677
        %v791 = vmul.f32 %v208, %v692
        %v792 = vadd.f32 %v790, %v791
        %v793 = vmul.f32 %v214, %v707
        %v794 = vadd.f32 %v792, %v793
        %v795 = vmul.f32 %v198, %v784
        %v796 = vmul.f32 %v204, %v789
        %v797 = vadd.f32 %v795, %v796
        %v798 = vmul.f32 %v210, %v794
        %v799 = vadd.f32 %v797, %v798
        %s800 = scalar_lea.vmem %s197, 120 [#allocation7]
        %801 = vst [vmem:[%s800] sm:$0xff] %v799
        %v802 = vmul.f32 %v200, %v784
        %v803 = vmul.f32 %v206, %v789
        %v804 = vadd.f32 %v802, %v803
        %v805 = vmul.f32 %v212, %v794
        %v806 = vadd.f32 %v804, %v805
        %s807 = scalar_lea.vmem %s197, 128 [#allocation7]
        %808 = vst [vmem:[%s807] sm:$0xff] %v806
        %v809 = vmul.f32 %v202, %v784
        %v810 = vmul.f32 %v208, %v789
        %v811 = vadd.f32 %v809, %v810
        %v812 = vmul.f32 %v214, %v794
        %v813 = vadd.f32 %v811, %v812
        %s814 = scalar_lea.vmem %s197, 136 [#allocation7]
        %815 = vst [vmem:[%s814] sm:$0xff] %v813
        %v816 = vmul.f32 %v202, %v224
        %v817 = vmul.f32 %v208, %v323
        %v818 = vadd.f32 %v816, %v817
        %v819 = vmul.f32 %v214, %v422
        %v820 = vadd.f32 %v818, %v819
        %v821 = vmul.f32 %v202, %v235
        %v822 = vmul.f32 %v208, %v334
        %v823 = vadd.f32 %v821, %v822
        %v824 = vmul.f32 %v214, %v433
        %v825 = vadd.f32 %v823, %v824
        %v826 = vmul.f32 %v202, %v246
        %v827 = vmul.f32 %v208, %v345
        %v828 = vadd.f32 %v826, %v827
        %v829 = vmul.f32 %v214, %v444
        %v830 = vadd.f32 %v828, %v829
        %v831 = vmul.f32 %v202, %v257
        %v832 = vmul.f32 %v208, %v356
        %v833 = vadd.f32 %v831, %v832
        %v834 = vmul.f32 %v214, %v455
        %v835 = vadd.f32 %v833, %v834
        %v836 = vmul.f32 %v202, %v268
        %v837 = vmul.f32 %v208, %v367
        %v838 = vadd.f32 %v836, %v837
        %v839 = vmul.f32 %v214, %v466
        %v840 = vadd.f32 %v838, %v839
        %v841 = vmul.f32 %v202, %v279
        %v842 = vmul.f32 %v208, %v378
        %v843 = vadd.f32 %v841, %v842
        %v844 = vmul.f32 %v214, %v477
        %v845 = vadd.f32 %v843, %v844
        %v846 = vmul.f32 %v202, %v290
        %v847 = vmul.f32 %v208, %v389
        %v848 = vadd.f32 %v846, %v847
        %v849 = vmul.f32 %v214, %v488
        %v850 = vadd.f32 %v848, %v849
        %v851 = vmul.f32 %v202, %v301
        %v852 = vmul.f32 %v208, %v400
        %v853 = vadd.f32 %v851, %v852
        %v854 = vmul.f32 %v214, %v499
        %v855 = vadd.f32 %v853, %v854
        %v856 = vmul.f32 %v202, %v312
        %v857 = vmul.f32 %v208, %v411
        %v858 = vadd.f32 %v856, %v857
        %v859 = vmul.f32 %v214, %v510
        %v860 = vadd.f32 %v858, %v859
        %v861 = vmul.f32 %v198, %v820
        %v862 = vmul.f32 %v204, %v835
        %v863 = vadd.f32 %v861, %v862
        %v864 = vmul.f32 %v210, %v850
        %v865 = vadd.f32 %v863, %v864
        %v866 = vmul.f32 %v198, %v825
        %v867 = vmul.f32 %v204, %v840
        %v868 = vadd.f32 %v866, %v867
        %v869 = vmul.f32 %v210, %v855
        %v870 = vadd.f32 %v868, %v869
        %v871 = vmul.f32 %v198, %v830
        %v872 = vmul.f32 %v204, %v845
        %v873 = vadd.f32 %v871, %v872
        %v874 = vmul.f32 %v210, %v860
        %v875 = vadd.f32 %v873, %v874
        %v876 = vmul.f32 %v198, %v865
        %v877 = vmul.f32 %v204, %v870
        %v878 = vadd.f32 %v876, %v877
        %v879 = vmul.f32 %v210, %v875
        %v880 = vadd.f32 %v878, %v879
        %s881 = scalar_lea.vmem %s197, 144 [#allocation7]
        %882 = vst [vmem:[%s881] sm:$0xff] %v880
        %v883 = vmul.f32 %v200, %v865
        %v884 = vmul.f32 %v206, %v870
        %v885 = vadd.f32 %v883, %v884
        %v886 = vmul.f32 %v212, %v875
        %v887 = vadd.f32 %v885, %v886
        %s888 = scalar_lea.vmem %s197, 152 [#allocation7]
        %889 = vst [vmem:[%s888] sm:$0xff] %v887
        %v890 = vmul.f32 %v202, %v865
        %v891 = vmul.f32 %v208, %v870
        %v892 = vadd.f32 %v890, %v891
        %v893 = vmul.f32 %v214, %v875
        %v894 = vadd.f32 %v892, %v893
        %s895 = scalar_lea.vmem %s197, 160 [#allocation7]
        %896 = vst [vmem:[%s895] sm:$0xff] %v894
        %v897 = vmul.f32 %v200, %v820
        %v898 = vmul.f32 %v206, %v835
        %v899 = vadd.f32 %v897, %v898
        %v900 = vmul.f32 %v212, %v850
        %v901 = vadd.f32 %v899, %v900
        %v902 = vmul.f32 %v200, %v825
        %v903 = vmul.f32 %v206, %v840
        %v904 = vadd.f32 %v902, %v903
        %v905 = vmul.f32 %v212, %v855
        %v906 = vadd.f32 %v904, %v905
        %v907 = vmul.f32 %v200, %v830
        %v908 = vmul.f32 %v206, %v845
        %v909 = vadd.f32 %v907, %v908
        %v910 = vmul.f32 %v212, %v860
        %v911 = vadd.f32 %v909, %v910
        %v912 = vmul.f32 %v198, %v901
        %v913 = vmul.f32 %v204, %v906
        %v914 = vadd.f32 %v912, %v913
        %v915 = vmul.f32 %v210, %v911
        %v916 = vadd.f32 %v914, %v915
        %s917 = scalar_lea.vmem %s197, 168 [#allocation7]
        %918 = vst [vmem:[%s917] sm:$0xff] %v916
        %v919 = vmul.f32 %v200, %v901
        %v920 = vmul.f32 %v206, %v906
        %v921 = vadd.f32 %v919, %v920
        %v922 = vmul.f32 %v212, %v911
        %v923 = vadd.f32 %v921, %v922
        %s924 = scalar_lea.vmem %s197, 176 [#allocation7]
        %925 = vst [vmem:[%s924] sm:$0xff] %v923
        %v926 = vmul.f32 %v202, %v901
        %v927 = vmul.f32 %v208, %v906
        %v928 = vadd.f32 %v926, %v927
        %v929 = vmul.f32 %v214, %v911
        %v930 = vadd.f32 %v928, %v929
        %s931 = scalar_lea.vmem %s197, 184 [#allocation7]
        %932 = vst [vmem:[%s931] sm:$0xff] %v930
        %v933 = vmul.f32 %v202, %v820
        %v934 = vmul.f32 %v208, %v835
        %v935 = vadd.f32 %v933, %v934
        %v936 = vmul.f32 %v214, %v850
        %v937 = vadd.f32 %v935, %v936
        %v938 = vmul.f32 %v202, %v825
        %v939 = vmul.f32 %v208, %v840
        %v940 = vadd.f32 %v938, %v939
        %v941 = vmul.f32 %v214, %v855
        %v942 = vadd.f32 %v940, %v941
        %v943 = vmul.f32 %v202, %v830
        %v944 = vmul.f32 %v208, %v845
        %v945 = vadd.f32 %v943, %v944
        %v946 = vmul.f32 %v214, %v860
        %v947 = vadd.f32 %v945, %v946
        %v948 = vmul.f32 %v198, %v937
        %v949 = vmul.f32 %v204, %v942
        %v950 = vadd.f32 %v948, %v949
        %v951 = vmul.f32 %v210, %v947
        %v952 = vadd.f32 %v950, %v951
        %s953 = scalar_lea.vmem %s197, 192 [#allocation7]
        %954 = vst [vmem:[%s953] sm:$0xff] %v952
        %v955 = vmul.f32 %v200, %v937
        %v956 = vmul.f32 %v206, %v942
        %v957 = vadd.f32 %v955, %v956
        %v958 = vmul.f32 %v212, %v947
        %v959 = vadd.f32 %v957, %v958
        %s960 = scalar_lea.vmem %s197, 200 [#allocation7]
        %961 = vst [vmem:[%s960] sm:$0xff] %v959
        %v962 = vmul.f32 %v202, %v937
        %v963 = vmul.f32 %v208, %v942
        %v964 = vadd.f32 %v962, %v963
        %v965 = vmul.f32 %v214, %v947
        %v966 = vadd.f32 %v964, %v965
        %s967 = scalar_lea.vmem %s197, 208 [#allocation7]
        %968 = vst [vmem:[%s967] sm:$0xff] %v966
        %v969 = vld [vmem:[#allocation2] sm:$0xff]
        %v970 = vmul.f32 %v969, %v200
        %v971 = vld [vmem:[%s217] sm:$0xff]
        %v972 = vmul.f32 %v971, %v206
        %v973 = vadd.f32 %v970, %v972
        %v974 = vld [vmem:[%s221] sm:$0xff]
        %v975 = vmul.f32 %v974, %v212
        %v976 = vadd.f32 %v973, %v975
        %v977 = vld [vmem:[%s225] sm:$0xff]
        %v978 = vmul.f32 %v977, %v200
        %v979 = vld [vmem:[%s228] sm:$0xff]
        %v980 = vmul.f32 %v979, %v206
        %v981 = vadd.f32 %v978, %v980
        %v982 = vld [vmem:[%s232] sm:$0xff]
        %v983 = vmul.f32 %v982, %v212
        %v984 = vadd.f32 %v981, %v983
        %v985 = vld [vmem:[%s236] sm:$0xff]
        %v986 = vmul.f32 %v985, %v200
        %v987 = vld [vmem:[%s239] sm:$0xff]
        %v988 = vmul.f32 %v987, %v206
        %v989 = vadd.f32 %v986, %v988
        %v990 = vld [vmem:[%s243] sm:$0xff]
        %v991 = vmul.f32 %v990, %v212
        %v992 = vadd.f32 %v989, %v991
        %v993 = vld [vmem:[%s247] sm:$0xff]
        %v994 = vmul.f32 %v993, %v200
        %v995 = vld [vmem:[%s250] sm:$0xff]
        %v996 = vmul.f32 %v995, %v206
        %v997 = vadd.f32 %v994, %v996
        %v998 = vld [vmem:[%s254] sm:$0xff]
        %v999 = vmul.f32 %v998, %v212
        %v1000 = vadd.f32 %v997, %v999
        %v1001 = vld [vmem:[%s258] sm:$0xff]
        %v1002 = vmul.f32 %v1001, %v200
        %v1003 = vld [vmem:[%s261] sm:$0xff]
        %v1004 = vmul.f32 %v1003, %v206
        %v1005 = vadd.f32 %v1002, %v1004
        %v1006 = vld [vmem:[%s265] sm:$0xff]
        %v1007 = vmul.f32 %v1006, %v212
        %v1008 = vadd.f32 %v1005, %v1007
        %v1009 = vld [vmem:[%s269] sm:$0xff]
        %v1010 = vmul.f32 %v1009, %v200
        %v1011 = vld [vmem:[%s272] sm:$0xff]
        %v1012 = vmul.f32 %v1011, %v206
        %v1013 = vadd.f32 %v1010, %v1012
        %v1014 = vld [vmem:[%s276] sm:$0xff]
        %v1015 = vmul.f32 %v1014, %v212
        %v1016 = vadd.f32 %v1013, %v1015
        %v1017 = vld [vmem:[%s280] sm:$0xff]
        %v1018 = vmul.f32 %v1017, %v200
        %v1019 = vld [vmem:[%s283] sm:$0xff]
        %v1020 = vmul.f32 %v1019, %v206
        %v1021 = vadd.f32 %v1018, %v1020
        %v1022 = vld [vmem:[%s287] sm:$0xff]
        %v1023 = vmul.f32 %v1022, %v212
        %v1024 = vadd.f32 %v1021, %v1023
        %v1025 = vld [vmem:[%s291] sm:$0xff]
        %v1026 = vmul.f32 %v1025, %v200
        %v1027 = vld [vmem:[%s294] sm:$0xff]
        %v1028 = vmul.f32 %v1027, %v206
        %v1029 = vadd.f32 %v1026, %v1028
        %v1030 = vld [vmem:[%s298] sm:$0xff]
        %v1031 = vmul.f32 %v1030, %v212
        %v1032 = vadd.f32 %v1029, %v1031
        %v1033 = vld [vmem:[%s302] sm:$0xff]
        %v1034 = vmul.f32 %v1033, %v200
        %v1035 = vld [vmem:[%s305] sm:$0xff]
        %v1036 = vmul.f32 %v1035, %v206
        %v1037 = vadd.f32 %v1034, %v1036
        %v1038 = vld [vmem:[%s309] sm:$0xff]
        %v1039 = vmul.f32 %v1038, %v212
        %v1040 = vadd.f32 %v1037, %v1039
        %v1041 = vld [vmem:[%s313] sm:$0xff]
        %v1042 = vmul.f32 %v1041, %v200
        %v1043 = vld [vmem:[%s316] sm:$0xff]
        %v1044 = vmul.f32 %v1043, %v206
        %v1045 = vadd.f32 %v1042, %v1044
        %v1046 = vld [vmem:[%s320] sm:$0xff]
        %v1047 = vmul.f32 %v1046, %v212
        %v1048 = vadd.f32 %v1045, %v1047
        %v1049 = vld [vmem:[%s324] sm:$0xff]
        %v1050 = vmul.f32 %v1049, %v200
        %v1051 = vld [vmem:[%s327] sm:$0xff]
        %v1052 = vmul.f32 %v1051, %v206
        %v1053 = vadd.f32 %v1050, %v1052
        %v1054 = vld [vmem:[%s331] sm:$0xff]
        %v1055 = vmul.f32 %v1054, %v212
        %v1056 = vadd.f32 %v1053, %v1055
        %v1057 = vld [vmem:[%s335] sm:$0xff]
        %v1058 = vmul.f32 %v1057, %v200
        %v1059 = vld [vmem:[%s338] sm:$0xff]
        %v1060 = vmul.f32 %v1059, %v206
        %v1061 = vadd.f32 %v1058, %v1060
        %v1062 = vld [vmem:[%s342] sm:$0xff]
        %v1063 = vmul.f32 %v1062, %v212
        %v1064 = vadd.f32 %v1061, %v1063
        %v1065 = vld [vmem:[%s346] sm:$0xff]
        %v1066 = vmul.f32 %v1065, %v200
        %v1067 = vld [vmem:[%s349] sm:$0xff]
        %v1068 = vmul.f32 %v1067, %v206
        %v1069 = vadd.f32 %v1066, %v1068
        %v1070 = vld [vmem:[%s353] sm:$0xff]
        %v1071 = vmul.f32 %v1070, %v212
        %v1072 = vadd.f32 %v1069, %v1071
        %v1073 = vld [vmem:[%s357] sm:$0xff]
        %v1074 = vmul.f32 %v1073, %v200
        %v1075 = vld [vmem:[%s360] sm:$0xff]
        %v1076 = vmul.f32 %v1075, %v206
        %v1077 = vadd.f32 %v1074, %v1076
        %v1078 = vld [vmem:[%s364] sm:$0xff]
        %v1079 = vmul.f32 %v1078, %v212
        %v1080 = vadd.f32 %v1077, %v1079
        %v1081 = vld [vmem:[%s368] sm:$0xff]
        %v1082 = vmul.f32 %v1081, %v200
        %v1083 = vld [vmem:[%s371] sm:$0xff]
        %v1084 = vmul.f32 %v1083, %v206
        %v1085 = vadd.f32 %v1082, %v1084
        %v1086 = vld [vmem:[%s375] sm:$0xff]
        %v1087 = vmul.f32 %v1086, %v212
        %v1088 = vadd.f32 %v1085, %v1087
        %v1089 = vld [vmem:[%s379] sm:$0xff]
        %v1090 = vmul.f32 %v1089, %v200
        %v1091 = vld [vmem:[%s382] sm:$0xff]
        %v1092 = vmul.f32 %v1091, %v206
        %v1093 = vadd.f32 %v1090, %v1092
        %v1094 = vld [vmem:[%s386] sm:$0xff]
        %v1095 = vmul.f32 %v1094, %v212
        %v1096 = vadd.f32 %v1093, %v1095
        %v1097 = vld [vmem:[%s390] sm:$0xff]
        %v1098 = vmul.f32 %v1097, %v200
        %v1099 = vld [vmem:[%s393] sm:$0xff]
        %v1100 = vmul.f32 %v1099, %v206
        %v1101 = vadd.f32 %v1098, %v1100
        %v1102 = vld [vmem:[%s397] sm:$0xff]
        %v1103 = vmul.f32 %v1102, %v212
        %v1104 = vadd.f32 %v1101, %v1103
        %v1105 = vld [vmem:[%s401] sm:$0xff]
        %v1106 = vmul.f32 %v1105, %v200
        %v1107 = vld [vmem:[%s404] sm:$0xff]
        %v1108 = vmul.f32 %v1107, %v206
        %v1109 = vadd.f32 %v1106, %v1108
        %v1110 = vld [vmem:[%s408] sm:$0xff]
        %v1111 = vmul.f32 %v1110, %v212
        %v1112 = vadd.f32 %v1109, %v1111
        %v1113 = vld [vmem:[%s412] sm:$0xff]
        %v1114 = vmul.f32 %v1113, %v200
        %v1115 = vld [vmem:[%s415] sm:$0xff]
        %v1116 = vmul.f32 %v1115, %v206
        %v1117 = vadd.f32 %v1114, %v1116
        %v1118 = vld [vmem:[%s419] sm:$0xff]
        %v1119 = vmul.f32 %v1118, %v212
        %v1120 = vadd.f32 %v1117, %v1119
        %v1121 = vld [vmem:[%s423] sm:$0xff]
        %v1122 = vmul.f32 %v1121, %v200
        %v1123 = vld [vmem:[%s426] sm:$0xff]
        %v1124 = vmul.f32 %v1123, %v206
        %v1125 = vadd.f32 %v1122, %v1124
        %v1126 = vld [vmem:[%s430] sm:$0xff]
        %v1127 = vmul.f32 %v1126, %v212
        %v1128 = vadd.f32 %v1125, %v1127
        %v1129 = vld [vmem:[%s434] sm:$0xff]
        %v1130 = vmul.f32 %v1129, %v200
        %v1131 = vld [vmem:[%s437] sm:$0xff]
        %v1132 = vmul.f32 %v1131, %v206
        %v1133 = vadd.f32 %v1130, %v1132
        %v1134 = vld [vmem:[%s441] sm:$0xff]
        %v1135 = vmul.f32 %v1134, %v212
        %v1136 = vadd.f32 %v1133, %v1135
        %v1137 = vld [vmem:[%s445] sm:$0xff]
        %v1138 = vmul.f32 %v1137, %v200
        %v1139 = vld [vmem:[%s448] sm:$0xff]
        %v1140 = vmul.f32 %v1139, %v206
        %v1141 = vadd.f32 %v1138, %v1140
        %v1142 = vld [vmem:[%s452] sm:$0xff]
        %v1143 = vmul.f32 %v1142, %v212
        %v1144 = vadd.f32 %v1141, %v1143
        %v1145 = vld [vmem:[%s456] sm:$0xff]
        %v1146 = vmul.f32 %v1145, %v200
        %v1147 = vld [vmem:[%s459] sm:$0xff]
        %v1148 = vmul.f32 %v1147, %v206
        %v1149 = vadd.f32 %v1146, %v1148
        %v1150 = vld [vmem:[%s463] sm:$0xff]
        %v1151 = vmul.f32 %v1150, %v212
        %v1152 = vadd.f32 %v1149, %v1151
        %v1153 = vld [vmem:[%s467] sm:$0xff]
        %v1154 = vmul.f32 %v1153, %v200
        %v1155 = vld [vmem:[%s470] sm:$0xff]
        %v1156 = vmul.f32 %v1155, %v206
        %v1157 = vadd.f32 %v1154, %v1156
        %v1158 = vld [vmem:[%s474] sm:$0xff]
        %v1159 = vmul.f32 %v1158, %v212
        %v1160 = vadd.f32 %v1157, %v1159
        %v1161 = vld [vmem:[%s478] sm:$0xff]
        %v1162 = vmul.f32 %v1161, %v200
        %v1163 = vld [vmem:[%s481] sm:$0xff]
        %v1164 = vmul.f32 %v1163, %v206
        %v1165 = vadd.f32 %v1162, %v1164
        %v1166 = vld [vmem:[%s485] sm:$0xff]
        %v1167 = vmul.f32 %v1166, %v212
        %v1168 = vadd.f32 %v1165, %v1167
        %v1169 = vld [vmem:[%s489] sm:$0xff]
        %v1170 = vmul.f32 %v1169, %v200
        %v1171 = vld [vmem:[%s492] sm:$0xff]
        %v1172 = vmul.f32 %v1171, %v206
        %v1173 = vadd.f32 %v1170, %v1172
        %v1174 = vld [vmem:[%s496] sm:$0xff]
        %v1175 = vmul.f32 %v1174, %v212
        %v1176 = vadd.f32 %v1173, %v1175
        %v1177 = vld [vmem:[%s500] sm:$0xff]
        %v1178 = vmul.f32 %v1177, %v200
        %v1179 = vld [vmem:[%s503] sm:$0xff]
        %v1180 = vmul.f32 %v1179, %v206
        %v1181 = vadd.f32 %v1178, %v1180
        %v1182 = vld [vmem:[%s507] sm:$0xff]
        %v1183 = vmul.f32 %v1182, %v212
        %v1184 = vadd.f32 %v1181, %v1183
        %v1185 = vmul.f32 %v198, %v976
        %v1186 = vmul.f32 %v204, %v1048
        %v1187 = vadd.f32 %v1185, %v1186
        %v1188 = vmul.f32 %v210, %v1120
        %v1189 = vadd.f32 %v1187, %v1188
        %v1190 = vmul.f32 %v198, %v984
        %v1191 = vmul.f32 %v204, %v1056
        %v1192 = vadd.f32 %v1190, %v1191
        %v1193 = vmul.f32 %v210, %v1128
        %v1194 = vadd.f32 %v1192, %v1193
        %v1195 = vmul.f32 %v198, %v992
        %v1196 = vmul.f32 %v204, %v1064
        %v1197 = vadd.f32 %v1195, %v1196
        %v1198 = vmul.f32 %v210, %v1136
        %v1199 = vadd.f32 %v1197, %v1198
        %v1200 = vmul.f32 %v198, %v1000
        %v1201 = vmul.f32 %v204, %v1072
        %v1202 = vadd.f32 %v1200, %v1201
        %v1203 = vmul.f32 %v210, %v1144
        %v1204 = vadd.f32 %v1202, %v1203
        %v1205 = vmul.f32 %v198, %v1008
        %v1206 = vmul.f32 %v204, %v1080
        %v1207 = vadd.f32 %v1205, %v1206
        %v1208 = vmul.f32 %v210, %v1152
        %v1209 = vadd.f32 %v1207, %v1208
        %v1210 = vmul.f32 %v198, %v1016
        %v1211 = vmul.f32 %v204, %v1088
        %v1212 = vadd.f32 %v1210, %v1211
        %v1213 = vmul.f32 %v210, %v1160
        %v1214 = vadd.f32 %v1212, %v1213
        %v1215 = vmul.f32 %v198, %v1024
        %v1216 = vmul.f32 %v204, %v1096
        %v1217 = vadd.f32 %v1215, %v1216
        %v1218 = vmul.f32 %v210, %v1168
        %v1219 = vadd.f32 %v1217, %v1218
        %v1220 = vmul.f32 %v198, %v1032
        %v1221 = vmul.f32 %v204, %v1104
        %v1222 = vadd.f32 %v1220, %v1221
        %v1223 = vmul.f32 %v210, %v1176
        %v1224 = vadd.f32 %v1222, %v1223
        %v1225 = vmul.f32 %v198, %v1040
        %v1226 = vmul.f32 %v204, %v1112
        %v1227 = vadd.f32 %v1225, %v1226
        %v1228 = vmul.f32 %v210, %v1184
        %v1229 = vadd.f32 %v1227, %v1228
        %v1230 = vmul.f32 %v198, %v1189
        %v1231 = vmul.f32 %v204, %v1204
        %v1232 = vadd.f32 %v1230, %v1231
        %v1233 = vmul.f32 %v210, %v1219
        %v1234 = vadd.f32 %v1232, %v1233
        %v1235 = vmul.f32 %v198, %v1194
        %v1236 = vmul.f32 %v204, %v1209
        %v1237 = vadd.f32 %v1235, %v1236
        %v1238 = vmul.f32 %v210, %v1224
        %v1239 = vadd.f32 %v1237, %v1238
        %v1240 = vmul.f32 %v198, %v1199
        %v1241 = vmul.f32 %v204, %v1214
        %v1242 = vadd.f32 %v1240, %v1241
        %v1243 = vmul.f32 %v210, %v1229
        %v1244 = vadd.f32 %v1242, %v1243
        %v1245 = vmul.f32 %v198, %v1234
        %v1246 = vmul.f32 %v204, %v1239
        %v1247 = vadd.f32 %v1245, %v1246
        %v1248 = vmul.f32 %v210, %v1244
        %v1249 = vadd.f32 %v1247, %v1248
        %s1250 = scalar_lea.vmem %s197, 216 [#allocation7]
        %1251 = vst [vmem:[%s1250] sm:$0xff] %v1249
        %v1252 = vmul.f32 %v200, %v1234
        %v1253 = vmul.f32 %v206, %v1239
        %v1254 = vadd.f32 %v1252, %v1253
        %v1255 = vmul.f32 %v212, %v1244
        %v1256 = vadd.f32 %v1254, %v1255
        %s1257 = scalar_lea.vmem %s197, 224 [#allocation7]
        %1258 = vst [vmem:[%s1257] sm:$0xff] %v1256
        %v1259 = vmul.f32 %v202, %v1234
        %v1260 = vmul.f32 %v208, %v1239
        %v1261 = vadd.f32 %v1259, %v1260
        %v1262 = vmul.f32 %v214, %v1244
        %v1263 = vadd.f32 %v1261, %v1262
        %s1264 = scalar_lea.vmem %s197, 232 [#allocation7]
        %1265 = vst [vmem:[%s1264] sm:$0xff] %v1263
        %v1266 = vmul.f32 %v200, %v1189
        %v1267 = vmul.f32 %v206, %v1204
        %v1268 = vadd.f32 %v1266, %v1267
        %v1269 = vmul.f32 %v212, %v1219
        %v1270 = vadd.f32 %v1268, %v1269
        %v1271 = vmul.f32 %v200, %v1194
        %v1272 = vmul.f32 %v206, %v1209
        %v1273 = vadd.f32 %v1271, %v1272
        %v1274 = vmul.f32 %v212, %v1224
        %v1275 = vadd.f32 %v1273, %v1274
        %v1276 = vmul.f32 %v200, %v1199
        %v1277 = vmul.f32 %v206, %v1214
        %v1278 = vadd.f32 %v1276, %v1277
        %v1279 = vmul.f32 %v212, %v1229
        %v1280 = vadd.f32 %v1278, %v1279
        %v1281 = vmul.f32 %v198, %v1270
        %v1282 = vmul.f32 %v204, %v1275
        %v1283 = vadd.f32 %v1281, %v1282
        %v1284 = vmul.f32 %v210, %v1280
        %v1285 = vadd.f32 %v1283, %v1284
        %s1286 = scalar_lea.vmem %s197, 240 [#allocation7]
        %1287 = vst [vmem:[%s1286] sm:$0xff] %v1285
        %v1288 = vmul.f32 %v200, %v1270
        %v1289 = vmul.f32 %v206, %v1275
        %v1290 = vadd.f32 %v1288, %v1289
        %v1291 = vmul.f32 %v212, %v1280
        %v1292 = vadd.f32 %v1290, %v1291
        %s1293 = scalar_lea.vmem %s197, 248 [#allocation7]
        %1294 = vst [vmem:[%s1293] sm:$0xff] %v1292
        %v1295 = vmul.f32 %v202, %v1270
        %v1296 = vmul.f32 %v208, %v1275
        %v1297 = vadd.f32 %v1295, %v1296
        %v1298 = vmul.f32 %v214, %v1280
        %v1299 = vadd.f32 %v1297, %v1298
        %s1300 = scalar_lea.vmem %s197, 256 [#allocation7]
        %1301 = vst [vmem:[%s1300] sm:$0xff] %v1299
        %v1302 = vmul.f32 %v202, %v1189
        %v1303 = vmul.f32 %v208, %v1204
        %v1304 = vadd.f32 %v1302, %v1303
        %v1305 = vmul.f32 %v214, %v1219
        %v1306 = vadd.f32 %v1304, %v1305
        %v1307 = vmul.f32 %v202, %v1194
        %v1308 = vmul.f32 %v208, %v1209
        %v1309 = vadd.f32 %v1307, %v1308
        %v1310 = vmul.f32 %v214, %v1224
        %v1311 = vadd.f32 %v1309, %v1310
        %v1312 = vmul.f32 %v202, %v1199
        %v1313 = vmul.f32 %v208, %v1214
        %v1314 = vadd.f32 %v1312, %v1313
        %v1315 = vmul.f32 %v214, %v1229
        %v1316 = vadd.f32 %v1314, %v1315
        %v1317 = vmul.f32 %v198, %v1306
        %v1318 = vmul.f32 %v204, %v1311
        %v1319 = vadd.f32 %v1317, %v1318
        %v1320 = vmul.f32 %v210, %v1316
        %v1321 = vadd.f32 %v1319, %v1320
        %s1322 = scalar_lea.vmem %s197, 264 [#allocation7]
        %1323 = vst [vmem:[%s1322] sm:$0xff] %v1321
        %v1324 = vmul.f32 %v200, %v1306
        %v1325 = vmul.f32 %v206, %v1311
        %v1326 = vadd.f32 %v1324, %v1325
        %v1327 = vmul.f32 %v212, %v1316
        %v1328 = vadd.f32 %v1326, %v1327
        %s1329 = scalar_lea.vmem %s197, 272 [#allocation7]
        %1330 = vst [vmem:[%s1329] sm:$0xff] %v1328
        %v1331 = vmul.f32 %v202, %v1306
        %v1332 = vmul.f32 %v208, %v1311
        %v1333 = vadd.f32 %v1331, %v1332
        %v1334 = vmul.f32 %v214, %v1316
        %v1335 = vadd.f32 %v1333, %v1334
        %s1336 = scalar_lea.vmem %s197, 280 [#allocation7]
        %1337 = vst [vmem:[%s1336] sm:$0xff] %v1335
        %v1338 = vmul.f32 %v200, %v976
        %v1339 = vmul.f32 %v206, %v1048
        %v1340 = vadd.f32 %v1338, %v1339
        %v1341 = vmul.f32 %v212, %v1120
        %v1342 = vadd.f32 %v1340, %v1341
        %v1343 = vmul.f32 %v200, %v984
        %v1344 = vmul.f32 %v206, %v1056
        %v1345 = vadd.f32 %v1343, %v1344
        %v1346 = vmul.f32 %v212, %v1128
        %v1347 = vadd.f32 %v1345, %v1346
        %v1348 = vmul.f32 %v200, %v992
        %v1349 = vmul.f32 %v206, %v1064
        %v1350 = vadd.f32 %v1348, %v1349
        %v1351 = vmul.f32 %v212, %v1136
        %v1352 = vadd.f32 %v1350, %v1351
        %v1353 = vmul.f32 %v200, %v1000
        %v1354 = vmul.f32 %v206, %v1072
        %v1355 = vadd.f32 %v1353, %v1354
        %v1356 = vmul.f32 %v212, %v1144
        %v1357 = vadd.f32 %v1355, %v1356
        %v1358 = vmul.f32 %v200, %v1008
        %v1359 = vmul.f32 %v206, %v1080
        %v1360 = vadd.f32 %v1358, %v1359
        %v1361 = vmul.f32 %v212, %v1152
        %v1362 = vadd.f32 %v1360, %v1361
        %v1363 = vmul.f32 %v200, %v1016
        %v1364 = vmul.f32 %v206, %v1088
        %v1365 = vadd.f32 %v1363, %v1364
        %v1366 = vmul.f32 %v212, %v1160
        %v1367 = vadd.f32 %v1365, %v1366
        %v1368 = vmul.f32 %v200, %v1024
        %v1369 = vmul.f32 %v206, %v1096
        %v1370 = vadd.f32 %v1368, %v1369
        %v1371 = vmul.f32 %v212, %v1168
        %v1372 = vadd.f32 %v1370, %v1371
        %v1373 = vmul.f32 %v200, %v1032
        %v1374 = vmul.f32 %v206, %v1104
        %v1375 = vadd.f32 %v1373, %v1374
        %v1376 = vmul.f32 %v212, %v1176
        %v1377 = vadd.f32 %v1375, %v1376
        %v1378 = vmul.f32 %v200, %v1040
        %v1379 = vmul.f32 %v206, %v1112
        %v1380 = vadd.f32 %v1378, %v1379
        %v1381 = vmul.f32 %v212, %v1184
        %v1382 = vadd.f32 %v1380, %v1381
        %v1383 = vmul.f32 %v198, %v1342
        %v1384 = vmul.f32 %v204, %v1357
        %v1385 = vadd.f32 %v1383, %v1384
        %v1386 = vmul.f32 %v210, %v1372
        %v1387 = vadd.f32 %v1385, %v1386
        %v1388 = vmul.f32 %v198, %v1347
        %v1389 = vmul.f32 %v204, %v1362
        %v1390 = vadd.f32 %v1388, %v1389
        %v1391 = vmul.f32 %v210, %v1377
        %v1392 = vadd.f32 %v1390, %v1391
        %v1393 = vmul.f32 %v198, %v1352
        %v1394 = vmul.f32 %v204, %v1367
        %v1395 = vadd.f32 %v1393, %v1394
        %v1396 = vmul.f32 %v210, %v1382
        %v1397 = vadd.f32 %v1395, %v1396
        %v1398 = vmul.f32 %v198, %v1387
        %v1399 = vmul.f32 %v204, %v1392
        %v1400 = vadd.f32 %v1398, %v1399
        %v1401 = vmul.f32 %v210, %v1397
        %v1402 = vadd.f32 %v1400, %v1401
        %s1403 = scalar_lea.vmem %s197, 288 [#allocation7]
        %1404 = vst [vmem:[%s1403] sm:$0xff] %v1402
        %v1405 = vmul.f32 %v200, %v1387
        %v1406 = vmul.f32 %v206, %v1392
        %v1407 = vadd.f32 %v1405, %v1406
        %v1408 = vmul.f32 %v212, %v1397
        %v1409 = vadd.f32 %v1407, %v1408
        %s1410 = scalar_lea.vmem %s197, 296 [#allocation7]
        %1411 = vst [vmem:[%s1410] sm:$0xff] %v1409
        %v1412 = vmul.f32 %v202, %v1387
        %v1413 = vmul.f32 %v208, %v1392
        %v1414 = vadd.f32 %v1412, %v1413
        %v1415 = vmul.f32 %v214, %v1397
        %v1416 = vadd.f32 %v1414, %v1415
        %s1417 = scalar_lea.vmem %s197, 304 [#allocation7]
        %1418 = vst [vmem:[%s1417] sm:$0xff] %v1416
        %v1419 = vmul.f32 %v200, %v1342
        %v1420 = vmul.f32 %v206, %v1357
        %v1421 = vadd.f32 %v1419, %v1420
        %v1422 = vmul.f32 %v212, %v1372
        %v1423 = vadd.f32 %v1421, %v1422
        %v1424 = vmul.f32 %v200, %v1347
        %v1425 = vmul.f32 %v206, %v1362
        %v1426 = vadd.f32 %v1424, %v1425
        %v1427 = vmul.f32 %v212, %v1377
        %v1428 = vadd.f32 %v1426, %v1427
        %v1429 = vmul.f32 %v200, %v1352
        %v1430 = vmul.f32 %v206, %v1367
        %v1431 = vadd.f32 %v1429, %v1430
        %v1432 = vmul.f32 %v212, %v1382
        %v1433 = vadd.f32 %v1431, %v1432
        %v1434 = vmul.f32 %v198, %v1423
        %v1435 = vmul.f32 %v204, %v1428
        %v1436 = vadd.f32 %v1434, %v1435
        %v1437 = vmul.f32 %v210, %v1433
        %v1438 = vadd.f32 %v1436, %v1437
        %s1439 = scalar_lea.vmem %s197, 312 [#allocation7]
        %1440 = vst [vmem:[%s1439] sm:$0xff] %v1438
        %v1441 = vmul.f32 %v200, %v1423
        %v1442 = vmul.f32 %v206, %v1428
        %v1443 = vadd.f32 %v1441, %v1442
        %v1444 = vmul.f32 %v212, %v1433
        %v1445 = vadd.f32 %v1443, %v1444
        %s1446 = scalar_lea.vmem %s197, 320 [#allocation7]
        %1447 = vst [vmem:[%s1446] sm:$0xff] %v1445
        %v1448 = vmul.f32 %v202, %v1423
        %v1449 = vmul.f32 %v208, %v1428
        %v1450 = vadd.f32 %v1448, %v1449
        %v1451 = vmul.f32 %v214, %v1433
        %v1452 = vadd.f32 %v1450, %v1451
        %s1453 = scalar_lea.vmem %s197, 328 [#allocation7]
        %1454 = vst [vmem:[%s1453] sm:$0xff] %v1452
        %v1455 = vmul.f32 %v202, %v1342
        %v1456 = vmul.f32 %v208, %v1357
        %v1457 = vadd.f32 %v1455, %v1456
        %v1458 = vmul.f32 %v214, %v1372
        %v1459 = vadd.f32 %v1457, %v1458
        %v1460 = vmul.f32 %v202, %v1347
        %v1461 = vmul.f32 %v208, %v1362
        %v1462 = vadd.f32 %v1460, %v1461
        %v1463 = vmul.f32 %v214, %v1377
        %v1464 = vadd.f32 %v1462, %v1463
        %v1465 = vmul.f32 %v202, %v1352
        %v1466 = vmul.f32 %v208, %v1367
        %v1467 = vadd.f32 %v1465, %v1466
        %v1468 = vmul.f32 %v214, %v1382
        %v1469 = vadd.f32 %v1467, %v1468
        %v1470 = vmul.f32 %v198, %v1459
        %v1471 = vmul.f32 %v204, %v1464
        %v1472 = vadd.f32 %v1470, %v1471
        %v1473 = vmul.f32 %v210, %v1469
        %v1474 = vadd.f32 %v1472, %v1473
        %s1475 = scalar_lea.vmem %s197, 336 [#allocation7]
        %1476 = vst [vmem:[%s1475] sm:$0xff] %v1474
        %v1477 = vmul.f32 %v200, %v1459
        %v1478 = vmul.f32 %v206, %v1464
        %v1479 = vadd.f32 %v1477, %v1478
        %v1480 = vmul.f32 %v212, %v1469
        %v1481 = vadd.f32 %v1479, %v1480
        %s1482 = scalar_lea.vmem %s197, 344 [#allocation7]
        %1483 = vst [vmem:[%s1482] sm:$0xff] %v1481
        %v1484 = vmul.f32 %v202, %v1459
        %v1485 = vmul.f32 %v208, %v1464
        %v1486 = vadd.f32 %v1484, %v1485
        %v1487 = vmul.f32 %v214, %v1469
        %v1488 = vadd.f32 %v1486, %v1487
        %s1489 = scalar_lea.vmem %s197, 352 [#allocation7]
        %1490 = vst [vmem:[%s1489] sm:$0xff] %v1488
        %v1491 = vmul.f32 %v202, %v976
        %v1492 = vmul.f32 %v208, %v1048
        %v1493 = vadd.f32 %v1491, %v1492
        %v1494 = vmul.f32 %v214, %v1120
        %v1495 = vadd.f32 %v1493, %v1494
        %v1496 = vmul.f32 %v202, %v984
        %v1497 = vmul.f32 %v208, %v1056
        %v1498 = vadd.f32 %v1496, %v1497
        %v1499 = vmul.f32 %v214, %v1128
        %v1500 = vadd.f32 %v1498, %v1499
        %v1501 = vmul.f32 %v202, %v992
        %v1502 = vmul.f32 %v208, %v1064
        %v1503 = vadd.f32 %v1501, %v1502
        %v1504 = vmul.f32 %v214, %v1136
        %v1505 = vadd.f32 %v1503, %v1504
        %v1506 = vmul.f32 %v202, %v1000
        %v1507 = vmul.f32 %v208, %v1072
        %v1508 = vadd.f32 %v1506, %v1507
        %v1509 = vmul.f32 %v214, %v1144
        %v1510 = vadd.f32 %v1508, %v1509
        %v1511 = vmul.f32 %v202, %v1008
        %v1512 = vmul.f32 %v208, %v1080
        %v1513 = vadd.f32 %v1511, %v1512
        %v1514 = vmul.f32 %v214, %v1152
        %v1515 = vadd.f32 %v1513, %v1514
        %v1516 = vmul.f32 %v202, %v1016
        %v1517 = vmul.f32 %v208, %v1088
        %v1518 = vadd.f32 %v1516, %v1517
        %v1519 = vmul.f32 %v214, %v1160
        %v1520 = vadd.f32 %v1518, %v1519
        %v1521 = vmul.f32 %v202, %v1024
        %v1522 = vmul.f32 %v208, %v1096
        %v1523 = vadd.f32 %v1521, %v1522
        %v1524 = vmul.f32 %v214, %v1168
        %v1525 = vadd.f32 %v1523, %v1524
        %v1526 = vmul.f32 %v202, %v1032
        %v1527 = vmul.f32 %v208, %v1104
        %v1528 = vadd.f32 %v1526, %v1527
        %v1529 = vmul.f32 %v214, %v1176
        %v1530 = vadd.f32 %v1528, %v1529
        %v1531 = vmul.f32 %v202, %v1040
        %v1532 = vmul.f32 %v208, %v1112
        %v1533 = vadd.f32 %v1531, %v1532
        %v1534 = vmul.f32 %v214, %v1184
        %v1535 = vadd.f32 %v1533, %v1534
        %v1536 = vmul.f32 %v198, %v1495
        %v1537 = vmul.f32 %v204, %v1510
        %v1538 = vadd.f32 %v1536, %v1537
        %v1539 = vmul.f32 %v210, %v1525
        %v1540 = vadd.f32 %v1538, %v1539
        %v1541 = vmul.f32 %v198, %v1500
        %v1542 = vmul.f32 %v204, %v1515
        %v1543 = vadd.f32 %v1541, %v1542
        %v1544 = vmul.f32 %v210, %v1530
        %v1545 = vadd.f32 %v1543, %v1544
        %v1546 = vmul.f32 %v198, %v1505
        %v1547 = vmul.f32 %v204, %v1520
        %v1548 = vadd.f32 %v1546, %v1547
        %v1549 = vmul.f32 %v210, %v1535
        %v1550 = vadd.f32 %v1548, %v1549
        %v1551 = vmul.f32 %v198, %v1540
        %v1552 = vmul.f32 %v204, %v1545
        %v1553 = vadd.f32 %v1551, %v1552
        %v1554 = vmul.f32 %v210, %v1550
        %v1555 = vadd.f32 %v1553, %v1554
        %s1556 = scalar_lea.vmem %s197, 360 [#allocation7]
        %1557 = vst [vmem:[%s1556] sm:$0xff] %v1555
        %v1558 = vmul.f32 %v200, %v1540
        %v1559 = vmul.f32 %v206, %v1545
        %v1560 = vadd.f32 %v1558, %v1559
        %v1561 = vmul.f32 %v212, %v1550
        %v1562 = vadd.f32 %v1560, %v1561
        %s1563 = scalar_lea.vmem %s197, 368 [#allocation7]
        %1564 = vst [vmem:[%s1563] sm:$0xff] %v1562
        %v1565 = vmul.f32 %v202, %v1540
        %v1566 = vmul.f32 %v208, %v1545
        %v1567 = vadd.f32 %v1565, %v1566
        %v1568 = vmul.f32 %v214, %v1550
        %v1569 = vadd.f32 %v1567, %v1568
        %s1570 = scalar_lea.vmem %s197, 376 [#allocation7]
        %1571 = vst [vmem:[%s1570] sm:$0xff] %v1569
        %v1572 = vmul.f32 %v200, %v1495
        %v1573 = vmul.f32 %v206, %v1510
        %v1574 = vadd.f32 %v1572, %v1573
        %v1575 = vmul.f32 %v212, %v1525
        %v1576 = vadd.f32 %v1574, %v1575
        %v1577 = vmul.f32 %v200, %v1500
        %v1578 = vmul.f32 %v206, %v1515
        %v1579 = vadd.f32 %v1577, %v1578
        %v1580 = vmul.f32 %v212, %v1530
        %v1581 = vadd.f32 %v1579, %v1580
        %v1582 = vmul.f32 %v200, %v1505
        %v1583 = vmul.f32 %v206, %v1520
        %v1584 = vadd.f32 %v1582, %v1583
        %v1585 = vmul.f32 %v212, %v1535
        %v1586 = vadd.f32 %v1584, %v1585
        %v1587 = vmul.f32 %v198, %v1576
        %v1588 = vmul.f32 %v204, %v1581
        %v1589 = vadd.f32 %v1587, %v1588
        %v1590 = vmul.f32 %v210, %v1586
        %v1591 = vadd.f32 %v1589, %v1590
        %s1592 = scalar_lea.vmem %s197, 384 [#allocation7]
        %1593 = vst [vmem:[%s1592] sm:$0xff] %v1591
        %v1594 = vmul.f32 %v200, %v1576
        %v1595 = vmul.f32 %v206, %v1581
        %v1596 = vadd.f32 %v1594, %v1595
        %v1597 = vmul.f32 %v212, %v1586
        %v1598 = vadd.f32 %v1596, %v1597
        %s1599 = scalar_lea.vmem %s197, 392 [#allocation7]
        %1600 = vst [vmem:[%s1599] sm:$0xff] %v1598
        %v1601 = vmul.f32 %v202, %v1576
        %v1602 = vmul.f32 %v208, %v1581
        %v1603 = vadd.f32 %v1601, %v1602
        %v1604 = vmul.f32 %v214, %v1586
        %v1605 = vadd.f32 %v1603, %v1604
        %s1606 = scalar_lea.vmem %s197, 400 [#allocation7]
        %1607 = vst [vmem:[%s1606] sm:$0xff] %v1605
        %v1608 = vmul.f32 %v202, %v1495
        %v1609 = vmul.f32 %v208, %v1510
        %v1610 = vadd.f32 %v1608, %v1609
        %v1611 = vmul.f32 %v214, %v1525
        %v1612 = vadd.f32 %v1610, %v1611
        %v1613 = vmul.f32 %v202, %v1500
        %v1614 = vmul.f32 %v208, %v1515
        %v1615 = vadd.f32 %v1613, %v1614
        %v1616 = vmul.f32 %v214, %v1530
        %v1617 = vadd.f32 %v1615, %v1616
        %v1618 = vmul.f32 %v202, %v1505
        %v1619 = vmul.f32 %v208, %v1520
        %v1620 = vadd.f32 %v1618, %v1619
        %v1621 = vmul.f32 %v214, %v1535
        %v1622 = vadd.f32 %v1620, %v1621
        %v1623 = vmul.f32 %v198, %v1612
        %v1624 = vmul.f32 %v204, %v1617
        %v1625 = vadd.f32 %v1623, %v1624
        %v1626 = vmul.f32 %v210, %v1622
        %v1627 = vadd.f32 %v1625, %v1626
        %s1628 = scalar_lea.vmem %s197, 408 [#allocation7]
        %1629 = vst [vmem:[%s1628] sm:$0xff] %v1627
        %v1630 = vmul.f32 %v200, %v1612
        %v1631 = vmul.f32 %v206, %v1617
        %v1632 = vadd.f32 %v1630, %v1631
        %v1633 = vmul.f32 %v212, %v1622
        %v1634 = vadd.f32 %v1632, %v1633
        %s1635 = scalar_lea.vmem %s197, 416 [#allocation7]
        %1636 = vst [vmem:[%s1635] sm:$0xff] %v1634
        %v1637 = vmul.f32 %v202, %v1612
        %v1638 = vmul.f32 %v208, %v1617
        %v1639 = vadd.f32 %v1637, %v1638
        %v1640 = vmul.f32 %v214, %v1622
        %v1641 = vadd.f32 %v1639, %v1640
        %s1642 = scalar_lea.vmem %s197, 424 [#allocation7]
        %1643 = vst [vmem:[%s1642] sm:$0xff] %v1641
        %v1644 = vld [vmem:[#allocation2] sm:$0xff]
        %v1645 = vmul.f32 %v1644, %v202
        %v1646 = vld [vmem:[%s217] sm:$0xff]
        %v1647 = vmul.f32 %v1646, %v208
        %v1648 = vadd.f32 %v1645, %v1647
        %v1649 = vld [vmem:[%s221] sm:$0xff]
        %v1650 = vmul.f32 %v1649, %v214
        %v1651 = vadd.f32 %v1648, %v1650
        %v1652 = vld [vmem:[%s225] sm:$0xff]
        %v1653 = vmul.f32 %v1652, %v202
        %v1654 = vld [vmem:[%s228] sm:$0xff]
        %v1655 = vmul.f32 %v1654, %v208
        %v1656 = vadd.f32 %v1653, %v1655
        %v1657 = vld [vmem:[%s232] sm:$0xff]
        %v1658 = vmul.f32 %v1657, %v214
        %v1659 = vadd.f32 %v1656, %v1658
        %v1660 = vld [vmem:[%s236] sm:$0xff]
        %v1661 = vmul.f32 %v1660, %v202
        %v1662 = vld [vmem:[%s239] sm:$0xff]
        %v1663 = vmul.f32 %v1662, %v208
        %v1664 = vadd.f32 %v1661, %v1663
        %v1665 = vld [vmem:[%s243] sm:$0xff]
        %v1666 = vmul.f32 %v1665, %v214
        %v1667 = vadd.f32 %v1664, %v1666
        %v1668 = vld [vmem:[%s247] sm:$0xff]
        %v1669 = vmul.f32 %v1668, %v202
        %v1670 = vld [vmem:[%s250] sm:$0xff]
        %v1671 = vmul.f32 %v1670, %v208
        %v1672 = vadd.f32 %v1669, %v1671
        %v1673 = vld [vmem:[%s254] sm:$0xff]
        %v1674 = vmul.f32 %v1673, %v214
        %v1675 = vadd.f32 %v1672, %v1674
        %v1676 = vld [vmem:[%s258] sm:$0xff]
        %v1677 = vmul.f32 %v1676, %v202
        %v1678 = vld [vmem:[%s261] sm:$0xff]
        %v1679 = vmul.f32 %v1678, %v208
        %v1680 = vadd.f32 %v1677, %v1679
        %v1681 = vld [vmem:[%s265] sm:$0xff]
        %v1682 = vmul.f32 %v1681, %v214
        %v1683 = vadd.f32 %v1680, %v1682
        %v1684 = vld [vmem:[%s269] sm:$0xff]
        %v1685 = vmul.f32 %v1684, %v202
        %v1686 = vld [vmem:[%s272] sm:$0xff]
        %v1687 = vmul.f32 %v1686, %v208
        %v1688 = vadd.f32 %v1685, %v1687
        %v1689 = vld [vmem:[%s276] sm:$0xff]
        %v1690 = vmul.f32 %v1689, %v214
        %v1691 = vadd.f32 %v1688, %v1690
        %v1692 = vld [vmem:[%s280] sm:$0xff]
        %v1693 = vmul.f32 %v1692, %v202
        %v1694 = vld [vmem:[%s283] sm:$0xff]
        %v1695 = vmul.f32 %v1694, %v208
        %v1696 = vadd.f32 %v1693, %v1695
        %v1697 = vld [vmem:[%s287] sm:$0xff]
        %v1698 = vmul.f32 %v1697, %v214
        %v1699 = vadd.f32 %v1696, %v1698
        %v1700 = vld [vmem:[%s291] sm:$0xff]
        %v1701 = vmul.f32 %v1700, %v202
        %v1702 = vld [vmem:[%s294] sm:$0xff]
        %v1703 = vmul.f32 %v1702, %v208
        %v1704 = vadd.f32 %v1701, %v1703
        %v1705 = vld [vmem:[%s298] sm:$0xff]
        %v1706 = vmul.f32 %v1705, %v214
        %v1707 = vadd.f32 %v1704, %v1706
        %v1708 = vld [vmem:[%s302] sm:$0xff]
        %v1709 = vmul.f32 %v1708, %v202
        %v1710 = vld [vmem:[%s305] sm:$0xff]
        %v1711 = vmul.f32 %v1710, %v208
        %v1712 = vadd.f32 %v1709, %v1711
        %v1713 = vld [vmem:[%s309] sm:$0xff]
        %v1714 = vmul.f32 %v1713, %v214
        %v1715 = vadd.f32 %v1712, %v1714
        %v1716 = vld [vmem:[%s313] sm:$0xff]
        %v1717 = vmul.f32 %v1716, %v202
        %v1718 = vld [vmem:[%s316] sm:$0xff]
        %v1719 = vmul.f32 %v1718, %v208
        %v1720 = vadd.f32 %v1717, %v1719
        %v1721 = vld [vmem:[%s320] sm:$0xff]
        %v1722 = vmul.f32 %v1721, %v214
        %v1723 = vadd.f32 %v1720, %v1722
        %v1724 = vld [vmem:[%s324] sm:$0xff]
        %v1725 = vmul.f32 %v1724, %v202
        %v1726 = vld [vmem:[%s327] sm:$0xff]
        %v1727 = vmul.f32 %v1726, %v208
        %v1728 = vadd.f32 %v1725, %v1727
        %v1729 = vld [vmem:[%s331] sm:$0xff]
        %v1730 = vmul.f32 %v1729, %v214
        %v1731 = vadd.f32 %v1728, %v1730
        %v1732 = vld [vmem:[%s335] sm:$0xff]
        %v1733 = vmul.f32 %v1732, %v202
        %v1734 = vld [vmem:[%s338] sm:$0xff]
        %v1735 = vmul.f32 %v1734, %v208
        %v1736 = vadd.f32 %v1733, %v1735
        %v1737 = vld [vmem:[%s342] sm:$0xff]
        %v1738 = vmul.f32 %v1737, %v214
        %v1739 = vadd.f32 %v1736, %v1738
        %v1740 = vld [vmem:[%s346] sm:$0xff]
        %v1741 = vmul.f32 %v1740, %v202
        %v1742 = vld [vmem:[%s349] sm:$0xff]
        %v1743 = vmul.f32 %v1742, %v208
        %v1744 = vadd.f32 %v1741, %v1743
        %v1745 = vld [vmem:[%s353] sm:$0xff]
        %v1746 = vmul.f32 %v1745, %v214
        %v1747 = vadd.f32 %v1744, %v1746
        %v1748 = vld [vmem:[%s357] sm:$0xff]
        %v1749 = vmul.f32 %v1748, %v202
        %v1750 = vld [vmem:[%s360] sm:$0xff]
        %v1751 = vmul.f32 %v1750, %v208
        %v1752 = vadd.f32 %v1749, %v1751
        %v1753 = vld [vmem:[%s364] sm:$0xff]
        %v1754 = vmul.f32 %v1753, %v214
        %v1755 = vadd.f32 %v1752, %v1754
        %v1756 = vld [vmem:[%s368] sm:$0xff]
        %v1757 = vmul.f32 %v1756, %v202
        %v1758 = vld [vmem:[%s371] sm:$0xff]
        %v1759 = vmul.f32 %v1758, %v208
        %v1760 = vadd.f32 %v1757, %v1759
        %v1761 = vld [vmem:[%s375] sm:$0xff]
        %v1762 = vmul.f32 %v1761, %v214
        %v1763 = vadd.f32 %v1760, %v1762
        %v1764 = vld [vmem:[%s379] sm:$0xff]
        %v1765 = vmul.f32 %v1764, %v202
        %v1766 = vld [vmem:[%s382] sm:$0xff]
        %v1767 = vmul.f32 %v1766, %v208
        %v1768 = vadd.f32 %v1765, %v1767
        %v1769 = vld [vmem:[%s386] sm:$0xff]
        %v1770 = vmul.f32 %v1769, %v214
        %v1771 = vadd.f32 %v1768, %v1770
        %v1772 = vld [vmem:[%s390] sm:$0xff]
        %v1773 = vmul.f32 %v1772, %v202
        %v1774 = vld [vmem:[%s393] sm:$0xff]
        %v1775 = vmul.f32 %v1774, %v208
        %v1776 = vadd.f32 %v1773, %v1775
        %v1777 = vld [vmem:[%s397] sm:$0xff]
        %v1778 = vmul.f32 %v1777, %v214
        %v1779 = vadd.f32 %v1776, %v1778
        %v1780 = vld [vmem:[%s401] sm:$0xff]
        %v1781 = vmul.f32 %v1780, %v202
        %v1782 = vld [vmem:[%s404] sm:$0xff]
        %v1783 = vmul.f32 %v1782, %v208
        %v1784 = vadd.f32 %v1781, %v1783
        %v1785 = vld [vmem:[%s408] sm:$0xff]
        %v1786 = vmul.f32 %v1785, %v214
        %v1787 = vadd.f32 %v1784, %v1786
        %v1788 = vld [vmem:[%s412] sm:$0xff]
        %v1789 = vmul.f32 %v1788, %v202
        %v1790 = vld [vmem:[%s415] sm:$0xff]
        %v1791 = vmul.f32 %v1790, %v208
        %v1792 = vadd.f32 %v1789, %v1791
        %v1793 = vld [vmem:[%s419] sm:$0xff]
        %v1794 = vmul.f32 %v1793, %v214
        %v1795 = vadd.f32 %v1792, %v1794
        %v1796 = vld [vmem:[%s423] sm:$0xff]
        %v1797 = vmul.f32 %v1796, %v202
        %v1798 = vld [vmem:[%s426] sm:$0xff]
        %v1799 = vmul.f32 %v1798, %v208
        %v1800 = vadd.f32 %v1797, %v1799
        %v1801 = vld [vmem:[%s430] sm:$0xff]
        %v1802 = vmul.f32 %v1801, %v214
        %v1803 = vadd.f32 %v1800, %v1802
        %v1804 = vld [vmem:[%s434] sm:$0xff]
        %v1805 = vmul.f32 %v1804, %v202
        %v1806 = vld [vmem:[%s437] sm:$0xff]
        %v1807 = vmul.f32 %v1806, %v208
        %v1808 = vadd.f32 %v1805, %v1807
        %v1809 = vld [vmem:[%s441] sm:$0xff]
        %v1810 = vmul.f32 %v1809, %v214
        %v1811 = vadd.f32 %v1808, %v1810
        %v1812 = vld [vmem:[%s445] sm:$0xff]
        %v1813 = vmul.f32 %v1812, %v202
        %v1814 = vld [vmem:[%s448] sm:$0xff]
        %v1815 = vmul.f32 %v1814, %v208
        %v1816 = vadd.f32 %v1813, %v1815
        %v1817 = vld [vmem:[%s452] sm:$0xff]
        %v1818 = vmul.f32 %v1817, %v214
        %v1819 = vadd.f32 %v1816, %v1818
        %v1820 = vld [vmem:[%s456] sm:$0xff]
        %v1821 = vmul.f32 %v1820, %v202
        %v1822 = vld [vmem:[%s459] sm:$0xff]
        %v1823 = vmul.f32 %v1822, %v208
        %v1824 = vadd.f32 %v1821, %v1823
        %v1825 = vld [vmem:[%s463] sm:$0xff]
        %v1826 = vmul.f32 %v1825, %v214
        %v1827 = vadd.f32 %v1824, %v1826
        %v1828 = vld [vmem:[%s467] sm:$0xff]
        %v1829 = vmul.f32 %v1828, %v202
        %v1830 = vld [vmem:[%s470] sm:$0xff]
        %v1831 = vmul.f32 %v1830, %v208
        %v1832 = vadd.f32 %v1829, %v1831
        %v1833 = vld [vmem:[%s474] sm:$0xff]
        %v1834 = vmul.f32 %v1833, %v214
        %v1835 = vadd.f32 %v1832, %v1834
        %v1836 = vld [vmem:[%s478] sm:$0xff]
        %v1837 = vmul.f32 %v1836, %v202
        %v1838 = vld [vmem:[%s481] sm:$0xff]
        %v1839 = vmul.f32 %v1838, %v208
        %v1840 = vadd.f32 %v1837, %v1839
        %v1841 = vld [vmem:[%s485] sm:$0xff]
        %v1842 = vmul.f32 %v1841, %v214
        %v1843 = vadd.f32 %v1840, %v1842
        %v1844 = vld [vmem:[%s489] sm:$0xff]
        %v1845 = vmul.f32 %v1844, %v202
        %v1846 = vld [vmem:[%s492] sm:$0xff]
        %v1847 = vmul.f32 %v1846, %v208
        %v1848 = vadd.f32 %v1845, %v1847
        %v1849 = vld [vmem:[%s496] sm:$0xff]
        %v1850 = vmul.f32 %v1849, %v214
        %v1851 = vadd.f32 %v1848, %v1850
        %v1852 = vld [vmem:[%s500] sm:$0xff]
        %v1853 = vmul.f32 %v1852, %v202
        %v1854 = vld [vmem:[%s503] sm:$0xff]
        %v1855 = vmul.f32 %v1854, %v208
        %v1856 = vadd.f32 %v1853, %v1855
        %v1857 = vld [vmem:[%s507] sm:$0xff]
        %v1858 = vmul.f32 %v1857, %v214
        %v1859 = vadd.f32 %v1856, %v1858
        %v1860 = vmul.f32 %v198, %v1651
        %v1861 = vmul.f32 %v204, %v1723
        %v1862 = vadd.f32 %v1860, %v1861
        %v1863 = vmul.f32 %v210, %v1795
        %v1864 = vadd.f32 %v1862, %v1863
        %v1865 = vmul.f32 %v198, %v1659
        %v1866 = vmul.f32 %v204, %v1731
        %v1867 = vadd.f32 %v1865, %v1866
        %v1868 = vmul.f32 %v210, %v1803
        %v1869 = vadd.f32 %v1867, %v1868
        %v1870 = vmul.f32 %v198, %v1667
        %v1871 = vmul.f32 %v204, %v1739
        %v1872 = vadd.f32 %v1870, %v1871
        %v1873 = vmul.f32 %v210, %v1811
        %v1874 = vadd.f32 %v1872, %v1873
        %v1875 = vmul.f32 %v198, %v1675
        %v1876 = vmul.f32 %v204, %v1747
        %v1877 = vadd.f32 %v1875, %v1876
        %v1878 = vmul.f32 %v210, %v1819
        %v1879 = vadd.f32 %v1877, %v1878
        %v1880 = vmul.f32 %v198, %v1683
        %v1881 = vmul.f32 %v204, %v1755
        %v1882 = vadd.f32 %v1880, %v1881
        %v1883 = vmul.f32 %v210, %v1827
        %v1884 = vadd.f32 %v1882, %v1883
        %v1885 = vmul.f32 %v198, %v1691
        %v1886 = vmul.f32 %v204, %v1763
        %v1887 = vadd.f32 %v1885, %v1886
        %v1888 = vmul.f32 %v210, %v1835
        %v1889 = vadd.f32 %v1887, %v1888
        %v1890 = vmul.f32 %v198, %v1699
        %v1891 = vmul.f32 %v204, %v1771
        %v1892 = vadd.f32 %v1890, %v1891
        %v1893 = vmul.f32 %v210, %v1843
        %v1894 = vadd.f32 %v1892, %v1893
        %v1895 = vmul.f32 %v198, %v1707
        %v1896 = vmul.f32 %v204, %v1779
        %v1897 = vadd.f32 %v1895, %v1896
        %v1898 = vmul.f32 %v210, %v1851
        %v1899 = vadd.f32 %v1897, %v1898
        %v1900 = vmul.f32 %v198, %v1715
        %v1901 = vmul.f32 %v204, %v1787
        %v1902 = vadd.f32 %v1900, %v1901
        %v1903 = vmul.f32 %v210, %v1859
        %v1904 = vadd.f32 %v1902, %v1903
        %v1905 = vmul.f32 %v198, %v1864
        %v1906 = vmul.f32 %v204, %v1879
        %v1907 = vadd.f32 %v1905, %v1906
        %v1908 = vmul.f32 %v210, %v1894
        %v1909 = vadd.f32 %v1907, %v1908
        %v1910 = vmul.f32 %v198, %v1869
        %v1911 = vmul.f32 %v204, %v1884
        %v1912 = vadd.f32 %v1910, %v1911
        %v1913 = vmul.f32 %v210, %v1899
        %v1914 = vadd.f32 %v1912, %v1913
        %v1915 = vmul.f32 %v198, %v1874
        %v1916 = vmul.f32 %v204, %v1889
        %v1917 = vadd.f32 %v1915, %v1916
        %v1918 = vmul.f32 %v210, %v1904
        %v1919 = vadd.f32 %v1917, %v1918
        %v1920 = vmul.f32 %v198, %v1909
        %v1921 = vmul.f32 %v204, %v1914
        %v1922 = vadd.f32 %v1920, %v1921
        %v1923 = vmul.f32 %v210, %v1919
        %v1924 = vadd.f32 %v1922, %v1923
        %s1925 = scalar_lea.vmem %s197, 432 [#allocation7]
        %1926 = vst [vmem:[%s1925] sm:$0xff] %v1924
        %v1927 = vmul.f32 %v200, %v1909
        %v1928 = vmul.f32 %v206, %v1914
        %v1929 = vadd.f32 %v1927, %v1928
        %v1930 = vmul.f32 %v212, %v1919
        %v1931 = vadd.f32 %v1929, %v1930
        %s1932 = scalar_lea.vmem %s197, 440 [#allocation7]
        %1933 = vst [vmem:[%s1932] sm:$0xff] %v1931
        %v1934 = vmul.f32 %v202, %v1909
        %v1935 = vmul.f32 %v208, %v1914
        %v1936 = vadd.f32 %v1934, %v1935
        %v1937 = vmul.f32 %v214, %v1919
        %v1938 = vadd.f32 %v1936, %v1937
        %s1939 = scalar_lea.vmem %s197, 448 [#allocation7]
        %1940 = vst [vmem:[%s1939] sm:$0xff] %v1938
        %v1941 = vmul.f32 %v200, %v1864
        %v1942 = vmul.f32 %v206, %v1879
        %v1943 = vadd.f32 %v1941, %v1942
        %v1944 = vmul.f32 %v212, %v1894
        %v1945 = vadd.f32 %v1943, %v1944
        %v1946 = vmul.f32 %v200, %v1869
        %v1947 = vmul.f32 %v206, %v1884
        %v1948 = vadd.f32 %v1946, %v1947
        %v1949 = vmul.f32 %v212, %v1899
        %v1950 = vadd.f32 %v1948, %v1949
        %v1951 = vmul.f32 %v200, %v1874
        %v1952 = vmul.f32 %v206, %v1889
        %v1953 = vadd.f32 %v1951, %v1952
        %v1954 = vmul.f32 %v212, %v1904
        %v1955 = vadd.f32 %v1953, %v1954
        %v1956 = vmul.f32 %v198, %v1945
        %v1957 = vmul.f32 %v204, %v1950
        %v1958 = vadd.f32 %v1956, %v1957
        %v1959 = vmul.f32 %v210, %v1955
        %v1960 = vadd.f32 %v1958, %v1959
        %s1961 = scalar_lea.vmem %s197, 456 [#allocation7]
        %1962 = vst [vmem:[%s1961] sm:$0xff] %v1960
        %v1963 = vmul.f32 %v200, %v1945
        %v1964 = vmul.f32 %v206, %v1950
        %v1965 = vadd.f32 %v1963, %v1964
        %v1966 = vmul.f32 %v212, %v1955
        %v1967 = vadd.f32 %v1965, %v1966
        %s1968 = scalar_lea.vmem %s197, 464 [#allocation7]
        %1969 = vst [vmem:[%s1968] sm:$0xff] %v1967
        %v1970 = vmul.f32 %v202, %v1945
        %v1971 = vmul.f32 %v208, %v1950
        %v1972 = vadd.f32 %v1970, %v1971
        %v1973 = vmul.f32 %v214, %v1955
        %v1974 = vadd.f32 %v1972, %v1973
        %s1975 = scalar_lea.vmem %s197, 472 [#allocation7]
        %1976 = vst [vmem:[%s1975] sm:$0xff] %v1974
        %v1977 = vmul.f32 %v202, %v1864
        %v1978 = vmul.f32 %v208, %v1879
        %v1979 = vadd.f32 %v1977, %v1978
        %v1980 = vmul.f32 %v214, %v1894
        %v1981 = vadd.f32 %v1979, %v1980
        %v1982 = vmul.f32 %v202, %v1869
        %v1983 = vmul.f32 %v208, %v1884
        %v1984 = vadd.f32 %v1982, %v1983
        %v1985 = vmul.f32 %v214, %v1899
        %v1986 = vadd.f32 %v1984, %v1985
        %v1987 = vmul.f32 %v202, %v1874
        %v1988 = vmul.f32 %v208, %v1889
        %v1989 = vadd.f32 %v1987, %v1988
        %v1990 = vmul.f32 %v214, %v1904
        %v1991 = vadd.f32 %v1989, %v1990
        %v1992 = vmul.f32 %v198, %v1981
        %v1993 = vmul.f32 %v204, %v1986
        %v1994 = vadd.f32 %v1992, %v1993
        %v1995 = vmul.f32 %v210, %v1991
        %v1996 = vadd.f32 %v1994, %v1995
        %s1997 = scalar_lea.vmem %s197, 480 [#allocation7]
        %1998 = vst [vmem:[%s1997] sm:$0xff] %v1996
        %v1999 = vmul.f32 %v200, %v1981
        %v2000 = vmul.f32 %v206, %v1986
        %v2001 = vadd.f32 %v1999, %v2000
        %v2002 = vmul.f32 %v212, %v1991
        %v2003 = vadd.f32 %v2001, %v2002
        %s2004 = scalar_lea.vmem %s197, 488 [#allocation7]
        %2005 = vst [vmem:[%s2004] sm:$0xff] %v2003
        %v2006 = vmul.f32 %v202, %v1981
        %v2007 = vmul.f32 %v208, %v1986
        %v2008 = vadd.f32 %v2006, %v2007
        %v2009 = vmul.f32 %v214, %v1991
        %v2010 = vadd.f32 %v2008, %v2009
        %s2011 = scalar_lea.vmem %s197, 496 [#allocation7]
        %2012 = vst [vmem:[%s2011] sm:$0xff] %v2010
        %v2013 = vmul.f32 %v200, %v1651
        %v2014 = vmul.f32 %v206, %v1723
        %v2015 = vadd.f32 %v2013, %v2014
        %v2016 = vmul.f32 %v212, %v1795
        %v2017 = vadd.f32 %v2015, %v2016
        %v2018 = vmul.f32 %v200, %v1659
        %v2019 = vmul.f32 %v206, %v1731
        %v2020 = vadd.f32 %v2018, %v2019
        %v2021 = vmul.f32 %v212, %v1803
        %v2022 = vadd.f32 %v2020, %v2021
        %v2023 = vmul.f32 %v200, %v1667
        %v2024 = vmul.f32 %v206, %v1739
        %v2025 = vadd.f32 %v2023, %v2024
        %v2026 = vmul.f32 %v212, %v1811
        %v2027 = vadd.f32 %v2025, %v2026
        %v2028 = vmul.f32 %v200, %v1675
        %v2029 = vmul.f32 %v206, %v1747
        %v2030 = vadd.f32 %v2028, %v2029
        %v2031 = vmul.f32 %v212, %v1819
        %v2032 = vadd.f32 %v2030, %v2031
        %v2033 = vmul.f32 %v200, %v1683
        %v2034 = vmul.f32 %v206, %v1755
        %v2035 = vadd.f32 %v2033, %v2034
        %v2036 = vmul.f32 %v212, %v1827
        %v2037 = vadd.f32 %v2035, %v2036
        %v2038 = vmul.f32 %v200, %v1691
        %v2039 = vmul.f32 %v206, %v1763
        %v2040 = vadd.f32 %v2038, %v2039
        %v2041 = vmul.f32 %v212, %v1835
        %v2042 = vadd.f32 %v2040, %v2041
        %v2043 = vmul.f32 %v200, %v1699
        %v2044 = vmul.f32 %v206, %v1771
        %v2045 = vadd.f32 %v2043, %v2044
        %v2046 = vmul.f32 %v212, %v1843
        %v2047 = vadd.f32 %v2045, %v2046
        %v2048 = vmul.f32 %v200, %v1707
        %v2049 = vmul.f32 %v206, %v1779
        %v2050 = vadd.f32 %v2048, %v2049
        %v2051 = vmul.f32 %v212, %v1851
        %v2052 = vadd.f32 %v2050, %v2051
        %v2053 = vmul.f32 %v200, %v1715
        %v2054 = vmul.f32 %v206, %v1787
        %v2055 = vadd.f32 %v2053, %v2054
        %v2056 = vmul.f32 %v212, %v1859
        %v2057 = vadd.f32 %v2055, %v2056
        %v2058 = vmul.f32 %v198, %v2017
        %v2059 = vmul.f32 %v204, %v2032
        %v2060 = vadd.f32 %v2058, %v2059
        %v2061 = vmul.f32 %v210, %v2047
        %v2062 = vadd.f32 %v2060, %v2061
        %v2063 = vmul.f32 %v198, %v2022
        %v2064 = vmul.f32 %v204, %v2037
        %v2065 = vadd.f32 %v2063, %v2064
        %v2066 = vmul.f32 %v210, %v2052
        %v2067 = vadd.f32 %v2065, %v2066
        %v2068 = vmul.f32 %v198, %v2027
        %v2069 = vmul.f32 %v204, %v2042
        %v2070 = vadd.f32 %v2068, %v2069
        %v2071 = vmul.f32 %v210, %v2057
        %v2072 = vadd.f32 %v2070, %v2071
        %v2073 = vmul.f32 %v198, %v2062
        %v2074 = vmul.f32 %v204, %v2067
        %v2075 = vadd.f32 %v2073, %v2074
        %v2076 = vmul.f32 %v210, %v2072
        %v2077 = vadd.f32 %v2075, %v2076
        %s2078 = scalar_lea.vmem %s197, 504 [#allocation7]
        %2079 = vst [vmem:[%s2078] sm:$0xff] %v2077
        %v2080 = vmul.f32 %v200, %v2062
        %v2081 = vmul.f32 %v206, %v2067
        %v2082 = vadd.f32 %v2080, %v2081
        %v2083 = vmul.f32 %v212, %v2072
        %v2084 = vadd.f32 %v2082, %v2083
        %s2085 = scalar_lea.vmem %s197, 512 [#allocation7]
        %2086 = vst [vmem:[%s2085] sm:$0xff] %v2084
        %v2087 = vmul.f32 %v202, %v2062
        %v2088 = vmul.f32 %v208, %v2067
        %v2089 = vadd.f32 %v2087, %v2088
        %v2090 = vmul.f32 %v214, %v2072
        %v2091 = vadd.f32 %v2089, %v2090
        %s2092 = scalar_lea.vmem %s197, 520 [#allocation7]
        %2093 = vst [vmem:[%s2092] sm:$0xff] %v2091
        %v2094 = vmul.f32 %v200, %v2017
        %v2095 = vmul.f32 %v206, %v2032
        %v2096 = vadd.f32 %v2094, %v2095
        %v2097 = vmul.f32 %v212, %v2047
        %v2098 = vadd.f32 %v2096, %v2097
        %v2099 = vmul.f32 %v200, %v2022
        %v2100 = vmul.f32 %v206, %v2037
        %v2101 = vadd.f32 %v2099, %v2100
        %v2102 = vmul.f32 %v212, %v2052
        %v2103 = vadd.f32 %v2101, %v2102
        %v2104 = vmul.f32 %v200, %v2027
        %v2105 = vmul.f32 %v206, %v2042
        %v2106 = vadd.f32 %v2104, %v2105
        %v2107 = vmul.f32 %v212, %v2057
        %v2108 = vadd.f32 %v2106, %v2107
        %v2109 = vmul.f32 %v198, %v2098
        %v2110 = vmul.f32 %v204, %v2103
        %v2111 = vadd.f32 %v2109, %v2110
        %v2112 = vmul.f32 %v210, %v2108
        %v2113 = vadd.f32 %v2111, %v2112
        %s2114 = scalar_lea.vmem %s197, 528 [#allocation7]
        %2115 = vst [vmem:[%s2114] sm:$0xff] %v2113
        %v2116 = vmul.f32 %v200, %v2098
        %v2117 = vmul.f32 %v206, %v2103
        %v2118 = vadd.f32 %v2116, %v2117
        %v2119 = vmul.f32 %v212, %v2108
        %v2120 = vadd.f32 %v2118, %v2119
        %s2121 = scalar_lea.vmem %s197, 536 [#allocation7]
        %2122 = vst [vmem:[%s2121] sm:$0xff] %v2120
        %v2123 = vmul.f32 %v202, %v2098
        %v2124 = vmul.f32 %v208, %v2103
        %v2125 = vadd.f32 %v2123, %v2124
        %v2126 = vmul.f32 %v214, %v2108
        %v2127 = vadd.f32 %v2125, %v2126
        %s2128 = scalar_lea.vmem %s197, 544 [#allocation7]
        %2129 = vst [vmem:[%s2128] sm:$0xff] %v2127
        %v2130 = vmul.f32 %v202, %v2017
        %v2131 = vmul.f32 %v208, %v2032
        %v2132 = vadd.f32 %v2130, %v2131
        %v2133 = vmul.f32 %v214, %v2047
        %v2134 = vadd.f32 %v2132, %v2133
        %v2135 = vmul.f32 %v202, %v2022
        %v2136 = vmul.f32 %v208, %v2037
        %v2137 = vadd.f32 %v2135, %v2136
        %v2138 = vmul.f32 %v214, %v2052
        %v2139 = vadd.f32 %v2137, %v2138
        %v2140 = vmul.f32 %v202, %v2027
        %v2141 = vmul.f32 %v208, %v2042
        %v2142 = vadd.f32 %v2140, %v2141
        %v2143 = vmul.f32 %v214, %v2057
        %v2144 = vadd.f32 %v2142, %v2143
        %v2145 = vmul.f32 %v198, %v2134
        %v2146 = vmul.f32 %v204, %v2139
        %v2147 = vadd.f32 %v2145, %v2146
        %v2148 = vmul.f32 %v210, %v2144
        %v2149 = vadd.f32 %v2147, %v2148
        %s2150 = scalar_lea.vmem %s197, 552 [#allocation7]
        %2151 = vst [vmem:[%s2150] sm:$0xff] %v2149
        %v2152 = vmul.f32 %v200, %v2134
        %v2153 = vmul.f32 %v206, %v2139
        %v2154 = vadd.f32 %v2152, %v2153
        %v2155 = vmul.f32 %v212, %v2144
        %v2156 = vadd.f32 %v2154, %v2155
        %s2157 = scalar_lea.vmem %s197, 560 [#allocation7]
        %2158 = vst [vmem:[%s2157] sm:$0xff] %v2156
        %v2159 = vmul.f32 %v202, %v2134
        %v2160 = vmul.f32 %v208, %v2139
        %v2161 = vadd.f32 %v2159, %v2160
        %v2162 = vmul.f32 %v214, %v2144
        %v2163 = vadd.f32 %v2161, %v2162
        %s2164 = scalar_lea.vmem %s197, 568 [#allocation7]
        %2165 = vst [vmem:[%s2164] sm:$0xff] %v2163
        %v2166 = vmul.f32 %v202, %v1651
        %v2167 = vmul.f32 %v208, %v1723
        %v2168 = vadd.f32 %v2166, %v2167
        %v2169 = vmul.f32 %v214, %v1795
        %v2170 = vadd.f32 %v2168, %v2169
        %v2171 = vmul.f32 %v202, %v1659
        %v2172 = vmul.f32 %v208, %v1731
        %v2173 = vadd.f32 %v2171, %v2172
        %v2174 = vmul.f32 %v214, %v1803
        %v2175 = vadd.f32 %v2173, %v2174
        %v2176 = vmul.f32 %v202, %v1667
        %v2177 = vmul.f32 %v208, %v1739
        %v2178 = vadd.f32 %v2176, %v2177
        %v2179 = vmul.f32 %v214, %v1811
        %v2180 = vadd.f32 %v2178, %v2179
        %v2181 = vmul.f32 %v202, %v1675
        %v2182 = vmul.f32 %v208, %v1747
        %v2183 = vadd.f32 %v2181, %v2182
        %v2184 = vmul.f32 %v214, %v1819
        %v2185 = vadd.f32 %v2183, %v2184
        %v2186 = vmul.f32 %v202, %v1683
        %v2187 = vmul.f32 %v208, %v1755
        %v2188 = vadd.f32 %v2186, %v2187
        %v2189 = vmul.f32 %v214, %v1827
        %v2190 = vadd.f32 %v2188, %v2189
        %v2191 = vmul.f32 %v202, %v1691
        %v2192 = vmul.f32 %v208, %v1763
        %v2193 = vadd.f32 %v2191, %v2192
        %v2194 = vmul.f32 %v214, %v1835
        %v2195 = vadd.f32 %v2193, %v2194
        %v2196 = vmul.f32 %v202, %v1699
        %v2197 = vmul.f32 %v208, %v1771
        %v2198 = vadd.f32 %v2196, %v2197
        %v2199 = vmul.f32 %v214, %v1843
        %v2200 = vadd.f32 %v2198, %v2199
        %v2201 = vmul.f32 %v202, %v1707
        %v2202 = vmul.f32 %v208, %v1779
        %v2203 = vadd.f32 %v2201, %v2202
        %v2204 = vmul.f32 %v214, %v1851
        %v2205 = vadd.f32 %v2203, %v2204
        %v2206 = vmul.f32 %v202, %v1715
        %v2207 = vmul.f32 %v208, %v1787
        %v2208 = vadd.f32 %v2206, %v2207
        %v2209 = vmul.f32 %v214, %v1859
        %v2210 = vadd.f32 %v2208, %v2209
        %v2211 = vmul.f32 %v198, %v2170
        %v2212 = vmul.f32 %v204, %v2185
        %v2213 = vadd.f32 %v2211, %v2212
        %v2214 = vmul.f32 %v210, %v2200
        %v2215 = vadd.f32 %v2213, %v2214
        %v2216 = vmul.f32 %v198, %v2175
        %v2217 = vmul.f32 %v204, %v2190
        %v2218 = vadd.f32 %v2216, %v2217
        %v2219 = vmul.f32 %v210, %v2205
        %v2220 = vadd.f32 %v2218, %v2219
        %v2221 = vmul.f32 %v198, %v2180
        %v2222 = vmul.f32 %v204, %v2195
        %v2223 = vadd.f32 %v2221, %v2222
        %v2224 = vmul.f32 %v210, %v2210
        %v2225 = vadd.f32 %v2223, %v2224
        %v2226 = vmul.f32 %v198, %v2215
        %v2227 = vmul.f32 %v204, %v2220
        %v2228 = vadd.f32 %v2226, %v2227
        %v2229 = vmul.f32 %v210, %v2225
        %v2230 = vadd.f32 %v2228, %v2229
        %s2231 = scalar_lea.vmem %s197, 576 [#allocation7]
        %2232 = vst [vmem:[%s2231] sm:$0xff] %v2230
        %v2233 = vmul.f32 %v200, %v2215
        %v2234 = vmul.f32 %v206, %v2220
        %v2235 = vadd.f32 %v2233, %v2234
        %v2236 = vmul.f32 %v212, %v2225
        %v2237 = vadd.f32 %v2235, %v2236
        %s2238 = scalar_lea.vmem %s197, 584 [#allocation7]
        %2239 = vst [vmem:[%s2238] sm:$0xff] %v2237
        %v2240 = vmul.f32 %v202, %v2215
        %v2241 = vmul.f32 %v208, %v2220
        %v2242 = vadd.f32 %v2240, %v2241
        %v2243 = vmul.f32 %v214, %v2225
        %v2244 = vadd.f32 %v2242, %v2243
        %s2245 = scalar_lea.vmem %s197, 592 [#allocation7]
        %2246 = vst [vmem:[%s2245] sm:$0xff] %v2244
        %v2247 = vmul.f32 %v200, %v2170
        %v2248 = vmul.f32 %v206, %v2185
        %v2249 = vadd.f32 %v2247, %v2248
        %v2250 = vmul.f32 %v212, %v2200
        %v2251 = vadd.f32 %v2249, %v2250
        %v2252 = vmul.f32 %v200, %v2175
        %v2253 = vmul.f32 %v206, %v2190
        %v2254 = vadd.f32 %v2252, %v2253
        %v2255 = vmul.f32 %v212, %v2205
        %v2256 = vadd.f32 %v2254, %v2255
        %v2257 = vmul.f32 %v200, %v2180
        %v2258 = vmul.f32 %v206, %v2195
        %v2259 = vadd.f32 %v2257, %v2258
        %v2260 = vmul.f32 %v212, %v2210
        %v2261 = vadd.f32 %v2259, %v2260
        %v2262 = vmul.f32 %v198, %v2251
        %v2263 = vmul.f32 %v204, %v2256
        %v2264 = vadd.f32 %v2262, %v2263
        %v2265 = vmul.f32 %v210, %v2261
        %v2266 = vadd.f32 %v2264, %v2265
        %s2267 = scalar_lea.vmem %s197, 600 [#allocation7]
        %2268 = vst [vmem:[%s2267] sm:$0xff] %v2266
        %v2269 = vmul.f32 %v200, %v2251
        %v2270 = vmul.f32 %v206, %v2256
        %v2271 = vadd.f32 %v2269, %v2270
        %v2272 = vmul.f32 %v212, %v2261
        %v2273 = vadd.f32 %v2271, %v2272
        %s2274 = scalar_lea.vmem %s197, 608 [#allocation7]
        %2275 = vst [vmem:[%s2274] sm:$0xff] %v2273
        %v2276 = vmul.f32 %v202, %v2251
        %v2277 = vmul.f32 %v208, %v2256
        %v2278 = vadd.f32 %v2276, %v2277
        %v2279 = vmul.f32 %v214, %v2261
        %v2280 = vadd.f32 %v2278, %v2279
        %s2281 = scalar_lea.vmem %s197, 616 [#allocation7]
        %2282 = vst [vmem:[%s2281] sm:$0xff] %v2280
        %v2283 = vmul.f32 %v202, %v2170
        %v2284 = vmul.f32 %v208, %v2185
        %v2285 = vadd.f32 %v2283, %v2284
        %v2286 = vmul.f32 %v214, %v2200
        %v2287 = vadd.f32 %v2285, %v2286
        %v2288 = vmul.f32 %v202, %v2175
        %v2289 = vmul.f32 %v208, %v2190
        %v2290 = vadd.f32 %v2288, %v2289
        %v2291 = vmul.f32 %v214, %v2205
        %v2292 = vadd.f32 %v2290, %v2291
        %v2293 = vmul.f32 %v202, %v2180
        %v2294 = vmul.f32 %v208, %v2195
        %v2295 = vadd.f32 %v2293, %v2294
        %v2296 = vmul.f32 %v214, %v2210
        %v2297 = vadd.f32 %v2295, %v2296
        %v2298 = vmul.f32 %v198, %v2287
        %v2299 = vmul.f32 %v204, %v2292
        %v2300 = vadd.f32 %v2298, %v2299
        %v2301 = vmul.f32 %v210, %v2297
        %v2302 = vadd.f32 %v2300, %v2301
        %s2303 = scalar_lea.vmem %s197, 624 [#allocation7]
        %2304 = vst [vmem:[%s2303] sm:$0xff] %v2302
        %v2305 = vmul.f32 %v200, %v2287
        %v2306 = vmul.f32 %v206, %v2292
        %v2307 = vadd.f32 %v2305, %v2306
        %v2308 = vmul.f32 %v212, %v2297
        %v2309 = vadd.f32 %v2307, %v2308
        %s2310 = scalar_lea.vmem %s197, 632 [#allocation7]
        %2311 = vst [vmem:[%s2310] sm:$0xff] %v2309
        %v2312 = vmul.f32 %v202, %v2287
        %v2313 = vmul.f32 %v208, %v2292
        %v2314 = vadd.f32 %v2312, %v2313
        %v2315 = vmul.f32 %v214, %v2297
        %v2316 = vadd.f32 %v2314, %v2315
        %s2317 = scalar_lea.vmem %s197, 640 [#allocation7]
        %2318 = vst [vmem:[%s2317] sm:$0xff] %v2316
        %s2319 = sand.u32 %s91, 1
        %s2320 = scalar_lea.sflag [#allocation4], %s2319
        %s2321 = sand.u32 %s91, 1
        %s2322 = smul.addr %s2321, 648
        %s2323 = scalar_lea.vmem [#allocation7], %s2322
        // Predicated region
        $region37: #{tpu_custom_call.1} parent=27 // pred_check
          %p2324 = pneg %p101
        $region38: #{tpu_custom_call.1} parent=27 // pred_check_branch
          %2326 = sbr.rel (%p2324) target = $region40
        $region39: #{tpu_custom_call.1} parent=27 // pred_region
          %2328 = vsyncadd %s2320, 0
          %s2329 = smul.addr %s24, 81
          %s2330 = sadd.s32 %s25, %s2329
          %s2331 = smul.addr %s2330, 8
          %s2332 = scalar_lea.hbm %s2, %s2331
          %s2333 = sshll.u32 %s2323, 4
          %s2334 = int_to_ptr.vmem [resolvable:$true] %s2333
          %s2335 = sshll.u32 %s2332, 4
          %s2336 = int_to_ptr.hbm [resolvable:$true] %s2335
          %2341 = dma.vmem_to_hbm [thread:$0]  %s2334, 10368, %s2336, %s2320, 128, 128, 8
        $region40: #{tpu_custom_call.1} parent=27 // pred_fallthru
          _
      $region28: #{tpu_custom_call.1} parent=5 // pred_fallthru
        _
      %p2342 = scmp.le.s32.totalorder 2, %s15
      // Predicated region
      $region41: #{tpu_custom_call.1} parent=5 // pred_check
        %p2343 = pneg %p2342
      $region42: #{tpu_custom_call.1} parent=5 // pred_check_branch
        %2345 = sbr.rel (%p2343) target = $region44
      $region43: #{tpu_custom_call.1} parent=5 // pred_region
        %s2346 = ssub.s32 %s15, 2
        // Predicated region
        $region45: #{tpu_custom_call.1} parent=43 // pred_check
          %p2347 = pneg %p107
        $region46: #{tpu_custom_call.1} parent=43 // pred_check_branch
          %2349 = sbr.rel (%p2347) target = $region48
        $region47: #{tpu_custom_call.1} parent=43 // pred_region
          %s2350 = sand.u32 %s92, 1
          %s2351 = scalar_lea.sflag [#allocation4], %s2350
          %s2352 = sand.u32 %s92, 1
          %s2353 = smul.addr %s2352, 648
          %s2354 = scalar_lea.vmem [#allocation7], %s2353
          %2356 = dma.done %s2351, 10368
        $region48: #{tpu_custom_call.1} parent=43 // pred_fallthru
          _
      $region44: #{tpu_custom_call.1} parent=5 // pred_fallthru
        _
    $region6: #{tpu_custom_call.1} parent=1 // loop_footer
      %s19 = sadd.s32 1, %s15
    $region7: #{tpu_custom_call.1} parent=1 // loop_footer_branch
      %14 = sbr.rel target = $region3
    $region8: #{tpu_custom_call.1} parent=1 // loop_exit
      _
    %2357 = vsyncpa [#allocation3], 1
    %s2358 = scalar_lea.sflag [#allocation3], 1
    %2359 = vsyncpa %s2358, 1
    %2360 = vsyncpa [#allocation6], 1
    %s2361 = scalar_lea.sflag [#allocation6], 1
    %2362 = vsyncpa %s2361, 1
    %2363 = vsyncpa [#allocation4], 1
    %s2364 = scalar_lea.sflag [#allocation4], 1
    %2365 = vsyncpa %s2364, 1

</llo_original>
